<compile_context>
chip_gen: v5e
topology: v5e:2x2
jax: 0.10.0
libtpu: 0.0.40
codegen_flags: <defaults>
</compile_context>

<pallas_src>
import jax
import jax.numpy as jnp
import numpy as np
from jax.experimental import pallas as pl
from jax.experimental.pallas import tpu as pltpu

CPAD = 128                       # padded FC feature width (lane-dense)
VMEM_LIMIT = 32 * 1024 * 1024    # explicit scoped-VMEM budget (safe on v5e/v6e/v7x)


# ----------------------------- Pallas kernel -------------------------------

def _lenet_kernel(x_ref, w1b_ref, b1_ref, w2b_ref, b2_ref,
                  wf1_ref, bf1_ref, wf2_ref, bf2_ref, wf3_ref, bf3_ref, o_ref):
    """Whole LeNet forward for one batch tile; all intermediates stay on-chip."""
    # Resident weights (tiny), loaded once per grid step.
    w1b = [w1b_ref[d] for d in range(5)]          # 5 x (28, 144)  bf16
    w2b = [w2b_ref[d] for d in range(5)]          # 5 x (144, 128) bf16
    b1 = b1_ref[...]                              # (1, 144) f32
    b2 = b2_ref[...]                              # (1, 128) f32

    # Input rows: x_ref is (28, TB, 28); row r is a (TB, 28) tile.
    xrow = [x_ref[r] for r in range(28)]

    # conv1 (5x5, 1->6) + bias + tanh, one output row at a time
    # (lane index = ox*6 + co), then the H half of AvgPool2d(2) as a row-pair
    # average.  The W half of the pool is folded into the conv2 band weights.
    def conv1_row(oy):
        acc = jnp.dot(xrow[oy], w1b[0], preferred_element_type=jnp.float32)
        for dy in range(1, 5):
            acc = acc + jnp.dot(xrow[oy + dy], w1b[dy],
                                preferred_element_type=jnp.float32)
        return jnp.tanh(acc + b1)                 # (TB, 144) f32

    r1 = [(0.5 * (conv1_row(2 * m) + conv1_row(2 * m + 1))).astype(jnp.bfloat16)
          for m in range(12)]                     # 12 x (TB, 144)

    # conv2 (5x5, 6->16, pool1-W folded in) + bias + tanh + H half of pool2.
    def conv2_row(oy):
        acc = jnp.dot(r1[oy], w2b[0], preferred_element_type=jnp.float32)
        for dy in range(1, 5):
            acc = acc + jnp.dot(r1[oy + dy], w2b[dy],
                                preferred_element_type=jnp.float32)
        return jnp.tanh(acc + b2)                 # (TB, 128) f32

    z = [(0.5 * (conv2_row(2 * h) + conv2_row(2 * h + 1))).astype(jnp.bfloat16)
         for h in range(4)]                       # 4 x (TB, 128)

    # FC1 (pool2-W and the NCHW flatten permutation folded into wf1) -> tanh.
    h = jnp.dot(z[0], wf1_ref[0], preferred_element_type=jnp.float32)
    for hh in range(1, 4):
        h = h + jnp.dot(z[hh], wf1_ref[hh], preferred_element_type=jnp.float32)
    h = jnp.tanh(h + bf1_ref[...])
    # FC2 -> tanh -> FC3 (+bias); padded lanes stay exactly zero.
    h = jnp.dot(h.astype(jnp.bfloat16), wf2_ref[...],
                preferred_element_type=jnp.float32)
    h = jnp.tanh(h + bf2_ref[...])
    h = jnp.dot(h.astype(jnp.bfloat16), wf3_ref[...],
                preferred_element_type=jnp.float32)
    o_ref[...] = (h + bf3_ref[...]).astype(o_ref.dtype)


# ----------------------------- Pallas wrapper -------------------------------

def _lenet_pallas(x_t, kp, tb):
    """x_t: (28, B_pad, 28) bf16; returns (B_pad, 128) f32 logits (lanes 10+ zero)."""
    b_pad = x_t.shape[1]
    consts = [kp["w1b"], kp["b1"], kp["w2b"], kp["b2"],
              kp["wf1"], kp["bf1"], kp["wf2"], kp["bf2"], kp["wf3"], kp["bf3"]]

    def full_block(a):
        zero = (0,) * a.ndim
        return pl.BlockSpec(a.shape, lambda i, _z=zero: _z)

    in_specs = [pl.BlockSpec((28, tb, 28), lambda i: (0, i, 0))]
    in_specs += [full_block(c) for c in consts]
    out_spec = pl.BlockSpec((tb, CPAD), lambda i: (i, 0))

    return pl.pallas_call(
        _lenet_kernel,
        out_shape=jax.ShapeDtypeStruct((b_pad, CPAD), jnp.float32),
        grid_spec=pltpu.PrefetchScalarGridSpec(
            num_scalar_prefetch=0,
            grid=(b_pad // tb,),
            in_specs=in_specs,
            out_specs=out_spec),
        compiler_params=pltpu.CompilerParams(
            dimension_semantics=("parallel",),
            vmem_limit_bytes=VMEM_LIMIT),
    )(x_t, *consts)


# ----------------------------- Params ---------------------------------------

def init_params(key):
    """PyTorch-layout LeNet params (Linear weights stored transposed: (in, out))."""
    ks = jax.random.split(key, 10)
    return {
        "w1": jax.random.normal(ks[0], (6, 1, 5, 5), jnp.float32) * 0.1,
        "b1": jax.random.normal(ks[1], (6,), jnp.float32) * 0.01,
        "w2": jax.random.normal(ks[2], (16, 6, 5, 5), jnp.float32) * 0.1,
        "b2": jax.random.normal(ks[3], (16,), jnp.float32) * 0.01,
        "wf1": jax.random.normal(ks[4], (256, 120), jnp.float32) * 0.05,
        "bf1": jax.random.normal(ks[5], (120,), jnp.float32) * 0.01,
        "wf2": jax.random.normal(ks[6], (120, 84), jnp.float32) * 0.05,
        "bf2": jax.random.normal(ks[7], (84,), jnp.float32) * 0.01,
        "wf3": jax.random.normal(ks[8], (84, 10), jnp.float32) * 0.05,
        "bf3": jax.random.normal(ks[9], (10,), jnp.float32) * 0.01,
    }


def prepare_params(p):
    """One-time reorder into banded / pool-folded / padded bf16 kernel weights."""
    f32, bf16 = jnp.float32, jnp.bfloat16

    # conv1 as 5 banded matrices: W1band[dy][ix, ox*6+co] = w1[co,0,dy,ix-ox].
    w1 = jnp.transpose(p["w1"][:, 0].astype(f32), (1, 2, 0))       # (dy, dx, co)
    ix = np.arange(28)[:, None]
    ox = np.arange(24)[None, :]
    dx = ix - ox
    band1 = jnp.where(((dx >= 0) & (dx <= 4))[None, :, :, None],
                      w1[:, np.clip(dx, 0, 4), :], 0.0)            # (5, 28, 24, 6)
    w1b = band1.reshape(5, 28, 24 * 6).astype(bf16)                # (5, 28, 144)

    # conv2 with pool1's W-average folded in:
    #   W2fold[dy][w*6+ci, ox*16+co] = 0.5 * w2[co,ci,dy, w//2 - ox].
    w2 = jnp.transpose(p["w2"].astype(f32), (2, 3, 1, 0))          # (dy, dx, ci, co)
    wi = np.arange(24)[:, None]
    ox2 = np.arange(8)[None, :]
    dx2 = wi // 2 - ox2
    band2 = jnp.where(((dx2 >= 0) & (dx2 <= 4))[None, :, :, None, None],
                      w2[:, np.clip(dx2, 0, 4), :, :], 0.0)        # (5, 24, 8, 6, 16)
    band2 = jnp.transpose(band2, (0, 1, 3, 2, 4))                  # (dy, w, ci, ox, co)
    w2b = (0.5 * band2.reshape(5, 24 * 6, 8 * 16)).astype(bf16)    # (5, 144, 128)

    # FC1 with pool2's W-average and PyTorch's NCHW flatten folded in:
    #   Wf1fold[h][ox*16+co, n] = 0.5 * wf1[co*16 + h*4 + ox//2, n].
    wf1 = p["wf1"].astype(f32).reshape(16, 4, 4, 120)              # (co, h, pw, n)
    wf1 = wf1[:, :, np.arange(8) // 2, :]                          # (co, h, ox, n)
    wf1 = jnp.transpose(wf1, (1, 2, 0, 3)).reshape(4, 128, 120)    # (h, ox*16+co, n)
    wf1 = jnp.pad(0.5 * wf1, ((0, 0), (0, 0), (0, CPAD - 120))).astype(bf16)

    # Biases tiled / padded to the lane-packed layouts.  Padded entries MUST be
    # zero: tanh(0)=0 keeps padded lanes exactly zero through the FC stack.
    b1row = jnp.tile(p["b1"].astype(f32), 24).reshape(1, 144)
    b2row = jnp.tile(p["b2"].astype(f32), 8).reshape(1, 128)
    bf1 = jnp.pad(p["bf1"].astype(f32), (0, CPAD - 120)).reshape(1, CPAD)
    bf2 = jnp.pad(p["bf2"].astype(f32), (0, CPAD - 84)).reshape(1, CPAD)
    bf3 = jnp.pad(p["bf3"].astype(f32), (0, CPAD - 10)).reshape(1, CPAD)

    wf2 = jnp.pad(p["wf2"].astype(f32), ((0, CPAD - 120), (0, CPAD - 84))).astype(bf16)
    wf3 = jnp.pad(p["wf3"].astype(f32), ((0, CPAD - 84), (0, CPAD - 10))).astype(bf16)

    kp = {"w1b": w1b, "b1": b1row, "w2b": w2b, "b2": b2row,
          "wf1": wf1, "bf1": bf1, "wf2": wf2, "bf2": bf2, "wf3": wf3, "bf3": bf3}
    assert kp["w1b"].shape == (5, 28, 144)
    assert kp["w2b"].shape == (5, 144, 128)
    assert kp["wf1"].shape == (4, 128, 128)
    return kp


# ----------------------------- LeNet forward --------------------------------

@jax.jit
def lenet_forward(x_nchw, kp):
    B = x_nchw.shape[0]
    assert x_nchw.shape[1:] == (1, 28, 28), "Linear(256,120) implies 1x28x28 inputs"
    # (B,1,28,28) -> (28, B, 28): row r of the kernel's input block is (TB, 28).
    x_t = jnp.transpose(x_nchw.reshape(B, 28, 28), (1, 0, 2)).astype(jnp.bfloat16)
    # Batch tile: single step for tiny batches; >= 2 "parallel" steps once B > 8
    # so v7x can shard the grid across its 2 TensorCores.
    tb = B if B <= 8 else (8 if B <= 64 else 32)
    b_pad = -(-B // tb) * tb
    if b_pad != B:
        x_t = jnp.pad(x_t, ((0, 0), (0, b_pad - B), (0, 0)))
    logits = _lenet_pallas(x_t, kp, tb)           # (B_pad, 128) f32
    return logits[:B, :10]


# ----------------------------- Plain-XLA reference ---------------------------

def lenet_reference(x_nchw, p):
    """Reference matching the PyTorch module; weights/activations rounded to
    bf16 at the matmul inputs to mirror the kernel's MXU precision."""
    f32 = jnp.float32
    bf = lambda v: v.astype(jnp.bfloat16).astype(f32)
    dn = ("NCHW", "OIHW", "NCHW")

    def avgpool2(t):
        s = jax.lax.reduce_window(t, 0.0, jax.lax.add,
                                  (1, 1, 2, 2), (1, 1, 2, 2), "VALID")
        return s * 0.25

    y = jax.lax.conv_general_dilated(bf(x_nchw.astype(f32)), bf(p["w1"]),
                                     (1, 1), "VALID", dimension_numbers=dn)
    y = avgpool2(jnp.tanh(y + p["b1"][None, :, None, None]))
    y = jax.lax.conv_general_dilated(bf(y), bf(p["w2"]),
                                     (1, 1), "VALID", dimension_numbers=dn)
    y = avgpool2(jnp.tanh(y + p["b2"][None, :, None, None]))
    y = y.reshape(y.shape[0], -1)                               # NCHW flatten -> 256
    y = jnp.tanh(bf(y) @ bf(p["wf1"]) + p["bf1"])
    y = jnp.tanh(bf(y) @ bf(p["wf2"]) + p["bf2"])
    return bf(y) @ bf(p["wf3"]) + p["bf3"]


if __name__ == "__main__":
    key = jax.random.PRNGKey(0)
    k_x, k_p = jax.random.split(key)
    x = jax.random.normal(k_x, (2, 1, 28, 28), jnp.float32)
    params = init_params(k_p)
    kernel_params = prepare_params(params)        # one-time weight reorder/fold/cast

    logits = lenet_forward(x, kernel_params)
    jax.block_until_ready(logits)
    assert logits.shape == (2, 10) and logits.dtype == jnp.float32

    ref = lenet_reference(x, params)
    err = float(jnp.max(jnp.abs(logits - ref)))
    assert err < 3e-2, f"kernel/reference mismatch: max abs err = {err}"
    print("KERNEL_OK")
</pallas_src>

<mosaic_0001>
module attributes {stable_mosaic.version = 11 : i64} {
  func.func @_lenet_kernel(%arg0: i32, %arg1: memref<28x2x28xbf16, #tpu.memory_space<vmem>>, %arg2: memref<5x28x144xbf16, #tpu.memory_space<vmem>>, %arg3: memref<1x144xf32, #tpu.memory_space<vmem>>, %arg4: memref<5x144x128xbf16, #tpu.memory_space<vmem>>, %arg5: memref<1x128xf32, #tpu.memory_space<vmem>>, %arg6: memref<4x128x128xbf16, #tpu.memory_space<vmem>>, %arg7: memref<1x128xf32, #tpu.memory_space<vmem>>, %arg8: memref<128x128xbf16, #tpu.memory_space<vmem>>, %arg9: memref<1x128xf32, #tpu.memory_space<vmem>>, %arg10: memref<128x128xbf16, #tpu.memory_space<vmem>>, %arg11: memref<1x128xf32, #tpu.memory_space<vmem>>, %arg12: memref<2x128xf32, #tpu.memory_space<vmem>>) attributes {dimension_semantics = [#tpu.dimension_semantics<parallel>], iteration_bounds = array<i64: 1>, scalar_prefetch = 0 : i64, scratch_operands = 0 : i64, tpu.core_type = #tpu.core_type<tc>, window_params = [{transform_indices = @transform_0, window_bounds = array<i64: 28, 2, 28>}, {pipeline_mode = #tpu.pipeline_mode<synchronous>, transform_indices = @transform_1, window_bounds = array<i64: 5, 28, 144>}, {pipeline_mode = #tpu.pipeline_mode<synchronous>, transform_indices = @transform_2, window_bounds = array<i64: 1, 144>}, {pipeline_mode = #tpu.pipeline_mode<synchronous>, transform_indices = @transform_3, window_bounds = array<i64: 5, 144, 128>}, {pipeline_mode = #tpu.pipeline_mode<synchronous>, transform_indices = @transform_4, window_bounds = array<i64: 1, 128>}, {pipeline_mode = #tpu.pipeline_mode<synchronous>, transform_indices = @transform_5, window_bounds = array<i64: 4, 128, 128>}, {pipeline_mode = #tpu.pipeline_mode<synchronous>, transform_indices = @transform_6, window_bounds = array<i64: 1, 128>}, {pipeline_mode = #tpu.pipeline_mode<synchronous>, transform_indices = @transform_7, window_bounds = array<i64: 128, 128>}, {pipeline_mode = #tpu.pipeline_mode<synchronous>, transform_indices = @transform_8, window_bounds = array<i64: 1, 128>}, {pipeline_mode = #tpu.pipeline_mode<synchronous>, transform_indices = @transform_9, window_bounds = array<i64: 128, 128>}, {pipeline_mode = #tpu.pipeline_mode<synchronous>, transform_indices = @transform_10, window_bounds = array<i64: 1, 128>}, {transform_indices = @transform_11, window_bounds = array<i64: 2, 128>}]} {
    %c0 = arith.constant 0 : index
    %c0_0 = arith.constant 0 : index
    %c0_1 = arith.constant 0 : index
    %0 = vector.load %arg2[%c0, %c0_0, %c0_1] : memref<5x28x144xbf16, #tpu.memory_space<vmem>>, vector<1x28x144xbf16>
    %1 = vector.shape_cast %0 : vector<1x28x144xbf16> to vector<28x144xbf16>
    %c1 = arith.constant 1 : index
    %c0_2 = arith.constant 0 : index
    %c0_3 = arith.constant 0 : index
    %2 = vector.load %arg2[%c1, %c0_2, %c0_3] : memref<5x28x144xbf16, #tpu.memory_space<vmem>>, vector<1x28x144xbf16>
    %3 = vector.shape_cast %2 : vector<1x28x144xbf16> to vector<28x144xbf16>
    %c2 = arith.constant 2 : index
    %c0_4 = arith.constant 0 : index
    %c0_5 = arith.constant 0 : index
    %4 = vector.load %arg2[%c2, %c0_4, %c0_5] : memref<5x28x144xbf16, #tpu.memory_space<vmem>>, vector<1x28x144xbf16>
    %5 = vector.shape_cast %4 : vector<1x28x144xbf16> to vector<28x144xbf16>
    %c3 = arith.constant 3 : index
    %c0_6 = arith.constant 0 : index
    %c0_7 = arith.constant 0 : index
    %6 = vector.load %arg2[%c3, %c0_6, %c0_7] : memref<5x28x144xbf16, #tpu.memory_space<vmem>>, vector<1x28x144xbf16>
    %7 = vector.shape_cast %6 : vector<1x28x144xbf16> to vector<28x144xbf16>
    %c4 = arith.constant 4 : index
    %c0_8 = arith.constant 0 : index
    %c0_9 = arith.constant 0 : index
    %8 = vector.load %arg2[%c4, %c0_8, %c0_9] : memref<5x28x144xbf16, #tpu.memory_space<vmem>>, vector<1x28x144xbf16>
    %9 = vector.shape_cast %8 : vector<1x28x144xbf16> to vector<28x144xbf16>
    %c0_10 = arith.constant 0 : index
    %c0_11 = arith.constant 0 : index
    %c0_12 = arith.constant 0 : index
    %10 = vector.load %arg4[%c0_10, %c0_11, %c0_12] : memref<5x144x128xbf16, #tpu.memory_space<vmem>>, vector<1x144x128xbf16>
    %11 = vector.shape_cast %10 : vector<1x144x128xbf16> to vector<144x128xbf16>
    %c1_13 = arith.constant 1 : index
    %c0_14 = arith.constant 0 : index
    %c0_15 = arith.constant 0 : index
    %12 = vector.load %arg4[%c1_13, %c0_14, %c0_15] : memref<5x144x128xbf16, #tpu.memory_space<vmem>>, vector<1x144x128xbf16>
    %13 = vector.shape_cast %12 : vector<1x144x128xbf16> to vector<144x128xbf16>
    %c2_16 = arith.constant 2 : index
    %c0_17 = arith.constant 0 : index
    %c0_18 = arith.constant 0 : index
    %14 = vector.load %arg4[%c2_16, %c0_17, %c0_18] : memref<5x144x128xbf16, #tpu.memory_space<vmem>>, vector<1x144x128xbf16>
    %15 = vector.shape_cast %14 : vector<1x144x128xbf16> to vector<144x128xbf16>
    %c3_19 = arith.constant 3 : index
    %c0_20 = arith.constant 0 : index
    %c0_21 = arith.constant 0 : index
    %16 = vector.load %arg4[%c3_19, %c0_20, %c0_21] : memref<5x144x128xbf16, #tpu.memory_space<vmem>>, vector<1x144x128xbf16>
    %17 = vector.shape_cast %16 : vector<1x144x128xbf16> to vector<144x128xbf16>
    %c4_22 = arith.constant 4 : index
    %c0_23 = arith.constant 0 : index
    %c0_24 = arith.constant 0 : index
    %18 = vector.load %arg4[%c4_22, %c0_23, %c0_24] : memref<5x144x128xbf16, #tpu.memory_space<vmem>>, vector<1x144x128xbf16>
    %19 = vector.shape_cast %18 : vector<1x144x128xbf16> to vector<144x128xbf16>
    %c0_25 = arith.constant 0 : index
    %c0_26 = arith.constant 0 : index
    %20 = vector.load %arg3[%c0_25, %c0_26] : memref<1x144xf32, #tpu.memory_space<vmem>>, vector<1x144xf32>
    %c0_27 = arith.constant 0 : index
    %c0_28 = arith.constant 0 : index
    %21 = vector.load %arg5[%c0_27, %c0_28] : memref<1x128xf32, #tpu.memory_space<vmem>>, vector<1x128xf32>
    %c0_29 = arith.constant 0 : index
    %c0_30 = arith.constant 0 : index
    %c0_31 = arith.constant 0 : index
    %22 = vector.load %arg1[%c0_29, %c0_30, %c0_31] : memref<28x2x28xbf16, #tpu.memory_space<vmem>>, vector<1x2x28xbf16>
    %23 = vector.shape_cast %22 : vector<1x2x28xbf16> to vector<2x28xbf16>
    %c1_32 = arith.constant 1 : index
    %c0_33 = arith.constant 0 : index
    %c0_34 = arith.constant 0 : index
    %24 = vector.load %arg1[%c1_32, %c0_33, %c0_34] : memref<28x2x28xbf16, #tpu.memory_space<vmem>>, vector<1x2x28xbf16>
    %25 = vector.shape_cast %24 : vector<1x2x28xbf16> to vector<2x28xbf16>
    %c2_35 = arith.constant 2 : index
    %c0_36 = arith.constant 0 : index
    %c0_37 = arith.constant 0 : index
    %26 = vector.load %arg1[%c2_35, %c0_36, %c0_37] : memref<28x2x28xbf16, #tpu.memory_space<vmem>>, vector<1x2x28xbf16>
    %27 = vector.shape_cast %26 : vector<1x2x28xbf16> to vector<2x28xbf16>
    %c3_38 = arith.constant 3 : index
    %c0_39 = arith.constant 0 : index
    %c0_40 = arith.constant 0 : index
    %28 = vector.load %arg1[%c3_38, %c0_39, %c0_40] : memref<28x2x28xbf16, #tpu.memory_space<vmem>>, vector<1x2x28xbf16>
    %29 = vector.shape_cast %28 : vector<1x2x28xbf16> to vector<2x28xbf16>
    %c4_41 = arith.constant 4 : index
    %c0_42 = arith.constant 0 : index
    %c0_43 = arith.constant 0 : index
    %30 = vector.load %arg1[%c4_41, %c0_42, %c0_43] : memref<28x2x28xbf16, #tpu.memory_space<vmem>>, vector<1x2x28xbf16>
    %31 = vector.shape_cast %30 : vector<1x2x28xbf16> to vector<2x28xbf16>
    %c5 = arith.constant 5 : index
    %c0_44 = arith.constant 0 : index
    %c0_45 = arith.constant 0 : index
    %32 = vector.load %arg1[%c5, %c0_44, %c0_45] : memref<28x2x28xbf16, #tpu.memory_space<vmem>>, vector<1x2x28xbf16>
    %33 = vector.shape_cast %32 : vector<1x2x28xbf16> to vector<2x28xbf16>
    %c6 = arith.constant 6 : index
    %c0_46 = arith.constant 0 : index
    %c0_47 = arith.constant 0 : index
    %34 = vector.load %arg1[%c6, %c0_46, %c0_47] : memref<28x2x28xbf16, #tpu.memory_space<vmem>>, vector<1x2x28xbf16>
    %35 = vector.shape_cast %34 : vector<1x2x28xbf16> to vector<2x28xbf16>
    %c7 = arith.constant 7 : index
    %c0_48 = arith.constant 0 : index
    %c0_49 = arith.constant 0 : index
    %36 = vector.load %arg1[%c7, %c0_48, %c0_49] : memref<28x2x28xbf16, #tpu.memory_space<vmem>>, vector<1x2x28xbf16>
    %37 = vector.shape_cast %36 : vector<1x2x28xbf16> to vector<2x28xbf16>
    %c8 = arith.constant 8 : index
    %c0_50 = arith.constant 0 : index
    %c0_51 = arith.constant 0 : index
    %38 = vector.load %arg1[%c8, %c0_50, %c0_51] : memref<28x2x28xbf16, #tpu.memory_space<vmem>>, vector<1x2x28xbf16>
    %39 = vector.shape_cast %38 : vector<1x2x28xbf16> to vector<2x28xbf16>
    %c9 = arith.constant 9 : index
    %c0_52 = arith.constant 0 : index
    %c0_53 = arith.constant 0 : index
    %40 = vector.load %arg1[%c9, %c0_52, %c0_53] : memref<28x2x28xbf16, #tpu.memory_space<vmem>>, vector<1x2x28xbf16>
    %41 = vector.shape_cast %40 : vector<1x2x28xbf16> to vector<2x28xbf16>
    %c10 = arith.constant 10 : index
    %c0_54 = arith.constant 0 : index
    %c0_55 = arith.constant 0 : index
    %42 = vector.load %arg1[%c10, %c0_54, %c0_55] : memref<28x2x28xbf16, #tpu.memory_space<vmem>>, vector<1x2x28xbf16>
    %43 = vector.shape_cast %42 : vector<1x2x28xbf16> to vector<2x28xbf16>
    %c11 = arith.constant 11 : index
    %c0_56 = arith.constant 0 : index
    %c0_57 = arith.constant 0 : index
    %44 = vector.load %arg1[%c11, %c0_56, %c0_57] : memref<28x2x28xbf16, #tpu.memory_space<vmem>>, vector<1x2x28xbf16>
    %45 = vector.shape_cast %44 : vector<1x2x28xbf16> to vector<2x28xbf16>
    %c12 = arith.constant 12 : index
    %c0_58 = arith.constant 0 : index
    %c0_59 = arith.constant 0 : index
    %46 = vector.load %arg1[%c12, %c0_58, %c0_59] : memref<28x2x28xbf16, #tpu.memory_space<vmem>>, vector<1x2x28xbf16>
    %47 = vector.shape_cast %46 : vector<1x2x28xbf16> to vector<2x28xbf16>
    %c13 = arith.constant 13 : index
    %c0_60 = arith.constant 0 : index
    %c0_61 = arith.constant 0 : index
    %48 = vector.load %arg1[%c13, %c0_60, %c0_61] : memref<28x2x28xbf16, #tpu.memory_space<vmem>>, vector<1x2x28xbf16>
    %49 = vector.shape_cast %48 : vector<1x2x28xbf16> to vector<2x28xbf16>
    %c14 = arith.constant 14 : index
    %c0_62 = arith.constant 0 : index
    %c0_63 = arith.constant 0 : index
    %50 = vector.load %arg1[%c14, %c0_62, %c0_63] : memref<28x2x28xbf16, #tpu.memory_space<vmem>>, vector<1x2x28xbf16>
    %51 = vector.shape_cast %50 : vector<1x2x28xbf16> to vector<2x28xbf16>
    %c15 = arith.constant 15 : index
    %c0_64 = arith.constant 0 : index
    %c0_65 = arith.constant 0 : index
    %52 = vector.load %arg1[%c15, %c0_64, %c0_65] : memref<28x2x28xbf16, #tpu.memory_space<vmem>>, vector<1x2x28xbf16>
    %53 = vector.shape_cast %52 : vector<1x2x28xbf16> to vector<2x28xbf16>
    %c16 = arith.constant 16 : index
    %c0_66 = arith.constant 0 : index
    %c0_67 = arith.constant 0 : index
    %54 = vector.load %arg1[%c16, %c0_66, %c0_67] : memref<28x2x28xbf16, #tpu.memory_space<vmem>>, vector<1x2x28xbf16>
    %55 = vector.shape_cast %54 : vector<1x2x28xbf16> to vector<2x28xbf16>
    %c17 = arith.constant 17 : index
    %c0_68 = arith.constant 0 : index
    %c0_69 = arith.constant 0 : index
    %56 = vector.load %arg1[%c17, %c0_68, %c0_69] : memref<28x2x28xbf16, #tpu.memory_space<vmem>>, vector<1x2x28xbf16>
    %57 = vector.shape_cast %56 : vector<1x2x28xbf16> to vector<2x28xbf16>
    %c18 = arith.constant 18 : index
    %c0_70 = arith.constant 0 : index
    %c0_71 = arith.constant 0 : index
    %58 = vector.load %arg1[%c18, %c0_70, %c0_71] : memref<28x2x28xbf16, #tpu.memory_space<vmem>>, vector<1x2x28xbf16>
    %59 = vector.shape_cast %58 : vector<1x2x28xbf16> to vector<2x28xbf16>
    %c19 = arith.constant 19 : index
    %c0_72 = arith.constant 0 : index
    %c0_73 = arith.constant 0 : index
    %60 = vector.load %arg1[%c19, %c0_72, %c0_73] : memref<28x2x28xbf16, #tpu.memory_space<vmem>>, vector<1x2x28xbf16>
    %61 = vector.shape_cast %60 : vector<1x2x28xbf16> to vector<2x28xbf16>
    %c20 = arith.constant 20 : index
    %c0_74 = arith.constant 0 : index
    %c0_75 = arith.constant 0 : index
    %62 = vector.load %arg1[%c20, %c0_74, %c0_75] : memref<28x2x28xbf16, #tpu.memory_space<vmem>>, vector<1x2x28xbf16>
    %63 = vector.shape_cast %62 : vector<1x2x28xbf16> to vector<2x28xbf16>
    %c21 = arith.constant 21 : index
    %c0_76 = arith.constant 0 : index
    %c0_77 = arith.constant 0 : index
    %64 = vector.load %arg1[%c21, %c0_76, %c0_77] : memref<28x2x28xbf16, #tpu.memory_space<vmem>>, vector<1x2x28xbf16>
    %65 = vector.shape_cast %64 : vector<1x2x28xbf16> to vector<2x28xbf16>
    %c22 = arith.constant 22 : index
    %c0_78 = arith.constant 0 : index
    %c0_79 = arith.constant 0 : index
    %66 = vector.load %arg1[%c22, %c0_78, %c0_79] : memref<28x2x28xbf16, #tpu.memory_space<vmem>>, vector<1x2x28xbf16>
    %67 = vector.shape_cast %66 : vector<1x2x28xbf16> to vector<2x28xbf16>
    %c23 = arith.constant 23 : index
    %c0_80 = arith.constant 0 : index
    %c0_81 = arith.constant 0 : index
    %68 = vector.load %arg1[%c23, %c0_80, %c0_81] : memref<28x2x28xbf16, #tpu.memory_space<vmem>>, vector<1x2x28xbf16>
    %69 = vector.shape_cast %68 : vector<1x2x28xbf16> to vector<2x28xbf16>
    %c24 = arith.constant 24 : index
    %c0_82 = arith.constant 0 : index
    %c0_83 = arith.constant 0 : index
    %70 = vector.load %arg1[%c24, %c0_82, %c0_83] : memref<28x2x28xbf16, #tpu.memory_space<vmem>>, vector<1x2x28xbf16>
    %71 = vector.shape_cast %70 : vector<1x2x28xbf16> to vector<2x28xbf16>
    %c25 = arith.constant 25 : index
    %c0_84 = arith.constant 0 : index
    %c0_85 = arith.constant 0 : index
    %72 = vector.load %arg1[%c25, %c0_84, %c0_85] : memref<28x2x28xbf16, #tpu.memory_space<vmem>>, vector<1x2x28xbf16>
    %73 = vector.shape_cast %72 : vector<1x2x28xbf16> to vector<2x28xbf16>
    %c26 = arith.constant 26 : index
    %c0_86 = arith.constant 0 : index
    %c0_87 = arith.constant 0 : index
    %74 = vector.load %arg1[%c26, %c0_86, %c0_87] : memref<28x2x28xbf16, #tpu.memory_space<vmem>>, vector<1x2x28xbf16>
    %75 = vector.shape_cast %74 : vector<1x2x28xbf16> to vector<2x28xbf16>
    %c27 = arith.constant 27 : index
    %c0_88 = arith.constant 0 : index
    %c0_89 = arith.constant 0 : index
    %76 = vector.load %arg1[%c27, %c0_88, %c0_89] : memref<28x2x28xbf16, #tpu.memory_space<vmem>>, vector<1x2x28xbf16>
    %77 = vector.shape_cast %76 : vector<1x2x28xbf16> to vector<2x28xbf16>
    %cst = arith.constant dense<0.000000e+00> : vector<2x144xf32>
    %78 = tpu.matmul %23, %1, %cst {dimension_numbers = #tpu.dot_dimension_numbers<[1], [0], [0], [1], [0, 0, 1, 1], [], []>} : vector<2x28xbf16>, vector<28x144xbf16>, vector<2x144xf32> -> vector<2x144xf32>
    %cst_90 = arith.constant dense<0.000000e+00> : vector<2x144xf32>
    %79 = tpu.matmul %25, %3, %cst_90 {dimension_numbers = #tpu.dot_dimension_numbers<[1], [0], [0], [1], [0, 0, 1, 1], [], []>} : vector<2x28xbf16>, vector<28x144xbf16>, vector<2x144xf32> -> vector<2x144xf32>
    %80 = arith.addf %78, %79 : vector<2x144xf32>
    %cst_91 = arith.constant dense<0.000000e+00> : vector<2x144xf32>
    %81 = tpu.matmul %27, %5, %cst_91 {dimension_numbers = #tpu.dot_dimension_numbers<[1], [0], [0], [1], [0, 0, 1, 1], [], []>} : vector<2x28xbf16>, vector<28x144xbf16>, vector<2x144xf32> -> vector<2x144xf32>
    %82 = arith.addf %80, %81 : vector<2x144xf32>
    %cst_92 = arith.constant dense<0.000000e+00> : vector<2x144xf32>
    %83 = tpu.matmul %29, %7, %cst_92 {dimension_numbers = #tpu.dot_dimension_numbers<[1], [0], [0], [1], [0, 0, 1, 1], [], []>} : vector<2x28xbf16>, vector<28x144xbf16>, vector<2x144xf32> -> vector<2x144xf32>
    %84 = arith.addf %82, %83 : vector<2x144xf32>
    %cst_93 = arith.constant dense<0.000000e+00> : vector<2x144xf32>
    %85 = tpu.matmul %31, %9, %cst_93 {dimension_numbers = #tpu.dot_dimension_numbers<[1], [0], [0], [1], [0, 0, 1, 1], [], []>} : vector<2x28xbf16>, vector<28x144xbf16>, vector<2x144xf32> -> vector<2x144xf32>
    %86 = arith.addf %84, %85 : vector<2x144xf32>
    %87 = vector.broadcast %20 : vector<1x144xf32> to vector<2x144xf32>
    %88 = arith.addf %86, %87 : vector<2x144xf32>
    %89 = math.tanh %88 : vector<2x144xf32>
    %cst_94 = arith.constant dense<0.000000e+00> : vector<2x144xf32>
    %90 = tpu.matmul %25, %1, %cst_94 {dimension_numbers = #tpu.dot_dimension_numbers<[1], [0], [0], [1], [0, 0, 1, 1], [], []>} : vector<2x28xbf16>, vector<28x144xbf16>, vector<2x144xf32> -> vector<2x144xf32>
    %cst_95 = arith.constant dense<0.000000e+00> : vector<2x144xf32>
    %91 = tpu.matmul %27, %3, %cst_95 {dimension_numbers = #tpu.dot_dimension_numbers<[1], [0], [0], [1], [0, 0, 1, 1], [], []>} : vector<2x28xbf16>, vector<28x144xbf16>, vector<2x144xf32> -> vector<2x144xf32>
    %92 = arith.addf %90, %91 : vector<2x144xf32>
    %cst_96 = arith.constant dense<0.000000e+00> : vector<2x144xf32>
    %93 = tpu.matmul %29, %5, %cst_96 {dimension_numbers = #tpu.dot_dimension_numbers<[1], [0], [0], [1], [0, 0, 1, 1], [], []>} : vector<2x28xbf16>, vector<28x144xbf16>, vector<2x144xf32> -> vector<2x144xf32>
    %94 = arith.addf %92, %93 : vector<2x144xf32>
    %cst_97 = arith.constant dense<0.000000e+00> : vector<2x144xf32>
    %95 = tpu.matmul %31, %7, %cst_97 {dimension_numbers = #tpu.dot_dimension_numbers<[1], [0], [0], [1], [0, 0, 1, 1], [], []>} : vector<2x28xbf16>, vector<28x144xbf16>, vector<2x144xf32> -> vector<2x144xf32>
    %96 = arith.addf %94, %95 : vector<2x144xf32>
    %cst_98 = arith.constant dense<0.000000e+00> : vector<2x144xf32>
    %97 = tpu.matmul %33, %9, %cst_98 {dimension_numbers = #tpu.dot_dimension_numbers<[1], [0], [0], [1], [0, 0, 1, 1], [], []>} : vector<2x28xbf16>, vector<28x144xbf16>, vector<2x144xf32> -> vector<2x144xf32>
    %98 = arith.addf %96, %97 : vector<2x144xf32>
    %99 = vector.broadcast %20 : vector<1x144xf32> to vector<2x144xf32>
    %100 = arith.addf %98, %99 : vector<2x144xf32>
    %101 = math.tanh %100 : vector<2x144xf32>
    %102 = arith.addf %89, %101 : vector<2x144xf32>
    %cst_99 = arith.constant 5.000000e-01 : f32
    %103 = vector.broadcast %cst_99 : f32 to vector<2x144xf32>
    %104 = arith.mulf %103, %102 : vector<2x144xf32>
    %105 = arith.truncf %104 : vector<2x144xf32> to vector<2x144xbf16>
    %cst_100 = arith.constant dense<0.000000e+00> : vector<2x144xf32>
    %106 = tpu.matmul %27, %1, %cst_100 {dimension_numbers = #tpu.dot_dimension_numbers<[1], [0], [0], [1], [0, 0, 1, 1], [], []>} : vector<2x28xbf16>, vector<28x144xbf16>, vector<2x144xf32> -> vector<2x144xf32>
    %cst_101 = arith.constant dense<0.000000e+00> : vector<2x144xf32>
    %107 = tpu.matmul %29, %3, %cst_101 {dimension_numbers = #tpu.dot_dimension_numbers<[1], [0], [0], [1], [0, 0, 1, 1], [], []>} : vector<2x28xbf16>, vector<28x144xbf16>, vector<2x144xf32> -> vector<2x144xf32>
    %108 = arith.addf %106, %107 : vector<2x144xf32>
    %cst_102 = arith.constant dense<0.000000e+00> : vector<2x144xf32>
    %109 = tpu.matmul %31, %5, %cst_102 {dimension_numbers = #tpu.dot_dimension_numbers<[1], [0], [0], [1], [0, 0, 1, 1], [], []>} : vector<2x28xbf16>, vector<28x144xbf16>, vector<2x144xf32> -> vector<2x144xf32>
    %110 = arith.addf %108, %109 : vector<2x144xf32>
    %cst_103 = arith.constant dense<0.000000e+00> : vector<2x144xf32>
    %111 = tpu.matmul %33, %7, %cst_103 {dimension_numbers = #tpu.dot_dimension_numbers<[1], [0], [0], [1], [0, 0, 1, 1], [], []>} : vector<2x28xbf16>, vector<28x144xbf16>, vector<2x144xf32> -> vector<2x144xf32>
    %112 = arith.addf %110, %111 : vector<2x144xf32>
    %cst_104 = arith.constant dense<0.000000e+00> : vector<2x144xf32>
    %113 = tpu.matmul %35, %9, %cst_104 {dimension_numbers = #tpu.dot_dimension_numbers<[1], [0], [0], [1], [0, 0, 1, 1], [], []>} : vector<2x28xbf16>, vector<28x144xbf16>, vector<2x144xf32> -> vector<2x144xf32>
    %114 = arith.addf %112, %113 : vector<2x144xf32>
    %115 = vector.broadcast %20 : vector<1x144xf32> to vector<2x144xf32>
    %116 = arith.addf %114, %115 : vector<2x144xf32>
    %117 = math.tanh %116 : vector<2x144xf32>
    %cst_105 = arith.constant dense<0.000000e+00> : vector<2x144xf32>
    %118 = tpu.matmul %29, %1, %cst_105 {dimension_numbers = #tpu.dot_dimension_numbers<[1], [0], [0], [1], [0, 0, 1, 1], [], []>} : vector<2x28xbf16>, vector<28x144xbf16>, vector<2x144xf32> -> vector<2x144xf32>
    %cst_106 = arith.constant dense<0.000000e+00> : vector<2x144xf32>
    %119 = tpu.matmul %31, %3, %cst_106 {dimension_numbers = #tpu.dot_dimension_numbers<[1], [0], [0], [1], [0, 0, 1, 1], [], []>} : vector<2x28xbf16>, vector<28x144xbf16>, vector<2x144xf32> -> vector<2x144xf32>
    %120 = arith.addf %118, %119 : vector<2x144xf32>
    %cst_107 = arith.constant dense<0.000000e+00> : vector<2x144xf32>
    %121 = tpu.matmul %33, %5, %cst_107 {dimension_numbers = #tpu.dot_dimension_numbers<[1], [0], [0], [1], [0, 0, 1, 1], [], []>} : vector<2x28xbf16>, vector<28x144xbf16>, vector<2x144xf32> -> vector<2x144xf32>
    %122 = arith.addf %120, %121 : vector<2x144xf32>
    %cst_108 = arith.constant dense<0.000000e+00> : vector<2x144xf32>
    %123 = tpu.matmul %35, %7, %cst_108 {dimension_numbers = #tpu.dot_dimension_numbers<[1], [0], [0], [1], [0, 0, 1, 1], [], []>} : vector<2x28xbf16>, vector<28x144xbf16>, vector<2x144xf32> -> vector<2x144xf32>
    %124 = arith.addf %122, %123 : vector<2x144xf32>
    %cst_109 = arith.constant dense<0.000000e+00> : vector<2x144xf32>
    %125 = tpu.matmul %37, %9, %cst_109 {dimension_numbers = #tpu.dot_dimension_numbers<[1], [0], [0], [1], [0, 0, 1, 1], [], []>} : vector<2x28xbf16>, vector<28x144xbf16>, vector<2x144xf32> -> vector<2x144xf32>
    %126 = arith.addf %124, %125 : vector<2x144xf32>
    %127 = vector.broadcast %20 : vector<1x144xf32> to vector<2x144xf32>
    %128 = arith.addf %126, %127 : vector<2x144xf32>
    %129 = math.tanh %128 : vector<2x144xf32>
    %130 = arith.addf %117, %129 : vector<2x144xf32>
    %cst_110 = arith.constant 5.000000e-01 : f32
    %131 = vector.broadcast %cst_110 : f32 to vector<2x144xf32>
    %132 = arith.mulf %131, %130 : vector<2x144xf32>
    %133 = arith.truncf %132 : vector<2x144xf32> to vector<2x144xbf16>
    %cst_111 = arith.constant dense<0.000000e+00> : vector<2x144xf32>
    %134 = tpu.matmul %31, %1, %cst_111 {dimension_numbers = #tpu.dot_dimension_numbers<[1], [0], [0], [1], [0, 0, 1, 1], [], []>} : vector<2x28xbf16>, vector<28x144xbf16>, vector<2x144xf32> -> vector<2x144xf32>
    %cst_112 = arith.constant dense<0.000000e+00> : vector<2x144xf32>
    %135 = tpu.matmul %33, %3, %cst_112 {dimension_numbers = #tpu.dot_dimension_numbers<[1], [0], [0], [1], [0, 0, 1, 1], [], []>} : vector<2x28xbf16>, vector<28x144xbf16>, vector<2x144xf32> -> vector<2x144xf32>
    %136 = arith.addf %134, %135 : vector<2x144xf32>
    %cst_113 = arith.constant dense<0.000000e+00> : vector<2x144xf32>
    %137 = tpu.matmul %35, %5, %cst_113 {dimension_numbers = #tpu.dot_dimension_numbers<[1], [0], [0], [1], [0, 0, 1, 1], [], []>} : vector<2x28xbf16>, vector<28x144xbf16>, vector<2x144xf32> -> vector<2x144xf32>
    %138 = arith.addf %136, %137 : vector<2x144xf32>
    %cst_114 = arith.constant dense<0.000000e+00> : vector<2x144xf32>
    %139 = tpu.matmul %37, %7, %cst_114 {dimension_numbers = #tpu.dot_dimension_numbers<[1], [0], [0], [1], [0, 0, 1, 1], [], []>} : vector<2x28xbf16>, vector<28x144xbf16>, vector<2x144xf32> -> vector<2x144xf32>
    %140 = arith.addf %138, %139 : vector<2x144xf32>
    %cst_115 = arith.constant dense<0.000000e+00> : vector<2x144xf32>
    %141 = tpu.matmul %39, %9, %cst_115 {dimension_numbers = #tpu.dot_dimension_numbers<[1], [0], [0], [1], [0, 0, 1, 1], [], []>} : vector<2x28xbf16>, vector<28x144xbf16>, vector<2x144xf32> -> vector<2x144xf32>
    %142 = arith.addf %140, %141 : vector<2x144xf32>
    %143 = vector.broadcast %20 : vector<1x144xf32> to vector<2x144xf32>
    %144 = arith.addf %142, %143 : vector<2x144xf32>
    %145 = math.tanh %144 : vector<2x144xf32>
    %cst_116 = arith.constant dense<0.000000e+00> : vector<2x144xf32>
    %146 = tpu.matmul %33, %1, %cst_116 {dimension_numbers = #tpu.dot_dimension_numbers<[1], [0], [0], [1], [0, 0, 1, 1], [], []>} : vector<2x28xbf16>, vector<28x144xbf16>, vector<2x144xf32> -> vector<2x144xf32>
    %cst_117 = arith.constant dense<0.000000e+00> : vector<2x144xf32>
    %147 = tpu.matmul %35, %3, %cst_117 {dimension_numbers = #tpu.dot_dimension_numbers<[1], [0], [0], [1], [0, 0, 1, 1], [], []>} : vector<2x28xbf16>, vector<28x144xbf16>, vector<2x144xf32> -> vector<2x144xf32>
    %148 = arith.addf %146, %147 : vector<2x144xf32>
    %cst_118 = arith.constant dense<0.000000e+00> : vector<2x144xf32>
    %149 = tpu.matmul %37, %5, %cst_118 {dimension_numbers = #tpu.dot_dimension_numbers<[1], [0], [0], [1], [0, 0, 1, 1], [], []>} : vector<2x28xbf16>, vector<28x144xbf16>, vector<2x144xf32> -> vector<2x144xf32>
    %150 = arith.addf %148, %149 : vector<2x144xf32>
    %cst_119 = arith.constant dense<0.000000e+00> : vector<2x144xf32>
    %151 = tpu.matmul %39, %7, %cst_119 {dimension_numbers = #tpu.dot_dimension_numbers<[1], [0], [0], [1], [0, 0, 1, 1], [], []>} : vector<2x28xbf16>, vector<28x144xbf16>, vector<2x144xf32> -> vector<2x144xf32>
    %152 = arith.addf %150, %151 : vector<2x144xf32>
    %cst_120 = arith.constant dense<0.000000e+00> : vector<2x144xf32>
    %153 = tpu.matmul %41, %9, %cst_120 {dimension_numbers = #tpu.dot_dimension_numbers<[1], [0], [0], [1], [0, 0, 1, 1], [], []>} : vector<2x28xbf16>, vector<28x144xbf16>, vector<2x144xf32> -> vector<2x144xf32>
    %154 = arith.addf %152, %153 : vector<2x144xf32>
    %155 = vector.broadcast %20 : vector<1x144xf32> to vector<2x144xf32>
    %156 = arith.addf %154, %155 : vector<2x144xf32>
    %157 = math.tanh %156 : vector<2x144xf32>
    %158 = arith.addf %145, %157 : vector<2x144xf32>
    %cst_121 = arith.constant 5.000000e-01 : f32
    %159 = vector.broadcast %cst_121 : f32 to vector<2x144xf32>
    %160 = arith.mulf %159, %158 : vector<2x144xf32>
    %161 = arith.truncf %160 : vector<2x144xf32> to vector<2x144xbf16>
    %cst_122 = arith.constant dense<0.000000e+00> : vector<2x144xf32>
    %162 = tpu.matmul %35, %1, %cst_122 {dimension_numbers = #tpu.dot_dimension_numbers<[1], [0], [0], [1], [0, 0, 1, 1], [], []>} : vector<2x28xbf16>, vector<28x144xbf16>, vector<2x144xf32> -> vector<2x144xf32>
    %cst_123 = arith.constant dense<0.000000e+00> : vector<2x144xf32>
    %163 = tpu.matmul %37, %3, %cst_123 {dimension_numbers = #tpu.dot_dimension_numbers<[1], [0], [0], [1], [0, 0, 1, 1], [], []>} : vector<2x28xbf16>, vector<28x144xbf16>, vector<2x144xf32> -> vector<2x144xf32>
    %164 = arith.addf %162, %163 : vector<2x144xf32>
    %cst_124 = arith.constant dense<0.000000e+00> : vector<2x144xf32>
    %165 = tpu.matmul %39, %5, %cst_124 {dimension_numbers = #tpu.dot_dimension_numbers<[1], [0], [0], [1], [0, 0, 1, 1], [], []>} : vector<2x28xbf16>, vector<28x144xbf16>, vector<2x144xf32> -> vector<2x144xf32>
    %166 = arith.addf %164, %165 : vector<2x144xf32>
    %cst_125 = arith.constant dense<0.000000e+00> : vector<2x144xf32>
    %167 = tpu.matmul %41, %7, %cst_125 {dimension_numbers = #tpu.dot_dimension_numbers<[1], [0], [0], [1], [0, 0, 1, 1], [], []>} : vector<2x28xbf16>, vector<28x144xbf16>, vector<2x144xf32> -> vector<2x144xf32>
    %168 = arith.addf %166, %167 : vector<2x144xf32>
    %cst_126 = arith.constant dense<0.000000e+00> : vector<2x144xf32>
    %169 = tpu.matmul %43, %9, %cst_126 {dimension_numbers = #tpu.dot_dimension_numbers<[1], [0], [0], [1], [0, 0, 1, 1], [], []>} : vector<2x28xbf16>, vector<28x144xbf16>, vector<2x144xf32> -> vector<2x144xf32>
    %170 = arith.addf %168, %169 : vector<2x144xf32>
    %171 = vector.broadcast %20 : vector<1x144xf32> to vector<2x144xf32>
    %172 = arith.addf %170, %171 : vector<2x144xf32>
    %173 = math.tanh %172 : vector<2x144xf32>
    %cst_127 = arith.constant dense<0.000000e+00> : vector<2x144xf32>
    %174 = tpu.matmul %37, %1, %cst_127 {dimension_numbers = #tpu.dot_dimension_numbers<[1], [0], [0], [1], [0, 0, 1, 1], [], []>} : vector<2x28xbf16>, vector<28x144xbf16>, vector<2x144xf32> -> vector<2x144xf32>
    %cst_128 = arith.constant dense<0.000000e+00> : vector<2x144xf32>
    %175 = tpu.matmul %39, %3, %cst_128 {dimension_numbers = #tpu.dot_dimension_numbers<[1], [0], [0], [1], [0, 0, 1, 1], [], []>} : vector<2x28xbf16>, vector<28x144xbf16>, vector<2x144xf32> -> vector<2x144xf32>
    %176 = arith.addf %174, %175 : vector<2x144xf32>
    %cst_129 = arith.constant dense<0.000000e+00> : vector<2x144xf32>
    %177 = tpu.matmul %41, %5, %cst_129 {dimension_numbers = #tpu.dot_dimension_numbers<[1], [0], [0], [1], [0, 0, 1, 1], [], []>} : vector<2x28xbf16>, vector<28x144xbf16>, vector<2x144xf32> -> vector<2x144xf32>
    %178 = arith.addf %176, %177 : vector<2x144xf32>
    %cst_130 = arith.constant dense<0.000000e+00> : vector<2x144xf32>
    %179 = tpu.matmul %43, %7, %cst_130 {dimension_numbers = #tpu.dot_dimension_numbers<[1], [0], [0], [1], [0, 0, 1, 1], [], []>} : vector<2x28xbf16>, vector<28x144xbf16>, vector<2x144xf32> -> vector<2x144xf32>
    %180 = arith.addf %178, %179 : vector<2x144xf32>
    %cst_131 = arith.constant dense<0.000000e+00> : vector<2x144xf32>
    %181 = tpu.matmul %45, %9, %cst_131 {dimension_numbers = #tpu.dot_dimension_numbers<[1], [0], [0], [1], [0, 0, 1, 1], [], []>} : vector<2x28xbf16>, vector<28x144xbf16>, vector<2x144xf32> -> vector<2x144xf32>
    %182 = arith.addf %180, %181 : vector<2x144xf32>
    %183 = vector.broadcast %20 : vector<1x144xf32> to vector<2x144xf32>
    %184 = arith.addf %182, %183 : vector<2x144xf32>
    %185 = math.tanh %184 : vector<2x144xf32>
    %186 = arith.addf %173, %185 : vector<2x144xf32>
    %cst_132 = arith.constant 5.000000e-01 : f32
    %187 = vector.broadcast %cst_132 : f32 to vector<2x144xf32>
    %188 = arith.mulf %187, %186 : vector<2x144xf32>
    %189 = arith.truncf %188 : vector<2x144xf32> to vector<2x144xbf16>
    %cst_133 = arith.constant dense<0.000000e+00> : vector<2x144xf32>
    %190 = tpu.matmul %39, %1, %cst_133 {dimension_numbers = #tpu.dot_dimension_numbers<[1], [0], [0], [1], [0, 0, 1, 1], [], []>} : vector<2x28xbf16>, vector<28x144xbf16>, vector<2x144xf32> -> vector<2x144xf32>
    %cst_134 = arith.constant dense<0.000000e+00> : vector<2x144xf32>
    %191 = tpu.matmul %41, %3, %cst_134 {dimension_numbers = #tpu.dot_dimension_numbers<[1], [0], [0], [1], [0, 0, 1, 1], [], []>} : vector<2x28xbf16>, vector<28x144xbf16>, vector<2x144xf32> -> vector<2x144xf32>
    %192 = arith.addf %190, %191 : vector<2x144xf32>
    %cst_135 = arith.constant dense<0.000000e+00> : vector<2x144xf32>
    %193 = tpu.matmul %43, %5, %cst_135 {dimension_numbers = #tpu.dot_dimension_numbers<[1], [0], [0], [1], [0, 0, 1, 1], [], []>} : vector<2x28xbf16>, vector<28x144xbf16>, vector<2x144xf32> -> vector<2x144xf32>
    %194 = arith.addf %192, %193 : vector<2x144xf32>
    %cst_136 = arith.constant dense<0.000000e+00> : vector<2x144xf32>
    %195 = tpu.matmul %45, %7, %cst_136 {dimension_numbers = #tpu.dot_dimension_numbers<[1], [0], [0], [1], [0, 0, 1, 1], [], []>} : vector<2x28xbf16>, vector<28x144xbf16>, vector<2x144xf32> -> vector<2x144xf32>
    %196 = arith.addf %194, %195 : vector<2x144xf32>
    %cst_137 = arith.constant dense<0.000000e+00> : vector<2x144xf32>
    %197 = tpu.matmul %47, %9, %cst_137 {dimension_numbers = #tpu.dot_dimension_numbers<[1], [0], [0], [1], [0, 0, 1, 1], [], []>} : vector<2x28xbf16>, vector<28x144xbf16>, vector<2x144xf32> -> vector<2x144xf32>
    %198 = arith.addf %196, %197 : vector<2x144xf32>
    %199 = vector.broadcast %20 : vector<1x144xf32> to vector<2x144xf32>
    %200 = arith.addf %198, %199 : vector<2x144xf32>
    %201 = math.tanh %200 : vector<2x144xf32>
    %cst_138 = arith.constant dense<0.000000e+00> : vector<2x144xf32>
    %202 = tpu.matmul %41, %1, %cst_138 {dimension_numbers = #tpu.dot_dimension_numbers<[1], [0], [0], [1], [0, 0, 1, 1], [], []>} : vector<2x28xbf16>, vector<28x144xbf16>, vector<2x144xf32> -> vector<2x144xf32>
    %cst_139 = arith.constant dense<0.000000e+00> : vector<2x144xf32>
    %203 = tpu.matmul %43, %3, %cst_139 {dimension_numbers = #tpu.dot_dimension_numbers<[1], [0], [0], [1], [0, 0, 1, 1], [], []>} : vector<2x28xbf16>, vector<28x144xbf16>, vector<2x144xf32> -> vector<2x144xf32>
    %204 = arith.addf %202, %203 : vector<2x144xf32>
    %cst_140 = arith.constant dense<0.000000e+00> : vector<2x144xf32>
    %205 = tpu.matmul %45, %5, %cst_140 {dimension_numbers = #tpu.dot_dimension_numbers<[1], [0], [0], [1], [0, 0, 1, 1], [], []>} : vector<2x28xbf16>, vector<28x144xbf16>, vector<2x144xf32> -> vector<2x144xf32>
    %206 = arith.addf %204, %205 : vector<2x144xf32>
    %cst_141 = arith.constant dense<0.000000e+00> : vector<2x144xf32>
    %207 = tpu.matmul %47, %7, %cst_141 {dimension_numbers = #tpu.dot_dimension_numbers<[1], [0], [0], [1], [0, 0, 1, 1], [], []>} : vector<2x28xbf16>, vector<28x144xbf16>, vector<2x144xf32> -> vector<2x144xf32>
    %208 = arith.addf %206, %207 : vector<2x144xf32>
    %cst_142 = arith.constant dense<0.000000e+00> : vector<2x144xf32>
    %209 = tpu.matmul %49, %9, %cst_142 {dimension_numbers = #tpu.dot_dimension_numbers<[1], [0], [0], [1], [0, 0, 1, 1], [], []>} : vector<2x28xbf16>, vector<28x144xbf16>, vector<2x144xf32> -> vector<2x144xf32>
    %210 = arith.addf %208, %209 : vector<2x144xf32>
    %211 = vector.broadcast %20 : vector<1x144xf32> to vector<2x144xf32>
    %212 = arith.addf %210, %211 : vector<2x144xf32>
    %213 = math.tanh %212 : vector<2x144xf32>
    %214 = arith.addf %201, %213 : vector<2x144xf32>
    %cst_143 = arith.constant 5.000000e-01 : f32
    %215 = vector.broadcast %cst_143 : f32 to vector<2x144xf32>
    %216 = arith.mulf %215, %214 : vector<2x144xf32>
    %217 = arith.truncf %216 : vector<2x144xf32> to vector<2x144xbf16>
    %cst_144 = arith.constant dense<0.000000e+00> : vector<2x144xf32>
    %218 = tpu.matmul %43, %1, %cst_144 {dimension_numbers = #tpu.dot_dimension_numbers<[1], [0], [0], [1], [0, 0, 1, 1], [], []>} : vector<2x28xbf16>, vector<28x144xbf16>, vector<2x144xf32> -> vector<2x144xf32>
    %cst_145 = arith.constant dense<0.000000e+00> : vector<2x144xf32>
    %219 = tpu.matmul %45, %3, %cst_145 {dimension_numbers = #tpu.dot_dimension_numbers<[1], [0], [0], [1], [0, 0, 1, 1], [], []>} : vector<2x28xbf16>, vector<28x144xbf16>, vector<2x144xf32> -> vector<2x144xf32>
    %220 = arith.addf %218, %219 : vector<2x144xf32>
    %cst_146 = arith.constant dense<0.000000e+00> : vector<2x144xf32>
    %221 = tpu.matmul %47, %5, %cst_146 {dimension_numbers = #tpu.dot_dimension_numbers<[1], [0], [0], [1], [0, 0, 1, 1], [], []>} : vector<2x28xbf16>, vector<28x144xbf16>, vector<2x144xf32> -> vector<2x144xf32>
    %222 = arith.addf %220, %221 : vector<2x144xf32>
    %cst_147 = arith.constant dense<0.000000e+00> : vector<2x144xf32>
    %223 = tpu.matmul %49, %7, %cst_147 {dimension_numbers = #tpu.dot_dimension_numbers<[1], [0], [0], [1], [0, 0, 1, 1], [], []>} : vector<2x28xbf16>, vector<28x144xbf16>, vector<2x144xf32> -> vector<2x144xf32>
    %224 = arith.addf %222, %223 : vector<2x144xf32>
    %cst_148 = arith.constant dense<0.000000e+00> : vector<2x144xf32>
    %225 = tpu.matmul %51, %9, %cst_148 {dimension_numbers = #tpu.dot_dimension_numbers<[1], [0], [0], [1], [0, 0, 1, 1], [], []>} : vector<2x28xbf16>, vector<28x144xbf16>, vector<2x144xf32> -> vector<2x144xf32>
    %226 = arith.addf %224, %225 : vector<2x144xf32>
    %227 = vector.broadcast %20 : vector<1x144xf32> to vector<2x144xf32>
    %228 = arith.addf %226, %227 : vector<2x144xf32>
    %229 = math.tanh %228 : vector<2x144xf32>
    %cst_149 = arith.constant dense<0.000000e+00> : vector<2x144xf32>
    %230 = tpu.matmul %45, %1, %cst_149 {dimension_numbers = #tpu.dot_dimension_numbers<[1], [0], [0], [1], [0, 0, 1, 1], [], []>} : vector<2x28xbf16>, vector<28x144xbf16>, vector<2x144xf32> -> vector<2x144xf32>
    %cst_150 = arith.constant dense<0.000000e+00> : vector<2x144xf32>
    %231 = tpu.matmul %47, %3, %cst_150 {dimension_numbers = #tpu.dot_dimension_numbers<[1], [0], [0], [1], [0, 0, 1, 1], [], []>} : vector<2x28xbf16>, vector<28x144xbf16>, vector<2x144xf32> -> vector<2x144xf32>
    %232 = arith.addf %230, %231 : vector<2x144xf32>
    %cst_151 = arith.constant dense<0.000000e+00> : vector<2x144xf32>
    %233 = tpu.matmul %49, %5, %cst_151 {dimension_numbers = #tpu.dot_dimension_numbers<[1], [0], [0], [1], [0, 0, 1, 1], [], []>} : vector<2x28xbf16>, vector<28x144xbf16>, vector<2x144xf32> -> vector<2x144xf32>
    %234 = arith.addf %232, %233 : vector<2x144xf32>
    %cst_152 = arith.constant dense<0.000000e+00> : vector<2x144xf32>
    %235 = tpu.matmul %51, %7, %cst_152 {dimension_numbers = #tpu.dot_dimension_numbers<[1], [0], [0], [1], [0, 0, 1, 1], [], []>} : vector<2x28xbf16>, vector<28x144xbf16>, vector<2x144xf32> -> vector<2x144xf32>
    %236 = arith.addf %234, %235 : vector<2x144xf32>
    %cst_153 = arith.constant dense<0.000000e+00> : vector<2x144xf32>
    %237 = tpu.matmul %53, %9, %cst_153 {dimension_numbers = #tpu.dot_dimension_numbers<[1], [0], [0], [1], [0, 0, 1, 1], [], []>} : vector<2x28xbf16>, vector<28x144xbf16>, vector<2x144xf32> -> vector<2x144xf32>
    %238 = arith.addf %236, %237 : vector<2x144xf32>
    %239 = vector.broadcast %20 : vector<1x144xf32> to vector<2x144xf32>
    %240 = arith.addf %238, %239 : vector<2x144xf32>
    %241 = math.tanh %240 : vector<2x144xf32>
    %242 = arith.addf %229, %241 : vector<2x144xf32>
    %cst_154 = arith.constant 5.000000e-01 : f32
    %243 = vector.broadcast %cst_154 : f32 to vector<2x144xf32>
    %244 = arith.mulf %243, %242 : vector<2x144xf32>
    %245 = arith.truncf %244 : vector<2x144xf32> to vector<2x144xbf16>
    %cst_155 = arith.constant dense<0.000000e+00> : vector<2x144xf32>
    %246 = tpu.matmul %47, %1, %cst_155 {dimension_numbers = #tpu.dot_dimension_numbers<[1], [0], [0], [1], [0, 0, 1, 1], [], []>} : vector<2x28xbf16>, vector<28x144xbf16>, vector<2x144xf32> -> vector<2x144xf32>
    %cst_156 = arith.constant dense<0.000000e+00> : vector<2x144xf32>
    %247 = tpu.matmul %49, %3, %cst_156 {dimension_numbers = #tpu.dot_dimension_numbers<[1], [0], [0], [1], [0, 0, 1, 1], [], []>} : vector<2x28xbf16>, vector<28x144xbf16>, vector<2x144xf32> -> vector<2x144xf32>
    %248 = arith.addf %246, %247 : vector<2x144xf32>
    %cst_157 = arith.constant dense<0.000000e+00> : vector<2x144xf32>
    %249 = tpu.matmul %51, %5, %cst_157 {dimension_numbers = #tpu.dot_dimension_numbers<[1], [0], [0], [1], [0, 0, 1, 1], [], []>} : vector<2x28xbf16>, vector<28x144xbf16>, vector<2x144xf32> -> vector<2x144xf32>
    %250 = arith.addf %248, %249 : vector<2x144xf32>
    %cst_158 = arith.constant dense<0.000000e+00> : vector<2x144xf32>
    %251 = tpu.matmul %53, %7, %cst_158 {dimension_numbers = #tpu.dot_dimension_numbers<[1], [0], [0], [1], [0, 0, 1, 1], [], []>} : vector<2x28xbf16>, vector<28x144xbf16>, vector<2x144xf32> -> vector<2x144xf32>
    %252 = arith.addf %250, %251 : vector<2x144xf32>
    %cst_159 = arith.constant dense<0.000000e+00> : vector<2x144xf32>
    %253 = tpu.matmul %55, %9, %cst_159 {dimension_numbers = #tpu.dot_dimension_numbers<[1], [0], [0], [1], [0, 0, 1, 1], [], []>} : vector<2x28xbf16>, vector<28x144xbf16>, vector<2x144xf32> -> vector<2x144xf32>
    %254 = arith.addf %252, %253 : vector<2x144xf32>
    %255 = vector.broadcast %20 : vector<1x144xf32> to vector<2x144xf32>
    %256 = arith.addf %254, %255 : vector<2x144xf32>
    %257 = math.tanh %256 : vector<2x144xf32>
    %cst_160 = arith.constant dense<0.000000e+00> : vector<2x144xf32>
    %258 = tpu.matmul %49, %1, %cst_160 {dimension_numbers = #tpu.dot_dimension_numbers<[1], [0], [0], [1], [0, 0, 1, 1], [], []>} : vector<2x28xbf16>, vector<28x144xbf16>, vector<2x144xf32> -> vector<2x144xf32>
    %cst_161 = arith.constant dense<0.000000e+00> : vector<2x144xf32>
    %259 = tpu.matmul %51, %3, %cst_161 {dimension_numbers = #tpu.dot_dimension_numbers<[1], [0], [0], [1], [0, 0, 1, 1], [], []>} : vector<2x28xbf16>, vector<28x144xbf16>, vector<2x144xf32> -> vector<2x144xf32>
    %260 = arith.addf %258, %259 : vector<2x144xf32>
    %cst_162 = arith.constant dense<0.000000e+00> : vector<2x144xf32>
    %261 = tpu.matmul %53, %5, %cst_162 {dimension_numbers = #tpu.dot_dimension_numbers<[1], [0], [0], [1], [0, 0, 1, 1], [], []>} : vector<2x28xbf16>, vector<28x144xbf16>, vector<2x144xf32> -> vector<2x144xf32>
    %262 = arith.addf %260, %261 : vector<2x144xf32>
    %cst_163 = arith.constant dense<0.000000e+00> : vector<2x144xf32>
    %263 = tpu.matmul %55, %7, %cst_163 {dimension_numbers = #tpu.dot_dimension_numbers<[1], [0], [0], [1], [0, 0, 1, 1], [], []>} : vector<2x28xbf16>, vector<28x144xbf16>, vector<2x144xf32> -> vector<2x144xf32>
    %264 = arith.addf %262, %263 : vector<2x144xf32>
    %cst_164 = arith.constant dense<0.000000e+00> : vector<2x144xf32>
    %265 = tpu.matmul %57, %9, %cst_164 {dimension_numbers = #tpu.dot_dimension_numbers<[1], [0], [0], [1], [0, 0, 1, 1], [], []>} : vector<2x28xbf16>, vector<28x144xbf16>, vector<2x144xf32> -> vector<2x144xf32>
    %266 = arith.addf %264, %265 : vector<2x144xf32>
    %267 = vector.broadcast %20 : vector<1x144xf32> to vector<2x144xf32>
    %268 = arith.addf %266, %267 : vector<2x144xf32>
    %269 = math.tanh %268 : vector<2x144xf32>
    %270 = arith.addf %257, %269 : vector<2x144xf32>
    %cst_165 = arith.constant 5.000000e-01 : f32
    %271 = vector.broadcast %cst_165 : f32 to vector<2x144xf32>
    %272 = arith.mulf %271, %270 : vector<2x144xf32>
    %273 = arith.truncf %272 : vector<2x144xf32> to vector<2x144xbf16>
    %cst_166 = arith.constant dense<0.000000e+00> : vector<2x144xf32>
    %274 = tpu.matmul %51, %1, %cst_166 {dimension_numbers = #tpu.dot_dimension_numbers<[1], [0], [0], [1], [0, 0, 1, 1], [], []>} : vector<2x28xbf16>, vector<28x144xbf16>, vector<2x144xf32> -> vector<2x144xf32>
    %cst_167 = arith.constant dense<0.000000e+00> : vector<2x144xf32>
    %275 = tpu.matmul %53, %3, %cst_167 {dimension_numbers = #tpu.dot_dimension_numbers<[1], [0], [0], [1], [0, 0, 1, 1], [], []>} : vector<2x28xbf16>, vector<28x144xbf16>, vector<2x144xf32> -> vector<2x144xf32>
    %276 = arith.addf %274, %275 : vector<2x144xf32>
    %cst_168 = arith.constant dense<0.000000e+00> : vector<2x144xf32>
    %277 = tpu.matmul %55, %5, %cst_168 {dimension_numbers = #tpu.dot_dimension_numbers<[1], [0], [0], [1], [0, 0, 1, 1], [], []>} : vector<2x28xbf16>, vector<28x144xbf16>, vector<2x144xf32> -> vector<2x144xf32>
    %278 = arith.addf %276, %277 : vector<2x144xf32>
    %cst_169 = arith.constant dense<0.000000e+00> : vector<2x144xf32>
    %279 = tpu.matmul %57, %7, %cst_169 {dimension_numbers = #tpu.dot_dimension_numbers<[1], [0], [0], [1], [0, 0, 1, 1], [], []>} : vector<2x28xbf16>, vector<28x144xbf16>, vector<2x144xf32> -> vector<2x144xf32>
    %280 = arith.addf %278, %279 : vector<2x144xf32>
    %cst_170 = arith.constant dense<0.000000e+00> : vector<2x144xf32>
    %281 = tpu.matmul %59, %9, %cst_170 {dimension_numbers = #tpu.dot_dimension_numbers<[1], [0], [0], [1], [0, 0, 1, 1], [], []>} : vector<2x28xbf16>, vector<28x144xbf16>, vector<2x144xf32> -> vector<2x144xf32>
    %282 = arith.addf %280, %281 : vector<2x144xf32>
    %283 = vector.broadcast %20 : vector<1x144xf32> to vector<2x144xf32>
    %284 = arith.addf %282, %283 : vector<2x144xf32>
    %285 = math.tanh %284 : vector<2x144xf32>
    %cst_171 = arith.constant dense<0.000000e+00> : vector<2x144xf32>
    %286 = tpu.matmul %53, %1, %cst_171 {dimension_numbers = #tpu.dot_dimension_numbers<[1], [0], [0], [1], [0, 0, 1, 1], [], []>} : vector<2x28xbf16>, vector<28x144xbf16>, vector<2x144xf32> -> vector<2x144xf32>
    %cst_172 = arith.constant dense<0.000000e+00> : vector<2x144xf32>
    %287 = tpu.matmul %55, %3, %cst_172 {dimension_numbers = #tpu.dot_dimension_numbers<[1], [0], [0], [1], [0, 0, 1, 1], [], []>} : vector<2x28xbf16>, vector<28x144xbf16>, vector<2x144xf32> -> vector<2x144xf32>
    %288 = arith.addf %286, %287 : vector<2x144xf32>
    %cst_173 = arith.constant dense<0.000000e+00> : vector<2x144xf32>
    %289 = tpu.matmul %57, %5, %cst_173 {dimension_numbers = #tpu.dot_dimension_numbers<[1], [0], [0], [1], [0, 0, 1, 1], [], []>} : vector<2x28xbf16>, vector<28x144xbf16>, vector<2x144xf32> -> vector<2x144xf32>
    %290 = arith.addf %288, %289 : vector<2x144xf32>
    %cst_174 = arith.constant dense<0.000000e+00> : vector<2x144xf32>
    %291 = tpu.matmul %59, %7, %cst_174 {dimension_numbers = #tpu.dot_dimension_numbers<[1], [0], [0], [1], [0, 0, 1, 1], [], []>} : vector<2x28xbf16>, vector<28x144xbf16>, vector<2x144xf32> -> vector<2x144xf32>
    %292 = arith.addf %290, %291 : vector<2x144xf32>
    %cst_175 = arith.constant dense<0.000000e+00> : vector<2x144xf32>
    %293 = tpu.matmul %61, %9, %cst_175 {dimension_numbers = #tpu.dot_dimension_numbers<[1], [0], [0], [1], [0, 0, 1, 1], [], []>} : vector<2x28xbf16>, vector<28x144xbf16>, vector<2x144xf32> -> vector<2x144xf32>
    %294 = arith.addf %292, %293 : vector<2x144xf32>
    %295 = vector.broadcast %20 : vector<1x144xf32> to vector<2x144xf32>
    %296 = arith.addf %294, %295 : vector<2x144xf32>
    %297 = math.tanh %296 : vector<2x144xf32>
    %298 = arith.addf %285, %297 : vector<2x144xf32>
    %cst_176 = arith.constant 5.000000e-01 : f32
    %299 = vector.broadcast %cst_176 : f32 to vector<2x144xf32>
    %300 = arith.mulf %299, %298 : vector<2x144xf32>
    %301 = arith.truncf %300 : vector<2x144xf32> to vector<2x144xbf16>
    %cst_177 = arith.constant dense<0.000000e+00> : vector<2x144xf32>
    %302 = tpu.matmul %55, %1, %cst_177 {dimension_numbers = #tpu.dot_dimension_numbers<[1], [0], [0], [1], [0, 0, 1, 1], [], []>} : vector<2x28xbf16>, vector<28x144xbf16>, vector<2x144xf32> -> vector<2x144xf32>
    %cst_178 = arith.constant dense<0.000000e+00> : vector<2x144xf32>
    %303 = tpu.matmul %57, %3, %cst_178 {dimension_numbers = #tpu.dot_dimension_numbers<[1], [0], [0], [1], [0, 0, 1, 1], [], []>} : vector<2x28xbf16>, vector<28x144xbf16>, vector<2x144xf32> -> vector<2x144xf32>
    %304 = arith.addf %302, %303 : vector<2x144xf32>
    %cst_179 = arith.constant dense<0.000000e+00> : vector<2x144xf32>
    %305 = tpu.matmul %59, %5, %cst_179 {dimension_numbers = #tpu.dot_dimension_numbers<[1], [0], [0], [1], [0, 0, 1, 1], [], []>} : vector<2x28xbf16>, vector<28x144xbf16>, vector<2x144xf32> -> vector<2x144xf32>
    %306 = arith.addf %304, %305 : vector<2x144xf32>
    %cst_180 = arith.constant dense<0.000000e+00> : vector<2x144xf32>
    %307 = tpu.matmul %61, %7, %cst_180 {dimension_numbers = #tpu.dot_dimension_numbers<[1], [0], [0], [1], [0, 0, 1, 1], [], []>} : vector<2x28xbf16>, vector<28x144xbf16>, vector<2x144xf32> -> vector<2x144xf32>
    %308 = arith.addf %306, %307 : vector<2x144xf32>
    %cst_181 = arith.constant dense<0.000000e+00> : vector<2x144xf32>
    %309 = tpu.matmul %63, %9, %cst_181 {dimension_numbers = #tpu.dot_dimension_numbers<[1], [0], [0], [1], [0, 0, 1, 1], [], []>} : vector<2x28xbf16>, vector<28x144xbf16>, vector<2x144xf32> -> vector<2x144xf32>
    %310 = arith.addf %308, %309 : vector<2x144xf32>
    %311 = vector.broadcast %20 : vector<1x144xf32> to vector<2x144xf32>
    %312 = arith.addf %310, %311 : vector<2x144xf32>
    %313 = math.tanh %312 : vector<2x144xf32>
    %cst_182 = arith.constant dense<0.000000e+00> : vector<2x144xf32>
    %314 = tpu.matmul %57, %1, %cst_182 {dimension_numbers = #tpu.dot_dimension_numbers<[1], [0], [0], [1], [0, 0, 1, 1], [], []>} : vector<2x28xbf16>, vector<28x144xbf16>, vector<2x144xf32> -> vector<2x144xf32>
    %cst_183 = arith.constant dense<0.000000e+00> : vector<2x144xf32>
    %315 = tpu.matmul %59, %3, %cst_183 {dimension_numbers = #tpu.dot_dimension_numbers<[1], [0], [0], [1], [0, 0, 1, 1], [], []>} : vector<2x28xbf16>, vector<28x144xbf16>, vector<2x144xf32> -> vector<2x144xf32>
    %316 = arith.addf %314, %315 : vector<2x144xf32>
    %cst_184 = arith.constant dense<0.000000e+00> : vector<2x144xf32>
    %317 = tpu.matmul %61, %5, %cst_184 {dimension_numbers = #tpu.dot_dimension_numbers<[1], [0], [0], [1], [0, 0, 1, 1], [], []>} : vector<2x28xbf16>, vector<28x144xbf16>, vector<2x144xf32> -> vector<2x144xf32>
    %318 = arith.addf %316, %317 : vector<2x144xf32>
    %cst_185 = arith.constant dense<0.000000e+00> : vector<2x144xf32>
    %319 = tpu.matmul %63, %7, %cst_185 {dimension_numbers = #tpu.dot_dimension_numbers<[1], [0], [0], [1], [0, 0, 1, 1], [], []>} : vector<2x28xbf16>, vector<28x144xbf16>, vector<2x144xf32> -> vector<2x144xf32>
    %320 = arith.addf %318, %319 : vector<2x144xf32>
    %cst_186 = arith.constant dense<0.000000e+00> : vector<2x144xf32>
    %321 = tpu.matmul %65, %9, %cst_186 {dimension_numbers = #tpu.dot_dimension_numbers<[1], [0], [0], [1], [0, 0, 1, 1], [], []>} : vector<2x28xbf16>, vector<28x144xbf16>, vector<2x144xf32> -> vector<2x144xf32>
    %322 = arith.addf %320, %321 : vector<2x144xf32>
    %323 = vector.broadcast %20 : vector<1x144xf32> to vector<2x144xf32>
    %324 = arith.addf %322, %323 : vector<2x144xf32>
    %325 = math.tanh %324 : vector<2x144xf32>
    %326 = arith.addf %313, %325 : vector<2x144xf32>
    %cst_187 = arith.constant 5.000000e-01 : f32
    %327 = vector.broadcast %cst_187 : f32 to vector<2x144xf32>
    %328 = arith.mulf %327, %326 : vector<2x144xf32>
    %329 = arith.truncf %328 : vector<2x144xf32> to vector<2x144xbf16>
    %cst_188 = arith.constant dense<0.000000e+00> : vector<2x144xf32>
    %330 = tpu.matmul %59, %1, %cst_188 {dimension_numbers = #tpu.dot_dimension_numbers<[1], [0], [0], [1], [0, 0, 1, 1], [], []>} : vector<2x28xbf16>, vector<28x144xbf16>, vector<2x144xf32> -> vector<2x144xf32>
    %cst_189 = arith.constant dense<0.000000e+00> : vector<2x144xf32>
    %331 = tpu.matmul %61, %3, %cst_189 {dimension_numbers = #tpu.dot_dimension_numbers<[1], [0], [0], [1], [0, 0, 1, 1], [], []>} : vector<2x28xbf16>, vector<28x144xbf16>, vector<2x144xf32> -> vector<2x144xf32>
    %332 = arith.addf %330, %331 : vector<2x144xf32>
    %cst_190 = arith.constant dense<0.000000e+00> : vector<2x144xf32>
    %333 = tpu.matmul %63, %5, %cst_190 {dimension_numbers = #tpu.dot_dimension_numbers<[1], [0], [0], [1], [0, 0, 1, 1], [], []>} : vector<2x28xbf16>, vector<28x144xbf16>, vector<2x144xf32> -> vector<2x144xf32>
    %334 = arith.addf %332, %333 : vector<2x144xf32>
    %cst_191 = arith.constant dense<0.000000e+00> : vector<2x144xf32>
    %335 = tpu.matmul %65, %7, %cst_191 {dimension_numbers = #tpu.dot_dimension_numbers<[1], [0], [0], [1], [0, 0, 1, 1], [], []>} : vector<2x28xbf16>, vector<28x144xbf16>, vector<2x144xf32> -> vector<2x144xf32>
    %336 = arith.addf %334, %335 : vector<2x144xf32>
    %cst_192 = arith.constant dense<0.000000e+00> : vector<2x144xf32>
    %337 = tpu.matmul %67, %9, %cst_192 {dimension_numbers = #tpu.dot_dimension_numbers<[1], [0], [0], [1], [0, 0, 1, 1], [], []>} : vector<2x28xbf16>, vector<28x144xbf16>, vector<2x144xf32> -> vector<2x144xf32>
    %338 = arith.addf %336, %337 : vector<2x144xf32>
    %339 = vector.broadcast %20 : vector<1x144xf32> to vector<2x144xf32>
    %340 = arith.addf %338, %339 : vector<2x144xf32>
    %341 = math.tanh %340 : vector<2x144xf32>
    %cst_193 = arith.constant dense<0.000000e+00> : vector<2x144xf32>
    %342 = tpu.matmul %61, %1, %cst_193 {dimension_numbers = #tpu.dot_dimension_numbers<[1], [0], [0], [1], [0, 0, 1, 1], [], []>} : vector<2x28xbf16>, vector<28x144xbf16>, vector<2x144xf32> -> vector<2x144xf32>
    %cst_194 = arith.constant dense<0.000000e+00> : vector<2x144xf32>
    %343 = tpu.matmul %63, %3, %cst_194 {dimension_numbers = #tpu.dot_dimension_numbers<[1], [0], [0], [1], [0, 0, 1, 1], [], []>} : vector<2x28xbf16>, vector<28x144xbf16>, vector<2x144xf32> -> vector<2x144xf32>
    %344 = arith.addf %342, %343 : vector<2x144xf32>
    %cst_195 = arith.constant dense<0.000000e+00> : vector<2x144xf32>
    %345 = tpu.matmul %65, %5, %cst_195 {dimension_numbers = #tpu.dot_dimension_numbers<[1], [0], [0], [1], [0, 0, 1, 1], [], []>} : vector<2x28xbf16>, vector<28x144xbf16>, vector<2x144xf32> -> vector<2x144xf32>
    %346 = arith.addf %344, %345 : vector<2x144xf32>
    %cst_196 = arith.constant dense<0.000000e+00> : vector<2x144xf32>
    %347 = tpu.matmul %67, %7, %cst_196 {dimension_numbers = #tpu.dot_dimension_numbers<[1], [0], [0], [1], [0, 0, 1, 1], [], []>} : vector<2x28xbf16>, vector<28x144xbf16>, vector<2x144xf32> -> vector<2x144xf32>
    %348 = arith.addf %346, %347 : vector<2x144xf32>
    %cst_197 = arith.constant dense<0.000000e+00> : vector<2x144xf32>
    %349 = tpu.matmul %69, %9, %cst_197 {dimension_numbers = #tpu.dot_dimension_numbers<[1], [0], [0], [1], [0, 0, 1, 1], [], []>} : vector<2x28xbf16>, vector<28x144xbf16>, vector<2x144xf32> -> vector<2x144xf32>
    %350 = arith.addf %348, %349 : vector<2x144xf32>
    %351 = vector.broadcast %20 : vector<1x144xf32> to vector<2x144xf32>
    %352 = arith.addf %350, %351 : vector<2x144xf32>
    %353 = math.tanh %352 : vector<2x144xf32>
    %354 = arith.addf %341, %353 : vector<2x144xf32>
    %cst_198 = arith.constant 5.000000e-01 : f32
    %355 = vector.broadcast %cst_198 : f32 to vector<2x144xf32>
    %356 = arith.mulf %355, %354 : vector<2x144xf32>
    %357 = arith.truncf %356 : vector<2x144xf32> to vector<2x144xbf16>
    %cst_199 = arith.constant dense<0.000000e+00> : vector<2x144xf32>
    %358 = tpu.matmul %63, %1, %cst_199 {dimension_numbers = #tpu.dot_dimension_numbers<[1], [0], [0], [1], [0, 0, 1, 1], [], []>} : vector<2x28xbf16>, vector<28x144xbf16>, vector<2x144xf32> -> vector<2x144xf32>
    %cst_200 = arith.constant dense<0.000000e+00> : vector<2x144xf32>
    %359 = tpu.matmul %65, %3, %cst_200 {dimension_numbers = #tpu.dot_dimension_numbers<[1], [0], [0], [1], [0, 0, 1, 1], [], []>} : vector<2x28xbf16>, vector<28x144xbf16>, vector<2x144xf32> -> vector<2x144xf32>
    %360 = arith.addf %358, %359 : vector<2x144xf32>
    %cst_201 = arith.constant dense<0.000000e+00> : vector<2x144xf32>
    %361 = tpu.matmul %67, %5, %cst_201 {dimension_numbers = #tpu.dot_dimension_numbers<[1], [0], [0], [1], [0, 0, 1, 1], [], []>} : vector<2x28xbf16>, vector<28x144xbf16>, vector<2x144xf32> -> vector<2x144xf32>
    %362 = arith.addf %360, %361 : vector<2x144xf32>
    %cst_202 = arith.constant dense<0.000000e+00> : vector<2x144xf32>
    %363 = tpu.matmul %69, %7, %cst_202 {dimension_numbers = #tpu.dot_dimension_numbers<[1], [0], [0], [1], [0, 0, 1, 1], [], []>} : vector<2x28xbf16>, vector<28x144xbf16>, vector<2x144xf32> -> vector<2x144xf32>
    %364 = arith.addf %362, %363 : vector<2x144xf32>
    %cst_203 = arith.constant dense<0.000000e+00> : vector<2x144xf32>
    %365 = tpu.matmul %71, %9, %cst_203 {dimension_numbers = #tpu.dot_dimension_numbers<[1], [0], [0], [1], [0, 0, 1, 1], [], []>} : vector<2x28xbf16>, vector<28x144xbf16>, vector<2x144xf32> -> vector<2x144xf32>
    %366 = arith.addf %364, %365 : vector<2x144xf32>
    %367 = vector.broadcast %20 : vector<1x144xf32> to vector<2x144xf32>
    %368 = arith.addf %366, %367 : vector<2x144xf32>
    %369 = math.tanh %368 : vector<2x144xf32>
    %cst_204 = arith.constant dense<0.000000e+00> : vector<2x144xf32>
    %370 = tpu.matmul %65, %1, %cst_204 {dimension_numbers = #tpu.dot_dimension_numbers<[1], [0], [0], [1], [0, 0, 1, 1], [], []>} : vector<2x28xbf16>, vector<28x144xbf16>, vector<2x144xf32> -> vector<2x144xf32>
    %cst_205 = arith.constant dense<0.000000e+00> : vector<2x144xf32>
    %371 = tpu.matmul %67, %3, %cst_205 {dimension_numbers = #tpu.dot_dimension_numbers<[1], [0], [0], [1], [0, 0, 1, 1], [], []>} : vector<2x28xbf16>, vector<28x144xbf16>, vector<2x144xf32> -> vector<2x144xf32>
    %372 = arith.addf %370, %371 : vector<2x144xf32>
    %cst_206 = arith.constant dense<0.000000e+00> : vector<2x144xf32>
    %373 = tpu.matmul %69, %5, %cst_206 {dimension_numbers = #tpu.dot_dimension_numbers<[1], [0], [0], [1], [0, 0, 1, 1], [], []>} : vector<2x28xbf16>, vector<28x144xbf16>, vector<2x144xf32> -> vector<2x144xf32>
    %374 = arith.addf %372, %373 : vector<2x144xf32>
    %cst_207 = arith.constant dense<0.000000e+00> : vector<2x144xf32>
    %375 = tpu.matmul %71, %7, %cst_207 {dimension_numbers = #tpu.dot_dimension_numbers<[1], [0], [0], [1], [0, 0, 1, 1], [], []>} : vector<2x28xbf16>, vector<28x144xbf16>, vector<2x144xf32> -> vector<2x144xf32>
    %376 = arith.addf %374, %375 : vector<2x144xf32>
    %cst_208 = arith.constant dense<0.000000e+00> : vector<2x144xf32>
    %377 = tpu.matmul %73, %9, %cst_208 {dimension_numbers = #tpu.dot_dimension_numbers<[1], [0], [0], [1], [0, 0, 1, 1], [], []>} : vector<2x28xbf16>, vector<28x144xbf16>, vector<2x144xf32> -> vector<2x144xf32>
    %378 = arith.addf %376, %377 : vector<2x144xf32>
    %379 = vector.broadcast %20 : vector<1x144xf32> to vector<2x144xf32>
    %380 = arith.addf %378, %379 : vector<2x144xf32>
    %381 = math.tanh %380 : vector<2x144xf32>
    %382 = arith.addf %369, %381 : vector<2x144xf32>
    %cst_209 = arith.constant 5.000000e-01 : f32
    %383 = vector.broadcast %cst_209 : f32 to vector<2x144xf32>
    %384 = arith.mulf %383, %382 : vector<2x144xf32>
    %385 = arith.truncf %384 : vector<2x144xf32> to vector<2x144xbf16>
    %cst_210 = arith.constant dense<0.000000e+00> : vector<2x144xf32>
    %386 = tpu.matmul %67, %1, %cst_210 {dimension_numbers = #tpu.dot_dimension_numbers<[1], [0], [0], [1], [0, 0, 1, 1], [], []>} : vector<2x28xbf16>, vector<28x144xbf16>, vector<2x144xf32> -> vector<2x144xf32>
    %cst_211 = arith.constant dense<0.000000e+00> : vector<2x144xf32>
    %387 = tpu.matmul %69, %3, %cst_211 {dimension_numbers = #tpu.dot_dimension_numbers<[1], [0], [0], [1], [0, 0, 1, 1], [], []>} : vector<2x28xbf16>, vector<28x144xbf16>, vector<2x144xf32> -> vector<2x144xf32>
    %388 = arith.addf %386, %387 : vector<2x144xf32>
    %cst_212 = arith.constant dense<0.000000e+00> : vector<2x144xf32>
    %389 = tpu.matmul %71, %5, %cst_212 {dimension_numbers = #tpu.dot_dimension_numbers<[1], [0], [0], [1], [0, 0, 1, 1], [], []>} : vector<2x28xbf16>, vector<28x144xbf16>, vector<2x144xf32> -> vector<2x144xf32>
    %390 = arith.addf %388, %389 : vector<2x144xf32>
    %cst_213 = arith.constant dense<0.000000e+00> : vector<2x144xf32>
    %391 = tpu.matmul %73, %7, %cst_213 {dimension_numbers = #tpu.dot_dimension_numbers<[1], [0], [0], [1], [0, 0, 1, 1], [], []>} : vector<2x28xbf16>, vector<28x144xbf16>, vector<2x144xf32> -> vector<2x144xf32>
    %392 = arith.addf %390, %391 : vector<2x144xf32>
    %cst_214 = arith.constant dense<0.000000e+00> : vector<2x144xf32>
    %393 = tpu.matmul %75, %9, %cst_214 {dimension_numbers = #tpu.dot_dimension_numbers<[1], [0], [0], [1], [0, 0, 1, 1], [], []>} : vector<2x28xbf16>, vector<28x144xbf16>, vector<2x144xf32> -> vector<2x144xf32>
    %394 = arith.addf %392, %393 : vector<2x144xf32>
    %395 = vector.broadcast %20 : vector<1x144xf32> to vector<2x144xf32>
    %396 = arith.addf %394, %395 : vector<2x144xf32>
    %397 = math.tanh %396 : vector<2x144xf32>
    %cst_215 = arith.constant dense<0.000000e+00> : vector<2x144xf32>
    %398 = tpu.matmul %69, %1, %cst_215 {dimension_numbers = #tpu.dot_dimension_numbers<[1], [0], [0], [1], [0, 0, 1, 1], [], []>} : vector<2x28xbf16>, vector<28x144xbf16>, vector<2x144xf32> -> vector<2x144xf32>
    %cst_216 = arith.constant dense<0.000000e+00> : vector<2x144xf32>
    %399 = tpu.matmul %71, %3, %cst_216 {dimension_numbers = #tpu.dot_dimension_numbers<[1], [0], [0], [1], [0, 0, 1, 1], [], []>} : vector<2x28xbf16>, vector<28x144xbf16>, vector<2x144xf32> -> vector<2x144xf32>
    %400 = arith.addf %398, %399 : vector<2x144xf32>
    %cst_217 = arith.constant dense<0.000000e+00> : vector<2x144xf32>
    %401 = tpu.matmul %73, %5, %cst_217 {dimension_numbers = #tpu.dot_dimension_numbers<[1], [0], [0], [1], [0, 0, 1, 1], [], []>} : vector<2x28xbf16>, vector<28x144xbf16>, vector<2x144xf32> -> vector<2x144xf32>
    %402 = arith.addf %400, %401 : vector<2x144xf32>
    %cst_218 = arith.constant dense<0.000000e+00> : vector<2x144xf32>
    %403 = tpu.matmul %75, %7, %cst_218 {dimension_numbers = #tpu.dot_dimension_numbers<[1], [0], [0], [1], [0, 0, 1, 1], [], []>} : vector<2x28xbf16>, vector<28x144xbf16>, vector<2x144xf32> -> vector<2x144xf32>
    %404 = arith.addf %402, %403 : vector<2x144xf32>
    %cst_219 = arith.constant dense<0.000000e+00> : vector<2x144xf32>
    %405 = tpu.matmul %77, %9, %cst_219 {dimension_numbers = #tpu.dot_dimension_numbers<[1], [0], [0], [1], [0, 0, 1, 1], [], []>} : vector<2x28xbf16>, vector<28x144xbf16>, vector<2x144xf32> -> vector<2x144xf32>
    %406 = arith.addf %404, %405 : vector<2x144xf32>
    %407 = vector.broadcast %20 : vector<1x144xf32> to vector<2x144xf32>
    %408 = arith.addf %406, %407 : vector<2x144xf32>
    %409 = math.tanh %408 : vector<2x144xf32>
    %410 = arith.addf %397, %409 : vector<2x144xf32>
    %cst_220 = arith.constant 5.000000e-01 : f32
    %411 = vector.broadcast %cst_220 : f32 to vector<2x144xf32>
    %412 = arith.mulf %411, %410 : vector<2x144xf32>
    %413 = arith.truncf %412 : vector<2x144xf32> to vector<2x144xbf16>
    %cst_221 = arith.constant dense<0.000000e+00> : vector<2x128xf32>
    %414 = tpu.matmul %105, %11, %cst_221 {dimension_numbers = #tpu.dot_dimension_numbers<[1], [0], [0], [1], [0, 0, 1, 1], [], []>} : vector<2x144xbf16>, vector<144x128xbf16>, vector<2x128xf32> -> vector<2x128xf32>
    %cst_222 = arith.constant dense<0.000000e+00> : vector<2x128xf32>
    %415 = tpu.matmul %133, %13, %cst_222 {dimension_numbers = #tpu.dot_dimension_numbers<[1], [0], [0], [1], [0, 0, 1, 1], [], []>} : vector<2x144xbf16>, vector<144x128xbf16>, vector<2x128xf32> -> vector<2x128xf32>
    %416 = arith.addf %414, %415 : vector<2x128xf32>
    %cst_223 = arith.constant dense<0.000000e+00> : vector<2x128xf32>
    %417 = tpu.matmul %161, %15, %cst_223 {dimension_numbers = #tpu.dot_dimension_numbers<[1], [0], [0], [1], [0, 0, 1, 1], [], []>} : vector<2x144xbf16>, vector<144x128xbf16>, vector<2x128xf32> -> vector<2x128xf32>
    %418 = arith.addf %416, %417 : vector<2x128xf32>
    %cst_224 = arith.constant dense<0.000000e+00> : vector<2x128xf32>
    %419 = tpu.matmul %189, %17, %cst_224 {dimension_numbers = #tpu.dot_dimension_numbers<[1], [0], [0], [1], [0, 0, 1, 1], [], []>} : vector<2x144xbf16>, vector<144x128xbf16>, vector<2x128xf32> -> vector<2x128xf32>
    %420 = arith.addf %418, %419 : vector<2x128xf32>
    %cst_225 = arith.constant dense<0.000000e+00> : vector<2x128xf32>
    %421 = tpu.matmul %217, %19, %cst_225 {dimension_numbers = #tpu.dot_dimension_numbers<[1], [0], [0], [1], [0, 0, 1, 1], [], []>} : vector<2x144xbf16>, vector<144x128xbf16>, vector<2x128xf32> -> vector<2x128xf32>
    %422 = arith.addf %420, %421 : vector<2x128xf32>
    %423 = vector.broadcast %21 : vector<1x128xf32> to vector<2x128xf32>
    %424 = arith.addf %422, %423 : vector<2x128xf32>
    %425 = math.tanh %424 : vector<2x128xf32>
    %cst_226 = arith.constant dense<0.000000e+00> : vector<2x128xf32>
    %426 = tpu.matmul %133, %11, %cst_226 {dimension_numbers = #tpu.dot_dimension_numbers<[1], [0], [0], [1], [0, 0, 1, 1], [], []>} : vector<2x144xbf16>, vector<144x128xbf16>, vector<2x128xf32> -> vector<2x128xf32>
    %cst_227 = arith.constant dense<0.000000e+00> : vector<2x128xf32>
    %427 = tpu.matmul %161, %13, %cst_227 {dimension_numbers = #tpu.dot_dimension_numbers<[1], [0], [0], [1], [0, 0, 1, 1], [], []>} : vector<2x144xbf16>, vector<144x128xbf16>, vector<2x128xf32> -> vector<2x128xf32>
    %428 = arith.addf %426, %427 : vector<2x128xf32>
    %cst_228 = arith.constant dense<0.000000e+00> : vector<2x128xf32>
    %429 = tpu.matmul %189, %15, %cst_228 {dimension_numbers = #tpu.dot_dimension_numbers<[1], [0], [0], [1], [0, 0, 1, 1], [], []>} : vector<2x144xbf16>, vector<144x128xbf16>, vector<2x128xf32> -> vector<2x128xf32>
    %430 = arith.addf %428, %429 : vector<2x128xf32>
    %cst_229 = arith.constant dense<0.000000e+00> : vector<2x128xf32>
    %431 = tpu.matmul %217, %17, %cst_229 {dimension_numbers = #tpu.dot_dimension_numbers<[1], [0], [0], [1], [0, 0, 1, 1], [], []>} : vector<2x144xbf16>, vector<144x128xbf16>, vector<2x128xf32> -> vector<2x128xf32>
    %432 = arith.addf %430, %431 : vector<2x128xf32>
    %cst_230 = arith.constant dense<0.000000e+00> : vector<2x128xf32>
    %433 = tpu.matmul %245, %19, %cst_230 {dimension_numbers = #tpu.dot_dimension_numbers<[1], [0], [0], [1], [0, 0, 1, 1], [], []>} : vector<2x144xbf16>, vector<144x128xbf16>, vector<2x128xf32> -> vector<2x128xf32>
    %434 = arith.addf %432, %433 : vector<2x128xf32>
    %435 = vector.broadcast %21 : vector<1x128xf32> to vector<2x128xf32>
    %436 = arith.addf %434, %435 : vector<2x128xf32>
    %437 = math.tanh %436 : vector<2x128xf32>
    %438 = arith.addf %425, %437 : vector<2x128xf32>
    %cst_231 = arith.constant 5.000000e-01 : f32
    %439 = vector.broadcast %cst_231 : f32 to vector<2x128xf32>
    %440 = arith.mulf %439, %438 : vector<2x128xf32>
    %441 = arith.truncf %440 : vector<2x128xf32> to vector<2x128xbf16>
    %cst_232 = arith.constant dense<0.000000e+00> : vector<2x128xf32>
    %442 = tpu.matmul %161, %11, %cst_232 {dimension_numbers = #tpu.dot_dimension_numbers<[1], [0], [0], [1], [0, 0, 1, 1], [], []>} : vector<2x144xbf16>, vector<144x128xbf16>, vector<2x128xf32> -> vector<2x128xf32>
    %cst_233 = arith.constant dense<0.000000e+00> : vector<2x128xf32>
    %443 = tpu.matmul %189, %13, %cst_233 {dimension_numbers = #tpu.dot_dimension_numbers<[1], [0], [0], [1], [0, 0, 1, 1], [], []>} : vector<2x144xbf16>, vector<144x128xbf16>, vector<2x128xf32> -> vector<2x128xf32>
    %444 = arith.addf %442, %443 : vector<2x128xf32>
    %cst_234 = arith.constant dense<0.000000e+00> : vector<2x128xf32>
    %445 = tpu.matmul %217, %15, %cst_234 {dimension_numbers = #tpu.dot_dimension_numbers<[1], [0], [0], [1], [0, 0, 1, 1], [], []>} : vector<2x144xbf16>, vector<144x128xbf16>, vector<2x128xf32> -> vector<2x128xf32>
    %446 = arith.addf %444, %445 : vector<2x128xf32>
    %cst_235 = arith.constant dense<0.000000e+00> : vector<2x128xf32>
    %447 = tpu.matmul %245, %17, %cst_235 {dimension_numbers = #tpu.dot_dimension_numbers<[1], [0], [0], [1], [0, 0, 1, 1], [], []>} : vector<2x144xbf16>, vector<144x128xbf16>, vector<2x128xf32> -> vector<2x128xf32>
    %448 = arith.addf %446, %447 : vector<2x128xf32>
    %cst_236 = arith.constant dense<0.000000e+00> : vector<2x128xf32>
    %449 = tpu.matmul %273, %19, %cst_236 {dimension_numbers = #tpu.dot_dimension_numbers<[1], [0], [0], [1], [0, 0, 1, 1], [], []>} : vector<2x144xbf16>, vector<144x128xbf16>, vector<2x128xf32> -> vector<2x128xf32>
    %450 = arith.addf %448, %449 : vector<2x128xf32>
    %451 = vector.broadcast %21 : vector<1x128xf32> to vector<2x128xf32>
    %452 = arith.addf %450, %451 : vector<2x128xf32>
    %453 = math.tanh %452 : vector<2x128xf32>
    %cst_237 = arith.constant dense<0.000000e+00> : vector<2x128xf32>
    %454 = tpu.matmul %189, %11, %cst_237 {dimension_numbers = #tpu.dot_dimension_numbers<[1], [0], [0], [1], [0, 0, 1, 1], [], []>} : vector<2x144xbf16>, vector<144x128xbf16>, vector<2x128xf32> -> vector<2x128xf32>
    %cst_238 = arith.constant dense<0.000000e+00> : vector<2x128xf32>
    %455 = tpu.matmul %217, %13, %cst_238 {dimension_numbers = #tpu.dot_dimension_numbers<[1], [0], [0], [1], [0, 0, 1, 1], [], []>} : vector<2x144xbf16>, vector<144x128xbf16>, vector<2x128xf32> -> vector<2x128xf32>
    %456 = arith.addf %454, %455 : vector<2x128xf32>
    %cst_239 = arith.constant dense<0.000000e+00> : vector<2x128xf32>
    %457 = tpu.matmul %245, %15, %cst_239 {dimension_numbers = #tpu.dot_dimension_numbers<[1], [0], [0], [1], [0, 0, 1, 1], [], []>} : vector<2x144xbf16>, vector<144x128xbf16>, vector<2x128xf32> -> vector<2x128xf32>
    %458 = arith.addf %456, %457 : vector<2x128xf32>
    %cst_240 = arith.constant dense<0.000000e+00> : vector<2x128xf32>
    %459 = tpu.matmul %273, %17, %cst_240 {dimension_numbers = #tpu.dot_dimension_numbers<[1], [0], [0], [1], [0, 0, 1, 1], [], []>} : vector<2x144xbf16>, vector<144x128xbf16>, vector<2x128xf32> -> vector<2x128xf32>
    %460 = arith.addf %458, %459 : vector<2x128xf32>
    %cst_241 = arith.constant dense<0.000000e+00> : vector<2x128xf32>
    %461 = tpu.matmul %301, %19, %cst_241 {dimension_numbers = #tpu.dot_dimension_numbers<[1], [0], [0], [1], [0, 0, 1, 1], [], []>} : vector<2x144xbf16>, vector<144x128xbf16>, vector<2x128xf32> -> vector<2x128xf32>
    %462 = arith.addf %460, %461 : vector<2x128xf32>
    %463 = vector.broadcast %21 : vector<1x128xf32> to vector<2x128xf32>
    %464 = arith.addf %462, %463 : vector<2x128xf32>
    %465 = math.tanh %464 : vector<2x128xf32>
    %466 = arith.addf %453, %465 : vector<2x128xf32>
    %cst_242 = arith.constant 5.000000e-01 : f32
    %467 = vector.broadcast %cst_242 : f32 to vector<2x128xf32>
    %468 = arith.mulf %467, %466 : vector<2x128xf32>
    %469 = arith.truncf %468 : vector<2x128xf32> to vector<2x128xbf16>
    %cst_243 = arith.constant dense<0.000000e+00> : vector<2x128xf32>
    %470 = tpu.matmul %217, %11, %cst_243 {dimension_numbers = #tpu.dot_dimension_numbers<[1], [0], [0], [1], [0, 0, 1, 1], [], []>} : vector<2x144xbf16>, vector<144x128xbf16>, vector<2x128xf32> -> vector<2x128xf32>
    %cst_244 = arith.constant dense<0.000000e+00> : vector<2x128xf32>
    %471 = tpu.matmul %245, %13, %cst_244 {dimension_numbers = #tpu.dot_dimension_numbers<[1], [0], [0], [1], [0, 0, 1, 1], [], []>} : vector<2x144xbf16>, vector<144x128xbf16>, vector<2x128xf32> -> vector<2x128xf32>
    %472 = arith.addf %470, %471 : vector<2x128xf32>
    %cst_245 = arith.constant dense<0.000000e+00> : vector<2x128xf32>
    %473 = tpu.matmul %273, %15, %cst_245 {dimension_numbers = #tpu.dot_dimension_numbers<[1], [0], [0], [1], [0, 0, 1, 1], [], []>} : vector<2x144xbf16>, vector<144x128xbf16>, vector<2x128xf32> -> vector<2x128xf32>
    %474 = arith.addf %472, %473 : vector<2x128xf32>
    %cst_246 = arith.constant dense<0.000000e+00> : vector<2x128xf32>
    %475 = tpu.matmul %301, %17, %cst_246 {dimension_numbers = #tpu.dot_dimension_numbers<[1], [0], [0], [1], [0, 0, 1, 1], [], []>} : vector<2x144xbf16>, vector<144x128xbf16>, vector<2x128xf32> -> vector<2x128xf32>
    %476 = arith.addf %474, %475 : vector<2x128xf32>
    %cst_247 = arith.constant dense<0.000000e+00> : vector<2x128xf32>
    %477 = tpu.matmul %329, %19, %cst_247 {dimension_numbers = #tpu.dot_dimension_numbers<[1], [0], [0], [1], [0, 0, 1, 1], [], []>} : vector<2x144xbf16>, vector<144x128xbf16>, vector<2x128xf32> -> vector<2x128xf32>
    %478 = arith.addf %476, %477 : vector<2x128xf32>
    %479 = vector.broadcast %21 : vector<1x128xf32> to vector<2x128xf32>
    %480 = arith.addf %478, %479 : vector<2x128xf32>
    %481 = math.tanh %480 : vector<2x128xf32>
    %cst_248 = arith.constant dense<0.000000e+00> : vector<2x128xf32>
    %482 = tpu.matmul %245, %11, %cst_248 {dimension_numbers = #tpu.dot_dimension_numbers<[1], [0], [0], [1], [0, 0, 1, 1], [], []>} : vector<2x144xbf16>, vector<144x128xbf16>, vector<2x128xf32> -> vector<2x128xf32>
    %cst_249 = arith.constant dense<0.000000e+00> : vector<2x128xf32>
    %483 = tpu.matmul %273, %13, %cst_249 {dimension_numbers = #tpu.dot_dimension_numbers<[1], [0], [0], [1], [0, 0, 1, 1], [], []>} : vector<2x144xbf16>, vector<144x128xbf16>, vector<2x128xf32> -> vector<2x128xf32>
    %484 = arith.addf %482, %483 : vector<2x128xf32>
    %cst_250 = arith.constant dense<0.000000e+00> : vector<2x128xf32>
    %485 = tpu.matmul %301, %15, %cst_250 {dimension_numbers = #tpu.dot_dimension_numbers<[1], [0], [0], [1], [0, 0, 1, 1], [], []>} : vector<2x144xbf16>, vector<144x128xbf16>, vector<2x128xf32> -> vector<2x128xf32>
    %486 = arith.addf %484, %485 : vector<2x128xf32>
    %cst_251 = arith.constant dense<0.000000e+00> : vector<2x128xf32>
    %487 = tpu.matmul %329, %17, %cst_251 {dimension_numbers = #tpu.dot_dimension_numbers<[1], [0], [0], [1], [0, 0, 1, 1], [], []>} : vector<2x144xbf16>, vector<144x128xbf16>, vector<2x128xf32> -> vector<2x128xf32>
    %488 = arith.addf %486, %487 : vector<2x128xf32>
    %cst_252 = arith.constant dense<0.000000e+00> : vector<2x128xf32>
    %489 = tpu.matmul %357, %19, %cst_252 {dimension_numbers = #tpu.dot_dimension_numbers<[1], [0], [0], [1], [0, 0, 1, 1], [], []>} : vector<2x144xbf16>, vector<144x128xbf16>, vector<2x128xf32> -> vector<2x128xf32>
    %490 = arith.addf %488, %489 : vector<2x128xf32>
    %491 = vector.broadcast %21 : vector<1x128xf32> to vector<2x128xf32>
    %492 = arith.addf %490, %491 : vector<2x128xf32>
    %493 = math.tanh %492 : vector<2x128xf32>
    %494 = arith.addf %481, %493 : vector<2x128xf32>
    %cst_253 = arith.constant 5.000000e-01 : f32
    %495 = vector.broadcast %cst_253 : f32 to vector<2x128xf32>
    %496 = arith.mulf %495, %494 : vector<2x128xf32>
    %497 = arith.truncf %496 : vector<2x128xf32> to vector<2x128xbf16>
    %cst_254 = arith.constant dense<0.000000e+00> : vector<2x128xf32>
    %498 = tpu.matmul %273, %11, %cst_254 {dimension_numbers = #tpu.dot_dimension_numbers<[1], [0], [0], [1], [0, 0, 1, 1], [], []>} : vector<2x144xbf16>, vector<144x128xbf16>, vector<2x128xf32> -> vector<2x128xf32>
    %cst_255 = arith.constant dense<0.000000e+00> : vector<2x128xf32>
    %499 = tpu.matmul %301, %13, %cst_255 {dimension_numbers = #tpu.dot_dimension_numbers<[1], [0], [0], [1], [0, 0, 1, 1], [], []>} : vector<2x144xbf16>, vector<144x128xbf16>, vector<2x128xf32> -> vector<2x128xf32>
    %500 = arith.addf %498, %499 : vector<2x128xf32>
    %cst_256 = arith.constant dense<0.000000e+00> : vector<2x128xf32>
    %501 = tpu.matmul %329, %15, %cst_256 {dimension_numbers = #tpu.dot_dimension_numbers<[1], [0], [0], [1], [0, 0, 1, 1], [], []>} : vector<2x144xbf16>, vector<144x128xbf16>, vector<2x128xf32> -> vector<2x128xf32>
    %502 = arith.addf %500, %501 : vector<2x128xf32>
    %cst_257 = arith.constant dense<0.000000e+00> : vector<2x128xf32>
    %503 = tpu.matmul %357, %17, %cst_257 {dimension_numbers = #tpu.dot_dimension_numbers<[1], [0], [0], [1], [0, 0, 1, 1], [], []>} : vector<2x144xbf16>, vector<144x128xbf16>, vector<2x128xf32> -> vector<2x128xf32>
    %504 = arith.addf %502, %503 : vector<2x128xf32>
    %cst_258 = arith.constant dense<0.000000e+00> : vector<2x128xf32>
    %505 = tpu.matmul %385, %19, %cst_258 {dimension_numbers = #tpu.dot_dimension_numbers<[1], [0], [0], [1], [0, 0, 1, 1], [], []>} : vector<2x144xbf16>, vector<144x128xbf16>, vector<2x128xf32> -> vector<2x128xf32>
    %506 = arith.addf %504, %505 : vector<2x128xf32>
    %507 = vector.broadcast %21 : vector<1x128xf32> to vector<2x128xf32>
    %508 = arith.addf %506, %507 : vector<2x128xf32>
    %509 = math.tanh %508 : vector<2x128xf32>
    %cst_259 = arith.constant dense<0.000000e+00> : vector<2x128xf32>
    %510 = tpu.matmul %301, %11, %cst_259 {dimension_numbers = #tpu.dot_dimension_numbers<[1], [0], [0], [1], [0, 0, 1, 1], [], []>} : vector<2x144xbf16>, vector<144x128xbf16>, vector<2x128xf32> -> vector<2x128xf32>
    %cst_260 = arith.constant dense<0.000000e+00> : vector<2x128xf32>
    %511 = tpu.matmul %329, %13, %cst_260 {dimension_numbers = #tpu.dot_dimension_numbers<[1], [0], [0], [1], [0, 0, 1, 1], [], []>} : vector<2x144xbf16>, vector<144x128xbf16>, vector<2x128xf32> -> vector<2x128xf32>
    %512 = arith.addf %510, %511 : vector<2x128xf32>
    %cst_261 = arith.constant dense<0.000000e+00> : vector<2x128xf32>
    %513 = tpu.matmul %357, %15, %cst_261 {dimension_numbers = #tpu.dot_dimension_numbers<[1], [0], [0], [1], [0, 0, 1, 1], [], []>} : vector<2x144xbf16>, vector<144x128xbf16>, vector<2x128xf32> -> vector<2x128xf32>
    %514 = arith.addf %512, %513 : vector<2x128xf32>
    %cst_262 = arith.constant dense<0.000000e+00> : vector<2x128xf32>
    %515 = tpu.matmul %385, %17, %cst_262 {dimension_numbers = #tpu.dot_dimension_numbers<[1], [0], [0], [1], [0, 0, 1, 1], [], []>} : vector<2x144xbf16>, vector<144x128xbf16>, vector<2x128xf32> -> vector<2x128xf32>
    %516 = arith.addf %514, %515 : vector<2x128xf32>
    %cst_263 = arith.constant dense<0.000000e+00> : vector<2x128xf32>
    %517 = tpu.matmul %413, %19, %cst_263 {dimension_numbers = #tpu.dot_dimension_numbers<[1], [0], [0], [1], [0, 0, 1, 1], [], []>} : vector<2x144xbf16>, vector<144x128xbf16>, vector<2x128xf32> -> vector<2x128xf32>
    %518 = arith.addf %516, %517 : vector<2x128xf32>
    %519 = vector.broadcast %21 : vector<1x128xf32> to vector<2x128xf32>
    %520 = arith.addf %518, %519 : vector<2x128xf32>
    %521 = math.tanh %520 : vector<2x128xf32>
    %522 = arith.addf %509, %521 : vector<2x128xf32>
    %cst_264 = arith.constant 5.000000e-01 : f32
    %523 = vector.broadcast %cst_264 : f32 to vector<2x128xf32>
    %524 = arith.mulf %523, %522 : vector<2x128xf32>
    %525 = arith.truncf %524 : vector<2x128xf32> to vector<2x128xbf16>
    %c0_265 = arith.constant 0 : index
    %c0_266 = arith.constant 0 : index
    %c0_267 = arith.constant 0 : index
    %526 = vector.load %arg6[%c0_265, %c0_266, %c0_267] : memref<4x128x128xbf16, #tpu.memory_space<vmem>>, vector<1x128x128xbf16>
    %527 = vector.shape_cast %526 : vector<1x128x128xbf16> to vector<128x128xbf16>
    %cst_268 = arith.constant dense<0.000000e+00> : vector<2x128xf32>
    %528 = tpu.matmul %441, %527, %cst_268 {dimension_numbers = #tpu.dot_dimension_numbers<[1], [0], [0], [1], [0, 0, 1, 1], [], []>} : vector<2x128xbf16>, vector<128x128xbf16>, vector<2x128xf32> -> vector<2x128xf32>
    %c1_269 = arith.constant 1 : index
    %c0_270 = arith.constant 0 : index
    %c0_271 = arith.constant 0 : index
    %529 = vector.load %arg6[%c1_269, %c0_270, %c0_271] : memref<4x128x128xbf16, #tpu.memory_space<vmem>>, vector<1x128x128xbf16>
    %530 = vector.shape_cast %529 : vector<1x128x128xbf16> to vector<128x128xbf16>
    %cst_272 = arith.constant dense<0.000000e+00> : vector<2x128xf32>
    %531 = tpu.matmul %469, %530, %cst_272 {dimension_numbers = #tpu.dot_dimension_numbers<[1], [0], [0], [1], [0, 0, 1, 1], [], []>} : vector<2x128xbf16>, vector<128x128xbf16>, vector<2x128xf32> -> vector<2x128xf32>
    %532 = arith.addf %528, %531 : vector<2x128xf32>
    %c2_273 = arith.constant 2 : index
    %c0_274 = arith.constant 0 : index
    %c0_275 = arith.constant 0 : index
    %533 = vector.load %arg6[%c2_273, %c0_274, %c0_275] : memref<4x128x128xbf16, #tpu.memory_space<vmem>>, vector<1x128x128xbf16>
    %534 = vector.shape_cast %533 : vector<1x128x128xbf16> to vector<128x128xbf16>
    %cst_276 = arith.constant dense<0.000000e+00> : vector<2x128xf32>
    %535 = tpu.matmul %497, %534, %cst_276 {dimension_numbers = #tpu.dot_dimension_numbers<[1], [0], [0], [1], [0, 0, 1, 1], [], []>} : vector<2x128xbf16>, vector<128x128xbf16>, vector<2x128xf32> -> vector<2x128xf32>
    %536 = arith.addf %532, %535 : vector<2x128xf32>
    %c3_277 = arith.constant 3 : index
    %c0_278 = arith.constant 0 : index
    %c0_279 = arith.constant 0 : index
    %537 = vector.load %arg6[%c3_277, %c0_278, %c0_279] : memref<4x128x128xbf16, #tpu.memory_space<vmem>>, vector<1x128x128xbf16>
    %538 = vector.shape_cast %537 : vector<1x128x128xbf16> to vector<128x128xbf16>
    %cst_280 = arith.constant dense<0.000000e+00> : vector<2x128xf32>
    %539 = tpu.matmul %525, %538, %cst_280 {dimension_numbers = #tpu.dot_dimension_numbers<[1], [0], [0], [1], [0, 0, 1, 1], [], []>} : vector<2x128xbf16>, vector<128x128xbf16>, vector<2x128xf32> -> vector<2x128xf32>
    %540 = arith.addf %536, %539 : vector<2x128xf32>
    %c0_281 = arith.constant 0 : index
    %c0_282 = arith.constant 0 : index
    %541 = vector.load %arg7[%c0_281, %c0_282] : memref<1x128xf32, #tpu.memory_space<vmem>>, vector<1x128xf32>
    %542 = vector.broadcast %541 : vector<1x128xf32> to vector<2x128xf32>
    %543 = arith.addf %540, %542 : vector<2x128xf32>
    %544 = math.tanh %543 : vector<2x128xf32>
    %545 = arith.truncf %544 : vector<2x128xf32> to vector<2x128xbf16>
    %c0_283 = arith.constant 0 : index
    %c0_284 = arith.constant 0 : index
    %546 = vector.load %arg8[%c0_283, %c0_284] : memref<128x128xbf16, #tpu.memory_space<vmem>>, vector<128x128xbf16>
    %cst_285 = arith.constant dense<0.000000e+00> : vector<2x128xf32>
    %547 = tpu.matmul %545, %546, %cst_285 {dimension_numbers = #tpu.dot_dimension_numbers<[1], [0], [0], [1], [0, 0, 1, 1], [], []>} : vector<2x128xbf16>, vector<128x128xbf16>, vector<2x128xf32> -> vector<2x128xf32>
    %c0_286 = arith.constant 0 : index
    %c0_287 = arith.constant 0 : index
    %548 = vector.load %arg9[%c0_286, %c0_287] : memref<1x128xf32, #tpu.memory_space<vmem>>, vector<1x128xf32>
    %549 = vector.broadcast %548 : vector<1x128xf32> to vector<2x128xf32>
    %550 = arith.addf %547, %549 : vector<2x128xf32>
    %551 = math.tanh %550 : vector<2x128xf32>
    %552 = arith.truncf %551 : vector<2x128xf32> to vector<2x128xbf16>
    %c0_288 = arith.constant 0 : index
    %c0_289 = arith.constant 0 : index
    %553 = vector.load %arg10[%c0_288, %c0_289] : memref<128x128xbf16, #tpu.memory_space<vmem>>, vector<128x128xbf16>
    %cst_290 = arith.constant dense<0.000000e+00> : vector<2x128xf32>
    %554 = tpu.matmul %552, %553, %cst_290 {dimension_numbers = #tpu.dot_dimension_numbers<[1], [0], [0], [1], [0, 0, 1, 1], [], []>} : vector<2x128xbf16>, vector<128x128xbf16>, vector<2x128xf32> -> vector<2x128xf32>
    %c0_291 = arith.constant 0 : index
    %c0_292 = arith.constant 0 : index
    %555 = vector.load %arg11[%c0_291, %c0_292] : memref<1x128xf32, #tpu.memory_space<vmem>>, vector<1x128xf32>
    %556 = vector.broadcast %555 : vector<1x128xf32> to vector<2x128xf32>
    %557 = arith.addf %554, %556 : vector<2x128xf32>
    %c0_293 = arith.constant 0 : index
    %c0_294 = arith.constant 0 : index
    %558 = vector.load %arg12[%c0_293, %c0_294] : memref<2x128xf32, #tpu.memory_space<vmem>>, vector<2x128xf32>
    tpu.vector_store %arg12[%c0_293, %c0_294], %557 {strides = array<i32>} : memref<2x128xf32, #tpu.memory_space<vmem>>, vector<2x128xf32>,
    return
  }
  func.func @transform_0(%arg0: i32) -> (i32, i32, i32) {
    %c0_i32 = arith.constant 0 : i32
    %c0_i32_0 = arith.constant 0 : i32
    %c0_i32_1 = arith.constant 0 : i32
    return %c0_i32, %arg0, %c0_i32_0 : i32, i32, i32
  }
  func.func @transform_1(%arg0: i32) -> (i32, i32, i32) {
    %c0_i32 = arith.constant 0 : i32
    %c0_i32_0 = arith.constant 0 : i32
    %c0_i32_1 = arith.constant 0 : i32
    %c0_i32_2 = arith.constant 0 : i32
    return %c0_i32, %c0_i32_0, %c0_i32_1 : i32, i32, i32
  }
  func.func @transform_2(%arg0: i32) -> (i32, i32) {
    %c0_i32 = arith.constant 0 : i32
    %c0_i32_0 = arith.constant 0 : i32
    %c0_i32_1 = arith.constant 0 : i32
    return %c0_i32, %c0_i32_0 : i32, i32
  }
  func.func @transform_3(%arg0: i32) -> (i32, i32, i32) {
    %c0_i32 = arith.constant 0 : i32
    %c0_i32_0 = arith.constant 0 : i32
    %c0_i32_1 = arith.constant 0 : i32
    %c0_i32_2 = arith.constant 0 : i32
    return %c0_i32, %c0_i32_0, %c0_i32_1 : i32, i32, i32
  }
  func.func @transform_4(%arg0: i32) -> (i32, i32) {
    %c0_i32 = arith.constant 0 : i32
    %c0_i32_0 = arith.constant 0 : i32
    %c0_i32_1 = arith.constant 0 : i32
    return %c0_i32, %c0_i32_0 : i32, i32
  }
  func.func @transform_5(%arg0: i32) -> (i32, i32, i32) {
    %c0_i32 = arith.constant 0 : i32
    %c0_i32_0 = arith.constant 0 : i32
    %c0_i32_1 = arith.constant 0 : i32
    %c0_i32_2 = arith.constant 0 : i32
    return %c0_i32, %c0_i32_0, %c0_i32_1 : i32, i32, i32
  }
  func.func @transform_6(%arg0: i32) -> (i32, i32) {
    %c0_i32 = arith.constant 0 : i32
    %c0_i32_0 = arith.constant 0 : i32
    %c0_i32_1 = arith.constant 0 : i32
    return %c0_i32, %c0_i32_0 : i32, i32
  }
  func.func @transform_7(%arg0: i32) -> (i32, i32) {
    %c0_i32 = arith.constant 0 : i32
    %c0_i32_0 = arith.constant 0 : i32
    %c0_i32_1 = arith.constant 0 : i32
    return %c0_i32, %c0_i32_0 : i32, i32
  }
  func.func @transform_8(%arg0: i32) -> (i32, i32) {
    %c0_i32 = arith.constant 0 : i32
    %c0_i32_0 = arith.constant 0 : i32
    %c0_i32_1 = arith.constant 0 : i32
    return %c0_i32, %c0_i32_0 : i32, i32
  }
  func.func @transform_9(%arg0: i32) -> (i32, i32) {
    %c0_i32 = arith.constant 0 : i32
    %c0_i32_0 = arith.constant 0 : i32
    %c0_i32_1 = arith.constant 0 : i32
    return %c0_i32, %c0_i32_0 : i32, i32
  }
  func.func @transform_10(%arg0: i32) -> (i32, i32) {
    %c0_i32 = arith.constant 0 : i32
    %c0_i32_0 = arith.constant 0 : i32
    %c0_i32_1 = arith.constant 0 : i32
    return %c0_i32, %c0_i32_0 : i32, i32
  }
  func.func @transform_11(%arg0: i32) -> (i32, i32) {
    %c0_i32 = arith.constant 0 : i32
    %c0_i32_0 = arith.constant 0 : i32
    return %arg0, %c0_i32 : i32, i32
  }
}

</mosaic_0001>

<llo_original>
// kernel: lenet_forward.1
$region0: #{lenet_forward.1}
  #allocation0 [shape = 'u32[]', space=smem, size = 0x4, offset = 0x4, fixed_abs, tag = 'smem constant byte address 0x4 - core index']
  #allocation1 [shape = 'u32[72,128]{1,0:T(1,128)}', space=vmem, size = 0x9000, scoped, tag = 'internal scratch']
  %s0 = inlined_call_operand.vmem [shape: bf16[28,2,28], index: 0, kind: input, shape index: {}]
  %s1 = inlined_call_operand.hbm [shape: bf16[5,28,144], index: 1, kind: input, shape index: {}]
  %s2 = inlined_call_operand.vmem [shape: f32[1,144], index: 2, kind: input, shape index: {}]
  %s3 = inlined_call_operand.hbm [shape: bf16[5,144,128], index: 3, kind: input, shape index: {}]
  %s4 = inlined_call_operand.vmem [shape: f32[1,128], index: 4, kind: input, shape index: {}]
  %s5 = inlined_call_operand.hbm [shape: bf16[4,128,128], index: 5, kind: input, shape index: {}]
  %s6 = inlined_call_operand.vmem [shape: f32[1,128], index: 6, kind: input, shape index: {}]
  %s7 = inlined_call_operand.vmem [shape: bf16[128,128], index: 7, kind: input, shape index: {}]
  %s8 = inlined_call_operand.vmem [shape: f32[1,128], index: 8, kind: input, shape index: {}]
  %s9 = inlined_call_operand.hbm [shape: bf16[128,128], index: 9, kind: input, shape index: {}]
  %s10 = inlined_call_operand.vmem [shape: f32[1,128], index: 10, kind: input, shape index: {}]
  %s11 = inlined_call_operand.hbm [shape: f32[2,128], index: 11, kind: output, shape index: {}]
  %s12 = sld [smem:[#allocation0]]
  $region70: #{lenet_forward.1} parent=0
    _
  %s14 = ssub.s32 1, %s12
  %s15 = scalar_select 0, %s14, %s12
  $region1: #{lenet_forward.1} parent=0
    #allocation2 [shape = 'u8[81920]{0}', space=vmem, size = 0x14000, scoped, tag = 'input window, operand 1, single buffered']
    #allocation3 [shape = 's32[1]{0}', space=sflag, size = 0x4, scoped, tag = 'scoped memory for lenet_forward.1']
    #allocation4 [shape = 's32[1]{0}', space=sflag, size = 0x4, scoped, tag = 'scoped memory for lenet_forward.1']
    #allocation5 [shape = 'u8[184320]{0}', space=vmem, size = 0x2d000, scoped, tag = 'input window, operand 3, single buffered']
    #allocation6 [shape = 's32[1]{0}', space=sflag, size = 0x4, scoped, tag = 'scoped memory for lenet_forward.1']
    #allocation7 [shape = 'u8[131072]{0}', space=vmem, size = 0x20000, scoped, tag = 'input window, operand 5, single buffered']
    #allocation8 [shape = 'u8[32768]{0}', space=vmem, size = 0x8000, scoped, tag = 'input window, operand 9, single buffered']
    #allocation9 [shape = 's32[1]{0}', space=sflag, size = 0x4, scoped, tag = 'scoped memory for lenet_forward.1']
    #allocation10 [shape = 'u8[1024]{0}', space=vmem, size = 0x400, scoped, tag = 'output window, operand 0, single buffered']
    %16 = vsyncpa [#allocation3], 0
    %17 = vsyncpa [#allocation6], 0
    %18 = vsyncpa [#allocation9], 0
    %19 = vsyncpa [#allocation4], 0
    // Predicated region
    $region2: #{lenet_forward.1} parent=1 // pred_check
      _
    $region3: #{lenet_forward.1} parent=1 // pred_check_branch
      %21 = sbr.rel (0) target = $region5
    $region4: #{lenet_forward.1} parent=1 // pred_region
      _
    $region5: #{lenet_forward.1} parent=1 // pred_fallthru
      _
    // Predicated region
    $region6: #{lenet_forward.1} parent=1 // pred_check
      _
    $region7: #{lenet_forward.1} parent=1 // pred_check_branch
      %23 = sbr.rel (0) target = $region9
    $region8: #{lenet_forward.1} parent=1 // pred_region
      %25 = vsyncadd [#allocation3], 0
      %s26 = sshll.u32 %s1, 4
      %s27 = int_to_ptr.hbm [resolvable:$true] %s26
      %s28 = sshll.u32 [#allocation2], 4
      %s29 = int_to_ptr.vmem [resolvable:$true] %s28
      %34 = dma.hbm_to_vmem [thread:$0]  %s27, 2560, %s29, [#allocation3], 128, 128, 8
    $region9: #{lenet_forward.1} parent=1 // pred_fallthru
      _
    // Predicated region
    $region10: #{lenet_forward.1} parent=1 // pred_check
      _
    $region11: #{lenet_forward.1} parent=1 // pred_check_branch
      %36 = sbr.rel (0) target = $region13
    $region12: #{lenet_forward.1} parent=1 // pred_region
      _
    $region13: #{lenet_forward.1} parent=1 // pred_fallthru
      _
    // Predicated region
    $region14: #{lenet_forward.1} parent=1 // pred_check
      _
    $region15: #{lenet_forward.1} parent=1 // pred_check_branch
      %38 = sbr.rel (0) target = $region17
    $region16: #{lenet_forward.1} parent=1 // pred_region
      %40 = vsyncadd [#allocation6], 0
      %s41 = sshll.u32 %s3, 4
      %s42 = int_to_ptr.hbm [resolvable:$true] %s41
      %s43 = sshll.u32 [#allocation5], 4
      %s44 = int_to_ptr.vmem [resolvable:$true] %s43
      %49 = dma.hbm_to_vmem [thread:$0]  %s42, 5760, %s44, [#allocation6], 64, 64, 4
    $region17: #{lenet_forward.1} parent=1 // pred_fallthru
      _
    // Predicated region
    $region18: #{lenet_forward.1} parent=1 // pred_check
      _
    $region19: #{lenet_forward.1} parent=1 // pred_check_branch
      %51 = sbr.rel (0) target = $region21
    $region20: #{lenet_forward.1} parent=1 // pred_region
      _
    $region21: #{lenet_forward.1} parent=1 // pred_fallthru
      _
    // Predicated region
    $region22: #{lenet_forward.1} parent=1 // pred_check
      _
    $region23: #{lenet_forward.1} parent=1 // pred_check_branch
      %53 = sbr.rel (0) target = $region25
    $region24: #{lenet_forward.1} parent=1 // pred_region
      %55 = vsyncadd [#allocation6], 0
      %s56 = sshll.u32 %s5, 4
      %s57 = int_to_ptr.hbm [resolvable:$true] %s56
      %s58 = sshll.u32 [#allocation7], 4
      %s59 = int_to_ptr.vmem [resolvable:$true] %s58
      %64 = dma.hbm_to_vmem [thread:$0]  %s57, 4096, %s59, [#allocation6], 64, 64, 4
    $region25: #{lenet_forward.1} parent=1 // pred_fallthru
      _
    // Predicated region
    $region26: #{lenet_forward.1} parent=1 // pred_check
      _
    $region27: #{lenet_forward.1} parent=1 // pred_check_branch
      %66 = sbr.rel (0) target = $region29
    $region28: #{lenet_forward.1} parent=1 // pred_region
      _
    $region29: #{lenet_forward.1} parent=1 // pred_fallthru
      _
    // Predicated region
    $region30: #{lenet_forward.1} parent=1 // pred_check
      _
    $region31: #{lenet_forward.1} parent=1 // pred_check_branch
      %68 = sbr.rel (0) target = $region33
    $region32: #{lenet_forward.1} parent=1 // pred_region
      _
    $region33: #{lenet_forward.1} parent=1 // pred_fallthru
      _
    // Predicated region
    $region34: #{lenet_forward.1} parent=1 // pred_check
      _
    $region35: #{lenet_forward.1} parent=1 // pred_check_branch
      %70 = sbr.rel (0) target = $region37
    $region36: #{lenet_forward.1} parent=1 // pred_region
      _
    $region37: #{lenet_forward.1} parent=1 // pred_fallthru
      _
    // Predicated region
    $region38: #{lenet_forward.1} parent=1 // pred_check
      _
    $region39: #{lenet_forward.1} parent=1 // pred_check_branch
      %72 = sbr.rel (0) target = $region41
    $region40: #{lenet_forward.1} parent=1 // pred_region
      %74 = vsyncadd [#allocation9], 0
      %s75 = sshll.u32 %s9, 4
      %s76 = int_to_ptr.hbm [resolvable:$true] %s75
      %s77 = sshll.u32 [#allocation8], 4
      %s78 = int_to_ptr.vmem [resolvable:$true] %s77
      %83 = dma.hbm_to_vmem [thread:$0]  %s76, 1024, %s78, [#allocation9], 64, 64, 4
    $region41: #{lenet_forward.1} parent=1 // pred_fallthru
      _
    // Predicated region
    $region42: #{lenet_forward.1} parent=1 // pred_check
      _
    $region43: #{lenet_forward.1} parent=1 // pred_check_branch
      %85 = sbr.rel (0) target = $region45
    $region44: #{lenet_forward.1} parent=1 // pred_region
      _
    $region45: #{lenet_forward.1} parent=1 // pred_fallthru
      _
    // Predicated region
    $region46: #{lenet_forward.1} parent=1 // pred_check
      _
    $region47: #{lenet_forward.1} parent=1 // pred_check_branch
      %87 = sbr.rel (0) target = $region49
    $region48: #{lenet_forward.1} parent=1 // pred_region
      %89 = dma.done [#allocation3], 2560
    $region49: #{lenet_forward.1} parent=1 // pred_fallthru
      _
    // Predicated region
    $region50: #{lenet_forward.1} parent=1 // pred_check
      _
    $region51: #{lenet_forward.1} parent=1 // pred_check_branch
      %91 = sbr.rel (0) target = $region53
    $region52: #{lenet_forward.1} parent=1 // pred_region
      %93 = dma.done [#allocation6], 5760
    $region53: #{lenet_forward.1} parent=1 // pred_fallthru
      _
    // Predicated region
    $region54: #{lenet_forward.1} parent=1 // pred_check
      _
    $region55: #{lenet_forward.1} parent=1 // pred_check_branch
      %95 = sbr.rel (0) target = $region57
    $region56: #{lenet_forward.1} parent=1 // pred_region
      %97 = dma.done [#allocation6], 4096
    $region57: #{lenet_forward.1} parent=1 // pred_fallthru
      _
    // Predicated region
    $region58: #{lenet_forward.1} parent=1 // pred_check
      _
    $region59: #{lenet_forward.1} parent=1 // pred_check_branch
      %99 = sbr.rel (0) target = $region61
    $region60: #{lenet_forward.1} parent=1 // pred_region
      %101 = dma.done [#allocation9], 1024
    $region61: #{lenet_forward.1} parent=1 // pred_fallthru
      _
    %v103 = vld [vmem:[#allocation2] sm:$0xff]
    %v104 = vld [vmem:[#allocation2 + $0x8] sm:$0xff]
    %v105 = vld [vmem:[#allocation2 + $0x10] sm:$0xff]
    %v106 = vld [vmem:[#allocation2 + $0x18] sm:$0x33]
    %s107 = scalar_lea.vmem [#allocation2], 32
    %v108 = vld [vmem:[%s107] sm:$0xff]
    %v109 = vld [vmem:[%s107 + $0x8] sm:$0xff]
    %v110 = vld [vmem:[%s107 + $0x10] sm:$0xff]
    %v111 = vld [vmem:[%s107 + $0x18] sm:$0x33]
    %s112 = scalar_lea.vmem [#allocation2], 64
    %v113 = vld [vmem:[%s112] sm:$0xff]
    %v114 = vld [vmem:[%s112 + $0x8] sm:$0xff]
    %v115 = vld [vmem:[%s112 + $0x10] sm:$0xff]
    %v116 = vld [vmem:[%s112 + $0x18] sm:$0x33]
    %s117 = scalar_lea.vmem [#allocation2], 96
    %v118 = vld [vmem:[%s117] sm:$0xff]
    %v119 = vld [vmem:[%s117 + $0x8] sm:$0xff]
    %v120 = vld [vmem:[%s117 + $0x10] sm:$0xff]
    %v121 = vld [vmem:[%s117 + $0x18] sm:$0x33]
    %s122 = scalar_lea.vmem [#allocation2], 128
    %v123 = vld [vmem:[%s122] sm:$0xff]
    %v124 = vld [vmem:[%s122 + $0x8] sm:$0xff]
    %v125 = vld [vmem:[%s122 + $0x10] sm:$0xff]
    %v126 = vld [vmem:[%s122 + $0x18] sm:$0x33]
    %v127 = vld [vmem:[#allocation5] sm:$0xf]
    %v128 = vld [vmem:[#allocation5 + $0x4] sm:$0xf]
    %v129 = vld [vmem:[#allocation5 + $0x8] sm:$0xf]
    %v130 = vld [vmem:[#allocation5 + $0xc] sm:$0xf]
    %v131 = vld [vmem:[#allocation5 + $0x10] sm:$0xf]
    %v132 = vld [vmem:[#allocation5 + $0x14] sm:$0xf]
    %v133 = vld [vmem:[#allocation5 + $0x18] sm:$0xf]
    %v134 = vld [vmem:[#allocation5 + $0x1c] sm:$0xf]
    %v135 = vld [vmem:[#allocation5 + $0x20] sm:$0xf]
    %v136 = vld [vmem:[#allocation5 + $0x24] sm:$0xf]
    %v137 = vld [vmem:[#allocation5 + $0x28] sm:$0xf]
    %v138 = vld [vmem:[#allocation5 + $0x2c] sm:$0xf]
    %v139 = vld [vmem:[#allocation5 + $0x30] sm:$0xf]
    %v140 = vld [vmem:[#allocation5 + $0x34] sm:$0xf]
    %v141 = vld [vmem:[#allocation5 + $0x38] sm:$0xf]
    %v142 = vld [vmem:[#allocation5 + $0x3c] sm:$0xf]
    %v143 = vld [vmem:[#allocation5 + $0x40] sm:$0xf]
    %v144 = vld [vmem:[#allocation5 + $0x44] sm:$0xf]
    %s145 = scalar_lea.vmem [#allocation5], 72
    %v146 = vld [vmem:[%s145] sm:$0xf]
    %v147 = vld [vmem:[%s145 + $0x4] sm:$0xf]
    %v148 = vld [vmem:[%s145 + $0x8] sm:$0xf]
    %v149 = vld [vmem:[%s145 + $0xc] sm:$0xf]
    %v150 = vld [vmem:[%s145 + $0x10] sm:$0xf]
    %v151 = vld [vmem:[%s145 + $0x14] sm:$0xf]
    %v152 = vld [vmem:[%s145 + $0x18] sm:$0xf]
    %v153 = vld [vmem:[%s145 + $0x1c] sm:$0xf]
    %v154 = vld [vmem:[%s145 + $0x20] sm:$0xf]
    %v155 = vld [vmem:[%s145 + $0x24] sm:$0xf]
    %v156 = vld [vmem:[%s145 + $0x28] sm:$0xf]
    %v157 = vld [vmem:[%s145 + $0x2c] sm:$0xf]
    %v158 = vld [vmem:[%s145 + $0x30] sm:$0xf]
    %v159 = vld [vmem:[%s145 + $0x34] sm:$0xf]
    %v160 = vld [vmem:[%s145 + $0x38] sm:$0xf]
    %v161 = vld [vmem:[%s145 + $0x3c] sm:$0xf]
    %v162 = vld [vmem:[%s145 + $0x40] sm:$0xf]
    %v163 = vld [vmem:[%s145 + $0x44] sm:$0xf]
    %s164 = scalar_lea.vmem [#allocation5], 144
    %v165 = vld [vmem:[%s164] sm:$0xf]
    %v166 = vld [vmem:[%s164 + $0x4] sm:$0xf]
    %v167 = vld [vmem:[%s164 + $0x8] sm:$0xf]
    %v168 = vld [vmem:[%s164 + $0xc] sm:$0xf]
    %v169 = vld [vmem:[%s164 + $0x10] sm:$0xf]
    %v170 = vld [vmem:[%s164 + $0x14] sm:$0xf]
    %v171 = vld [vmem:[%s164 + $0x18] sm:$0xf]
    %v172 = vld [vmem:[%s164 + $0x1c] sm:$0xf]
    %v173 = vld [vmem:[%s164 + $0x20] sm:$0xf]
    %v174 = vld [vmem:[%s164 + $0x24] sm:$0xf]
    %v175 = vld [vmem:[%s164 + $0x28] sm:$0xf]
    %v176 = vld [vmem:[%s164 + $0x2c] sm:$0xf]
    %v177 = vld [vmem:[%s164 + $0x30] sm:$0xf]
    %v178 = vld [vmem:[%s164 + $0x34] sm:$0xf]
    %v179 = vld [vmem:[%s164 + $0x38] sm:$0xf]
    %v180 = vld [vmem:[%s164 + $0x3c] sm:$0xf]
    %v181 = vld [vmem:[%s164 + $0x40] sm:$0xf]
    %v182 = vld [vmem:[%s164 + $0x44] sm:$0xf]
    %s183 = scalar_lea.vmem [#allocation5], 216
    %v184 = vld [vmem:[%s183] sm:$0xf]
    %v185 = vld [vmem:[%s183 + $0x4] sm:$0xf]
    %v186 = vld [vmem:[%s183 + $0x8] sm:$0xf]
    %v187 = vld [vmem:[%s183 + $0xc] sm:$0xf]
    %v188 = vld [vmem:[%s183 + $0x10] sm:$0xf]
    %v189 = vld [vmem:[%s183 + $0x14] sm:$0xf]
    %v190 = vld [vmem:[%s183 + $0x18] sm:$0xf]
    %v191 = vld [vmem:[%s183 + $0x1c] sm:$0xf]
    %v192 = vld [vmem:[%s183 + $0x20] sm:$0xf]
    %v193 = vld [vmem:[%s183 + $0x24] sm:$0xf]
    %v194 = vld [vmem:[%s183 + $0x28] sm:$0xf]
    %v195 = vld [vmem:[%s183 + $0x2c] sm:$0xf]
    %v196 = vld [vmem:[%s183 + $0x30] sm:$0xf]
    %v197 = vld [vmem:[%s183 + $0x34] sm:$0xf]
    %v198 = vld [vmem:[%s183 + $0x38] sm:$0xf]
    %v199 = vld [vmem:[%s183 + $0x3c] sm:$0xf]
    %v200 = vld [vmem:[%s183 + $0x40] sm:$0xf]
    %v201 = vld [vmem:[%s183 + $0x44] sm:$0xf]
    %s202 = scalar_lea.vmem [#allocation5], 288
    %v203 = vld [vmem:[%s202] sm:$0xf]
    %v204 = vld [vmem:[%s202 + $0x4] sm:$0xf]
    %v205 = vld [vmem:[%s202 + $0x8] sm:$0xf]
    %v206 = vld [vmem:[%s202 + $0xc] sm:$0xf]
    %v207 = vld [vmem:[%s202 + $0x10] sm:$0xf]
    %v208 = vld [vmem:[%s202 + $0x14] sm:$0xf]
    %v209 = vld [vmem:[%s202 + $0x18] sm:$0xf]
    %v210 = vld [vmem:[%s202 + $0x1c] sm:$0xf]
    %v211 = vld [vmem:[%s202 + $0x20] sm:$0xf]
    %v212 = vld [vmem:[%s202 + $0x24] sm:$0xf]
    %v213 = vld [vmem:[%s202 + $0x28] sm:$0xf]
    %v214 = vld [vmem:[%s202 + $0x2c] sm:$0xf]
    %v215 = vld [vmem:[%s202 + $0x30] sm:$0xf]
    %v216 = vld [vmem:[%s202 + $0x34] sm:$0xf]
    %v217 = vld [vmem:[%s202 + $0x38] sm:$0xf]
    %v218 = vld [vmem:[%s202 + $0x3c] sm:$0xf]
    %v219 = vld [vmem:[%s202 + $0x40] sm:$0xf]
    %v220 = vld [vmem:[%s202 + $0x44] sm:$0xf]
    %v221 = vld [vmem:[%s2] sm:$0x3]
    %v222 = vld [vmem:[%s4] sm:$0x1]
    %v223 = vld [vmem:[%s0] sm:$0x1]
    %s224 = scalar_lea.vmem %s0, 1
    %v225 = vld [vmem:[%s224] sm:$0x1]
    %s226 = scalar_lea.vmem %s0, 2
    %v227 = vld [vmem:[%s226] sm:$0x1]
    %s228 = scalar_lea.vmem %s0, 3
    %v229 = vld [vmem:[%s228] sm:$0x1]
    %s230 = scalar_lea.vmem %s0, 4
    %v231 = vld [vmem:[%s230] sm:$0x1]
    %s232 = scalar_lea.vmem %s0, 5
    %v233 = vld [vmem:[%s232] sm:$0x1]
    %s234 = scalar_lea.vmem %s0, 6
    %v235 = vld [vmem:[%s234] sm:$0x1]
    %s236 = scalar_lea.vmem %s0, 7
    %v237 = vld [vmem:[%s236] sm:$0x1]
    %s238 = scalar_lea.vmem %s0, 8
    %v239 = vld [vmem:[%s238] sm:$0x1]
    %s240 = scalar_lea.vmem %s0, 9
    %v241 = vld [vmem:[%s240] sm:$0x1]
    %s242 = scalar_lea.vmem %s0, 10
    %v243 = vld [vmem:[%s242] sm:$0x1]
    %s244 = scalar_lea.vmem %s0, 11
    %v245 = vld [vmem:[%s244] sm:$0x1]
    %s246 = scalar_lea.vmem %s0, 12
    %v247 = vld [vmem:[%s246] sm:$0x1]
    %s248 = scalar_lea.vmem %s0, 13
    %v249 = vld [vmem:[%s248] sm:$0x1]
    %s250 = scalar_lea.vmem %s0, 14
    %v251 = vld [vmem:[%s250] sm:$0x1]
    %s252 = scalar_lea.vmem %s0, 15
    %v253 = vld [vmem:[%s252] sm:$0x1]
    %s254 = scalar_lea.vmem %s0, 16
    %v255 = vld [vmem:[%s254] sm:$0x1]
    %s256 = scalar_lea.vmem %s0, 17
    %v257 = vld [vmem:[%s256] sm:$0x1]
    %s258 = scalar_lea.vmem %s0, 18
    %v259 = vld [vmem:[%s258] sm:$0x1]
    %s260 = scalar_lea.vmem %s0, 19
    %v261 = vld [vmem:[%s260] sm:$0x1]
    %s262 = scalar_lea.vmem %s0, 20
    %v263 = vld [vmem:[%s262] sm:$0x1]
    %s264 = scalar_lea.vmem %s0, 21
    %v265 = vld [vmem:[%s264] sm:$0x1]
    %s266 = scalar_lea.vmem %s0, 22
    %v267 = vld [vmem:[%s266] sm:$0x1]
    %s268 = scalar_lea.vmem %s0, 23
    %v269 = vld [vmem:[%s268] sm:$0x1]
    %s270 = scalar_lea.vmem %s0, 24
    %v271 = vld [vmem:[%s270] sm:$0x1]
    %s272 = scalar_lea.vmem %s0, 25
    %v273 = vld [vmem:[%s272] sm:$0x1]
    %s274 = scalar_lea.vmem %s0, 26
    %v275 = vld [vmem:[%s274] sm:$0x1]
    %s276 = scalar_lea.vmem %s0, 27
    %v277 = vld [vmem:[%s276] sm:$0x1]
    %v282 = vunpack.c.l.b16 %v108
    %v283 = vunpack.c.h.b16 %v108
    %v284 = vunpack.c.l.b16 %v109
    %v285 = vunpack.c.h.b16 %v109
    %v286 = vunpack.c.l.b16 %v110
    %v287 = vunpack.c.h.b16 %v110
    %v288 = vunpack.c.l.b16 %v111
    %v289 = vunpack.c.h.b16 %v111
    %v290 = vpack.c.b16 %v284, %v282
    %v291 = vpack.c.b16 %v285, %v283
    %v292 = vpack.c.b16 %v288, %v286
    %v293 = vpack.c.b16 %v289, %v287
    %vm296 = vcmask 228352
    %v298 = vsel %vm296, %v225, 0
    %vm300 = vcmask 1045504
    %v302 = vsel %vm300, %v292, 0
    %v305 = vsel %vm300, %v293, 0
    %307 = vmatpush.bf16.msra.mxu0 0
    %308 = vmatpush.bf16.msra.mxu0 0
    %309 = vmatpush.bf16.msra.mxu0 0
    %310 = vmatpush.bf16.msra.mxu0 0
    %311 = vmatpush.bf16.msra.mxu0 0
    %312 = vmatpush.bf16.msra.mxu0 0
    %313 = vmatpush.bf16.msra.mxu0 %v302
    %314 = vmatpush.bf16.msra.mxu0 %v290
    %315 = vmatmul.bf16.gmra.mxu0 %v298
    %v316 = vpop.f32.mrf.mxu0
    %v317 = vadd.f32 0.0, %v316
    %v318 = vpop.f32.mrf.mxu0
    %319 = vdwg.mxu0
    %320 = vmatpush.bf16.msra.mxu0 0
    %321 = vmatpush.bf16.msra.mxu0 0
    %322 = vmatpush.bf16.msra.mxu0 0
    %323 = vmatpush.bf16.msra.mxu0 0
    %324 = vmatpush.bf16.msra.mxu0 0
    %325 = vmatpush.bf16.msra.mxu0 0
    %326 = vmatpush.bf16.msra.mxu0 %v305
    %327 = vmatpush.bf16.msra.mxu0 %v291
    %328 = vmatmul.bf16.gmra.mxu0 %v298
    %v329 = vpop.f32.mrf.mxu0
    %v330 = vadd.f32 0.0, %v329
    %v331 = vpop.f32.mrf.mxu0
    %332 = vdwg.mxu0
    %v337 = vunpack.c.l.b16 %v103
    %v338 = vunpack.c.h.b16 %v103
    %v339 = vunpack.c.l.b16 %v104
    %v340 = vunpack.c.h.b16 %v104
    %v341 = vunpack.c.l.b16 %v105
    %v342 = vunpack.c.h.b16 %v105
    %v343 = vunpack.c.l.b16 %v106
    %v344 = vunpack.c.h.b16 %v106
    %v345 = vpack.c.b16 %v339, %v337
    %v346 = vpack.c.b16 %v340, %v338
    %v347 = vpack.c.b16 %v343, %v341
    %v348 = vpack.c.b16 %v344, %v342
    %v352 = vsel %vm296, %v223, 0
    %v355 = vsel %vm300, %v347, 0
    %v358 = vsel %vm300, %v348, 0
    %360 = vmatpush.bf16.msra.mxu0 0
    %361 = vmatpush.bf16.msra.mxu0 0
    %362 = vmatpush.bf16.msra.mxu0 0
    %363 = vmatpush.bf16.msra.mxu0 0
    %364 = vmatpush.bf16.msra.mxu0 0
    %365 = vmatpush.bf16.msra.mxu0 0
    %366 = vmatpush.bf16.msra.mxu0 %v355
    %367 = vmatpush.bf16.msra.mxu0 %v345
    %368 = vmatmul.bf16.gmra.mxu0 %v352
    %v369 = vpop.f32.mrf.mxu0
    %v370 = vadd.f32 %v317, %v369
    %v371 = vpop.f32.mrf.mxu0
    %372 = vdwg.mxu0
    %373 = vmatpush.bf16.msra.mxu0 0
    %374 = vmatpush.bf16.msra.mxu0 0
    %375 = vmatpush.bf16.msra.mxu0 0
    %376 = vmatpush.bf16.msra.mxu0 0
    %377 = vmatpush.bf16.msra.mxu0 0
    %378 = vmatpush.bf16.msra.mxu0 0
    %379 = vmatpush.bf16.msra.mxu0 %v358
    %380 = vmatpush.bf16.msra.mxu0 %v346
    %381 = vmatmul.bf16.gmra.mxu0 %v352
    %v382 = vpop.f32.mrf.mxu0
    %v383 = vadd.f32 %v330, %v382
    %v384 = vpop.f32.mrf.mxu0
    %385 = vdwg.mxu0
    %v390 = vunpack.c.l.b16 %v113
    %v391 = vunpack.c.h.b16 %v113
    %v392 = vunpack.c.l.b16 %v114
    %v393 = vunpack.c.h.b16 %v114
    %v394 = vunpack.c.l.b16 %v115
    %v395 = vunpack.c.h.b16 %v115
    %v396 = vunpack.c.l.b16 %v116
    %v397 = vunpack.c.h.b16 %v116
    %v398 = vpack.c.b16 %v392, %v390
    %v399 = vpack.c.b16 %v393, %v391
    %v400 = vpack.c.b16 %v396, %v394
    %v401 = vpack.c.b16 %v397, %v395
    %v405 = vsel %vm296, %v227, 0
    %v408 = vsel %vm300, %v400, 0
    %v411 = vsel %vm300, %v401, 0
    %413 = vmatpush.bf16.msra.mxu0 0
    %414 = vmatpush.bf16.msra.mxu0 0
    %415 = vmatpush.bf16.msra.mxu0 0
    %416 = vmatpush.bf16.msra.mxu0 0
    %417 = vmatpush.bf16.msra.mxu0 0
    %418 = vmatpush.bf16.msra.mxu0 0
    %419 = vmatpush.bf16.msra.mxu0 %v408
    %420 = vmatpush.bf16.msra.mxu0 %v398
    %421 = vmatmul.bf16.gmra.mxu0 %v405
    %v422 = vpop.f32.mrf.mxu0
    %v423 = vadd.f32 0.0, %v422
    %v424 = vpop.f32.mrf.mxu0
    %425 = vdwg.mxu0
    %426 = vmatpush.bf16.msra.mxu0 0
    %427 = vmatpush.bf16.msra.mxu0 0
    %428 = vmatpush.bf16.msra.mxu0 0
    %429 = vmatpush.bf16.msra.mxu0 0
    %430 = vmatpush.bf16.msra.mxu0 0
    %431 = vmatpush.bf16.msra.mxu0 0
    %432 = vmatpush.bf16.msra.mxu0 %v411
    %433 = vmatpush.bf16.msra.mxu0 %v399
    %434 = vmatmul.bf16.gmra.mxu0 %v405
    %v435 = vpop.f32.mrf.mxu0
    %v436 = vadd.f32 0.0, %v435
    %v437 = vpop.f32.mrf.mxu0
    %438 = vdwg.mxu0
    %v439 = vadd.f32 %v370, %v423
    %v440 = vadd.f32 %v383, %v436
    %v445 = vunpack.c.l.b16 %v118
    %v446 = vunpack.c.h.b16 %v118
    %v447 = vunpack.c.l.b16 %v119
    %v448 = vunpack.c.h.b16 %v119
    %v449 = vunpack.c.l.b16 %v120
    %v450 = vunpack.c.h.b16 %v120
    %v451 = vunpack.c.l.b16 %v121
    %v452 = vunpack.c.h.b16 %v121
    %v453 = vpack.c.b16 %v447, %v445
    %v454 = vpack.c.b16 %v448, %v446
    %v455 = vpack.c.b16 %v451, %v449
    %v456 = vpack.c.b16 %v452, %v450
    %v460 = vsel %vm296, %v229, 0
    %v463 = vsel %vm300, %v455, 0
    %v466 = vsel %vm300, %v456, 0
    %468 = vmatpush.bf16.msra.mxu0 0
    %469 = vmatpush.bf16.msra.mxu0 0
    %470 = vmatpush.bf16.msra.mxu0 0
    %471 = vmatpush.bf16.msra.mxu0 0
    %472 = vmatpush.bf16.msra.mxu0 0
    %473 = vmatpush.bf16.msra.mxu0 0
    %474 = vmatpush.bf16.msra.mxu0 %v463
    %475 = vmatpush.bf16.msra.mxu0 %v453
    %476 = vmatmul.bf16.gmra.mxu0 %v460
    %v477 = vpop.f32.mrf.mxu0
    %v478 = vadd.f32 0.0, %v477
    %v479 = vpop.f32.mrf.mxu0
    %480 = vdwg.mxu0
    %481 = vmatpush.bf16.msra.mxu0 0
    %482 = vmatpush.bf16.msra.mxu0 0
    %483 = vmatpush.bf16.msra.mxu0 0
    %484 = vmatpush.bf16.msra.mxu0 0
    %485 = vmatpush.bf16.msra.mxu0 0
    %486 = vmatpush.bf16.msra.mxu0 0
    %487 = vmatpush.bf16.msra.mxu0 %v466
    %488 = vmatpush.bf16.msra.mxu0 %v454
    %489 = vmatmul.bf16.gmra.mxu0 %v460
    %v490 = vpop.f32.mrf.mxu0
    %v491 = vadd.f32 0.0, %v490
    %v492 = vpop.f32.mrf.mxu0
    %493 = vdwg.mxu0
    %v494 = vadd.f32 %v439, %v478
    %v495 = vadd.f32 %v440, %v491
    %v500 = vunpack.c.l.b16 %v123
    %v501 = vunpack.c.h.b16 %v123
    %v502 = vunpack.c.l.b16 %v124
    %v503 = vunpack.c.h.b16 %v124
    %v504 = vunpack.c.l.b16 %v125
    %v505 = vunpack.c.h.b16 %v125
    %v506 = vunpack.c.l.b16 %v126
    %v507 = vunpack.c.h.b16 %v126
    %v508 = vpack.c.b16 %v502, %v500
    %v509 = vpack.c.b16 %v503, %v501
    %v510 = vpack.c.b16 %v506, %v504
    %v511 = vpack.c.b16 %v507, %v505
    %v515 = vsel %vm296, %v231, 0
    %v518 = vsel %vm300, %v510, 0
    %v521 = vsel %vm300, %v511, 0
    %523 = vmatpush.bf16.msra.mxu0 0
    %524 = vmatpush.bf16.msra.mxu0 0
    %525 = vmatpush.bf16.msra.mxu0 0
    %526 = vmatpush.bf16.msra.mxu0 0
    %527 = vmatpush.bf16.msra.mxu0 0
    %528 = vmatpush.bf16.msra.mxu0 0
    %529 = vmatpush.bf16.msra.mxu0 %v518
    %530 = vmatpush.bf16.msra.mxu0 %v508
    %531 = vmatmul.bf16.gmra.mxu0 %v515
    %v532 = vpop.f32.mrf.mxu0
    %v533 = vadd.f32 0.0, %v532
    %v534 = vpop.f32.mrf.mxu0
    %535 = vdwg.mxu0
    %536 = vmatpush.bf16.msra.mxu0 0
    %537 = vmatpush.bf16.msra.mxu0 0
    %538 = vmatpush.bf16.msra.mxu0 0
    %539 = vmatpush.bf16.msra.mxu0 0
    %540 = vmatpush.bf16.msra.mxu0 0
    %541 = vmatpush.bf16.msra.mxu0 0
    %542 = vmatpush.bf16.msra.mxu0 %v521
    %543 = vmatpush.bf16.msra.mxu0 %v509
    %544 = vmatmul.bf16.gmra.mxu0 %v515
    %v545 = vpop.f32.mrf.mxu0
    %v546 = vadd.f32 0.0, %v545
    %v547 = vpop.f32.mrf.mxu0
    %548 = vdwg.mxu0
    %v549 = vadd.f32 %v494, %v533
    %v550 = vadd.f32 %v495, %v546
    %v552 = vperm.slane %v221, 0
    %v553 = vperm.slane %v221, 1
    %v556 = vadd.f32 %v549, %v552
    %v557 = vadd.f32 %v550, %v553
    %v558 = vtanh.pop %v556
    %v559 = vtanh.pop %v557
    %560 = vmatpush.bf16.msra.mxu0 0
    %561 = vmatpush.bf16.msra.mxu0 0
    %562 = vmatpush.bf16.msra.mxu0 0
    %563 = vmatpush.bf16.msra.mxu0 0
    %564 = vmatpush.bf16.msra.mxu0 0
    %565 = vmatpush.bf16.msra.mxu0 0
    %566 = vmatpush.bf16.msra.mxu0 %v302
    %567 = vmatpush.bf16.msra.mxu0 %v290
    %568 = vmatmul.bf16.gmra.mxu0 %v405
    %v569 = vpop.f32.mrf.mxu0
    %v570 = vadd.f32 0.0, %v569
    %v571 = vpop.f32.mrf.mxu0
    %572 = vdwg.mxu0
    %573 = vmatpush.bf16.msra.mxu0 0
    %574 = vmatpush.bf16.msra.mxu0 0
    %575 = vmatpush.bf16.msra.mxu0 0
    %576 = vmatpush.bf16.msra.mxu0 0
    %577 = vmatpush.bf16.msra.mxu0 0
    %578 = vmatpush.bf16.msra.mxu0 0
    %579 = vmatpush.bf16.msra.mxu0 %v305
    %580 = vmatpush.bf16.msra.mxu0 %v291
    %581 = vmatmul.bf16.gmra.mxu0 %v405
    %v582 = vpop.f32.mrf.mxu0
    %v583 = vadd.f32 0.0, %v582
    %v584 = vpop.f32.mrf.mxu0
    %585 = vdwg.mxu0
    %586 = vmatpush.bf16.msra.mxu0 0
    %587 = vmatpush.bf16.msra.mxu0 0
    %588 = vmatpush.bf16.msra.mxu0 0
    %589 = vmatpush.bf16.msra.mxu0 0
    %590 = vmatpush.bf16.msra.mxu0 0
    %591 = vmatpush.bf16.msra.mxu0 0
    %592 = vmatpush.bf16.msra.mxu0 %v355
    %593 = vmatpush.bf16.msra.mxu0 %v345
    %594 = vmatmul.bf16.gmra.mxu0 %v298
    %v595 = vpop.f32.mrf.mxu0
    %v596 = vadd.f32 %v570, %v595
    %v597 = vpop.f32.mrf.mxu0
    %598 = vdwg.mxu0
    %599 = vmatpush.bf16.msra.mxu0 0
    %600 = vmatpush.bf16.msra.mxu0 0
    %601 = vmatpush.bf16.msra.mxu0 0
    %602 = vmatpush.bf16.msra.mxu0 0
    %603 = vmatpush.bf16.msra.mxu0 0
    %604 = vmatpush.bf16.msra.mxu0 0
    %605 = vmatpush.bf16.msra.mxu0 %v358
    %606 = vmatpush.bf16.msra.mxu0 %v346
    %607 = vmatmul.bf16.gmra.mxu0 %v298
    %v608 = vpop.f32.mrf.mxu0
    %v609 = vadd.f32 %v583, %v608
    %v610 = vpop.f32.mrf.mxu0
    %611 = vdwg.mxu0
    %612 = vmatpush.bf16.msra.mxu0 0
    %613 = vmatpush.bf16.msra.mxu0 0
    %614 = vmatpush.bf16.msra.mxu0 0
    %615 = vmatpush.bf16.msra.mxu0 0
    %616 = vmatpush.bf16.msra.mxu0 0
    %617 = vmatpush.bf16.msra.mxu0 0
    %618 = vmatpush.bf16.msra.mxu0 %v408
    %619 = vmatpush.bf16.msra.mxu0 %v398
    %620 = vmatmul.bf16.gmra.mxu0 %v460
    %v621 = vpop.f32.mrf.mxu0
    %v622 = vadd.f32 0.0, %v621
    %v623 = vpop.f32.mrf.mxu0
    %624 = vdwg.mxu0
    %625 = vmatpush.bf16.msra.mxu0 0
    %626 = vmatpush.bf16.msra.mxu0 0
    %627 = vmatpush.bf16.msra.mxu0 0
    %628 = vmatpush.bf16.msra.mxu0 0
    %629 = vmatpush.bf16.msra.mxu0 0
    %630 = vmatpush.bf16.msra.mxu0 0
    %631 = vmatpush.bf16.msra.mxu0 %v411
    %632 = vmatpush.bf16.msra.mxu0 %v399
    %633 = vmatmul.bf16.gmra.mxu0 %v460
    %v634 = vpop.f32.mrf.mxu0
    %v635 = vadd.f32 0.0, %v634
    %v636 = vpop.f32.mrf.mxu0
    %637 = vdwg.mxu0
    %v638 = vadd.f32 %v596, %v622
    %v639 = vadd.f32 %v609, %v635
    %640 = vmatpush.bf16.msra.mxu0 0
    %641 = vmatpush.bf16.msra.mxu0 0
    %642 = vmatpush.bf16.msra.mxu0 0
    %643 = vmatpush.bf16.msra.mxu0 0
    %644 = vmatpush.bf16.msra.mxu0 0
    %645 = vmatpush.bf16.msra.mxu0 0
    %646 = vmatpush.bf16.msra.mxu0 %v463
    %647 = vmatpush.bf16.msra.mxu0 %v453
    %648 = vmatmul.bf16.gmra.mxu0 %v515
    %v649 = vpop.f32.mrf.mxu0
    %v650 = vadd.f32 0.0, %v649
    %v651 = vpop.f32.mrf.mxu0
    %652 = vdwg.mxu0
    %653 = vmatpush.bf16.msra.mxu0 0
    %654 = vmatpush.bf16.msra.mxu0 0
    %655 = vmatpush.bf16.msra.mxu0 0
    %656 = vmatpush.bf16.msra.mxu0 0
    %657 = vmatpush.bf16.msra.mxu0 0
    %658 = vmatpush.bf16.msra.mxu0 0
    %659 = vmatpush.bf16.msra.mxu0 %v466
    %660 = vmatpush.bf16.msra.mxu0 %v454
    %661 = vmatmul.bf16.gmra.mxu0 %v515
    %v662 = vpop.f32.mrf.mxu0
    %v663 = vadd.f32 0.0, %v662
    %v664 = vpop.f32.mrf.mxu0
    %665 = vdwg.mxu0
    %v666 = vadd.f32 %v638, %v650
    %v667 = vadd.f32 %v639, %v663
    %v669 = vsel %vm296, %v233, 0
    %671 = vmatpush.bf16.msra.mxu0 0
    %672 = vmatpush.bf16.msra.mxu0 0
    %673 = vmatpush.bf16.msra.mxu0 0
    %674 = vmatpush.bf16.msra.mxu0 0
    %675 = vmatpush.bf16.msra.mxu0 0
    %676 = vmatpush.bf16.msra.mxu0 0
    %677 = vmatpush.bf16.msra.mxu0 %v518
    %678 = vmatpush.bf16.msra.mxu0 %v508
    %679 = vmatmul.bf16.gmra.mxu0 %v669
    %v680 = vpop.f32.mrf.mxu0
    %v681 = vadd.f32 0.0, %v680
    %v682 = vpop.f32.mrf.mxu0
    %683 = vdwg.mxu0
    %684 = vmatpush.bf16.msra.mxu0 0
    %685 = vmatpush.bf16.msra.mxu0 0
    %686 = vmatpush.bf16.msra.mxu0 0
    %687 = vmatpush.bf16.msra.mxu0 0
    %688 = vmatpush.bf16.msra.mxu0 0
    %689 = vmatpush.bf16.msra.mxu0 0
    %690 = vmatpush.bf16.msra.mxu0 %v521
    %691 = vmatpush.bf16.msra.mxu0 %v509
    %692 = vmatmul.bf16.gmra.mxu0 %v669
    %v693 = vpop.f32.mrf.mxu0
    %v694 = vadd.f32 0.0, %v693
    %v695 = vpop.f32.mrf.mxu0
    %696 = vdwg.mxu0
    %v697 = vadd.f32 %v666, %v681
    %v698 = vadd.f32 %v667, %v694
    %v699 = vadd.f32 %v697, %v552
    %v700 = vadd.f32 %v698, %v553
    %v701 = vtanh.pop %v699
    %v702 = vtanh.pop %v700
    %v703 = vadd.f32 %v558, %v701
    %v704 = vadd.f32 %v559, %v702
    %v705 = vmul.f32 %v703, 0.5
    %v706 = vmul.f32 %v704, 0.5
    %v707 = vpack.c.bf16 %v705, %v705
    %v708 = vpack.c.bf16 %v706, %v706
    %709 = vmatpush.bf16.msra.mxu0 0
    %710 = vmatpush.bf16.msra.mxu0 0
    %711 = vmatpush.bf16.msra.mxu0 0
    %712 = vmatpush.bf16.msra.mxu0 0
    %713 = vmatpush.bf16.msra.mxu0 0
    %714 = vmatpush.bf16.msra.mxu0 0
    %715 = vmatpush.bf16.msra.mxu0 %v302
    %716 = vmatpush.bf16.msra.mxu0 %v290
    %717 = vmatmul.bf16.gmra.mxu0 %v460
    %v718 = vpop.f32.mrf.mxu0
    %v719 = vadd.f32 0.0, %v718
    %v720 = vpop.f32.mrf.mxu0
    %721 = vdwg.mxu0
    %722 = vmatpush.bf16.msra.mxu0 0
    %723 = vmatpush.bf16.msra.mxu0 0
    %724 = vmatpush.bf16.msra.mxu0 0
    %725 = vmatpush.bf16.msra.mxu0 0
    %726 = vmatpush.bf16.msra.mxu0 0
    %727 = vmatpush.bf16.msra.mxu0 0
    %728 = vmatpush.bf16.msra.mxu0 %v305
    %729 = vmatpush.bf16.msra.mxu0 %v291
    %730 = vmatmul.bf16.gmra.mxu0 %v460
    %v731 = vpop.f32.mrf.mxu0
    %v732 = vadd.f32 0.0, %v731
    %v733 = vpop.f32.mrf.mxu0
    %734 = vdwg.mxu0
    %735 = vmatpush.bf16.msra.mxu0 0
    %736 = vmatpush.bf16.msra.mxu0 0
    %737 = vmatpush.bf16.msra.mxu0 0
    %738 = vmatpush.bf16.msra.mxu0 0
    %739 = vmatpush.bf16.msra.mxu0 0
    %740 = vmatpush.bf16.msra.mxu0 0
    %741 = vmatpush.bf16.msra.mxu0 %v355
    %742 = vmatpush.bf16.msra.mxu0 %v345
    %743 = vmatmul.bf16.gmra.mxu0 %v405
    %v744 = vpop.f32.mrf.mxu0
    %v745 = vadd.f32 %v719, %v744
    %v746 = vpop.f32.mrf.mxu0
    %747 = vdwg.mxu0
    %748 = vmatpush.bf16.msra.mxu0 0
    %749 = vmatpush.bf16.msra.mxu0 0
    %750 = vmatpush.bf16.msra.mxu0 0
    %751 = vmatpush.bf16.msra.mxu0 0
    %752 = vmatpush.bf16.msra.mxu0 0
    %753 = vmatpush.bf16.msra.mxu0 0
    %754 = vmatpush.bf16.msra.mxu0 %v358
    %755 = vmatpush.bf16.msra.mxu0 %v346
    %756 = vmatmul.bf16.gmra.mxu0 %v405
    %v757 = vpop.f32.mrf.mxu0
    %v758 = vadd.f32 %v732, %v757
    %v759 = vpop.f32.mrf.mxu0
    %760 = vdwg.mxu0
    %761 = vmatpush.bf16.msra.mxu0 0
    %762 = vmatpush.bf16.msra.mxu0 0
    %763 = vmatpush.bf16.msra.mxu0 0
    %764 = vmatpush.bf16.msra.mxu0 0
    %765 = vmatpush.bf16.msra.mxu0 0
    %766 = vmatpush.bf16.msra.mxu0 0
    %767 = vmatpush.bf16.msra.mxu0 %v408
    %768 = vmatpush.bf16.msra.mxu0 %v398
    %769 = vmatmul.bf16.gmra.mxu0 %v515
    %v770 = vpop.f32.mrf.mxu0
    %v771 = vadd.f32 0.0, %v770
    %v772 = vpop.f32.mrf.mxu0
    %773 = vdwg.mxu0
    %774 = vmatpush.bf16.msra.mxu0 0
    %775 = vmatpush.bf16.msra.mxu0 0
    %776 = vmatpush.bf16.msra.mxu0 0
    %777 = vmatpush.bf16.msra.mxu0 0
    %778 = vmatpush.bf16.msra.mxu0 0
    %779 = vmatpush.bf16.msra.mxu0 0
    %780 = vmatpush.bf16.msra.mxu0 %v411
    %781 = vmatpush.bf16.msra.mxu0 %v399
    %782 = vmatmul.bf16.gmra.mxu0 %v515
    %v783 = vpop.f32.mrf.mxu0
    %v784 = vadd.f32 0.0, %v783
    %v785 = vpop.f32.mrf.mxu0
    %786 = vdwg.mxu0
    %v787 = vadd.f32 %v745, %v771
    %v788 = vadd.f32 %v758, %v784
    %789 = vmatpush.bf16.msra.mxu0 0
    %790 = vmatpush.bf16.msra.mxu0 0
    %791 = vmatpush.bf16.msra.mxu0 0
    %792 = vmatpush.bf16.msra.mxu0 0
    %793 = vmatpush.bf16.msra.mxu0 0
    %794 = vmatpush.bf16.msra.mxu0 0
    %795 = vmatpush.bf16.msra.mxu0 %v463
    %796 = vmatpush.bf16.msra.mxu0 %v453
    %797 = vmatmul.bf16.gmra.mxu0 %v669
    %v798 = vpop.f32.mrf.mxu0
    %v799 = vadd.f32 0.0, %v798
    %v800 = vpop.f32.mrf.mxu0
    %801 = vdwg.mxu0
    %802 = vmatpush.bf16.msra.mxu0 0
    %803 = vmatpush.bf16.msra.mxu0 0
    %804 = vmatpush.bf16.msra.mxu0 0
    %805 = vmatpush.bf16.msra.mxu0 0
    %806 = vmatpush.bf16.msra.mxu0 0
    %807 = vmatpush.bf16.msra.mxu0 0
    %808 = vmatpush.bf16.msra.mxu0 %v466
    %809 = vmatpush.bf16.msra.mxu0 %v454
    %810 = vmatmul.bf16.gmra.mxu0 %v669
    %v811 = vpop.f32.mrf.mxu0
    %v812 = vadd.f32 0.0, %v811
    %v813 = vpop.f32.mrf.mxu0
    %814 = vdwg.mxu0
    %v815 = vadd.f32 %v787, %v799
    %v816 = vadd.f32 %v788, %v812
    %v818 = vsel %vm296, %v235, 0
    %820 = vmatpush.bf16.msra.mxu0 0
    %821 = vmatpush.bf16.msra.mxu0 0
    %822 = vmatpush.bf16.msra.mxu0 0
    %823 = vmatpush.bf16.msra.mxu0 0
    %824 = vmatpush.bf16.msra.mxu0 0
    %825 = vmatpush.bf16.msra.mxu0 0
    %826 = vmatpush.bf16.msra.mxu0 %v518
    %827 = vmatpush.bf16.msra.mxu0 %v508
    %828 = vmatmul.bf16.gmra.mxu0 %v818
    %v829 = vpop.f32.mrf.mxu0
    %v830 = vadd.f32 0.0, %v829
    %v831 = vpop.f32.mrf.mxu0
    %832 = vdwg.mxu0
    %833 = vmatpush.bf16.msra.mxu0 0
    %834 = vmatpush.bf16.msra.mxu0 0
    %835 = vmatpush.bf16.msra.mxu0 0
    %836 = vmatpush.bf16.msra.mxu0 0
    %837 = vmatpush.bf16.msra.mxu0 0
    %838 = vmatpush.bf16.msra.mxu0 0
    %839 = vmatpush.bf16.msra.mxu0 %v521
    %840 = vmatpush.bf16.msra.mxu0 %v509
    %841 = vmatmul.bf16.gmra.mxu0 %v818
    %v842 = vpop.f32.mrf.mxu0
    %v843 = vadd.f32 0.0, %v842
    %v844 = vpop.f32.mrf.mxu0
    %845 = vdwg.mxu0
    %v846 = vadd.f32 %v815, %v830
    %v847 = vadd.f32 %v816, %v843
    %v848 = vadd.f32 %v846, %v552
    %v849 = vadd.f32 %v847, %v553
    %v850 = vtanh.pop %v848
    %v851 = vtanh.pop %v849
    %852 = vmatpush.bf16.msra.mxu0 0
    %853 = vmatpush.bf16.msra.mxu0 0
    %854 = vmatpush.bf16.msra.mxu0 0
    %855 = vmatpush.bf16.msra.mxu0 0
    %856 = vmatpush.bf16.msra.mxu0 0
    %857 = vmatpush.bf16.msra.mxu0 0
    %858 = vmatpush.bf16.msra.mxu0 %v302
    %859 = vmatpush.bf16.msra.mxu0 %v290
    %860 = vmatmul.bf16.gmra.mxu0 %v515
    %v861 = vpop.f32.mrf.mxu0
    %v862 = vadd.f32 0.0, %v861
    %v863 = vpop.f32.mrf.mxu0
    %864 = vdwg.mxu0
    %865 = vmatpush.bf16.msra.mxu0 0
    %866 = vmatpush.bf16.msra.mxu0 0
    %867 = vmatpush.bf16.msra.mxu0 0
    %868 = vmatpush.bf16.msra.mxu0 0
    %869 = vmatpush.bf16.msra.mxu0 0
    %870 = vmatpush.bf16.msra.mxu0 0
    %871 = vmatpush.bf16.msra.mxu0 %v305
    %872 = vmatpush.bf16.msra.mxu0 %v291
    %873 = vmatmul.bf16.gmra.mxu0 %v515
    %v874 = vpop.f32.mrf.mxu0
    %v875 = vadd.f32 0.0, %v874
    %v876 = vpop.f32.mrf.mxu0
    %877 = vdwg.mxu0
    %878 = vmatpush.bf16.msra.mxu0 0
    %879 = vmatpush.bf16.msra.mxu0 0
    %880 = vmatpush.bf16.msra.mxu0 0
    %881 = vmatpush.bf16.msra.mxu0 0
    %882 = vmatpush.bf16.msra.mxu0 0
    %883 = vmatpush.bf16.msra.mxu0 0
    %884 = vmatpush.bf16.msra.mxu0 %v355
    %885 = vmatpush.bf16.msra.mxu0 %v345
    %886 = vmatmul.bf16.gmra.mxu0 %v460
    %v887 = vpop.f32.mrf.mxu0
    %v888 = vadd.f32 %v862, %v887
    %v889 = vpop.f32.mrf.mxu0
    %890 = vdwg.mxu0
    %891 = vmatpush.bf16.msra.mxu0 0
    %892 = vmatpush.bf16.msra.mxu0 0
    %893 = vmatpush.bf16.msra.mxu0 0
    %894 = vmatpush.bf16.msra.mxu0 0
    %895 = vmatpush.bf16.msra.mxu0 0
    %896 = vmatpush.bf16.msra.mxu0 0
    %897 = vmatpush.bf16.msra.mxu0 %v358
    %898 = vmatpush.bf16.msra.mxu0 %v346
    %899 = vmatmul.bf16.gmra.mxu0 %v460
    %v900 = vpop.f32.mrf.mxu0
    %v901 = vadd.f32 %v875, %v900
    %v902 = vpop.f32.mrf.mxu0
    %903 = vdwg.mxu0
    %904 = vmatpush.bf16.msra.mxu0 0
    %905 = vmatpush.bf16.msra.mxu0 0
    %906 = vmatpush.bf16.msra.mxu0 0
    %907 = vmatpush.bf16.msra.mxu0 0
    %908 = vmatpush.bf16.msra.mxu0 0
    %909 = vmatpush.bf16.msra.mxu0 0
    %910 = vmatpush.bf16.msra.mxu0 %v408
    %911 = vmatpush.bf16.msra.mxu0 %v398
    %912 = vmatmul.bf16.gmra.mxu0 %v669
    %v913 = vpop.f32.mrf.mxu0
    %v914 = vadd.f32 0.0, %v913
    %v915 = vpop.f32.mrf.mxu0
    %916 = vdwg.mxu0
    %917 = vmatpush.bf16.msra.mxu0 0
    %918 = vmatpush.bf16.msra.mxu0 0
    %919 = vmatpush.bf16.msra.mxu0 0
    %920 = vmatpush.bf16.msra.mxu0 0
    %921 = vmatpush.bf16.msra.mxu0 0
    %922 = vmatpush.bf16.msra.mxu0 0
    %923 = vmatpush.bf16.msra.mxu0 %v411
    %924 = vmatpush.bf16.msra.mxu0 %v399
    %925 = vmatmul.bf16.gmra.mxu0 %v669
    %v926 = vpop.f32.mrf.mxu0
    %v927 = vadd.f32 0.0, %v926
    %v928 = vpop.f32.mrf.mxu0
    %929 = vdwg.mxu0
    %v930 = vadd.f32 %v888, %v914
    %v931 = vadd.f32 %v901, %v927
    %932 = vmatpush.bf16.msra.mxu0 0
    %933 = vmatpush.bf16.msra.mxu0 0
    %934 = vmatpush.bf16.msra.mxu0 0
    %935 = vmatpush.bf16.msra.mxu0 0
    %936 = vmatpush.bf16.msra.mxu0 0
    %937 = vmatpush.bf16.msra.mxu0 0
    %938 = vmatpush.bf16.msra.mxu0 %v463
    %939 = vmatpush.bf16.msra.mxu0 %v453
    %940 = vmatmul.bf16.gmra.mxu0 %v818
    %v941 = vpop.f32.mrf.mxu0
    %v942 = vadd.f32 0.0, %v941
    %v943 = vpop.f32.mrf.mxu0
    %944 = vdwg.mxu0
    %945 = vmatpush.bf16.msra.mxu0 0
    %946 = vmatpush.bf16.msra.mxu0 0
    %947 = vmatpush.bf16.msra.mxu0 0
    %948 = vmatpush.bf16.msra.mxu0 0
    %949 = vmatpush.bf16.msra.mxu0 0
    %950 = vmatpush.bf16.msra.mxu0 0
    %951 = vmatpush.bf16.msra.mxu0 %v466
    %952 = vmatpush.bf16.msra.mxu0 %v454
    %953 = vmatmul.bf16.gmra.mxu0 %v818
    %v954 = vpop.f32.mrf.mxu0
    %v955 = vadd.f32 0.0, %v954
    %v956 = vpop.f32.mrf.mxu0
    %957 = vdwg.mxu0
    %v958 = vadd.f32 %v930, %v942
    %v959 = vadd.f32 %v931, %v955
    %v961 = vsel %vm296, %v237, 0
    %963 = vmatpush.bf16.msra.mxu0 0
    %964 = vmatpush.bf16.msra.mxu0 0
    %965 = vmatpush.bf16.msra.mxu0 0
    %966 = vmatpush.bf16.msra.mxu0 0
    %967 = vmatpush.bf16.msra.mxu0 0
    %968 = vmatpush.bf16.msra.mxu0 0
    %969 = vmatpush.bf16.msra.mxu0 %v518
    %970 = vmatpush.bf16.msra.mxu0 %v508
    %971 = vmatmul.bf16.gmra.mxu0 %v961
    %v972 = vpop.f32.mrf.mxu0
    %v973 = vadd.f32 0.0, %v972
    %v974 = vpop.f32.mrf.mxu0
    %975 = vdwg.mxu0
    %976 = vmatpush.bf16.msra.mxu0 0
    %977 = vmatpush.bf16.msra.mxu0 0
    %978 = vmatpush.bf16.msra.mxu0 0
    %979 = vmatpush.bf16.msra.mxu0 0
    %980 = vmatpush.bf16.msra.mxu0 0
    %981 = vmatpush.bf16.msra.mxu0 0
    %982 = vmatpush.bf16.msra.mxu0 %v521
    %983 = vmatpush.bf16.msra.mxu0 %v509
    %984 = vmatmul.bf16.gmra.mxu0 %v961
    %v985 = vpop.f32.mrf.mxu0
    %v986 = vadd.f32 0.0, %v985
    %v987 = vpop.f32.mrf.mxu0
    %988 = vdwg.mxu0
    %v989 = vadd.f32 %v958, %v973
    %v990 = vadd.f32 %v959, %v986
    %v991 = vadd.f32 %v989, %v552
    %v992 = vadd.f32 %v990, %v553
    %v993 = vtanh.pop %v991
    %v994 = vtanh.pop %v992
    %v995 = vadd.f32 %v850, %v993
    %v996 = vadd.f32 %v851, %v994
    %v997 = vmul.f32 %v995, 0.5
    %v998 = vmul.f32 %v996, 0.5
    %v999 = vpack.c.bf16 %v997, %v997
    %v1000 = vpack.c.bf16 %v998, %v998
    %1001 = vmatpush.bf16.msra.mxu0 0
    %1002 = vmatpush.bf16.msra.mxu0 0
    %1003 = vmatpush.bf16.msra.mxu0 0
    %1004 = vmatpush.bf16.msra.mxu0 0
    %1005 = vmatpush.bf16.msra.mxu0 0
    %1006 = vmatpush.bf16.msra.mxu0 0
    %1007 = vmatpush.bf16.msra.mxu0 %v302
    %1008 = vmatpush.bf16.msra.mxu0 %v290
    %1009 = vmatmul.bf16.gmra.mxu0 %v669
    %v1010 = vpop.f32.mrf.mxu0
    %v1011 = vadd.f32 0.0, %v1010
    %v1012 = vpop.f32.mrf.mxu0
    %1013 = vdwg.mxu0
    %1014 = vmatpush.bf16.msra.mxu0 0
    %1015 = vmatpush.bf16.msra.mxu0 0
    %1016 = vmatpush.bf16.msra.mxu0 0
    %1017 = vmatpush.bf16.msra.mxu0 0
    %1018 = vmatpush.bf16.msra.mxu0 0
    %1019 = vmatpush.bf16.msra.mxu0 0
    %1020 = vmatpush.bf16.msra.mxu0 %v305
    %1021 = vmatpush.bf16.msra.mxu0 %v291
    %1022 = vmatmul.bf16.gmra.mxu0 %v669
    %v1023 = vpop.f32.mrf.mxu0
    %v1024 = vadd.f32 0.0, %v1023
    %v1025 = vpop.f32.mrf.mxu0
    %1026 = vdwg.mxu0
    %1027 = vmatpush.bf16.msra.mxu0 0
    %1028 = vmatpush.bf16.msra.mxu0 0
    %1029 = vmatpush.bf16.msra.mxu0 0
    %1030 = vmatpush.bf16.msra.mxu0 0
    %1031 = vmatpush.bf16.msra.mxu0 0
    %1032 = vmatpush.bf16.msra.mxu0 0
    %1033 = vmatpush.bf16.msra.mxu0 %v355
    %1034 = vmatpush.bf16.msra.mxu0 %v345
    %1035 = vmatmul.bf16.gmra.mxu0 %v515
    %v1036 = vpop.f32.mrf.mxu0
    %v1037 = vadd.f32 %v1011, %v1036
    %v1038 = vpop.f32.mrf.mxu0
    %1039 = vdwg.mxu0
    %1040 = vmatpush.bf16.msra.mxu0 0
    %1041 = vmatpush.bf16.msra.mxu0 0
    %1042 = vmatpush.bf16.msra.mxu0 0
    %1043 = vmatpush.bf16.msra.mxu0 0
    %1044 = vmatpush.bf16.msra.mxu0 0
    %1045 = vmatpush.bf16.msra.mxu0 0
    %1046 = vmatpush.bf16.msra.mxu0 %v358
    %1047 = vmatpush.bf16.msra.mxu0 %v346
    %1048 = vmatmul.bf16.gmra.mxu0 %v515
    %v1049 = vpop.f32.mrf.mxu0
    %v1050 = vadd.f32 %v1024, %v1049
    %v1051 = vpop.f32.mrf.mxu0
    %1052 = vdwg.mxu0
    %1053 = vmatpush.bf16.msra.mxu0 0
    %1054 = vmatpush.bf16.msra.mxu0 0
    %1055 = vmatpush.bf16.msra.mxu0 0
    %1056 = vmatpush.bf16.msra.mxu0 0
    %1057 = vmatpush.bf16.msra.mxu0 0
    %1058 = vmatpush.bf16.msra.mxu0 0
    %1059 = vmatpush.bf16.msra.mxu0 %v408
    %1060 = vmatpush.bf16.msra.mxu0 %v398
    %1061 = vmatmul.bf16.gmra.mxu0 %v818
    %v1062 = vpop.f32.mrf.mxu0
    %v1063 = vadd.f32 0.0, %v1062
    %v1064 = vpop.f32.mrf.mxu0
    %1065 = vdwg.mxu0
    %1066 = vmatpush.bf16.msra.mxu0 0
    %1067 = vmatpush.bf16.msra.mxu0 0
    %1068 = vmatpush.bf16.msra.mxu0 0
    %1069 = vmatpush.bf16.msra.mxu0 0
    %1070 = vmatpush.bf16.msra.mxu0 0
    %1071 = vmatpush.bf16.msra.mxu0 0
    %1072 = vmatpush.bf16.msra.mxu0 %v411
    %1073 = vmatpush.bf16.msra.mxu0 %v399
    %1074 = vmatmul.bf16.gmra.mxu0 %v818
    %v1075 = vpop.f32.mrf.mxu0
    %v1076 = vadd.f32 0.0, %v1075
    %v1077 = vpop.f32.mrf.mxu0
    %1078 = vdwg.mxu0
    %v1079 = vadd.f32 %v1037, %v1063
    %v1080 = vadd.f32 %v1050, %v1076
    %1081 = vmatpush.bf16.msra.mxu0 0
    %1082 = vmatpush.bf16.msra.mxu0 0
    %1083 = vmatpush.bf16.msra.mxu0 0
    %1084 = vmatpush.bf16.msra.mxu0 0
    %1085 = vmatpush.bf16.msra.mxu0 0
    %1086 = vmatpush.bf16.msra.mxu0 0
    %1087 = vmatpush.bf16.msra.mxu0 %v463
    %1088 = vmatpush.bf16.msra.mxu0 %v453
    %1089 = vmatmul.bf16.gmra.mxu0 %v961
    %v1090 = vpop.f32.mrf.mxu0
    %v1091 = vadd.f32 0.0, %v1090
    %v1092 = vpop.f32.mrf.mxu0
    %1093 = vdwg.mxu0
    %1094 = vmatpush.bf16.msra.mxu0 0
    %1095 = vmatpush.bf16.msra.mxu0 0
    %1096 = vmatpush.bf16.msra.mxu0 0
    %1097 = vmatpush.bf16.msra.mxu0 0
    %1098 = vmatpush.bf16.msra.mxu0 0
    %1099 = vmatpush.bf16.msra.mxu0 0
    %1100 = vmatpush.bf16.msra.mxu0 %v466
    %1101 = vmatpush.bf16.msra.mxu0 %v454
    %1102 = vmatmul.bf16.gmra.mxu0 %v961
    %v1103 = vpop.f32.mrf.mxu0
    %v1104 = vadd.f32 0.0, %v1103
    %v1105 = vpop.f32.mrf.mxu0
    %1106 = vdwg.mxu0
    %v1107 = vadd.f32 %v1079, %v1091
    %v1108 = vadd.f32 %v1080, %v1104
    %v1110 = vsel %vm296, %v239, 0
    %1112 = vmatpush.bf16.msra.mxu0 0
    %1113 = vmatpush.bf16.msra.mxu0 0
    %1114 = vmatpush.bf16.msra.mxu0 0
    %1115 = vmatpush.bf16.msra.mxu0 0
    %1116 = vmatpush.bf16.msra.mxu0 0
    %1117 = vmatpush.bf16.msra.mxu0 0
    %1118 = vmatpush.bf16.msra.mxu0 %v518
    %1119 = vmatpush.bf16.msra.mxu0 %v508
    %1120 = vmatmul.bf16.gmra.mxu0 %v1110
    %v1121 = vpop.f32.mrf.mxu0
    %v1122 = vadd.f32 0.0, %v1121
    %v1123 = vpop.f32.mrf.mxu0
    %1124 = vdwg.mxu0
    %1125 = vmatpush.bf16.msra.mxu0 0
    %1126 = vmatpush.bf16.msra.mxu0 0
    %1127 = vmatpush.bf16.msra.mxu0 0
    %1128 = vmatpush.bf16.msra.mxu0 0
    %1129 = vmatpush.bf16.msra.mxu0 0
    %1130 = vmatpush.bf16.msra.mxu0 0
    %1131 = vmatpush.bf16.msra.mxu0 %v521
    %1132 = vmatpush.bf16.msra.mxu0 %v509
    %1133 = vmatmul.bf16.gmra.mxu0 %v1110
    %v1134 = vpop.f32.mrf.mxu0
    %v1135 = vadd.f32 0.0, %v1134
    %v1136 = vpop.f32.mrf.mxu0
    %1137 = vdwg.mxu0
    %v1138 = vadd.f32 %v1107, %v1122
    %v1139 = vadd.f32 %v1108, %v1135
    %v1140 = vadd.f32 %v1138, %v552
    %v1141 = vadd.f32 %v1139, %v553
    %v1142 = vtanh.pop %v1140
    %v1143 = vtanh.pop %v1141
    %1144 = vmatpush.bf16.msra.mxu0 0
    %1145 = vmatpush.bf16.msra.mxu0 0
    %1146 = vmatpush.bf16.msra.mxu0 0
    %1147 = vmatpush.bf16.msra.mxu0 0
    %1148 = vmatpush.bf16.msra.mxu0 0
    %1149 = vmatpush.bf16.msra.mxu0 0
    %1150 = vmatpush.bf16.msra.mxu0 %v302
    %1151 = vmatpush.bf16.msra.mxu0 %v290
    %1152 = vmatmul.bf16.gmra.mxu0 %v818
    %v1153 = vpop.f32.mrf.mxu0
    %v1154 = vadd.f32 0.0, %v1153
    %v1155 = vpop.f32.mrf.mxu0
    %1156 = vdwg.mxu0
    %1157 = vmatpush.bf16.msra.mxu0 0
    %1158 = vmatpush.bf16.msra.mxu0 0
    %1159 = vmatpush.bf16.msra.mxu0 0
    %1160 = vmatpush.bf16.msra.mxu0 0
    %1161 = vmatpush.bf16.msra.mxu0 0
    %1162 = vmatpush.bf16.msra.mxu0 0
    %1163 = vmatpush.bf16.msra.mxu0 %v305
    %1164 = vmatpush.bf16.msra.mxu0 %v291
    %1165 = vmatmul.bf16.gmra.mxu0 %v818
    %v1166 = vpop.f32.mrf.mxu0
    %v1167 = vadd.f32 0.0, %v1166
    %v1168 = vpop.f32.mrf.mxu0
    %1169 = vdwg.mxu0
    %1170 = vmatpush.bf16.msra.mxu0 0
    %1171 = vmatpush.bf16.msra.mxu0 0
    %1172 = vmatpush.bf16.msra.mxu0 0
    %1173 = vmatpush.bf16.msra.mxu0 0
    %1174 = vmatpush.bf16.msra.mxu0 0
    %1175 = vmatpush.bf16.msra.mxu0 0
    %1176 = vmatpush.bf16.msra.mxu0 %v355
    %1177 = vmatpush.bf16.msra.mxu0 %v345
    %1178 = vmatmul.bf16.gmra.mxu0 %v669
    %v1179 = vpop.f32.mrf.mxu0
    %v1180 = vadd.f32 %v1154, %v1179
    %v1181 = vpop.f32.mrf.mxu0
    %1182 = vdwg.mxu0
    %1183 = vmatpush.bf16.msra.mxu0 0
    %1184 = vmatpush.bf16.msra.mxu0 0
    %1185 = vmatpush.bf16.msra.mxu0 0
    %1186 = vmatpush.bf16.msra.mxu0 0
    %1187 = vmatpush.bf16.msra.mxu0 0
    %1188 = vmatpush.bf16.msra.mxu0 0
    %1189 = vmatpush.bf16.msra.mxu0 %v358
    %1190 = vmatpush.bf16.msra.mxu0 %v346
    %1191 = vmatmul.bf16.gmra.mxu0 %v669
    %v1192 = vpop.f32.mrf.mxu0
    %v1193 = vadd.f32 %v1167, %v1192
    %v1194 = vpop.f32.mrf.mxu0
    %1195 = vdwg.mxu0
    %1196 = vmatpush.bf16.msra.mxu0 0
    %1197 = vmatpush.bf16.msra.mxu0 0
    %1198 = vmatpush.bf16.msra.mxu0 0
    %1199 = vmatpush.bf16.msra.mxu0 0
    %1200 = vmatpush.bf16.msra.mxu0 0
    %1201 = vmatpush.bf16.msra.mxu0 0
    %1202 = vmatpush.bf16.msra.mxu0 %v408
    %1203 = vmatpush.bf16.msra.mxu0 %v398
    %1204 = vmatmul.bf16.gmra.mxu0 %v961
    %v1205 = vpop.f32.mrf.mxu0
    %v1206 = vadd.f32 0.0, %v1205
    %v1207 = vpop.f32.mrf.mxu0
    %1208 = vdwg.mxu0
    %1209 = vmatpush.bf16.msra.mxu0 0
    %1210 = vmatpush.bf16.msra.mxu0 0
    %1211 = vmatpush.bf16.msra.mxu0 0
    %1212 = vmatpush.bf16.msra.mxu0 0
    %1213 = vmatpush.bf16.msra.mxu0 0
    %1214 = vmatpush.bf16.msra.mxu0 0
    %1215 = vmatpush.bf16.msra.mxu0 %v411
    %1216 = vmatpush.bf16.msra.mxu0 %v399
    %1217 = vmatmul.bf16.gmra.mxu0 %v961
    %v1218 = vpop.f32.mrf.mxu0
    %v1219 = vadd.f32 0.0, %v1218
    %v1220 = vpop.f32.mrf.mxu0
    %1221 = vdwg.mxu0
    %v1222 = vadd.f32 %v1180, %v1206
    %v1223 = vadd.f32 %v1193, %v1219
    %1224 = vmatpush.bf16.msra.mxu0 0
    %1225 = vmatpush.bf16.msra.mxu0 0
    %1226 = vmatpush.bf16.msra.mxu0 0
    %1227 = vmatpush.bf16.msra.mxu0 0
    %1228 = vmatpush.bf16.msra.mxu0 0
    %1229 = vmatpush.bf16.msra.mxu0 0
    %1230 = vmatpush.bf16.msra.mxu0 %v463
    %1231 = vmatpush.bf16.msra.mxu0 %v453
    %1232 = vmatmul.bf16.gmra.mxu0 %v1110
    %v1233 = vpop.f32.mrf.mxu0
    %v1234 = vadd.f32 0.0, %v1233
    %v1235 = vpop.f32.mrf.mxu0
    %1236 = vdwg.mxu0
    %1237 = vmatpush.bf16.msra.mxu0 0
    %1238 = vmatpush.bf16.msra.mxu0 0
    %1239 = vmatpush.bf16.msra.mxu0 0
    %1240 = vmatpush.bf16.msra.mxu0 0
    %1241 = vmatpush.bf16.msra.mxu0 0
    %1242 = vmatpush.bf16.msra.mxu0 0
    %1243 = vmatpush.bf16.msra.mxu0 %v466
    %1244 = vmatpush.bf16.msra.mxu0 %v454
    %1245 = vmatmul.bf16.gmra.mxu0 %v1110
    %v1246 = vpop.f32.mrf.mxu0
    %v1247 = vadd.f32 0.0, %v1246
    %v1248 = vpop.f32.mrf.mxu0
    %1249 = vdwg.mxu0
    %v1250 = vadd.f32 %v1222, %v1234
    %v1251 = vadd.f32 %v1223, %v1247
    %v1253 = vsel %vm296, %v241, 0
    %1255 = vmatpush.bf16.msra.mxu0 0
    %1256 = vmatpush.bf16.msra.mxu0 0
    %1257 = vmatpush.bf16.msra.mxu0 0
    %1258 = vmatpush.bf16.msra.mxu0 0
    %1259 = vmatpush.bf16.msra.mxu0 0
    %1260 = vmatpush.bf16.msra.mxu0 0
    %1261 = vmatpush.bf16.msra.mxu0 %v518
    %1262 = vmatpush.bf16.msra.mxu0 %v508
    %1263 = vmatmul.bf16.gmra.mxu0 %v1253
    %v1264 = vpop.f32.mrf.mxu0
    %v1265 = vadd.f32 0.0, %v1264
    %v1266 = vpop.f32.mrf.mxu0
    %1267 = vdwg.mxu0
    %1268 = vmatpush.bf16.msra.mxu0 0
    %1269 = vmatpush.bf16.msra.mxu0 0
    %1270 = vmatpush.bf16.msra.mxu0 0
    %1271 = vmatpush.bf16.msra.mxu0 0
    %1272 = vmatpush.bf16.msra.mxu0 0
    %1273 = vmatpush.bf16.msra.mxu0 0
    %1274 = vmatpush.bf16.msra.mxu0 %v521
    %1275 = vmatpush.bf16.msra.mxu0 %v509
    %1276 = vmatmul.bf16.gmra.mxu0 %v1253
    %v1277 = vpop.f32.mrf.mxu0
    %v1278 = vadd.f32 0.0, %v1277
    %v1279 = vpop.f32.mrf.mxu0
    %1280 = vdwg.mxu0
    %v1281 = vadd.f32 %v1250, %v1265
    %v1282 = vadd.f32 %v1251, %v1278
    %v1283 = vadd.f32 %v1281, %v552
    %v1284 = vadd.f32 %v1282, %v553
    %v1285 = vtanh.pop %v1283
    %v1286 = vtanh.pop %v1284
    %v1287 = vadd.f32 %v1142, %v1285
    %v1288 = vadd.f32 %v1143, %v1286
    %v1289 = vmul.f32 %v1287, 0.5
    %v1290 = vmul.f32 %v1288, 0.5
    %v1291 = vpack.c.bf16 %v1289, %v1289
    %v1292 = vpack.c.bf16 %v1290, %v1290
    %1293 = vmatpush.bf16.msra.mxu0 0
    %1294 = vmatpush.bf16.msra.mxu0 0
    %1295 = vmatpush.bf16.msra.mxu0 0
    %1296 = vmatpush.bf16.msra.mxu0 0
    %1297 = vmatpush.bf16.msra.mxu0 0
    %1298 = vmatpush.bf16.msra.mxu0 0
    %1299 = vmatpush.bf16.msra.mxu0 %v302
    %1300 = vmatpush.bf16.msra.mxu0 %v290
    %1301 = vmatmul.bf16.gmra.mxu0 %v961
    %v1302 = vpop.f32.mrf.mxu0
    %v1303 = vadd.f32 0.0, %v1302
    %v1304 = vpop.f32.mrf.mxu0
    %1305 = vdwg.mxu0
    %1306 = vmatpush.bf16.msra.mxu0 0
    %1307 = vmatpush.bf16.msra.mxu0 0
    %1308 = vmatpush.bf16.msra.mxu0 0
    %1309 = vmatpush.bf16.msra.mxu0 0
    %1310 = vmatpush.bf16.msra.mxu0 0
    %1311 = vmatpush.bf16.msra.mxu0 0
    %1312 = vmatpush.bf16.msra.mxu0 %v305
    %1313 = vmatpush.bf16.msra.mxu0 %v291
    %1314 = vmatmul.bf16.gmra.mxu0 %v961
    %v1315 = vpop.f32.mrf.mxu0
    %v1316 = vadd.f32 0.0, %v1315
    %v1317 = vpop.f32.mrf.mxu0
    %1318 = vdwg.mxu0
    %1319 = vmatpush.bf16.msra.mxu0 0
    %1320 = vmatpush.bf16.msra.mxu0 0
    %1321 = vmatpush.bf16.msra.mxu0 0
    %1322 = vmatpush.bf16.msra.mxu0 0
    %1323 = vmatpush.bf16.msra.mxu0 0
    %1324 = vmatpush.bf16.msra.mxu0 0
    %1325 = vmatpush.bf16.msra.mxu0 %v355
    %1326 = vmatpush.bf16.msra.mxu0 %v345
    %1327 = vmatmul.bf16.gmra.mxu0 %v818
    %v1328 = vpop.f32.mrf.mxu0
    %v1329 = vadd.f32 %v1303, %v1328
    %v1330 = vpop.f32.mrf.mxu0
    %1331 = vdwg.mxu0
    %1332 = vmatpush.bf16.msra.mxu0 0
    %1333 = vmatpush.bf16.msra.mxu0 0
    %1334 = vmatpush.bf16.msra.mxu0 0
    %1335 = vmatpush.bf16.msra.mxu0 0
    %1336 = vmatpush.bf16.msra.mxu0 0
    %1337 = vmatpush.bf16.msra.mxu0 0
    %1338 = vmatpush.bf16.msra.mxu0 %v358
    %1339 = vmatpush.bf16.msra.mxu0 %v346
    %1340 = vmatmul.bf16.gmra.mxu0 %v818
    %v1341 = vpop.f32.mrf.mxu0
    %v1342 = vadd.f32 %v1316, %v1341
    %v1343 = vpop.f32.mrf.mxu0
    %1344 = vdwg.mxu0
    %1345 = vmatpush.bf16.msra.mxu0 0
    %1346 = vmatpush.bf16.msra.mxu0 0
    %1347 = vmatpush.bf16.msra.mxu0 0
    %1348 = vmatpush.bf16.msra.mxu0 0
    %1349 = vmatpush.bf16.msra.mxu0 0
    %1350 = vmatpush.bf16.msra.mxu0 0
    %1351 = vmatpush.bf16.msra.mxu0 %v408
    %1352 = vmatpush.bf16.msra.mxu0 %v398
    %1353 = vmatmul.bf16.gmra.mxu0 %v1110
    %v1354 = vpop.f32.mrf.mxu0
    %v1355 = vadd.f32 0.0, %v1354
    %v1356 = vpop.f32.mrf.mxu0
    %1357 = vdwg.mxu0
    %1358 = vmatpush.bf16.msra.mxu0 0
    %1359 = vmatpush.bf16.msra.mxu0 0
    %1360 = vmatpush.bf16.msra.mxu0 0
    %1361 = vmatpush.bf16.msra.mxu0 0
    %1362 = vmatpush.bf16.msra.mxu0 0
    %1363 = vmatpush.bf16.msra.mxu0 0
    %1364 = vmatpush.bf16.msra.mxu0 %v411
    %1365 = vmatpush.bf16.msra.mxu0 %v399
    %1366 = vmatmul.bf16.gmra.mxu0 %v1110
    %v1367 = vpop.f32.mrf.mxu0
    %v1368 = vadd.f32 0.0, %v1367
    %v1369 = vpop.f32.mrf.mxu0
    %1370 = vdwg.mxu0
    %v1371 = vadd.f32 %v1329, %v1355
    %v1372 = vadd.f32 %v1342, %v1368
    %1373 = vmatpush.bf16.msra.mxu0 0
    %1374 = vmatpush.bf16.msra.mxu0 0
    %1375 = vmatpush.bf16.msra.mxu0 0
    %1376 = vmatpush.bf16.msra.mxu0 0
    %1377 = vmatpush.bf16.msra.mxu0 0
    %1378 = vmatpush.bf16.msra.mxu0 0
    %1379 = vmatpush.bf16.msra.mxu0 %v463
    %1380 = vmatpush.bf16.msra.mxu0 %v453
    %1381 = vmatmul.bf16.gmra.mxu0 %v1253
    %v1382 = vpop.f32.mrf.mxu0
    %v1383 = vadd.f32 0.0, %v1382
    %v1384 = vpop.f32.mrf.mxu0
    %1385 = vdwg.mxu0
    %1386 = vmatpush.bf16.msra.mxu0 0
    %1387 = vmatpush.bf16.msra.mxu0 0
    %1388 = vmatpush.bf16.msra.mxu0 0
    %1389 = vmatpush.bf16.msra.mxu0 0
    %1390 = vmatpush.bf16.msra.mxu0 0
    %1391 = vmatpush.bf16.msra.mxu0 0
    %1392 = vmatpush.bf16.msra.mxu0 %v466
    %1393 = vmatpush.bf16.msra.mxu0 %v454
    %1394 = vmatmul.bf16.gmra.mxu0 %v1253
    %v1395 = vpop.f32.mrf.mxu0
    %v1396 = vadd.f32 0.0, %v1395
    %v1397 = vpop.f32.mrf.mxu0
    %1398 = vdwg.mxu0
    %v1399 = vadd.f32 %v1371, %v1383
    %v1400 = vadd.f32 %v1372, %v1396
    %v1402 = vsel %vm296, %v243, 0
    %1404 = vmatpush.bf16.msra.mxu0 0
    %1405 = vmatpush.bf16.msra.mxu0 0
    %1406 = vmatpush.bf16.msra.mxu0 0
    %1407 = vmatpush.bf16.msra.mxu0 0
    %1408 = vmatpush.bf16.msra.mxu0 0
    %1409 = vmatpush.bf16.msra.mxu0 0
    %1410 = vmatpush.bf16.msra.mxu0 %v518
    %1411 = vmatpush.bf16.msra.mxu0 %v508
    %1412 = vmatmul.bf16.gmra.mxu0 %v1402
    %v1413 = vpop.f32.mrf.mxu0
    %v1414 = vadd.f32 0.0, %v1413
    %v1415 = vpop.f32.mrf.mxu0
    %1416 = vdwg.mxu0
    %1417 = vmatpush.bf16.msra.mxu0 0
    %1418 = vmatpush.bf16.msra.mxu0 0
    %1419 = vmatpush.bf16.msra.mxu0 0
    %1420 = vmatpush.bf16.msra.mxu0 0
    %1421 = vmatpush.bf16.msra.mxu0 0
    %1422 = vmatpush.bf16.msra.mxu0 0
    %1423 = vmatpush.bf16.msra.mxu0 %v521
    %1424 = vmatpush.bf16.msra.mxu0 %v509
    %1425 = vmatmul.bf16.gmra.mxu0 %v1402
    %v1426 = vpop.f32.mrf.mxu0
    %v1427 = vadd.f32 0.0, %v1426
    %v1428 = vpop.f32.mrf.mxu0
    %1429 = vdwg.mxu0
    %v1430 = vadd.f32 %v1399, %v1414
    %v1431 = vadd.f32 %v1400, %v1427
    %v1432 = vadd.f32 %v1430, %v552
    %v1433 = vadd.f32 %v1431, %v553
    %v1434 = vtanh.pop %v1432
    %v1435 = vtanh.pop %v1433
    %1436 = vmatpush.bf16.msra.mxu0 0
    %1437 = vmatpush.bf16.msra.mxu0 0
    %1438 = vmatpush.bf16.msra.mxu0 0
    %1439 = vmatpush.bf16.msra.mxu0 0
    %1440 = vmatpush.bf16.msra.mxu0 0
    %1441 = vmatpush.bf16.msra.mxu0 0
    %1442 = vmatpush.bf16.msra.mxu0 %v302
    %1443 = vmatpush.bf16.msra.mxu0 %v290
    %1444 = vmatmul.bf16.gmra.mxu0 %v1110
    %v1445 = vpop.f32.mrf.mxu0
    %v1446 = vadd.f32 0.0, %v1445
    %v1447 = vpop.f32.mrf.mxu0
    %1448 = vdwg.mxu0
    %1449 = vmatpush.bf16.msra.mxu0 0
    %1450 = vmatpush.bf16.msra.mxu0 0
    %1451 = vmatpush.bf16.msra.mxu0 0
    %1452 = vmatpush.bf16.msra.mxu0 0
    %1453 = vmatpush.bf16.msra.mxu0 0
    %1454 = vmatpush.bf16.msra.mxu0 0
    %1455 = vmatpush.bf16.msra.mxu0 %v305
    %1456 = vmatpush.bf16.msra.mxu0 %v291
    %1457 = vmatmul.bf16.gmra.mxu0 %v1110
    %v1458 = vpop.f32.mrf.mxu0
    %v1459 = vadd.f32 0.0, %v1458
    %v1460 = vpop.f32.mrf.mxu0
    %1461 = vdwg.mxu0
    %1462 = vmatpush.bf16.msra.mxu0 0
    %1463 = vmatpush.bf16.msra.mxu0 0
    %1464 = vmatpush.bf16.msra.mxu0 0
    %1465 = vmatpush.bf16.msra.mxu0 0
    %1466 = vmatpush.bf16.msra.mxu0 0
    %1467 = vmatpush.bf16.msra.mxu0 0
    %1468 = vmatpush.bf16.msra.mxu0 %v355
    %1469 = vmatpush.bf16.msra.mxu0 %v345
    %1470 = vmatmul.bf16.gmra.mxu0 %v961
    %v1471 = vpop.f32.mrf.mxu0
    %v1472 = vadd.f32 %v1446, %v1471
    %v1473 = vpop.f32.mrf.mxu0
    %1474 = vdwg.mxu0
    %1475 = vmatpush.bf16.msra.mxu0 0
    %1476 = vmatpush.bf16.msra.mxu0 0
    %1477 = vmatpush.bf16.msra.mxu0 0
    %1478 = vmatpush.bf16.msra.mxu0 0
    %1479 = vmatpush.bf16.msra.mxu0 0
    %1480 = vmatpush.bf16.msra.mxu0 0
    %1481 = vmatpush.bf16.msra.mxu0 %v358
    %1482 = vmatpush.bf16.msra.mxu0 %v346
    %1483 = vmatmul.bf16.gmra.mxu0 %v961
    %v1484 = vpop.f32.mrf.mxu0
    %v1485 = vadd.f32 %v1459, %v1484
    %v1486 = vpop.f32.mrf.mxu0
    %1487 = vdwg.mxu0
    %1488 = vmatpush.bf16.msra.mxu0 0
    %1489 = vmatpush.bf16.msra.mxu0 0
    %1490 = vmatpush.bf16.msra.mxu0 0
    %1491 = vmatpush.bf16.msra.mxu0 0
    %1492 = vmatpush.bf16.msra.mxu0 0
    %1493 = vmatpush.bf16.msra.mxu0 0
    %1494 = vmatpush.bf16.msra.mxu0 %v408
    %1495 = vmatpush.bf16.msra.mxu0 %v398
    %1496 = vmatmul.bf16.gmra.mxu0 %v1253
    %v1497 = vpop.f32.mrf.mxu0
    %v1498 = vadd.f32 0.0, %v1497
    %v1499 = vpop.f32.mrf.mxu0
    %1500 = vdwg.mxu0
    %1501 = vmatpush.bf16.msra.mxu0 0
    %1502 = vmatpush.bf16.msra.mxu0 0
    %1503 = vmatpush.bf16.msra.mxu0 0
    %1504 = vmatpush.bf16.msra.mxu0 0
    %1505 = vmatpush.bf16.msra.mxu0 0
    %1506 = vmatpush.bf16.msra.mxu0 0
    %1507 = vmatpush.bf16.msra.mxu0 %v411
    %1508 = vmatpush.bf16.msra.mxu0 %v399
    %1509 = vmatmul.bf16.gmra.mxu0 %v1253
    %v1510 = vpop.f32.mrf.mxu0
    %v1511 = vadd.f32 0.0, %v1510
    %v1512 = vpop.f32.mrf.mxu0
    %1513 = vdwg.mxu0
    %v1514 = vadd.f32 %v1472, %v1498
    %v1515 = vadd.f32 %v1485, %v1511
    %1516 = vmatpush.bf16.msra.mxu0 0
    %1517 = vmatpush.bf16.msra.mxu0 0
    %1518 = vmatpush.bf16.msra.mxu0 0
    %1519 = vmatpush.bf16.msra.mxu0 0
    %1520 = vmatpush.bf16.msra.mxu0 0
    %1521 = vmatpush.bf16.msra.mxu0 0
    %1522 = vmatpush.bf16.msra.mxu0 %v463
    %1523 = vmatpush.bf16.msra.mxu0 %v453
    %1524 = vmatmul.bf16.gmra.mxu0 %v1402
    %v1525 = vpop.f32.mrf.mxu0
    %v1526 = vadd.f32 0.0, %v1525
    %v1527 = vpop.f32.mrf.mxu0
    %1528 = vdwg.mxu0
    %1529 = vmatpush.bf16.msra.mxu0 0
    %1530 = vmatpush.bf16.msra.mxu0 0
    %1531 = vmatpush.bf16.msra.mxu0 0
    %1532 = vmatpush.bf16.msra.mxu0 0
    %1533 = vmatpush.bf16.msra.mxu0 0
    %1534 = vmatpush.bf16.msra.mxu0 0
    %1535 = vmatpush.bf16.msra.mxu0 %v466
    %1536 = vmatpush.bf16.msra.mxu0 %v454
    %1537 = vmatmul.bf16.gmra.mxu0 %v1402
    %v1538 = vpop.f32.mrf.mxu0
    %v1539 = vadd.f32 0.0, %v1538
    %v1540 = vpop.f32.mrf.mxu0
    %1541 = vdwg.mxu0
    %v1542 = vadd.f32 %v1514, %v1526
    %v1543 = vadd.f32 %v1515, %v1539
    %v1545 = vsel %vm296, %v245, 0
    %1547 = vmatpush.bf16.msra.mxu0 0
    %1548 = vmatpush.bf16.msra.mxu0 0
    %1549 = vmatpush.bf16.msra.mxu0 0
    %1550 = vmatpush.bf16.msra.mxu0 0
    %1551 = vmatpush.bf16.msra.mxu0 0
    %1552 = vmatpush.bf16.msra.mxu0 0
    %1553 = vmatpush.bf16.msra.mxu0 %v518
    %1554 = vmatpush.bf16.msra.mxu0 %v508
    %1555 = vmatmul.bf16.gmra.mxu0 %v1545
    %v1556 = vpop.f32.mrf.mxu0
    %v1557 = vadd.f32 0.0, %v1556
    %v1558 = vpop.f32.mrf.mxu0
    %1559 = vdwg.mxu0
    %1560 = vmatpush.bf16.msra.mxu0 0
    %1561 = vmatpush.bf16.msra.mxu0 0
    %1562 = vmatpush.bf16.msra.mxu0 0
    %1563 = vmatpush.bf16.msra.mxu0 0
    %1564 = vmatpush.bf16.msra.mxu0 0
    %1565 = vmatpush.bf16.msra.mxu0 0
    %1566 = vmatpush.bf16.msra.mxu0 %v521
    %1567 = vmatpush.bf16.msra.mxu0 %v509
    %1568 = vmatmul.bf16.gmra.mxu0 %v1545
    %v1569 = vpop.f32.mrf.mxu0
    %v1570 = vadd.f32 0.0, %v1569
    %v1571 = vpop.f32.mrf.mxu0
    %1572 = vdwg.mxu0
    %v1573 = vadd.f32 %v1542, %v1557
    %v1574 = vadd.f32 %v1543, %v1570
    %v1575 = vadd.f32 %v1573, %v552
    %v1576 = vadd.f32 %v1574, %v553
    %v1577 = vtanh.pop %v1575
    %v1578 = vtanh.pop %v1576
    %v1579 = vadd.f32 %v1434, %v1577
    %v1580 = vadd.f32 %v1435, %v1578
    %v1581 = vmul.f32 %v1579, 0.5
    %v1582 = vmul.f32 %v1580, 0.5
    %v1583 = vpack.c.bf16 %v1581, %v1581
    %v1584 = vpack.c.bf16 %v1582, %v1582
    %1585 = vmatpush.bf16.msra.mxu0 0
    %1586 = vmatpush.bf16.msra.mxu0 0
    %1587 = vmatpush.bf16.msra.mxu0 0
    %1588 = vmatpush.bf16.msra.mxu0 0
    %1589 = vmatpush.bf16.msra.mxu0 0
    %1590 = vmatpush.bf16.msra.mxu0 0
    %1591 = vmatpush.bf16.msra.mxu0 %v302
    %1592 = vmatpush.bf16.msra.mxu0 %v290
    %1593 = vmatmul.bf16.gmra.mxu0 %v1253
    %v1594 = vpop.f32.mrf.mxu0
    %v1595 = vadd.f32 0.0, %v1594
    %v1596 = vpop.f32.mrf.mxu0
    %1597 = vdwg.mxu0
    %1598 = vmatpush.bf16.msra.mxu0 0
    %1599 = vmatpush.bf16.msra.mxu0 0
    %1600 = vmatpush.bf16.msra.mxu0 0
    %1601 = vmatpush.bf16.msra.mxu0 0
    %1602 = vmatpush.bf16.msra.mxu0 0
    %1603 = vmatpush.bf16.msra.mxu0 0
    %1604 = vmatpush.bf16.msra.mxu0 %v305
    %1605 = vmatpush.bf16.msra.mxu0 %v291
    %1606 = vmatmul.bf16.gmra.mxu0 %v1253
    %v1607 = vpop.f32.mrf.mxu0
    %v1608 = vadd.f32 0.0, %v1607
    %v1609 = vpop.f32.mrf.mxu0
    %1610 = vdwg.mxu0
    %1611 = vmatpush.bf16.msra.mxu0 0
    %1612 = vmatpush.bf16.msra.mxu0 0
    %1613 = vmatpush.bf16.msra.mxu0 0
    %1614 = vmatpush.bf16.msra.mxu0 0
    %1615 = vmatpush.bf16.msra.mxu0 0
    %1616 = vmatpush.bf16.msra.mxu0 0
    %1617 = vmatpush.bf16.msra.mxu0 %v355
    %1618 = vmatpush.bf16.msra.mxu0 %v345
    %1619 = vmatmul.bf16.gmra.mxu0 %v1110
    %v1620 = vpop.f32.mrf.mxu0
    %v1621 = vadd.f32 %v1595, %v1620
    %v1622 = vpop.f32.mrf.mxu0
    %1623 = vdwg.mxu0
    %1624 = vmatpush.bf16.msra.mxu0 0
    %1625 = vmatpush.bf16.msra.mxu0 0
    %1626 = vmatpush.bf16.msra.mxu0 0
    %1627 = vmatpush.bf16.msra.mxu0 0
    %1628 = vmatpush.bf16.msra.mxu0 0
    %1629 = vmatpush.bf16.msra.mxu0 0
    %1630 = vmatpush.bf16.msra.mxu0 %v358
    %1631 = vmatpush.bf16.msra.mxu0 %v346
    %1632 = vmatmul.bf16.gmra.mxu0 %v1110
    %v1633 = vpop.f32.mrf.mxu0
    %v1634 = vadd.f32 %v1608, %v1633
    %v1635 = vpop.f32.mrf.mxu0
    %1636 = vdwg.mxu0
    %1637 = vmatpush.bf16.msra.mxu0 0
    %1638 = vmatpush.bf16.msra.mxu0 0
    %1639 = vmatpush.bf16.msra.mxu0 0
    %1640 = vmatpush.bf16.msra.mxu0 0
    %1641 = vmatpush.bf16.msra.mxu0 0
    %1642 = vmatpush.bf16.msra.mxu0 0
    %1643 = vmatpush.bf16.msra.mxu0 %v408
    %1644 = vmatpush.bf16.msra.mxu0 %v398
    %1645 = vmatmul.bf16.gmra.mxu0 %v1402
    %v1646 = vpop.f32.mrf.mxu0
    %v1647 = vadd.f32 0.0, %v1646
    %v1648 = vpop.f32.mrf.mxu0
    %1649 = vdwg.mxu0
    %1650 = vmatpush.bf16.msra.mxu0 0
    %1651 = vmatpush.bf16.msra.mxu0 0
    %1652 = vmatpush.bf16.msra.mxu0 0
    %1653 = vmatpush.bf16.msra.mxu0 0
    %1654 = vmatpush.bf16.msra.mxu0 0
    %1655 = vmatpush.bf16.msra.mxu0 0
    %1656 = vmatpush.bf16.msra.mxu0 %v411
    %1657 = vmatpush.bf16.msra.mxu0 %v399
    %1658 = vmatmul.bf16.gmra.mxu0 %v1402
    %v1659 = vpop.f32.mrf.mxu0
    %v1660 = vadd.f32 0.0, %v1659
    %v1661 = vpop.f32.mrf.mxu0
    %1662 = vdwg.mxu0
    %v1663 = vadd.f32 %v1621, %v1647
    %v1664 = vadd.f32 %v1634, %v1660
    %1665 = vmatpush.bf16.msra.mxu0 0
    %1666 = vmatpush.bf16.msra.mxu0 0
    %1667 = vmatpush.bf16.msra.mxu0 0
    %1668 = vmatpush.bf16.msra.mxu0 0
    %1669 = vmatpush.bf16.msra.mxu0 0
    %1670 = vmatpush.bf16.msra.mxu0 0
    %1671 = vmatpush.bf16.msra.mxu0 %v463
    %1672 = vmatpush.bf16.msra.mxu0 %v453
    %1673 = vmatmul.bf16.gmra.mxu0 %v1545
    %v1674 = vpop.f32.mrf.mxu0
    %v1675 = vadd.f32 0.0, %v1674
    %v1676 = vpop.f32.mrf.mxu0
    %1677 = vdwg.mxu0
    %1678 = vmatpush.bf16.msra.mxu0 0
    %1679 = vmatpush.bf16.msra.mxu0 0
    %1680 = vmatpush.bf16.msra.mxu0 0
    %1681 = vmatpush.bf16.msra.mxu0 0
    %1682 = vmatpush.bf16.msra.mxu0 0
    %1683 = vmatpush.bf16.msra.mxu0 0
    %1684 = vmatpush.bf16.msra.mxu0 %v466
    %1685 = vmatpush.bf16.msra.mxu0 %v454
    %1686 = vmatmul.bf16.gmra.mxu0 %v1545
    %v1687 = vpop.f32.mrf.mxu0
    %v1688 = vadd.f32 0.0, %v1687
    %v1689 = vpop.f32.mrf.mxu0
    %1690 = vdwg.mxu0
    %v1691 = vadd.f32 %v1663, %v1675
    %v1692 = vadd.f32 %v1664, %v1688
    %v1694 = vsel %vm296, %v247, 0
    %1696 = vmatpush.bf16.msra.mxu0 0
    %1697 = vmatpush.bf16.msra.mxu0 0
    %1698 = vmatpush.bf16.msra.mxu0 0
    %1699 = vmatpush.bf16.msra.mxu0 0
    %1700 = vmatpush.bf16.msra.mxu0 0
    %1701 = vmatpush.bf16.msra.mxu0 0
    %1702 = vmatpush.bf16.msra.mxu0 %v518
    %1703 = vmatpush.bf16.msra.mxu0 %v508
    %1704 = vmatmul.bf16.gmra.mxu0 %v1694
    %v1705 = vpop.f32.mrf.mxu0
    %v1706 = vadd.f32 0.0, %v1705
    %v1707 = vpop.f32.mrf.mxu0
    %1708 = vdwg.mxu0
    %1709 = vmatpush.bf16.msra.mxu0 0
    %1710 = vmatpush.bf16.msra.mxu0 0
    %1711 = vmatpush.bf16.msra.mxu0 0
    %1712 = vmatpush.bf16.msra.mxu0 0
    %1713 = vmatpush.bf16.msra.mxu0 0
    %1714 = vmatpush.bf16.msra.mxu0 0
    %1715 = vmatpush.bf16.msra.mxu0 %v521
    %1716 = vmatpush.bf16.msra.mxu0 %v509
    %1717 = vmatmul.bf16.gmra.mxu0 %v1694
    %v1718 = vpop.f32.mrf.mxu0
    %v1719 = vadd.f32 0.0, %v1718
    %v1720 = vpop.f32.mrf.mxu0
    %1721 = vdwg.mxu0
    %v1722 = vadd.f32 %v1691, %v1706
    %v1723 = vadd.f32 %v1692, %v1719
    %v1724 = vadd.f32 %v1722, %v552
    %v1725 = vadd.f32 %v1723, %v553
    %v1726 = vtanh.pop %v1724
    %v1727 = vtanh.pop %v1725
    %1728 = vmatpush.bf16.msra.mxu0 0
    %1729 = vmatpush.bf16.msra.mxu0 0
    %1730 = vmatpush.bf16.msra.mxu0 0
    %1731 = vmatpush.bf16.msra.mxu0 0
    %1732 = vmatpush.bf16.msra.mxu0 0
    %1733 = vmatpush.bf16.msra.mxu0 0
    %1734 = vmatpush.bf16.msra.mxu0 %v302
    %1735 = vmatpush.bf16.msra.mxu0 %v290
    %1736 = vmatmul.bf16.gmra.mxu0 %v1402
    %v1737 = vpop.f32.mrf.mxu0
    %v1738 = vadd.f32 0.0, %v1737
    %v1739 = vpop.f32.mrf.mxu0
    %1740 = vdwg.mxu0
    %1741 = vmatpush.bf16.msra.mxu0 0
    %1742 = vmatpush.bf16.msra.mxu0 0
    %1743 = vmatpush.bf16.msra.mxu0 0
    %1744 = vmatpush.bf16.msra.mxu0 0
    %1745 = vmatpush.bf16.msra.mxu0 0
    %1746 = vmatpush.bf16.msra.mxu0 0
    %1747 = vmatpush.bf16.msra.mxu0 %v305
    %1748 = vmatpush.bf16.msra.mxu0 %v291
    %1749 = vmatmul.bf16.gmra.mxu0 %v1402
    %v1750 = vpop.f32.mrf.mxu0
    %v1751 = vadd.f32 0.0, %v1750
    %v1752 = vpop.f32.mrf.mxu0
    %1753 = vdwg.mxu0
    %1754 = vmatpush.bf16.msra.mxu0 0
    %1755 = vmatpush.bf16.msra.mxu0 0
    %1756 = vmatpush.bf16.msra.mxu0 0
    %1757 = vmatpush.bf16.msra.mxu0 0
    %1758 = vmatpush.bf16.msra.mxu0 0
    %1759 = vmatpush.bf16.msra.mxu0 0
    %1760 = vmatpush.bf16.msra.mxu0 %v355
    %1761 = vmatpush.bf16.msra.mxu0 %v345
    %1762 = vmatmul.bf16.gmra.mxu0 %v1253
    %v1763 = vpop.f32.mrf.mxu0
    %v1764 = vadd.f32 %v1738, %v1763
    %v1765 = vpop.f32.mrf.mxu0
    %1766 = vdwg.mxu0
    %1767 = vmatpush.bf16.msra.mxu0 0
    %1768 = vmatpush.bf16.msra.mxu0 0
    %1769 = vmatpush.bf16.msra.mxu0 0
    %1770 = vmatpush.bf16.msra.mxu0 0
    %1771 = vmatpush.bf16.msra.mxu0 0
    %1772 = vmatpush.bf16.msra.mxu0 0
    %1773 = vmatpush.bf16.msra.mxu0 %v358
    %1774 = vmatpush.bf16.msra.mxu0 %v346
    %1775 = vmatmul.bf16.gmra.mxu0 %v1253
    %v1776 = vpop.f32.mrf.mxu0
    %v1777 = vadd.f32 %v1751, %v1776
    %v1778 = vpop.f32.mrf.mxu0
    %1779 = vdwg.mxu0
    %1780 = vmatpush.bf16.msra.mxu0 0
    %1781 = vmatpush.bf16.msra.mxu0 0
    %1782 = vmatpush.bf16.msra.mxu0 0
    %1783 = vmatpush.bf16.msra.mxu0 0
    %1784 = vmatpush.bf16.msra.mxu0 0
    %1785 = vmatpush.bf16.msra.mxu0 0
    %1786 = vmatpush.bf16.msra.mxu0 %v408
    %1787 = vmatpush.bf16.msra.mxu0 %v398
    %1788 = vmatmul.bf16.gmra.mxu0 %v1545
    %v1789 = vpop.f32.mrf.mxu0
    %v1790 = vadd.f32 0.0, %v1789
    %v1791 = vpop.f32.mrf.mxu0
    %1792 = vdwg.mxu0
    %1793 = vmatpush.bf16.msra.mxu0 0
    %1794 = vmatpush.bf16.msra.mxu0 0
    %1795 = vmatpush.bf16.msra.mxu0 0
    %1796 = vmatpush.bf16.msra.mxu0 0
    %1797 = vmatpush.bf16.msra.mxu0 0
    %1798 = vmatpush.bf16.msra.mxu0 0
    %1799 = vmatpush.bf16.msra.mxu0 %v411
    %1800 = vmatpush.bf16.msra.mxu0 %v399
    %1801 = vmatmul.bf16.gmra.mxu0 %v1545
    %v1802 = vpop.f32.mrf.mxu0
    %v1803 = vadd.f32 0.0, %v1802
    %v1804 = vpop.f32.mrf.mxu0
    %1805 = vdwg.mxu0
    %v1806 = vadd.f32 %v1764, %v1790
    %v1807 = vadd.f32 %v1777, %v1803
    %1808 = vmatpush.bf16.msra.mxu0 0
    %1809 = vmatpush.bf16.msra.mxu0 0
    %1810 = vmatpush.bf16.msra.mxu0 0
    %1811 = vmatpush.bf16.msra.mxu0 0
    %1812 = vmatpush.bf16.msra.mxu0 0
    %1813 = vmatpush.bf16.msra.mxu0 0
    %1814 = vmatpush.bf16.msra.mxu0 %v463
    %1815 = vmatpush.bf16.msra.mxu0 %v453
    %1816 = vmatmul.bf16.gmra.mxu0 %v1694
    %v1817 = vpop.f32.mrf.mxu0
    %v1818 = vadd.f32 0.0, %v1817
    %v1819 = vpop.f32.mrf.mxu0
    %1820 = vdwg.mxu0
    %1821 = vmatpush.bf16.msra.mxu0 0
    %1822 = vmatpush.bf16.msra.mxu0 0
    %1823 = vmatpush.bf16.msra.mxu0 0
    %1824 = vmatpush.bf16.msra.mxu0 0
    %1825 = vmatpush.bf16.msra.mxu0 0
    %1826 = vmatpush.bf16.msra.mxu0 0
    %1827 = vmatpush.bf16.msra.mxu0 %v466
    %1828 = vmatpush.bf16.msra.mxu0 %v454
    %1829 = vmatmul.bf16.gmra.mxu0 %v1694
    %v1830 = vpop.f32.mrf.mxu0
    %v1831 = vadd.f32 0.0, %v1830
    %v1832 = vpop.f32.mrf.mxu0
    %1833 = vdwg.mxu0
    %v1834 = vadd.f32 %v1806, %v1818
    %v1835 = vadd.f32 %v1807, %v1831
    %v1837 = vsel %vm296, %v249, 0
    %1839 = vmatpush.bf16.msra.mxu0 0
    %1840 = vmatpush.bf16.msra.mxu0 0
    %1841 = vmatpush.bf16.msra.mxu0 0
    %1842 = vmatpush.bf16.msra.mxu0 0
    %1843 = vmatpush.bf16.msra.mxu0 0
    %1844 = vmatpush.bf16.msra.mxu0 0
    %1845 = vmatpush.bf16.msra.mxu0 %v518
    %1846 = vmatpush.bf16.msra.mxu0 %v508
    %1847 = vmatmul.bf16.gmra.mxu0 %v1837
    %v1848 = vpop.f32.mrf.mxu0
    %v1849 = vadd.f32 0.0, %v1848
    %v1850 = vpop.f32.mrf.mxu0
    %1851 = vdwg.mxu0
    %1852 = vmatpush.bf16.msra.mxu0 0
    %1853 = vmatpush.bf16.msra.mxu0 0
    %1854 = vmatpush.bf16.msra.mxu0 0
    %1855 = vmatpush.bf16.msra.mxu0 0
    %1856 = vmatpush.bf16.msra.mxu0 0
    %1857 = vmatpush.bf16.msra.mxu0 0
    %1858 = vmatpush.bf16.msra.mxu0 %v521
    %1859 = vmatpush.bf16.msra.mxu0 %v509
    %1860 = vmatmul.bf16.gmra.mxu0 %v1837
    %v1861 = vpop.f32.mrf.mxu0
    %v1862 = vadd.f32 0.0, %v1861
    %v1863 = vpop.f32.mrf.mxu0
    %1864 = vdwg.mxu0
    %v1865 = vadd.f32 %v1834, %v1849
    %v1866 = vadd.f32 %v1835, %v1862
    %v1867 = vadd.f32 %v1865, %v552
    %v1868 = vadd.f32 %v1866, %v553
    %v1869 = vtanh.pop %v1867
    %v1870 = vtanh.pop %v1868
    %v1871 = vadd.f32 %v1726, %v1869
    %v1872 = vadd.f32 %v1727, %v1870
    %v1873 = vmul.f32 %v1871, 0.5
    %v1874 = vmul.f32 %v1872, 0.5
    %v1875 = vpack.c.bf16 %v1873, %v1873
    %v1876 = vpack.c.bf16 %v1874, %v1874
    %1877 = vmatpush.bf16.msra.mxu0 0
    %1878 = vmatpush.bf16.msra.mxu0 0
    %1879 = vmatpush.bf16.msra.mxu0 0
    %1880 = vmatpush.bf16.msra.mxu0 0
    %1881 = vmatpush.bf16.msra.mxu0 0
    %1882 = vmatpush.bf16.msra.mxu0 0
    %1883 = vmatpush.bf16.msra.mxu0 %v302
    %1884 = vmatpush.bf16.msra.mxu0 %v290
    %1885 = vmatmul.bf16.gmra.mxu0 %v1545
    %v1886 = vpop.f32.mrf.mxu0
    %v1887 = vadd.f32 0.0, %v1886
    %v1888 = vpop.f32.mrf.mxu0
    %1889 = vdwg.mxu0
    %1890 = vmatpush.bf16.msra.mxu0 0
    %1891 = vmatpush.bf16.msra.mxu0 0
    %1892 = vmatpush.bf16.msra.mxu0 0
    %1893 = vmatpush.bf16.msra.mxu0 0
    %1894 = vmatpush.bf16.msra.mxu0 0
    %1895 = vmatpush.bf16.msra.mxu0 0
    %1896 = vmatpush.bf16.msra.mxu0 %v305
    %1897 = vmatpush.bf16.msra.mxu0 %v291
    %1898 = vmatmul.bf16.gmra.mxu0 %v1545
    %v1899 = vpop.f32.mrf.mxu0
    %v1900 = vadd.f32 0.0, %v1899
    %v1901 = vpop.f32.mrf.mxu0
    %1902 = vdwg.mxu0
    %1903 = vmatpush.bf16.msra.mxu0 0
    %1904 = vmatpush.bf16.msra.mxu0 0
    %1905 = vmatpush.bf16.msra.mxu0 0
    %1906 = vmatpush.bf16.msra.mxu0 0
    %1907 = vmatpush.bf16.msra.mxu0 0
    %1908 = vmatpush.bf16.msra.mxu0 0
    %1909 = vmatpush.bf16.msra.mxu0 %v355
    %1910 = vmatpush.bf16.msra.mxu0 %v345
    %1911 = vmatmul.bf16.gmra.mxu0 %v1402
    %v1912 = vpop.f32.mrf.mxu0
    %v1913 = vadd.f32 %v1887, %v1912
    %v1914 = vpop.f32.mrf.mxu0
    %1915 = vdwg.mxu0
    %1916 = vmatpush.bf16.msra.mxu0 0
    %1917 = vmatpush.bf16.msra.mxu0 0
    %1918 = vmatpush.bf16.msra.mxu0 0
    %1919 = vmatpush.bf16.msra.mxu0 0
    %1920 = vmatpush.bf16.msra.mxu0 0
    %1921 = vmatpush.bf16.msra.mxu0 0
    %1922 = vmatpush.bf16.msra.mxu0 %v358
    %1923 = vmatpush.bf16.msra.mxu0 %v346
    %1924 = vmatmul.bf16.gmra.mxu0 %v1402
    %v1925 = vpop.f32.mrf.mxu0
    %v1926 = vadd.f32 %v1900, %v1925
    %v1927 = vpop.f32.mrf.mxu0
    %1928 = vdwg.mxu0
    %1929 = vmatpush.bf16.msra.mxu0 0
    %1930 = vmatpush.bf16.msra.mxu0 0
    %1931 = vmatpush.bf16.msra.mxu0 0
    %1932 = vmatpush.bf16.msra.mxu0 0
    %1933 = vmatpush.bf16.msra.mxu0 0
    %1934 = vmatpush.bf16.msra.mxu0 0
    %1935 = vmatpush.bf16.msra.mxu0 %v408
    %1936 = vmatpush.bf16.msra.mxu0 %v398
    %1937 = vmatmul.bf16.gmra.mxu0 %v1694
    %v1938 = vpop.f32.mrf.mxu0
    %v1939 = vadd.f32 0.0, %v1938
    %v1940 = vpop.f32.mrf.mxu0
    %1941 = vdwg.mxu0
    %1942 = vmatpush.bf16.msra.mxu0 0
    %1943 = vmatpush.bf16.msra.mxu0 0
    %1944 = vmatpush.bf16.msra.mxu0 0
    %1945 = vmatpush.bf16.msra.mxu0 0
    %1946 = vmatpush.bf16.msra.mxu0 0
    %1947 = vmatpush.bf16.msra.mxu0 0
    %1948 = vmatpush.bf16.msra.mxu0 %v411
    %1949 = vmatpush.bf16.msra.mxu0 %v399
    %1950 = vmatmul.bf16.gmra.mxu0 %v1694
    %v1951 = vpop.f32.mrf.mxu0
    %v1952 = vadd.f32 0.0, %v1951
    %v1953 = vpop.f32.mrf.mxu0
    %1954 = vdwg.mxu0
    %v1955 = vadd.f32 %v1913, %v1939
    %v1956 = vadd.f32 %v1926, %v1952
    %1957 = vmatpush.bf16.msra.mxu0 0
    %1958 = vmatpush.bf16.msra.mxu0 0
    %1959 = vmatpush.bf16.msra.mxu0 0
    %1960 = vmatpush.bf16.msra.mxu0 0
    %1961 = vmatpush.bf16.msra.mxu0 0
    %1962 = vmatpush.bf16.msra.mxu0 0
    %1963 = vmatpush.bf16.msra.mxu0 %v463
    %1964 = vmatpush.bf16.msra.mxu0 %v453
    %1965 = vmatmul.bf16.gmra.mxu0 %v1837
    %v1966 = vpop.f32.mrf.mxu0
    %v1967 = vadd.f32 0.0, %v1966
    %v1968 = vpop.f32.mrf.mxu0
    %1969 = vdwg.mxu0
    %1970 = vmatpush.bf16.msra.mxu0 0
    %1971 = vmatpush.bf16.msra.mxu0 0
    %1972 = vmatpush.bf16.msra.mxu0 0
    %1973 = vmatpush.bf16.msra.mxu0 0
    %1974 = vmatpush.bf16.msra.mxu0 0
    %1975 = vmatpush.bf16.msra.mxu0 0
    %1976 = vmatpush.bf16.msra.mxu0 %v466
    %1977 = vmatpush.bf16.msra.mxu0 %v454
    %1978 = vmatmul.bf16.gmra.mxu0 %v1837
    %v1979 = vpop.f32.mrf.mxu0
    %v1980 = vadd.f32 0.0, %v1979
    %v1981 = vpop.f32.mrf.mxu0
    %1982 = vdwg.mxu0
    %v1983 = vadd.f32 %v1955, %v1967
    %v1984 = vadd.f32 %v1956, %v1980
    %v1986 = vsel %vm296, %v251, 0
    %1988 = vmatpush.bf16.msra.mxu0 0
    %1989 = vmatpush.bf16.msra.mxu0 0
    %1990 = vmatpush.bf16.msra.mxu0 0
    %1991 = vmatpush.bf16.msra.mxu0 0
    %1992 = vmatpush.bf16.msra.mxu0 0
    %1993 = vmatpush.bf16.msra.mxu0 0
    %1994 = vmatpush.bf16.msra.mxu0 %v518
    %1995 = vmatpush.bf16.msra.mxu0 %v508
    %1996 = vmatmul.bf16.gmra.mxu0 %v1986
    %v1997 = vpop.f32.mrf.mxu0
    %v1998 = vadd.f32 0.0, %v1997
    %v1999 = vpop.f32.mrf.mxu0
    %2000 = vdwg.mxu0
    %2001 = vmatpush.bf16.msra.mxu0 0
    %2002 = vmatpush.bf16.msra.mxu0 0
    %2003 = vmatpush.bf16.msra.mxu0 0
    %2004 = vmatpush.bf16.msra.mxu0 0
    %2005 = vmatpush.bf16.msra.mxu0 0
    %2006 = vmatpush.bf16.msra.mxu0 0
    %2007 = vmatpush.bf16.msra.mxu0 %v521
    %2008 = vmatpush.bf16.msra.mxu0 %v509
    %2009 = vmatmul.bf16.gmra.mxu0 %v1986
    %v2010 = vpop.f32.mrf.mxu0
    %v2011 = vadd.f32 0.0, %v2010
    %v2012 = vpop.f32.mrf.mxu0
    %2013 = vdwg.mxu0
    %v2014 = vadd.f32 %v1983, %v1998
    %v2015 = vadd.f32 %v1984, %v2011
    %v2016 = vadd.f32 %v2014, %v552
    %v2017 = vadd.f32 %v2015, %v553
    %v2018 = vtanh.pop %v2016
    %v2019 = vtanh.pop %v2017
    %2020 = vmatpush.bf16.msra.mxu0 0
    %2021 = vmatpush.bf16.msra.mxu0 0
    %2022 = vmatpush.bf16.msra.mxu0 0
    %2023 = vmatpush.bf16.msra.mxu0 0
    %2024 = vmatpush.bf16.msra.mxu0 0
    %2025 = vmatpush.bf16.msra.mxu0 0
    %2026 = vmatpush.bf16.msra.mxu0 %v302
    %2027 = vmatpush.bf16.msra.mxu0 %v290
    %2028 = vmatmul.bf16.gmra.mxu0 %v1694
    %v2029 = vpop.f32.mrf.mxu0
    %v2030 = vadd.f32 0.0, %v2029
    %v2031 = vpop.f32.mrf.mxu0
    %2032 = vdwg.mxu0
    %2033 = vmatpush.bf16.msra.mxu0 0
    %2034 = vmatpush.bf16.msra.mxu0 0
    %2035 = vmatpush.bf16.msra.mxu0 0
    %2036 = vmatpush.bf16.msra.mxu0 0
    %2037 = vmatpush.bf16.msra.mxu0 0
    %2038 = vmatpush.bf16.msra.mxu0 0
    %2039 = vmatpush.bf16.msra.mxu0 %v305
    %2040 = vmatpush.bf16.msra.mxu0 %v291
    %2041 = vmatmul.bf16.gmra.mxu0 %v1694
    %v2042 = vpop.f32.mrf.mxu0
    %v2043 = vadd.f32 0.0, %v2042
    %v2044 = vpop.f32.mrf.mxu0
    %2045 = vdwg.mxu0
    %2046 = vmatpush.bf16.msra.mxu0 0
    %2047 = vmatpush.bf16.msra.mxu0 0
    %2048 = vmatpush.bf16.msra.mxu0 0
    %2049 = vmatpush.bf16.msra.mxu0 0
    %2050 = vmatpush.bf16.msra.mxu0 0
    %2051 = vmatpush.bf16.msra.mxu0 0
    %2052 = vmatpush.bf16.msra.mxu0 %v355
    %2053 = vmatpush.bf16.msra.mxu0 %v345
    %2054 = vmatmul.bf16.gmra.mxu0 %v1545
    %v2055 = vpop.f32.mrf.mxu0
    %v2056 = vadd.f32 %v2030, %v2055
    %v2057 = vpop.f32.mrf.mxu0
    %2058 = vdwg.mxu0
    %2059 = vmatpush.bf16.msra.mxu0 0
    %2060 = vmatpush.bf16.msra.mxu0 0
    %2061 = vmatpush.bf16.msra.mxu0 0
    %2062 = vmatpush.bf16.msra.mxu0 0
    %2063 = vmatpush.bf16.msra.mxu0 0
    %2064 = vmatpush.bf16.msra.mxu0 0
    %2065 = vmatpush.bf16.msra.mxu0 %v358
    %2066 = vmatpush.bf16.msra.mxu0 %v346
    %2067 = vmatmul.bf16.gmra.mxu0 %v1545
    %v2068 = vpop.f32.mrf.mxu0
    %v2069 = vadd.f32 %v2043, %v2068
    %v2070 = vpop.f32.mrf.mxu0
    %2071 = vdwg.mxu0
    %2072 = vmatpush.bf16.msra.mxu0 0
    %2073 = vmatpush.bf16.msra.mxu0 0
    %2074 = vmatpush.bf16.msra.mxu0 0
    %2075 = vmatpush.bf16.msra.mxu0 0
    %2076 = vmatpush.bf16.msra.mxu0 0
    %2077 = vmatpush.bf16.msra.mxu0 0
    %2078 = vmatpush.bf16.msra.mxu0 %v408
    %2079 = vmatpush.bf16.msra.mxu0 %v398
    %2080 = vmatmul.bf16.gmra.mxu0 %v1837
    %v2081 = vpop.f32.mrf.mxu0
    %v2082 = vadd.f32 0.0, %v2081
    %v2083 = vpop.f32.mrf.mxu0
    %2084 = vdwg.mxu0
    %2085 = vmatpush.bf16.msra.mxu0 0
    %2086 = vmatpush.bf16.msra.mxu0 0
    %2087 = vmatpush.bf16.msra.mxu0 0
    %2088 = vmatpush.bf16.msra.mxu0 0
    %2089 = vmatpush.bf16.msra.mxu0 0
    %2090 = vmatpush.bf16.msra.mxu0 0
    %2091 = vmatpush.bf16.msra.mxu0 %v411
    %2092 = vmatpush.bf16.msra.mxu0 %v399
    %2093 = vmatmul.bf16.gmra.mxu0 %v1837
    %v2094 = vpop.f32.mrf.mxu0
    %v2095 = vadd.f32 0.0, %v2094
    %v2096 = vpop.f32.mrf.mxu0
    %2097 = vdwg.mxu0
    %v2098 = vadd.f32 %v2056, %v2082
    %v2099 = vadd.f32 %v2069, %v2095
    %2100 = vmatpush.bf16.msra.mxu0 0
    %2101 = vmatpush.bf16.msra.mxu0 0
    %2102 = vmatpush.bf16.msra.mxu0 0
    %2103 = vmatpush.bf16.msra.mxu0 0
    %2104 = vmatpush.bf16.msra.mxu0 0
    %2105 = vmatpush.bf16.msra.mxu0 0
    %2106 = vmatpush.bf16.msra.mxu0 %v463
    %2107 = vmatpush.bf16.msra.mxu0 %v453
    %2108 = vmatmul.bf16.gmra.mxu0 %v1986
    %v2109 = vpop.f32.mrf.mxu0
    %v2110 = vadd.f32 0.0, %v2109
    %v2111 = vpop.f32.mrf.mxu0
    %2112 = vdwg.mxu0
    %2113 = vmatpush.bf16.msra.mxu0 0
    %2114 = vmatpush.bf16.msra.mxu0 0
    %2115 = vmatpush.bf16.msra.mxu0 0
    %2116 = vmatpush.bf16.msra.mxu0 0
    %2117 = vmatpush.bf16.msra.mxu0 0
    %2118 = vmatpush.bf16.msra.mxu0 0
    %2119 = vmatpush.bf16.msra.mxu0 %v466
    %2120 = vmatpush.bf16.msra.mxu0 %v454
    %2121 = vmatmul.bf16.gmra.mxu0 %v1986
    %v2122 = vpop.f32.mrf.mxu0
    %v2123 = vadd.f32 0.0, %v2122
    %v2124 = vpop.f32.mrf.mxu0
    %2125 = vdwg.mxu0
    %v2126 = vadd.f32 %v2098, %v2110
    %v2127 = vadd.f32 %v2099, %v2123
    %v2129 = vsel %vm296, %v253, 0
    %2131 = vmatpush.bf16.msra.mxu0 0
    %2132 = vmatpush.bf16.msra.mxu0 0
    %2133 = vmatpush.bf16.msra.mxu0 0
    %2134 = vmatpush.bf16.msra.mxu0 0
    %2135 = vmatpush.bf16.msra.mxu0 0
    %2136 = vmatpush.bf16.msra.mxu0 0
    %2137 = vmatpush.bf16.msra.mxu0 %v518
    %2138 = vmatpush.bf16.msra.mxu0 %v508
    %2139 = vmatmul.bf16.gmra.mxu0 %v2129
    %v2140 = vpop.f32.mrf.mxu0
    %v2141 = vadd.f32 0.0, %v2140
    %v2142 = vpop.f32.mrf.mxu0
    %2143 = vdwg.mxu0
    %2144 = vmatpush.bf16.msra.mxu0 0
    %2145 = vmatpush.bf16.msra.mxu0 0
    %2146 = vmatpush.bf16.msra.mxu0 0
    %2147 = vmatpush.bf16.msra.mxu0 0
    %2148 = vmatpush.bf16.msra.mxu0 0
    %2149 = vmatpush.bf16.msra.mxu0 0
    %2150 = vmatpush.bf16.msra.mxu0 %v521
    %2151 = vmatpush.bf16.msra.mxu0 %v509
    %2152 = vmatmul.bf16.gmra.mxu0 %v2129
    %v2153 = vpop.f32.mrf.mxu0
    %v2154 = vadd.f32 0.0, %v2153
    %v2155 = vpop.f32.mrf.mxu0
    %2156 = vdwg.mxu0
    %v2157 = vadd.f32 %v2126, %v2141
    %v2158 = vadd.f32 %v2127, %v2154
    %v2159 = vadd.f32 %v2157, %v552
    %v2160 = vadd.f32 %v2158, %v553
    %v2161 = vtanh.pop %v2159
    %v2162 = vtanh.pop %v2160
    %v2163 = vadd.f32 %v2018, %v2161
    %v2164 = vadd.f32 %v2019, %v2162
    %v2165 = vmul.f32 %v2163, 0.5
    %v2166 = vmul.f32 %v2164, 0.5
    %v2167 = vpack.c.bf16 %v2165, %v2165
    %v2168 = vpack.c.bf16 %v2166, %v2166
    %2169 = vmatpush.bf16.msra.mxu0 0
    %2170 = vmatpush.bf16.msra.mxu0 0
    %2171 = vmatpush.bf16.msra.mxu0 0
    %2172 = vmatpush.bf16.msra.mxu0 0
    %2173 = vmatpush.bf16.msra.mxu0 0
    %2174 = vmatpush.bf16.msra.mxu0 0
    %2175 = vmatpush.bf16.msra.mxu0 %v302
    %2176 = vmatpush.bf16.msra.mxu0 %v290
    %2177 = vmatmul.bf16.gmra.mxu0 %v1837
    %v2178 = vpop.f32.mrf.mxu0
    %v2179 = vadd.f32 0.0, %v2178
    %v2180 = vpop.f32.mrf.mxu0
    %2181 = vdwg.mxu0
    %2182 = vmatpush.bf16.msra.mxu0 0
    %2183 = vmatpush.bf16.msra.mxu0 0
    %2184 = vmatpush.bf16.msra.mxu0 0
    %2185 = vmatpush.bf16.msra.mxu0 0
    %2186 = vmatpush.bf16.msra.mxu0 0
    %2187 = vmatpush.bf16.msra.mxu0 0
    %2188 = vmatpush.bf16.msra.mxu0 %v305
    %2189 = vmatpush.bf16.msra.mxu0 %v291
    %2190 = vmatmul.bf16.gmra.mxu0 %v1837
    %v2191 = vpop.f32.mrf.mxu0
    %v2192 = vadd.f32 0.0, %v2191
    %v2193 = vpop.f32.mrf.mxu0
    %2194 = vdwg.mxu0
    %2195 = vmatpush.bf16.msra.mxu0 0
    %2196 = vmatpush.bf16.msra.mxu0 0
    %2197 = vmatpush.bf16.msra.mxu0 0
    %2198 = vmatpush.bf16.msra.mxu0 0
    %2199 = vmatpush.bf16.msra.mxu0 0
    %2200 = vmatpush.bf16.msra.mxu0 0
    %2201 = vmatpush.bf16.msra.mxu0 %v355
    %2202 = vmatpush.bf16.msra.mxu0 %v345
    %2203 = vmatmul.bf16.gmra.mxu0 %v1694
    %v2204 = vpop.f32.mrf.mxu0
    %v2205 = vadd.f32 %v2179, %v2204
    %v2206 = vpop.f32.mrf.mxu0
    %2207 = vdwg.mxu0
    %2208 = vmatpush.bf16.msra.mxu0 0
    %2209 = vmatpush.bf16.msra.mxu0 0
    %2210 = vmatpush.bf16.msra.mxu0 0
    %2211 = vmatpush.bf16.msra.mxu0 0
    %2212 = vmatpush.bf16.msra.mxu0 0
    %2213 = vmatpush.bf16.msra.mxu0 0
    %2214 = vmatpush.bf16.msra.mxu0 %v358
    %2215 = vmatpush.bf16.msra.mxu0 %v346
    %2216 = vmatmul.bf16.gmra.mxu0 %v1694
    %v2217 = vpop.f32.mrf.mxu0
    %v2218 = vadd.f32 %v2192, %v2217
    %v2219 = vpop.f32.mrf.mxu0
    %2220 = vdwg.mxu0
    %2221 = vmatpush.bf16.msra.mxu0 0
    %2222 = vmatpush.bf16.msra.mxu0 0
    %2223 = vmatpush.bf16.msra.mxu0 0
    %2224 = vmatpush.bf16.msra.mxu0 0
    %2225 = vmatpush.bf16.msra.mxu0 0
    %2226 = vmatpush.bf16.msra.mxu0 0
    %2227 = vmatpush.bf16.msra.mxu0 %v408
    %2228 = vmatpush.bf16.msra.mxu0 %v398
    %2229 = vmatmul.bf16.gmra.mxu0 %v1986
    %v2230 = vpop.f32.mrf.mxu0
    %v2231 = vadd.f32 0.0, %v2230
    %v2232 = vpop.f32.mrf.mxu0
    %2233 = vdwg.mxu0
    %2234 = vmatpush.bf16.msra.mxu0 0
    %2235 = vmatpush.bf16.msra.mxu0 0
    %2236 = vmatpush.bf16.msra.mxu0 0
    %2237 = vmatpush.bf16.msra.mxu0 0
    %2238 = vmatpush.bf16.msra.mxu0 0
    %2239 = vmatpush.bf16.msra.mxu0 0
    %2240 = vmatpush.bf16.msra.mxu0 %v411
    %2241 = vmatpush.bf16.msra.mxu0 %v399
    %2242 = vmatmul.bf16.gmra.mxu0 %v1986
    %v2243 = vpop.f32.mrf.mxu0
    %v2244 = vadd.f32 0.0, %v2243
    %v2245 = vpop.f32.mrf.mxu0
    %2246 = vdwg.mxu0
    %v2247 = vadd.f32 %v2205, %v2231
    %v2248 = vadd.f32 %v2218, %v2244
    %2249 = vmatpush.bf16.msra.mxu0 0
    %2250 = vmatpush.bf16.msra.mxu0 0
    %2251 = vmatpush.bf16.msra.mxu0 0
    %2252 = vmatpush.bf16.msra.mxu0 0
    %2253 = vmatpush.bf16.msra.mxu0 0
    %2254 = vmatpush.bf16.msra.mxu0 0
    %2255 = vmatpush.bf16.msra.mxu0 %v463
    %2256 = vmatpush.bf16.msra.mxu0 %v453
    %2257 = vmatmul.bf16.gmra.mxu0 %v2129
    %v2258 = vpop.f32.mrf.mxu0
    %v2259 = vadd.f32 0.0, %v2258
    %v2260 = vpop.f32.mrf.mxu0
    %2261 = vdwg.mxu0
    %2262 = vmatpush.bf16.msra.mxu0 0
    %2263 = vmatpush.bf16.msra.mxu0 0
    %2264 = vmatpush.bf16.msra.mxu0 0
    %2265 = vmatpush.bf16.msra.mxu0 0
    %2266 = vmatpush.bf16.msra.mxu0 0
    %2267 = vmatpush.bf16.msra.mxu0 0
    %2268 = vmatpush.bf16.msra.mxu0 %v466
    %2269 = vmatpush.bf16.msra.mxu0 %v454
    %2270 = vmatmul.bf16.gmra.mxu0 %v2129
    %v2271 = vpop.f32.mrf.mxu0
    %v2272 = vadd.f32 0.0, %v2271
    %v2273 = vpop.f32.mrf.mxu0
    %2274 = vdwg.mxu0
    %v2275 = vadd.f32 %v2247, %v2259
    %v2276 = vadd.f32 %v2248, %v2272
    %v2278 = vsel %vm296, %v255, 0
    %2280 = vmatpush.bf16.msra.mxu0 0
    %2281 = vmatpush.bf16.msra.mxu0 0
    %2282 = vmatpush.bf16.msra.mxu0 0
    %2283 = vmatpush.bf16.msra.mxu0 0
    %2284 = vmatpush.bf16.msra.mxu0 0
    %2285 = vmatpush.bf16.msra.mxu0 0
    %2286 = vmatpush.bf16.msra.mxu0 %v518
    %2287 = vmatpush.bf16.msra.mxu0 %v508
    %2288 = vmatmul.bf16.gmra.mxu0 %v2278
    %v2289 = vpop.f32.mrf.mxu0
    %v2290 = vadd.f32 0.0, %v2289
    %v2291 = vpop.f32.mrf.mxu0
    %2292 = vdwg.mxu0
    %2293 = vmatpush.bf16.msra.mxu0 0
    %2294 = vmatpush.bf16.msra.mxu0 0
    %2295 = vmatpush.bf16.msra.mxu0 0
    %2296 = vmatpush.bf16.msra.mxu0 0
    %2297 = vmatpush.bf16.msra.mxu0 0
    %2298 = vmatpush.bf16.msra.mxu0 0
    %2299 = vmatpush.bf16.msra.mxu0 %v521
    %2300 = vmatpush.bf16.msra.mxu0 %v509
    %2301 = vmatmul.bf16.gmra.mxu0 %v2278
    %v2302 = vpop.f32.mrf.mxu0
    %v2303 = vadd.f32 0.0, %v2302
    %v2304 = vpop.f32.mrf.mxu0
    %2305 = vdwg.mxu0
    %v2306 = vadd.f32 %v2275, %v2290
    %v2307 = vadd.f32 %v2276, %v2303
    %v2308 = vadd.f32 %v2306, %v552
    %v2309 = vadd.f32 %v2307, %v553
    %v2310 = vtanh.pop %v2308
    %v2311 = vtanh.pop %v2309
    %2312 = vmatpush.bf16.msra.mxu0 0
    %2313 = vmatpush.bf16.msra.mxu0 0
    %2314 = vmatpush.bf16.msra.mxu0 0
    %2315 = vmatpush.bf16.msra.mxu0 0
    %2316 = vmatpush.bf16.msra.mxu0 0
    %2317 = vmatpush.bf16.msra.mxu0 0
    %2318 = vmatpush.bf16.msra.mxu0 %v302
    %2319 = vmatpush.bf16.msra.mxu0 %v290
    %2320 = vmatmul.bf16.gmra.mxu0 %v1986
    %v2321 = vpop.f32.mrf.mxu0
    %v2322 = vadd.f32 0.0, %v2321
    %v2323 = vpop.f32.mrf.mxu0
    %2324 = vdwg.mxu0
    %2325 = vmatpush.bf16.msra.mxu0 0
    %2326 = vmatpush.bf16.msra.mxu0 0
    %2327 = vmatpush.bf16.msra.mxu0 0
    %2328 = vmatpush.bf16.msra.mxu0 0
    %2329 = vmatpush.bf16.msra.mxu0 0
    %2330 = vmatpush.bf16.msra.mxu0 0
    %2331 = vmatpush.bf16.msra.mxu0 %v305
    %2332 = vmatpush.bf16.msra.mxu0 %v291
    %2333 = vmatmul.bf16.gmra.mxu0 %v1986
    %v2334 = vpop.f32.mrf.mxu0
    %v2335 = vadd.f32 0.0, %v2334
    %v2336 = vpop.f32.mrf.mxu0
    %2337 = vdwg.mxu0
    %2338 = vmatpush.bf16.msra.mxu0 0
    %2339 = vmatpush.bf16.msra.mxu0 0
    %2340 = vmatpush.bf16.msra.mxu0 0
    %2341 = vmatpush.bf16.msra.mxu0 0
    %2342 = vmatpush.bf16.msra.mxu0 0
    %2343 = vmatpush.bf16.msra.mxu0 0
    %2344 = vmatpush.bf16.msra.mxu0 %v355
    %2345 = vmatpush.bf16.msra.mxu0 %v345
    %2346 = vmatmul.bf16.gmra.mxu0 %v1837
    %v2347 = vpop.f32.mrf.mxu0
    %v2348 = vadd.f32 %v2322, %v2347
    %v2349 = vpop.f32.mrf.mxu0
    %2350 = vdwg.mxu0
    %2351 = vmatpush.bf16.msra.mxu0 0
    %2352 = vmatpush.bf16.msra.mxu0 0
    %2353 = vmatpush.bf16.msra.mxu0 0
    %2354 = vmatpush.bf16.msra.mxu0 0
    %2355 = vmatpush.bf16.msra.mxu0 0
    %2356 = vmatpush.bf16.msra.mxu0 0
    %2357 = vmatpush.bf16.msra.mxu0 %v358
    %2358 = vmatpush.bf16.msra.mxu0 %v346
    %2359 = vmatmul.bf16.gmra.mxu0 %v1837
    %v2360 = vpop.f32.mrf.mxu0
    %v2361 = vadd.f32 %v2335, %v2360
    %v2362 = vpop.f32.mrf.mxu0
    %2363 = vdwg.mxu0
    %2364 = vmatpush.bf16.msra.mxu0 0
    %2365 = vmatpush.bf16.msra.mxu0 0
    %2366 = vmatpush.bf16.msra.mxu0 0
    %2367 = vmatpush.bf16.msra.mxu0 0
    %2368 = vmatpush.bf16.msra.mxu0 0
    %2369 = vmatpush.bf16.msra.mxu0 0
    %2370 = vmatpush.bf16.msra.mxu0 %v408
    %2371 = vmatpush.bf16.msra.mxu0 %v398
    %2372 = vmatmul.bf16.gmra.mxu0 %v2129
    %v2373 = vpop.f32.mrf.mxu0
    %v2374 = vadd.f32 0.0, %v2373
    %v2375 = vpop.f32.mrf.mxu0
    %2376 = vdwg.mxu0
    %2377 = vmatpush.bf16.msra.mxu0 0
    %2378 = vmatpush.bf16.msra.mxu0 0
    %2379 = vmatpush.bf16.msra.mxu0 0
    %2380 = vmatpush.bf16.msra.mxu0 0
    %2381 = vmatpush.bf16.msra.mxu0 0
    %2382 = vmatpush.bf16.msra.mxu0 0
    %2383 = vmatpush.bf16.msra.mxu0 %v411
    %2384 = vmatpush.bf16.msra.mxu0 %v399
    %2385 = vmatmul.bf16.gmra.mxu0 %v2129
    %v2386 = vpop.f32.mrf.mxu0
    %v2387 = vadd.f32 0.0, %v2386
    %v2388 = vpop.f32.mrf.mxu0
    %2389 = vdwg.mxu0
    %v2390 = vadd.f32 %v2348, %v2374
    %v2391 = vadd.f32 %v2361, %v2387
    %2392 = vmatpush.bf16.msra.mxu0 0
    %2393 = vmatpush.bf16.msra.mxu0 0
    %2394 = vmatpush.bf16.msra.mxu0 0
    %2395 = vmatpush.bf16.msra.mxu0 0
    %2396 = vmatpush.bf16.msra.mxu0 0
    %2397 = vmatpush.bf16.msra.mxu0 0
    %2398 = vmatpush.bf16.msra.mxu0 %v463
    %2399 = vmatpush.bf16.msra.mxu0 %v453
    %2400 = vmatmul.bf16.gmra.mxu0 %v2278
    %v2401 = vpop.f32.mrf.mxu0
    %v2402 = vadd.f32 0.0, %v2401
    %v2403 = vpop.f32.mrf.mxu0
    %2404 = vdwg.mxu0
    %2405 = vmatpush.bf16.msra.mxu0 0
    %2406 = vmatpush.bf16.msra.mxu0 0
    %2407 = vmatpush.bf16.msra.mxu0 0
    %2408 = vmatpush.bf16.msra.mxu0 0
    %2409 = vmatpush.bf16.msra.mxu0 0
    %2410 = vmatpush.bf16.msra.mxu0 0
    %2411 = vmatpush.bf16.msra.mxu0 %v466
    %2412 = vmatpush.bf16.msra.mxu0 %v454
    %2413 = vmatmul.bf16.gmra.mxu0 %v2278
    %v2414 = vpop.f32.mrf.mxu0
    %v2415 = vadd.f32 0.0, %v2414
    %v2416 = vpop.f32.mrf.mxu0
    %2417 = vdwg.mxu0
    %v2418 = vadd.f32 %v2390, %v2402
    %v2419 = vadd.f32 %v2391, %v2415
    %v2421 = vsel %vm296, %v257, 0
    %2423 = vmatpush.bf16.msra.mxu0 0
    %2424 = vmatpush.bf16.msra.mxu0 0
    %2425 = vmatpush.bf16.msra.mxu0 0
    %2426 = vmatpush.bf16.msra.mxu0 0
    %2427 = vmatpush.bf16.msra.mxu0 0
    %2428 = vmatpush.bf16.msra.mxu0 0
    %2429 = vmatpush.bf16.msra.mxu0 %v518
    %2430 = vmatpush.bf16.msra.mxu0 %v508
    %2431 = vmatmul.bf16.gmra.mxu0 %v2421
    %v2432 = vpop.f32.mrf.mxu0
    %v2433 = vadd.f32 0.0, %v2432
    %v2434 = vpop.f32.mrf.mxu0
    %2435 = vdwg.mxu0
    %2436 = vmatpush.bf16.msra.mxu0 0
    %2437 = vmatpush.bf16.msra.mxu0 0
    %2438 = vmatpush.bf16.msra.mxu0 0
    %2439 = vmatpush.bf16.msra.mxu0 0
    %2440 = vmatpush.bf16.msra.mxu0 0
    %2441 = vmatpush.bf16.msra.mxu0 0
    %2442 = vmatpush.bf16.msra.mxu0 %v521
    %2443 = vmatpush.bf16.msra.mxu0 %v509
    %2444 = vmatmul.bf16.gmra.mxu0 %v2421
    %v2445 = vpop.f32.mrf.mxu0
    %v2446 = vadd.f32 0.0, %v2445
    %v2447 = vpop.f32.mrf.mxu0
    %2448 = vdwg.mxu0
    %v2449 = vadd.f32 %v2418, %v2433
    %v2450 = vadd.f32 %v2419, %v2446
    %v2451 = vadd.f32 %v2449, %v552
    %v2452 = vadd.f32 %v2450, %v553
    %v2453 = vtanh.pop %v2451
    %v2454 = vtanh.pop %v2452
    %v2455 = vadd.f32 %v2310, %v2453
    %v2456 = vadd.f32 %v2311, %v2454
    %v2457 = vmul.f32 %v2455, 0.5
    %v2458 = vmul.f32 %v2456, 0.5
    %v2459 = vpack.c.bf16 %v2457, %v2457
    %v2460 = vpack.c.bf16 %v2458, %v2458
    %2461 = vmatpush.bf16.msra.mxu0 0
    %2462 = vmatpush.bf16.msra.mxu0 0
    %2463 = vmatpush.bf16.msra.mxu0 0
    %2464 = vmatpush.bf16.msra.mxu0 0
    %2465 = vmatpush.bf16.msra.mxu0 0
    %2466 = vmatpush.bf16.msra.mxu0 0
    %2467 = vmatpush.bf16.msra.mxu0 %v302
    %2468 = vmatpush.bf16.msra.mxu0 %v290
    %2469 = vmatmul.bf16.gmra.mxu0 %v2129
    %v2470 = vpop.f32.mrf.mxu0
    %v2471 = vadd.f32 0.0, %v2470
    %v2472 = vpop.f32.mrf.mxu0
    %2473 = vdwg.mxu0
    %2474 = vmatpush.bf16.msra.mxu0 0
    %2475 = vmatpush.bf16.msra.mxu0 0
    %2476 = vmatpush.bf16.msra.mxu0 0
    %2477 = vmatpush.bf16.msra.mxu0 0
    %2478 = vmatpush.bf16.msra.mxu0 0
    %2479 = vmatpush.bf16.msra.mxu0 0
    %2480 = vmatpush.bf16.msra.mxu0 %v305
    %2481 = vmatpush.bf16.msra.mxu0 %v291
    %2482 = vmatmul.bf16.gmra.mxu0 %v2129
    %v2483 = vpop.f32.mrf.mxu0
    %v2484 = vadd.f32 0.0, %v2483
    %v2485 = vpop.f32.mrf.mxu0
    %2486 = vdwg.mxu0
    %2487 = vmatpush.bf16.msra.mxu0 0
    %2488 = vmatpush.bf16.msra.mxu0 0
    %2489 = vmatpush.bf16.msra.mxu0 0
    %2490 = vmatpush.bf16.msra.mxu0 0
    %2491 = vmatpush.bf16.msra.mxu0 0
    %2492 = vmatpush.bf16.msra.mxu0 0
    %2493 = vmatpush.bf16.msra.mxu0 %v355
    %2494 = vmatpush.bf16.msra.mxu0 %v345
    %2495 = vmatmul.bf16.gmra.mxu0 %v1986
    %v2496 = vpop.f32.mrf.mxu0
    %v2497 = vadd.f32 %v2471, %v2496
    %v2498 = vpop.f32.mrf.mxu0
    %2499 = vdwg.mxu0
    %2500 = vmatpush.bf16.msra.mxu0 0
    %2501 = vmatpush.bf16.msra.mxu0 0
    %2502 = vmatpush.bf16.msra.mxu0 0
    %2503 = vmatpush.bf16.msra.mxu0 0
    %2504 = vmatpush.bf16.msra.mxu0 0
    %2505 = vmatpush.bf16.msra.mxu0 0
    %2506 = vmatpush.bf16.msra.mxu0 %v358
    %2507 = vmatpush.bf16.msra.mxu0 %v346
    %2508 = vmatmul.bf16.gmra.mxu0 %v1986
    %v2509 = vpop.f32.mrf.mxu0
    %v2510 = vadd.f32 %v2484, %v2509
    %v2511 = vpop.f32.mrf.mxu0
    %2512 = vdwg.mxu0
    %2513 = vmatpush.bf16.msra.mxu0 0
    %2514 = vmatpush.bf16.msra.mxu0 0
    %2515 = vmatpush.bf16.msra.mxu0 0
    %2516 = vmatpush.bf16.msra.mxu0 0
    %2517 = vmatpush.bf16.msra.mxu0 0
    %2518 = vmatpush.bf16.msra.mxu0 0
    %2519 = vmatpush.bf16.msra.mxu0 %v408
    %2520 = vmatpush.bf16.msra.mxu0 %v398
    %2521 = vmatmul.bf16.gmra.mxu0 %v2278
    %v2522 = vpop.f32.mrf.mxu0
    %v2523 = vadd.f32 0.0, %v2522
    %v2524 = vpop.f32.mrf.mxu0
    %2525 = vdwg.mxu0
    %2526 = vmatpush.bf16.msra.mxu0 0
    %2527 = vmatpush.bf16.msra.mxu0 0
    %2528 = vmatpush.bf16.msra.mxu0 0
    %2529 = vmatpush.bf16.msra.mxu0 0
    %2530 = vmatpush.bf16.msra.mxu0 0
    %2531 = vmatpush.bf16.msra.mxu0 0
    %2532 = vmatpush.bf16.msra.mxu0 %v411
    %2533 = vmatpush.bf16.msra.mxu0 %v399
    %2534 = vmatmul.bf16.gmra.mxu0 %v2278
    %v2535 = vpop.f32.mrf.mxu0
    %v2536 = vadd.f32 0.0, %v2535
    %v2537 = vpop.f32.mrf.mxu0
    %2538 = vdwg.mxu0
    %v2539 = vadd.f32 %v2497, %v2523
    %v2540 = vadd.f32 %v2510, %v2536
    %2541 = vmatpush.bf16.msra.mxu0 0
    %2542 = vmatpush.bf16.msra.mxu0 0
    %2543 = vmatpush.bf16.msra.mxu0 0
    %2544 = vmatpush.bf16.msra.mxu0 0
    %2545 = vmatpush.bf16.msra.mxu0 0
    %2546 = vmatpush.bf16.msra.mxu0 0
    %2547 = vmatpush.bf16.msra.mxu0 %v463
    %2548 = vmatpush.bf16.msra.mxu0 %v453
    %2549 = vmatmul.bf16.gmra.mxu0 %v2421
    %v2550 = vpop.f32.mrf.mxu0
    %v2551 = vadd.f32 0.0, %v2550
    %v2552 = vpop.f32.mrf.mxu0
    %2553 = vdwg.mxu0
    %2554 = vmatpush.bf16.msra.mxu0 0
    %2555 = vmatpush.bf16.msra.mxu0 0
    %2556 = vmatpush.bf16.msra.mxu0 0
    %2557 = vmatpush.bf16.msra.mxu0 0
    %2558 = vmatpush.bf16.msra.mxu0 0
    %2559 = vmatpush.bf16.msra.mxu0 0
    %2560 = vmatpush.bf16.msra.mxu0 %v466
    %2561 = vmatpush.bf16.msra.mxu0 %v454
    %2562 = vmatmul.bf16.gmra.mxu0 %v2421
    %v2563 = vpop.f32.mrf.mxu0
    %v2564 = vadd.f32 0.0, %v2563
    %v2565 = vpop.f32.mrf.mxu0
    %2566 = vdwg.mxu0
    %v2567 = vadd.f32 %v2539, %v2551
    %v2568 = vadd.f32 %v2540, %v2564
    %v2570 = vsel %vm296, %v259, 0
    %2572 = vmatpush.bf16.msra.mxu0 0
    %2573 = vmatpush.bf16.msra.mxu0 0
    %2574 = vmatpush.bf16.msra.mxu0 0
    %2575 = vmatpush.bf16.msra.mxu0 0
    %2576 = vmatpush.bf16.msra.mxu0 0
    %2577 = vmatpush.bf16.msra.mxu0 0
    %2578 = vmatpush.bf16.msra.mxu0 %v518
    %2579 = vmatpush.bf16.msra.mxu0 %v508
    %2580 = vmatmul.bf16.gmra.mxu0 %v2570
    %v2581 = vpop.f32.mrf.mxu0
    %v2582 = vadd.f32 0.0, %v2581
    %v2583 = vpop.f32.mrf.mxu0
    %2584 = vdwg.mxu0
    %2585 = vmatpush.bf16.msra.mxu0 0
    %2586 = vmatpush.bf16.msra.mxu0 0
    %2587 = vmatpush.bf16.msra.mxu0 0
    %2588 = vmatpush.bf16.msra.mxu0 0
    %2589 = vmatpush.bf16.msra.mxu0 0
    %2590 = vmatpush.bf16.msra.mxu0 0
    %2591 = vmatpush.bf16.msra.mxu0 %v521
    %2592 = vmatpush.bf16.msra.mxu0 %v509
    %2593 = vmatmul.bf16.gmra.mxu0 %v2570
    %v2594 = vpop.f32.mrf.mxu0
    %v2595 = vadd.f32 0.0, %v2594
    %v2596 = vpop.f32.mrf.mxu0
    %2597 = vdwg.mxu0
    %v2598 = vadd.f32 %v2567, %v2582
    %v2599 = vadd.f32 %v2568, %v2595
    %v2600 = vadd.f32 %v2598, %v552
    %v2601 = vadd.f32 %v2599, %v553
    %v2602 = vtanh.pop %v2600
    %v2603 = vtanh.pop %v2601
    %2604 = vmatpush.bf16.msra.mxu0 0
    %2605 = vmatpush.bf16.msra.mxu0 0
    %2606 = vmatpush.bf16.msra.mxu0 0
    %2607 = vmatpush.bf16.msra.mxu0 0
    %2608 = vmatpush.bf16.msra.mxu0 0
    %2609 = vmatpush.bf16.msra.mxu0 0
    %2610 = vmatpush.bf16.msra.mxu0 %v302
    %2611 = vmatpush.bf16.msra.mxu0 %v290
    %2612 = vmatmul.bf16.gmra.mxu0 %v2278
    %v2613 = vpop.f32.mrf.mxu0
    %v2614 = vadd.f32 0.0, %v2613
    %v2615 = vpop.f32.mrf.mxu0
    %2616 = vdwg.mxu0
    %2617 = vmatpush.bf16.msra.mxu0 0
    %2618 = vmatpush.bf16.msra.mxu0 0
    %2619 = vmatpush.bf16.msra.mxu0 0
    %2620 = vmatpush.bf16.msra.mxu0 0
    %2621 = vmatpush.bf16.msra.mxu0 0
    %2622 = vmatpush.bf16.msra.mxu0 0
    %2623 = vmatpush.bf16.msra.mxu0 %v305
    %2624 = vmatpush.bf16.msra.mxu0 %v291
    %2625 = vmatmul.bf16.gmra.mxu0 %v2278
    %v2626 = vpop.f32.mrf.mxu0
    %v2627 = vadd.f32 0.0, %v2626
    %v2628 = vpop.f32.mrf.mxu0
    %2629 = vdwg.mxu0
    %2630 = vmatpush.bf16.msra.mxu0 0
    %2631 = vmatpush.bf16.msra.mxu0 0
    %2632 = vmatpush.bf16.msra.mxu0 0
    %2633 = vmatpush.bf16.msra.mxu0 0
    %2634 = vmatpush.bf16.msra.mxu0 0
    %2635 = vmatpush.bf16.msra.mxu0 0
    %2636 = vmatpush.bf16.msra.mxu0 %v355
    %2637 = vmatpush.bf16.msra.mxu0 %v345
    %2638 = vmatmul.bf16.gmra.mxu0 %v2129
    %v2639 = vpop.f32.mrf.mxu0
    %v2640 = vadd.f32 %v2614, %v2639
    %v2641 = vpop.f32.mrf.mxu0
    %2642 = vdwg.mxu0
    %2643 = vmatpush.bf16.msra.mxu0 0
    %2644 = vmatpush.bf16.msra.mxu0 0
    %2645 = vmatpush.bf16.msra.mxu0 0
    %2646 = vmatpush.bf16.msra.mxu0 0
    %2647 = vmatpush.bf16.msra.mxu0 0
    %2648 = vmatpush.bf16.msra.mxu0 0
    %2649 = vmatpush.bf16.msra.mxu0 %v358
    %2650 = vmatpush.bf16.msra.mxu0 %v346
    %2651 = vmatmul.bf16.gmra.mxu0 %v2129
    %v2652 = vpop.f32.mrf.mxu0
    %v2653 = vadd.f32 %v2627, %v2652
    %v2654 = vpop.f32.mrf.mxu0
    %2655 = vdwg.mxu0
    %2656 = vmatpush.bf16.msra.mxu0 0
    %2657 = vmatpush.bf16.msra.mxu0 0
    %2658 = vmatpush.bf16.msra.mxu0 0
    %2659 = vmatpush.bf16.msra.mxu0 0
    %2660 = vmatpush.bf16.msra.mxu0 0
    %2661 = vmatpush.bf16.msra.mxu0 0
    %2662 = vmatpush.bf16.msra.mxu0 %v408
    %2663 = vmatpush.bf16.msra.mxu0 %v398
    %2664 = vmatmul.bf16.gmra.mxu0 %v2421
    %v2665 = vpop.f32.mrf.mxu0
    %v2666 = vadd.f32 0.0, %v2665
    %v2667 = vpop.f32.mrf.mxu0
    %2668 = vdwg.mxu0
    %2669 = vmatpush.bf16.msra.mxu0 0
    %2670 = vmatpush.bf16.msra.mxu0 0
    %2671 = vmatpush.bf16.msra.mxu0 0
    %2672 = vmatpush.bf16.msra.mxu0 0
    %2673 = vmatpush.bf16.msra.mxu0 0
    %2674 = vmatpush.bf16.msra.mxu0 0
    %2675 = vmatpush.bf16.msra.mxu0 %v411
    %2676 = vmatpush.bf16.msra.mxu0 %v399
    %2677 = vmatmul.bf16.gmra.mxu0 %v2421
    %v2678 = vpop.f32.mrf.mxu0
    %v2679 = vadd.f32 0.0, %v2678
    %v2680 = vpop.f32.mrf.mxu0
    %2681 = vdwg.mxu0
    %v2682 = vadd.f32 %v2640, %v2666
    %v2683 = vadd.f32 %v2653, %v2679
    %2684 = vmatpush.bf16.msra.mxu0 0
    %2685 = vmatpush.bf16.msra.mxu0 0
    %2686 = vmatpush.bf16.msra.mxu0 0
    %2687 = vmatpush.bf16.msra.mxu0 0
    %2688 = vmatpush.bf16.msra.mxu0 0
    %2689 = vmatpush.bf16.msra.mxu0 0
    %2690 = vmatpush.bf16.msra.mxu0 %v463
    %2691 = vmatpush.bf16.msra.mxu0 %v453
    %2692 = vmatmul.bf16.gmra.mxu0 %v2570
    %v2693 = vpop.f32.mrf.mxu0
    %v2694 = vadd.f32 0.0, %v2693
    %v2695 = vpop.f32.mrf.mxu0
    %2696 = vdwg.mxu0
    %2697 = vmatpush.bf16.msra.mxu0 0
    %2698 = vmatpush.bf16.msra.mxu0 0
    %2699 = vmatpush.bf16.msra.mxu0 0
    %2700 = vmatpush.bf16.msra.mxu0 0
    %2701 = vmatpush.bf16.msra.mxu0 0
    %2702 = vmatpush.bf16.msra.mxu0 0
    %2703 = vmatpush.bf16.msra.mxu0 %v466
    %2704 = vmatpush.bf16.msra.mxu0 %v454
    %2705 = vmatmul.bf16.gmra.mxu0 %v2570
    %v2706 = vpop.f32.mrf.mxu0
    %v2707 = vadd.f32 0.0, %v2706
    %v2708 = vpop.f32.mrf.mxu0
    %2709 = vdwg.mxu0
    %v2710 = vadd.f32 %v2682, %v2694
    %v2711 = vadd.f32 %v2683, %v2707
    %v2713 = vsel %vm296, %v261, 0
    %2715 = vmatpush.bf16.msra.mxu0 0
    %2716 = vmatpush.bf16.msra.mxu0 0
    %2717 = vmatpush.bf16.msra.mxu0 0
    %2718 = vmatpush.bf16.msra.mxu0 0
    %2719 = vmatpush.bf16.msra.mxu0 0
    %2720 = vmatpush.bf16.msra.mxu0 0
    %2721 = vmatpush.bf16.msra.mxu0 %v518
    %2722 = vmatpush.bf16.msra.mxu0 %v508
    %2723 = vmatmul.bf16.gmra.mxu0 %v2713
    %v2724 = vpop.f32.mrf.mxu0
    %v2725 = vadd.f32 0.0, %v2724
    %v2726 = vpop.f32.mrf.mxu0
    %2727 = vdwg.mxu0
    %2728 = vmatpush.bf16.msra.mxu0 0
    %2729 = vmatpush.bf16.msra.mxu0 0
    %2730 = vmatpush.bf16.msra.mxu0 0
    %2731 = vmatpush.bf16.msra.mxu0 0
    %2732 = vmatpush.bf16.msra.mxu0 0
    %2733 = vmatpush.bf16.msra.mxu0 0
    %2734 = vmatpush.bf16.msra.mxu0 %v521
    %2735 = vmatpush.bf16.msra.mxu0 %v509
    %2736 = vmatmul.bf16.gmra.mxu0 %v2713
    %v2737 = vpop.f32.mrf.mxu0
    %v2738 = vadd.f32 0.0, %v2737
    %v2739 = vpop.f32.mrf.mxu0
    %2740 = vdwg.mxu0
    %v2741 = vadd.f32 %v2710, %v2725
    %v2742 = vadd.f32 %v2711, %v2738
    %v2743 = vadd.f32 %v2741, %v552
    %v2744 = vadd.f32 %v2742, %v553
    %v2745 = vtanh.pop %v2743
    %v2746 = vtanh.pop %v2744
    %v2747 = vadd.f32 %v2602, %v2745
    %v2748 = vadd.f32 %v2603, %v2746
    %v2749 = vmul.f32 %v2747, 0.5
    %v2750 = vmul.f32 %v2748, 0.5
    %v2751 = vpack.c.bf16 %v2749, %v2749
    %v2752 = vpack.c.bf16 %v2750, %v2750
    %2753 = vmatpush.bf16.msra.mxu0 0
    %2754 = vmatpush.bf16.msra.mxu0 0
    %2755 = vmatpush.bf16.msra.mxu0 0
    %2756 = vmatpush.bf16.msra.mxu0 0
    %2757 = vmatpush.bf16.msra.mxu0 0
    %2758 = vmatpush.bf16.msra.mxu0 0
    %2759 = vmatpush.bf16.msra.mxu0 %v302
    %2760 = vmatpush.bf16.msra.mxu0 %v290
    %2761 = vmatmul.bf16.gmra.mxu0 %v2421
    %v2762 = vpop.f32.mrf.mxu0
    %v2763 = vadd.f32 0.0, %v2762
    %v2764 = vpop.f32.mrf.mxu0
    %2765 = vdwg.mxu0
    %2766 = vmatpush.bf16.msra.mxu0 0
    %2767 = vmatpush.bf16.msra.mxu0 0
    %2768 = vmatpush.bf16.msra.mxu0 0
    %2769 = vmatpush.bf16.msra.mxu0 0
    %2770 = vmatpush.bf16.msra.mxu0 0
    %2771 = vmatpush.bf16.msra.mxu0 0
    %2772 = vmatpush.bf16.msra.mxu0 %v305
    %2773 = vmatpush.bf16.msra.mxu0 %v291
    %2774 = vmatmul.bf16.gmra.mxu0 %v2421
    %v2775 = vpop.f32.mrf.mxu0
    %v2776 = vadd.f32 0.0, %v2775
    %v2777 = vpop.f32.mrf.mxu0
    %2778 = vdwg.mxu0
    %2779 = vmatpush.bf16.msra.mxu0 0
    %2780 = vmatpush.bf16.msra.mxu0 0
    %2781 = vmatpush.bf16.msra.mxu0 0
    %2782 = vmatpush.bf16.msra.mxu0 0
    %2783 = vmatpush.bf16.msra.mxu0 0
    %2784 = vmatpush.bf16.msra.mxu0 0
    %2785 = vmatpush.bf16.msra.mxu0 %v355
    %2786 = vmatpush.bf16.msra.mxu0 %v345
    %2787 = vmatmul.bf16.gmra.mxu0 %v2278
    %v2788 = vpop.f32.mrf.mxu0
    %v2789 = vadd.f32 %v2763, %v2788
    %v2790 = vpop.f32.mrf.mxu0
    %2791 = vdwg.mxu0
    %2792 = vmatpush.bf16.msra.mxu0 0
    %2793 = vmatpush.bf16.msra.mxu0 0
    %2794 = vmatpush.bf16.msra.mxu0 0
    %2795 = vmatpush.bf16.msra.mxu0 0
    %2796 = vmatpush.bf16.msra.mxu0 0
    %2797 = vmatpush.bf16.msra.mxu0 0
    %2798 = vmatpush.bf16.msra.mxu0 %v358
    %2799 = vmatpush.bf16.msra.mxu0 %v346
    %2800 = vmatmul.bf16.gmra.mxu0 %v2278
    %v2801 = vpop.f32.mrf.mxu0
    %v2802 = vadd.f32 %v2776, %v2801
    %v2803 = vpop.f32.mrf.mxu0
    %2804 = vdwg.mxu0
    %2805 = vmatpush.bf16.msra.mxu0 0
    %2806 = vmatpush.bf16.msra.mxu0 0
    %2807 = vmatpush.bf16.msra.mxu0 0
    %2808 = vmatpush.bf16.msra.mxu0 0
    %2809 = vmatpush.bf16.msra.mxu0 0
    %2810 = vmatpush.bf16.msra.mxu0 0
    %2811 = vmatpush.bf16.msra.mxu0 %v408
    %2812 = vmatpush.bf16.msra.mxu0 %v398
    %2813 = vmatmul.bf16.gmra.mxu0 %v2570
    %v2814 = vpop.f32.mrf.mxu0
    %v2815 = vadd.f32 0.0, %v2814
    %v2816 = vpop.f32.mrf.mxu0
    %2817 = vdwg.mxu0
    %2818 = vmatpush.bf16.msra.mxu0 0
    %2819 = vmatpush.bf16.msra.mxu0 0
    %2820 = vmatpush.bf16.msra.mxu0 0
    %2821 = vmatpush.bf16.msra.mxu0 0
    %2822 = vmatpush.bf16.msra.mxu0 0
    %2823 = vmatpush.bf16.msra.mxu0 0
    %2824 = vmatpush.bf16.msra.mxu0 %v411
    %2825 = vmatpush.bf16.msra.mxu0 %v399
    %2826 = vmatmul.bf16.gmra.mxu0 %v2570
    %v2827 = vpop.f32.mrf.mxu0
    %v2828 = vadd.f32 0.0, %v2827
    %v2829 = vpop.f32.mrf.mxu0
    %2830 = vdwg.mxu0
    %v2831 = vadd.f32 %v2789, %v2815
    %v2832 = vadd.f32 %v2802, %v2828
    %2833 = vmatpush.bf16.msra.mxu0 0
    %2834 = vmatpush.bf16.msra.mxu0 0
    %2835 = vmatpush.bf16.msra.mxu0 0
    %2836 = vmatpush.bf16.msra.mxu0 0
    %2837 = vmatpush.bf16.msra.mxu0 0
    %2838 = vmatpush.bf16.msra.mxu0 0
    %2839 = vmatpush.bf16.msra.mxu0 %v463
    %2840 = vmatpush.bf16.msra.mxu0 %v453
    %2841 = vmatmul.bf16.gmra.mxu0 %v2713
    %v2842 = vpop.f32.mrf.mxu0
    %v2843 = vadd.f32 0.0, %v2842
    %v2844 = vpop.f32.mrf.mxu0
    %2845 = vdwg.mxu0
    %2846 = vmatpush.bf16.msra.mxu0 0
    %2847 = vmatpush.bf16.msra.mxu0 0
    %2848 = vmatpush.bf16.msra.mxu0 0
    %2849 = vmatpush.bf16.msra.mxu0 0
    %2850 = vmatpush.bf16.msra.mxu0 0
    %2851 = vmatpush.bf16.msra.mxu0 0
    %2852 = vmatpush.bf16.msra.mxu0 %v466
    %2853 = vmatpush.bf16.msra.mxu0 %v454
    %2854 = vmatmul.bf16.gmra.mxu0 %v2713
    %v2855 = vpop.f32.mrf.mxu0
    %v2856 = vadd.f32 0.0, %v2855
    %v2857 = vpop.f32.mrf.mxu0
    %2858 = vdwg.mxu0
    %v2859 = vadd.f32 %v2831, %v2843
    %v2860 = vadd.f32 %v2832, %v2856
    %v2862 = vsel %vm296, %v263, 0
    %2864 = vmatpush.bf16.msra.mxu0 0
    %2865 = vmatpush.bf16.msra.mxu0 0
    %2866 = vmatpush.bf16.msra.mxu0 0
    %2867 = vmatpush.bf16.msra.mxu0 0
    %2868 = vmatpush.bf16.msra.mxu0 0
    %2869 = vmatpush.bf16.msra.mxu0 0
    %2870 = vmatpush.bf16.msra.mxu0 %v518
    %2871 = vmatpush.bf16.msra.mxu0 %v508
    %2872 = vmatmul.bf16.gmra.mxu0 %v2862
    %v2873 = vpop.f32.mrf.mxu0
    %v2874 = vadd.f32 0.0, %v2873
    %v2875 = vpop.f32.mrf.mxu0
    %2876 = vdwg.mxu0
    %2877 = vmatpush.bf16.msra.mxu0 0
    %2878 = vmatpush.bf16.msra.mxu0 0
    %2879 = vmatpush.bf16.msra.mxu0 0
    %2880 = vmatpush.bf16.msra.mxu0 0
    %2881 = vmatpush.bf16.msra.mxu0 0
    %2882 = vmatpush.bf16.msra.mxu0 0
    %2883 = vmatpush.bf16.msra.mxu0 %v521
    %2884 = vmatpush.bf16.msra.mxu0 %v509
    %2885 = vmatmul.bf16.gmra.mxu0 %v2862
    %v2886 = vpop.f32.mrf.mxu0
    %v2887 = vadd.f32 0.0, %v2886
    %v2888 = vpop.f32.mrf.mxu0
    %2889 = vdwg.mxu0
    %v2890 = vadd.f32 %v2859, %v2874
    %v2891 = vadd.f32 %v2860, %v2887
    %v2892 = vadd.f32 %v2890, %v552
    %v2893 = vadd.f32 %v2891, %v553
    %v2894 = vtanh.pop %v2892
    %v2895 = vtanh.pop %v2893
    %2896 = vmatpush.bf16.msra.mxu0 0
    %2897 = vmatpush.bf16.msra.mxu0 0
    %2898 = vmatpush.bf16.msra.mxu0 0
    %2899 = vmatpush.bf16.msra.mxu0 0
    %2900 = vmatpush.bf16.msra.mxu0 0
    %2901 = vmatpush.bf16.msra.mxu0 0
    %2902 = vmatpush.bf16.msra.mxu0 %v302
    %2903 = vmatpush.bf16.msra.mxu0 %v290
    %2904 = vmatmul.bf16.gmra.mxu0 %v2570
    %v2905 = vpop.f32.mrf.mxu0
    %v2906 = vadd.f32 0.0, %v2905
    %v2907 = vpop.f32.mrf.mxu0
    %2908 = vdwg.mxu0
    %2909 = vmatpush.bf16.msra.mxu0 0
    %2910 = vmatpush.bf16.msra.mxu0 0
    %2911 = vmatpush.bf16.msra.mxu0 0
    %2912 = vmatpush.bf16.msra.mxu0 0
    %2913 = vmatpush.bf16.msra.mxu0 0
    %2914 = vmatpush.bf16.msra.mxu0 0
    %2915 = vmatpush.bf16.msra.mxu0 %v305
    %2916 = vmatpush.bf16.msra.mxu0 %v291
    %2917 = vmatmul.bf16.gmra.mxu0 %v2570
    %v2918 = vpop.f32.mrf.mxu0
    %v2919 = vadd.f32 0.0, %v2918
    %v2920 = vpop.f32.mrf.mxu0
    %2921 = vdwg.mxu0
    %2922 = vmatpush.bf16.msra.mxu0 0
    %2923 = vmatpush.bf16.msra.mxu0 0
    %2924 = vmatpush.bf16.msra.mxu0 0
    %2925 = vmatpush.bf16.msra.mxu0 0
    %2926 = vmatpush.bf16.msra.mxu0 0
    %2927 = vmatpush.bf16.msra.mxu0 0
    %2928 = vmatpush.bf16.msra.mxu0 %v355
    %2929 = vmatpush.bf16.msra.mxu0 %v345
    %2930 = vmatmul.bf16.gmra.mxu0 %v2421
    %v2931 = vpop.f32.mrf.mxu0
    %v2932 = vadd.f32 %v2906, %v2931
    %v2933 = vpop.f32.mrf.mxu0
    %2934 = vdwg.mxu0
    %2935 = vmatpush.bf16.msra.mxu0 0
    %2936 = vmatpush.bf16.msra.mxu0 0
    %2937 = vmatpush.bf16.msra.mxu0 0
    %2938 = vmatpush.bf16.msra.mxu0 0
    %2939 = vmatpush.bf16.msra.mxu0 0
    %2940 = vmatpush.bf16.msra.mxu0 0
    %2941 = vmatpush.bf16.msra.mxu0 %v358
    %2942 = vmatpush.bf16.msra.mxu0 %v346
    %2943 = vmatmul.bf16.gmra.mxu0 %v2421
    %v2944 = vpop.f32.mrf.mxu0
    %v2945 = vadd.f32 %v2919, %v2944
    %v2946 = vpop.f32.mrf.mxu0
    %2947 = vdwg.mxu0
    %2948 = vmatpush.bf16.msra.mxu0 0
    %2949 = vmatpush.bf16.msra.mxu0 0
    %2950 = vmatpush.bf16.msra.mxu0 0
    %2951 = vmatpush.bf16.msra.mxu0 0
    %2952 = vmatpush.bf16.msra.mxu0 0
    %2953 = vmatpush.bf16.msra.mxu0 0
    %2954 = vmatpush.bf16.msra.mxu0 %v408
    %2955 = vmatpush.bf16.msra.mxu0 %v398
    %2956 = vmatmul.bf16.gmra.mxu0 %v2713
    %v2957 = vpop.f32.mrf.mxu0
    %v2958 = vadd.f32 0.0, %v2957
    %v2959 = vpop.f32.mrf.mxu0
    %2960 = vdwg.mxu0
    %2961 = vmatpush.bf16.msra.mxu0 0
    %2962 = vmatpush.bf16.msra.mxu0 0
    %2963 = vmatpush.bf16.msra.mxu0 0
    %2964 = vmatpush.bf16.msra.mxu0 0
    %2965 = vmatpush.bf16.msra.mxu0 0
    %2966 = vmatpush.bf16.msra.mxu0 0
    %2967 = vmatpush.bf16.msra.mxu0 %v411
    %2968 = vmatpush.bf16.msra.mxu0 %v399
    %2969 = vmatmul.bf16.gmra.mxu0 %v2713
    %v2970 = vpop.f32.mrf.mxu0
    %v2971 = vadd.f32 0.0, %v2970
    %v2972 = vpop.f32.mrf.mxu0
    %2973 = vdwg.mxu0
    %v2974 = vadd.f32 %v2932, %v2958
    %v2975 = vadd.f32 %v2945, %v2971
    %2976 = vmatpush.bf16.msra.mxu0 0
    %2977 = vmatpush.bf16.msra.mxu0 0
    %2978 = vmatpush.bf16.msra.mxu0 0
    %2979 = vmatpush.bf16.msra.mxu0 0
    %2980 = vmatpush.bf16.msra.mxu0 0
    %2981 = vmatpush.bf16.msra.mxu0 0
    %2982 = vmatpush.bf16.msra.mxu0 %v463
    %2983 = vmatpush.bf16.msra.mxu0 %v453
    %2984 = vmatmul.bf16.gmra.mxu0 %v2862
    %v2985 = vpop.f32.mrf.mxu0
    %v2986 = vadd.f32 0.0, %v2985
    %v2987 = vpop.f32.mrf.mxu0
    %2988 = vdwg.mxu0
    %2989 = vmatpush.bf16.msra.mxu0 0
    %2990 = vmatpush.bf16.msra.mxu0 0
    %2991 = vmatpush.bf16.msra.mxu0 0
    %2992 = vmatpush.bf16.msra.mxu0 0
    %2993 = vmatpush.bf16.msra.mxu0 0
    %2994 = vmatpush.bf16.msra.mxu0 0
    %2995 = vmatpush.bf16.msra.mxu0 %v466
    %2996 = vmatpush.bf16.msra.mxu0 %v454
    %2997 = vmatmul.bf16.gmra.mxu0 %v2862
    %v2998 = vpop.f32.mrf.mxu0
    %v2999 = vadd.f32 0.0, %v2998
    %v3000 = vpop.f32.mrf.mxu0
    %3001 = vdwg.mxu0
    %v3002 = vadd.f32 %v2974, %v2986
    %v3003 = vadd.f32 %v2975, %v2999
    %v3005 = vsel %vm296, %v265, 0
    %3007 = vmatpush.bf16.msra.mxu0 0
    %3008 = vmatpush.bf16.msra.mxu0 0
    %3009 = vmatpush.bf16.msra.mxu0 0
    %3010 = vmatpush.bf16.msra.mxu0 0
    %3011 = vmatpush.bf16.msra.mxu0 0
    %3012 = vmatpush.bf16.msra.mxu0 0
    %3013 = vmatpush.bf16.msra.mxu0 %v518
    %3014 = vmatpush.bf16.msra.mxu0 %v508
    %3015 = vmatmul.bf16.gmra.mxu0 %v3005
    %v3016 = vpop.f32.mrf.mxu0
    %v3017 = vadd.f32 0.0, %v3016
    %v3018 = vpop.f32.mrf.mxu0
    %3019 = vdwg.mxu0
    %3020 = vmatpush.bf16.msra.mxu0 0
    %3021 = vmatpush.bf16.msra.mxu0 0
    %3022 = vmatpush.bf16.msra.mxu0 0
    %3023 = vmatpush.bf16.msra.mxu0 0
    %3024 = vmatpush.bf16.msra.mxu0 0
    %3025 = vmatpush.bf16.msra.mxu0 0
    %3026 = vmatpush.bf16.msra.mxu0 %v521
    %3027 = vmatpush.bf16.msra.mxu0 %v509
    %3028 = vmatmul.bf16.gmra.mxu0 %v3005
    %v3029 = vpop.f32.mrf.mxu0
    %v3030 = vadd.f32 0.0, %v3029
    %v3031 = vpop.f32.mrf.mxu0
    %3032 = vdwg.mxu0
    %v3033 = vadd.f32 %v3002, %v3017
    %v3034 = vadd.f32 %v3003, %v3030
    %v3035 = vadd.f32 %v3033, %v552
    %v3036 = vadd.f32 %v3034, %v553
    %v3037 = vtanh.pop %v3035
    %v3038 = vtanh.pop %v3036
    %v3039 = vadd.f32 %v2894, %v3037
    %v3040 = vadd.f32 %v2895, %v3038
    %v3041 = vmul.f32 %v3039, 0.5
    %v3042 = vmul.f32 %v3040, 0.5
    %v3043 = vpack.c.bf16 %v3041, %v3041
    %v3044 = vpack.c.bf16 %v3042, %v3042
    %3045 = vmatpush.bf16.msra.mxu0 0
    %3046 = vmatpush.bf16.msra.mxu0 0
    %3047 = vmatpush.bf16.msra.mxu0 0
    %3048 = vmatpush.bf16.msra.mxu0 0
    %3049 = vmatpush.bf16.msra.mxu0 0
    %3050 = vmatpush.bf16.msra.mxu0 0
    %3051 = vmatpush.bf16.msra.mxu0 %v302
    %3052 = vmatpush.bf16.msra.mxu0 %v290
    %3053 = vmatmul.bf16.gmra.mxu0 %v2713
    %v3054 = vpop.f32.mrf.mxu0
    %v3055 = vadd.f32 0.0, %v3054
    %v3056 = vpop.f32.mrf.mxu0
    %3057 = vdwg.mxu0
    %3058 = vmatpush.bf16.msra.mxu0 0
    %3059 = vmatpush.bf16.msra.mxu0 0
    %3060 = vmatpush.bf16.msra.mxu0 0
    %3061 = vmatpush.bf16.msra.mxu0 0
    %3062 = vmatpush.bf16.msra.mxu0 0
    %3063 = vmatpush.bf16.msra.mxu0 0
    %3064 = vmatpush.bf16.msra.mxu0 %v305
    %3065 = vmatpush.bf16.msra.mxu0 %v291
    %3066 = vmatmul.bf16.gmra.mxu0 %v2713
    %v3067 = vpop.f32.mrf.mxu0
    %v3068 = vadd.f32 0.0, %v3067
    %v3069 = vpop.f32.mrf.mxu0
    %3070 = vdwg.mxu0
    %3071 = vmatpush.bf16.msra.mxu0 0
    %3072 = vmatpush.bf16.msra.mxu0 0
    %3073 = vmatpush.bf16.msra.mxu0 0
    %3074 = vmatpush.bf16.msra.mxu0 0
    %3075 = vmatpush.bf16.msra.mxu0 0
    %3076 = vmatpush.bf16.msra.mxu0 0
    %3077 = vmatpush.bf16.msra.mxu0 %v355
    %3078 = vmatpush.bf16.msra.mxu0 %v345
    %3079 = vmatmul.bf16.gmra.mxu0 %v2570
    %v3080 = vpop.f32.mrf.mxu0
    %v3081 = vadd.f32 %v3055, %v3080
    %v3082 = vpop.f32.mrf.mxu0
    %3083 = vdwg.mxu0
    %3084 = vmatpush.bf16.msra.mxu0 0
    %3085 = vmatpush.bf16.msra.mxu0 0
    %3086 = vmatpush.bf16.msra.mxu0 0
    %3087 = vmatpush.bf16.msra.mxu0 0
    %3088 = vmatpush.bf16.msra.mxu0 0
    %3089 = vmatpush.bf16.msra.mxu0 0
    %3090 = vmatpush.bf16.msra.mxu0 %v358
    %3091 = vmatpush.bf16.msra.mxu0 %v346
    %3092 = vmatmul.bf16.gmra.mxu0 %v2570
    %v3093 = vpop.f32.mrf.mxu0
    %v3094 = vadd.f32 %v3068, %v3093
    %v3095 = vpop.f32.mrf.mxu0
    %3096 = vdwg.mxu0
    %3097 = vmatpush.bf16.msra.mxu0 0
    %3098 = vmatpush.bf16.msra.mxu0 0
    %3099 = vmatpush.bf16.msra.mxu0 0
    %3100 = vmatpush.bf16.msra.mxu0 0
    %3101 = vmatpush.bf16.msra.mxu0 0
    %3102 = vmatpush.bf16.msra.mxu0 0
    %3103 = vmatpush.bf16.msra.mxu0 %v408
    %3104 = vmatpush.bf16.msra.mxu0 %v398
    %3105 = vmatmul.bf16.gmra.mxu0 %v2862
    %v3106 = vpop.f32.mrf.mxu0
    %v3107 = vadd.f32 0.0, %v3106
    %v3108 = vpop.f32.mrf.mxu0
    %3109 = vdwg.mxu0
    %3110 = vmatpush.bf16.msra.mxu0 0
    %3111 = vmatpush.bf16.msra.mxu0 0
    %3112 = vmatpush.bf16.msra.mxu0 0
    %3113 = vmatpush.bf16.msra.mxu0 0
    %3114 = vmatpush.bf16.msra.mxu0 0
    %3115 = vmatpush.bf16.msra.mxu0 0
    %3116 = vmatpush.bf16.msra.mxu0 %v411
    %3117 = vmatpush.bf16.msra.mxu0 %v399
    %3118 = vmatmul.bf16.gmra.mxu0 %v2862
    %v3119 = vpop.f32.mrf.mxu0
    %v3120 = vadd.f32 0.0, %v3119
    %v3121 = vpop.f32.mrf.mxu0
    %3122 = vdwg.mxu0
    %v3123 = vadd.f32 %v3081, %v3107
    %v3124 = vadd.f32 %v3094, %v3120
    %3125 = vmatpush.bf16.msra.mxu0 0
    %3126 = vmatpush.bf16.msra.mxu0 0
    %3127 = vmatpush.bf16.msra.mxu0 0
    %3128 = vmatpush.bf16.msra.mxu0 0
    %3129 = vmatpush.bf16.msra.mxu0 0
    %3130 = vmatpush.bf16.msra.mxu0 0
    %3131 = vmatpush.bf16.msra.mxu0 %v463
    %3132 = vmatpush.bf16.msra.mxu0 %v453
    %3133 = vmatmul.bf16.gmra.mxu0 %v3005
    %v3134 = vpop.f32.mrf.mxu0
    %v3135 = vadd.f32 0.0, %v3134
    %v3136 = vpop.f32.mrf.mxu0
    %3137 = vdwg.mxu0
    %3138 = vmatpush.bf16.msra.mxu0 0
    %3139 = vmatpush.bf16.msra.mxu0 0
    %3140 = vmatpush.bf16.msra.mxu0 0
    %3141 = vmatpush.bf16.msra.mxu0 0
    %3142 = vmatpush.bf16.msra.mxu0 0
    %3143 = vmatpush.bf16.msra.mxu0 0
    %3144 = vmatpush.bf16.msra.mxu0 %v466
    %3145 = vmatpush.bf16.msra.mxu0 %v454
    %3146 = vmatmul.bf16.gmra.mxu0 %v3005
    %v3147 = vpop.f32.mrf.mxu0
    %v3148 = vadd.f32 0.0, %v3147
    %v3149 = vpop.f32.mrf.mxu0
    %3150 = vdwg.mxu0
    %v3151 = vadd.f32 %v3123, %v3135
    %v3152 = vadd.f32 %v3124, %v3148
    %v3154 = vsel %vm296, %v267, 0
    %3156 = vmatpush.bf16.msra.mxu0 0
    %3157 = vmatpush.bf16.msra.mxu0 0
    %3158 = vmatpush.bf16.msra.mxu0 0
    %3159 = vmatpush.bf16.msra.mxu0 0
    %3160 = vmatpush.bf16.msra.mxu0 0
    %3161 = vmatpush.bf16.msra.mxu0 0
    %3162 = vmatpush.bf16.msra.mxu0 %v518
    %3163 = vmatpush.bf16.msra.mxu0 %v508
    %3164 = vmatmul.bf16.gmra.mxu0 %v3154
    %v3165 = vpop.f32.mrf.mxu0
    %v3166 = vadd.f32 0.0, %v3165
    %v3167 = vpop.f32.mrf.mxu0
    %3168 = vdwg.mxu0
    %3169 = vmatpush.bf16.msra.mxu0 0
    %3170 = vmatpush.bf16.msra.mxu0 0
    %3171 = vmatpush.bf16.msra.mxu0 0
    %3172 = vmatpush.bf16.msra.mxu0 0
    %3173 = vmatpush.bf16.msra.mxu0 0
    %3174 = vmatpush.bf16.msra.mxu0 0
    %3175 = vmatpush.bf16.msra.mxu0 %v521
    %3176 = vmatpush.bf16.msra.mxu0 %v509
    %3177 = vmatmul.bf16.gmra.mxu0 %v3154
    %v3178 = vpop.f32.mrf.mxu0
    %v3179 = vadd.f32 0.0, %v3178
    %v3180 = vpop.f32.mrf.mxu0
    %3181 = vdwg.mxu0
    %v3182 = vadd.f32 %v3151, %v3166
    %v3183 = vadd.f32 %v3152, %v3179
    %v3184 = vadd.f32 %v3182, %v552
    %v3185 = vadd.f32 %v3183, %v553
    %v3186 = vtanh.pop %v3184
    %v3187 = vtanh.pop %v3185
    %3188 = vmatpush.bf16.msra.mxu0 0
    %3189 = vmatpush.bf16.msra.mxu0 0
    %3190 = vmatpush.bf16.msra.mxu0 0
    %3191 = vmatpush.bf16.msra.mxu0 0
    %3192 = vmatpush.bf16.msra.mxu0 0
    %3193 = vmatpush.bf16.msra.mxu0 0
    %3194 = vmatpush.bf16.msra.mxu0 %v302
    %3195 = vmatpush.bf16.msra.mxu0 %v290
    %3196 = vmatmul.bf16.gmra.mxu0 %v2862
    %v3197 = vpop.f32.mrf.mxu0
    %v3198 = vadd.f32 0.0, %v3197
    %v3199 = vpop.f32.mrf.mxu0
    %3200 = vdwg.mxu0
    %3201 = vmatpush.bf16.msra.mxu0 0
    %3202 = vmatpush.bf16.msra.mxu0 0
    %3203 = vmatpush.bf16.msra.mxu0 0
    %3204 = vmatpush.bf16.msra.mxu0 0
    %3205 = vmatpush.bf16.msra.mxu0 0
    %3206 = vmatpush.bf16.msra.mxu0 0
    %3207 = vmatpush.bf16.msra.mxu0 %v305
    %3208 = vmatpush.bf16.msra.mxu0 %v291
    %3209 = vmatmul.bf16.gmra.mxu0 %v2862
    %v3210 = vpop.f32.mrf.mxu0
    %v3211 = vadd.f32 0.0, %v3210
    %v3212 = vpop.f32.mrf.mxu0
    %3213 = vdwg.mxu0
    %3214 = vmatpush.bf16.msra.mxu0 0
    %3215 = vmatpush.bf16.msra.mxu0 0
    %3216 = vmatpush.bf16.msra.mxu0 0
    %3217 = vmatpush.bf16.msra.mxu0 0
    %3218 = vmatpush.bf16.msra.mxu0 0
    %3219 = vmatpush.bf16.msra.mxu0 0
    %3220 = vmatpush.bf16.msra.mxu0 %v355
    %3221 = vmatpush.bf16.msra.mxu0 %v345
    %3222 = vmatmul.bf16.gmra.mxu0 %v2713
    %v3223 = vpop.f32.mrf.mxu0
    %v3224 = vadd.f32 %v3198, %v3223
    %v3225 = vpop.f32.mrf.mxu0
    %3226 = vdwg.mxu0
    %3227 = vmatpush.bf16.msra.mxu0 0
    %3228 = vmatpush.bf16.msra.mxu0 0
    %3229 = vmatpush.bf16.msra.mxu0 0
    %3230 = vmatpush.bf16.msra.mxu0 0
    %3231 = vmatpush.bf16.msra.mxu0 0
    %3232 = vmatpush.bf16.msra.mxu0 0
    %3233 = vmatpush.bf16.msra.mxu0 %v358
    %3234 = vmatpush.bf16.msra.mxu0 %v346
    %3235 = vmatmul.bf16.gmra.mxu0 %v2713
    %v3236 = vpop.f32.mrf.mxu0
    %v3237 = vadd.f32 %v3211, %v3236
    %v3238 = vpop.f32.mrf.mxu0
    %3239 = vdwg.mxu0
    %3240 = vmatpush.bf16.msra.mxu0 0
    %3241 = vmatpush.bf16.msra.mxu0 0
    %3242 = vmatpush.bf16.msra.mxu0 0
    %3243 = vmatpush.bf16.msra.mxu0 0
    %3244 = vmatpush.bf16.msra.mxu0 0
    %3245 = vmatpush.bf16.msra.mxu0 0
    %3246 = vmatpush.bf16.msra.mxu0 %v408
    %3247 = vmatpush.bf16.msra.mxu0 %v398
    %3248 = vmatmul.bf16.gmra.mxu0 %v3005
    %v3249 = vpop.f32.mrf.mxu0
    %v3250 = vadd.f32 0.0, %v3249
    %v3251 = vpop.f32.mrf.mxu0
    %3252 = vdwg.mxu0
    %3253 = vmatpush.bf16.msra.mxu0 0
    %3254 = vmatpush.bf16.msra.mxu0 0
    %3255 = vmatpush.bf16.msra.mxu0 0
    %3256 = vmatpush.bf16.msra.mxu0 0
    %3257 = vmatpush.bf16.msra.mxu0 0
    %3258 = vmatpush.bf16.msra.mxu0 0
    %3259 = vmatpush.bf16.msra.mxu0 %v411
    %3260 = vmatpush.bf16.msra.mxu0 %v399
    %3261 = vmatmul.bf16.gmra.mxu0 %v3005
    %v3262 = vpop.f32.mrf.mxu0
    %v3263 = vadd.f32 0.0, %v3262
    %v3264 = vpop.f32.mrf.mxu0
    %3265 = vdwg.mxu0
    %v3266 = vadd.f32 %v3224, %v3250
    %v3267 = vadd.f32 %v3237, %v3263
    %3268 = vmatpush.bf16.msra.mxu0 0
    %3269 = vmatpush.bf16.msra.mxu0 0
    %3270 = vmatpush.bf16.msra.mxu0 0
    %3271 = vmatpush.bf16.msra.mxu0 0
    %3272 = vmatpush.bf16.msra.mxu0 0
    %3273 = vmatpush.bf16.msra.mxu0 0
    %3274 = vmatpush.bf16.msra.mxu0 %v463
    %3275 = vmatpush.bf16.msra.mxu0 %v453
    %3276 = vmatmul.bf16.gmra.mxu0 %v3154
    %v3277 = vpop.f32.mrf.mxu0
    %v3278 = vadd.f32 0.0, %v3277
    %v3279 = vpop.f32.mrf.mxu0
    %3280 = vdwg.mxu0
    %3281 = vmatpush.bf16.msra.mxu0 0
    %3282 = vmatpush.bf16.msra.mxu0 0
    %3283 = vmatpush.bf16.msra.mxu0 0
    %3284 = vmatpush.bf16.msra.mxu0 0
    %3285 = vmatpush.bf16.msra.mxu0 0
    %3286 = vmatpush.bf16.msra.mxu0 0
    %3287 = vmatpush.bf16.msra.mxu0 %v466
    %3288 = vmatpush.bf16.msra.mxu0 %v454
    %3289 = vmatmul.bf16.gmra.mxu0 %v3154
    %v3290 = vpop.f32.mrf.mxu0
    %v3291 = vadd.f32 0.0, %v3290
    %v3292 = vpop.f32.mrf.mxu0
    %3293 = vdwg.mxu0
    %v3294 = vadd.f32 %v3266, %v3278
    %v3295 = vadd.f32 %v3267, %v3291
    %v3297 = vsel %vm296, %v269, 0
    %3299 = vmatpush.bf16.msra.mxu0 0
    %3300 = vmatpush.bf16.msra.mxu0 0
    %3301 = vmatpush.bf16.msra.mxu0 0
    %3302 = vmatpush.bf16.msra.mxu0 0
    %3303 = vmatpush.bf16.msra.mxu0 0
    %3304 = vmatpush.bf16.msra.mxu0 0
    %3305 = vmatpush.bf16.msra.mxu0 %v518
    %3306 = vmatpush.bf16.msra.mxu0 %v508
    %3307 = vmatmul.bf16.gmra.mxu0 %v3297
    %v3308 = vpop.f32.mrf.mxu0
    %v3309 = vadd.f32 0.0, %v3308
    %v3310 = vpop.f32.mrf.mxu0
    %3311 = vdwg.mxu0
    %3312 = vmatpush.bf16.msra.mxu0 0
    %3313 = vmatpush.bf16.msra.mxu0 0
    %3314 = vmatpush.bf16.msra.mxu0 0
    %3315 = vmatpush.bf16.msra.mxu0 0
    %3316 = vmatpush.bf16.msra.mxu0 0
    %3317 = vmatpush.bf16.msra.mxu0 0
    %3318 = vmatpush.bf16.msra.mxu0 %v521
    %3319 = vmatpush.bf16.msra.mxu0 %v509
    %3320 = vmatmul.bf16.gmra.mxu0 %v3297
    %v3321 = vpop.f32.mrf.mxu0
    %v3322 = vadd.f32 0.0, %v3321
    %v3323 = vpop.f32.mrf.mxu0
    %3324 = vdwg.mxu0
    %v3325 = vadd.f32 %v3294, %v3309
    %v3326 = vadd.f32 %v3295, %v3322
    %v3327 = vadd.f32 %v3325, %v552
    %v3328 = vadd.f32 %v3326, %v553
    %v3329 = vtanh.pop %v3327
    %v3330 = vtanh.pop %v3328
    %v3331 = vadd.f32 %v3186, %v3329
    %v3332 = vadd.f32 %v3187, %v3330
    %v3333 = vmul.f32 %v3331, 0.5
    %v3334 = vmul.f32 %v3332, 0.5
    %v3335 = vpack.c.bf16 %v3333, %v3333
    %v3336 = vpack.c.bf16 %v3334, %v3334
    %3337 = vmatpush.bf16.msra.mxu0 0
    %3338 = vmatpush.bf16.msra.mxu0 0
    %3339 = vmatpush.bf16.msra.mxu0 0
    %3340 = vmatpush.bf16.msra.mxu0 0
    %3341 = vmatpush.bf16.msra.mxu0 0
    %3342 = vmatpush.bf16.msra.mxu0 0
    %3343 = vmatpush.bf16.msra.mxu0 %v302
    %3344 = vmatpush.bf16.msra.mxu0 %v290
    %3345 = vmatmul.bf16.gmra.mxu0 %v3005
    %v3346 = vpop.f32.mrf.mxu0
    %v3347 = vadd.f32 0.0, %v3346
    %v3348 = vpop.f32.mrf.mxu0
    %3349 = vdwg.mxu0
    %3350 = vmatpush.bf16.msra.mxu0 0
    %3351 = vmatpush.bf16.msra.mxu0 0
    %3352 = vmatpush.bf16.msra.mxu0 0
    %3353 = vmatpush.bf16.msra.mxu0 0
    %3354 = vmatpush.bf16.msra.mxu0 0
    %3355 = vmatpush.bf16.msra.mxu0 0
    %3356 = vmatpush.bf16.msra.mxu0 %v305
    %3357 = vmatpush.bf16.msra.mxu0 %v291
    %3358 = vmatmul.bf16.gmra.mxu0 %v3005
    %v3359 = vpop.f32.mrf.mxu0
    %v3360 = vadd.f32 0.0, %v3359
    %v3361 = vpop.f32.mrf.mxu0
    %3362 = vdwg.mxu0
    %3363 = vmatpush.bf16.msra.mxu0 0
    %3364 = vmatpush.bf16.msra.mxu0 0
    %3365 = vmatpush.bf16.msra.mxu0 0
    %3366 = vmatpush.bf16.msra.mxu0 0
    %3367 = vmatpush.bf16.msra.mxu0 0
    %3368 = vmatpush.bf16.msra.mxu0 0
    %3369 = vmatpush.bf16.msra.mxu0 %v355
    %3370 = vmatpush.bf16.msra.mxu0 %v345
    %3371 = vmatmul.bf16.gmra.mxu0 %v2862
    %v3372 = vpop.f32.mrf.mxu0
    %v3373 = vadd.f32 %v3347, %v3372
    %v3374 = vpop.f32.mrf.mxu0
    %3375 = vdwg.mxu0
    %3376 = vmatpush.bf16.msra.mxu0 0
    %3377 = vmatpush.bf16.msra.mxu0 0
    %3378 = vmatpush.bf16.msra.mxu0 0
    %3379 = vmatpush.bf16.msra.mxu0 0
    %3380 = vmatpush.bf16.msra.mxu0 0
    %3381 = vmatpush.bf16.msra.mxu0 0
    %3382 = vmatpush.bf16.msra.mxu0 %v358
    %3383 = vmatpush.bf16.msra.mxu0 %v346
    %3384 = vmatmul.bf16.gmra.mxu0 %v2862
    %v3385 = vpop.f32.mrf.mxu0
    %v3386 = vadd.f32 %v3360, %v3385
    %v3387 = vpop.f32.mrf.mxu0
    %3388 = vdwg.mxu0
    %3389 = vmatpush.bf16.msra.mxu0 0
    %3390 = vmatpush.bf16.msra.mxu0 0
    %3391 = vmatpush.bf16.msra.mxu0 0
    %3392 = vmatpush.bf16.msra.mxu0 0
    %3393 = vmatpush.bf16.msra.mxu0 0
    %3394 = vmatpush.bf16.msra.mxu0 0
    %3395 = vmatpush.bf16.msra.mxu0 %v408
    %3396 = vmatpush.bf16.msra.mxu0 %v398
    %3397 = vmatmul.bf16.gmra.mxu0 %v3154
    %v3398 = vpop.f32.mrf.mxu0
    %v3399 = vadd.f32 0.0, %v3398
    %v3400 = vpop.f32.mrf.mxu0
    %3401 = vdwg.mxu0
    %3402 = vmatpush.bf16.msra.mxu0 0
    %3403 = vmatpush.bf16.msra.mxu0 0
    %3404 = vmatpush.bf16.msra.mxu0 0
    %3405 = vmatpush.bf16.msra.mxu0 0
    %3406 = vmatpush.bf16.msra.mxu0 0
    %3407 = vmatpush.bf16.msra.mxu0 0
    %3408 = vmatpush.bf16.msra.mxu0 %v411
    %3409 = vmatpush.bf16.msra.mxu0 %v399
    %3410 = vmatmul.bf16.gmra.mxu0 %v3154
    %v3411 = vpop.f32.mrf.mxu0
    %v3412 = vadd.f32 0.0, %v3411
    %v3413 = vpop.f32.mrf.mxu0
    %3414 = vdwg.mxu0
    %v3415 = vadd.f32 %v3373, %v3399
    %v3416 = vadd.f32 %v3386, %v3412
    %3417 = vmatpush.bf16.msra.mxu0 0
    %3418 = vmatpush.bf16.msra.mxu0 0
    %3419 = vmatpush.bf16.msra.mxu0 0
    %3420 = vmatpush.bf16.msra.mxu0 0
    %3421 = vmatpush.bf16.msra.mxu0 0
    %3422 = vmatpush.bf16.msra.mxu0 0
    %3423 = vmatpush.bf16.msra.mxu0 %v463
    %3424 = vmatpush.bf16.msra.mxu0 %v453
    %3425 = vmatmul.bf16.gmra.mxu0 %v3297
    %v3426 = vpop.f32.mrf.mxu0
    %v3427 = vadd.f32 0.0, %v3426
    %v3428 = vpop.f32.mrf.mxu0
    %3429 = vdwg.mxu0
    %3430 = vmatpush.bf16.msra.mxu0 0
    %3431 = vmatpush.bf16.msra.mxu0 0
    %3432 = vmatpush.bf16.msra.mxu0 0
    %3433 = vmatpush.bf16.msra.mxu0 0
    %3434 = vmatpush.bf16.msra.mxu0 0
    %3435 = vmatpush.bf16.msra.mxu0 0
    %3436 = vmatpush.bf16.msra.mxu0 %v466
    %3437 = vmatpush.bf16.msra.mxu0 %v454
    %3438 = vmatmul.bf16.gmra.mxu0 %v3297
    %v3439 = vpop.f32.mrf.mxu0
    %v3440 = vadd.f32 0.0, %v3439
    %v3441 = vpop.f32.mrf.mxu0
    %3442 = vdwg.mxu0
    %v3443 = vadd.f32 %v3415, %v3427
    %v3444 = vadd.f32 %v3416, %v3440
    %v3446 = vsel %vm296, %v271, 0
    %3448 = vmatpush.bf16.msra.mxu0 0
    %3449 = vmatpush.bf16.msra.mxu0 0
    %3450 = vmatpush.bf16.msra.mxu0 0
    %3451 = vmatpush.bf16.msra.mxu0 0
    %3452 = vmatpush.bf16.msra.mxu0 0
    %3453 = vmatpush.bf16.msra.mxu0 0
    %3454 = vmatpush.bf16.msra.mxu0 %v518
    %3455 = vmatpush.bf16.msra.mxu0 %v508
    %3456 = vmatmul.bf16.gmra.mxu0 %v3446
    %v3457 = vpop.f32.mrf.mxu0
    %v3458 = vadd.f32 0.0, %v3457
    %v3459 = vpop.f32.mrf.mxu0
    %3460 = vdwg.mxu0
    %3461 = vmatpush.bf16.msra.mxu0 0
    %3462 = vmatpush.bf16.msra.mxu0 0
    %3463 = vmatpush.bf16.msra.mxu0 0
    %3464 = vmatpush.bf16.msra.mxu0 0
    %3465 = vmatpush.bf16.msra.mxu0 0
    %3466 = vmatpush.bf16.msra.mxu0 0
    %3467 = vmatpush.bf16.msra.mxu0 %v521
    %3468 = vmatpush.bf16.msra.mxu0 %v509
    %3469 = vmatmul.bf16.gmra.mxu0 %v3446
    %v3470 = vpop.f32.mrf.mxu0
    %v3471 = vadd.f32 0.0, %v3470
    %v3472 = vpop.f32.mrf.mxu0
    %3473 = vdwg.mxu0
    %v3474 = vadd.f32 %v3443, %v3458
    %v3475 = vadd.f32 %v3444, %v3471
    %v3476 = vadd.f32 %v3474, %v552
    %v3477 = vadd.f32 %v3475, %v553
    %v3478 = vtanh.pop %v3476
    %v3479 = vtanh.pop %v3477
    %3480 = vmatpush.bf16.msra.mxu0 0
    %3481 = vmatpush.bf16.msra.mxu0 0
    %3482 = vmatpush.bf16.msra.mxu0 0
    %3483 = vmatpush.bf16.msra.mxu0 0
    %3484 = vmatpush.bf16.msra.mxu0 0
    %3485 = vmatpush.bf16.msra.mxu0 0
    %3486 = vmatpush.bf16.msra.mxu0 %v302
    %3487 = vmatpush.bf16.msra.mxu0 %v290
    %3488 = vmatmul.bf16.gmra.mxu0 %v3154
    %v3489 = vpop.f32.mrf.mxu0
    %v3490 = vadd.f32 0.0, %v3489
    %v3491 = vpop.f32.mrf.mxu0
    %3492 = vdwg.mxu0
    %3493 = vmatpush.bf16.msra.mxu0 0
    %3494 = vmatpush.bf16.msra.mxu0 0
    %3495 = vmatpush.bf16.msra.mxu0 0
    %3496 = vmatpush.bf16.msra.mxu0 0
    %3497 = vmatpush.bf16.msra.mxu0 0
    %3498 = vmatpush.bf16.msra.mxu0 0
    %3499 = vmatpush.bf16.msra.mxu0 %v305
    %3500 = vmatpush.bf16.msra.mxu0 %v291
    %3501 = vmatmul.bf16.gmra.mxu0 %v3154
    %v3502 = vpop.f32.mrf.mxu0
    %v3503 = vadd.f32 0.0, %v3502
    %v3504 = vpop.f32.mrf.mxu0
    %3505 = vdwg.mxu0
    %3506 = vmatpush.bf16.msra.mxu0 0
    %3507 = vmatpush.bf16.msra.mxu0 0
    %3508 = vmatpush.bf16.msra.mxu0 0
    %3509 = vmatpush.bf16.msra.mxu0 0
    %3510 = vmatpush.bf16.msra.mxu0 0
    %3511 = vmatpush.bf16.msra.mxu0 0
    %3512 = vmatpush.bf16.msra.mxu0 %v355
    %3513 = vmatpush.bf16.msra.mxu0 %v345
    %3514 = vmatmul.bf16.gmra.mxu0 %v3005
    %v3515 = vpop.f32.mrf.mxu0
    %v3516 = vadd.f32 %v3490, %v3515
    %v3517 = vpop.f32.mrf.mxu0
    %3518 = vdwg.mxu0
    %3519 = vmatpush.bf16.msra.mxu0 0
    %3520 = vmatpush.bf16.msra.mxu0 0
    %3521 = vmatpush.bf16.msra.mxu0 0
    %3522 = vmatpush.bf16.msra.mxu0 0
    %3523 = vmatpush.bf16.msra.mxu0 0
    %3524 = vmatpush.bf16.msra.mxu0 0
    %3525 = vmatpush.bf16.msra.mxu0 %v358
    %3526 = vmatpush.bf16.msra.mxu0 %v346
    %3527 = vmatmul.bf16.gmra.mxu0 %v3005
    %v3528 = vpop.f32.mrf.mxu0
    %v3529 = vadd.f32 %v3503, %v3528
    %v3530 = vpop.f32.mrf.mxu0
    %3531 = vdwg.mxu0
    %3532 = vmatpush.bf16.msra.mxu0 0
    %3533 = vmatpush.bf16.msra.mxu0 0
    %3534 = vmatpush.bf16.msra.mxu0 0
    %3535 = vmatpush.bf16.msra.mxu0 0
    %3536 = vmatpush.bf16.msra.mxu0 0
    %3537 = vmatpush.bf16.msra.mxu0 0
    %3538 = vmatpush.bf16.msra.mxu0 %v408
    %3539 = vmatpush.bf16.msra.mxu0 %v398
    %3540 = vmatmul.bf16.gmra.mxu0 %v3297
    %v3541 = vpop.f32.mrf.mxu0
    %v3542 = vadd.f32 0.0, %v3541
    %v3543 = vpop.f32.mrf.mxu0
    %3544 = vdwg.mxu0
    %3545 = vmatpush.bf16.msra.mxu0 0
    %3546 = vmatpush.bf16.msra.mxu0 0
    %3547 = vmatpush.bf16.msra.mxu0 0
    %3548 = vmatpush.bf16.msra.mxu0 0
    %3549 = vmatpush.bf16.msra.mxu0 0
    %3550 = vmatpush.bf16.msra.mxu0 0
    %3551 = vmatpush.bf16.msra.mxu0 %v411
    %3552 = vmatpush.bf16.msra.mxu0 %v399
    %3553 = vmatmul.bf16.gmra.mxu0 %v3297
    %v3554 = vpop.f32.mrf.mxu0
    %v3555 = vadd.f32 0.0, %v3554
    %v3556 = vpop.f32.mrf.mxu0
    %3557 = vdwg.mxu0
    %v3558 = vadd.f32 %v3516, %v3542
    %v3559 = vadd.f32 %v3529, %v3555
    %3560 = vmatpush.bf16.msra.mxu0 0
    %3561 = vmatpush.bf16.msra.mxu0 0
    %3562 = vmatpush.bf16.msra.mxu0 0
    %3563 = vmatpush.bf16.msra.mxu0 0
    %3564 = vmatpush.bf16.msra.mxu0 0
    %3565 = vmatpush.bf16.msra.mxu0 0
    %3566 = vmatpush.bf16.msra.mxu0 %v463
    %3567 = vmatpush.bf16.msra.mxu0 %v453
    %3568 = vmatmul.bf16.gmra.mxu0 %v3446
    %v3569 = vpop.f32.mrf.mxu0
    %v3570 = vadd.f32 0.0, %v3569
    %v3571 = vpop.f32.mrf.mxu0
    %3572 = vdwg.mxu0
    %3573 = vmatpush.bf16.msra.mxu0 0
    %3574 = vmatpush.bf16.msra.mxu0 0
    %3575 = vmatpush.bf16.msra.mxu0 0
    %3576 = vmatpush.bf16.msra.mxu0 0
    %3577 = vmatpush.bf16.msra.mxu0 0
    %3578 = vmatpush.bf16.msra.mxu0 0
    %3579 = vmatpush.bf16.msra.mxu0 %v466
    %3580 = vmatpush.bf16.msra.mxu0 %v454
    %3581 = vmatmul.bf16.gmra.mxu0 %v3446
    %v3582 = vpop.f32.mrf.mxu0
    %v3583 = vadd.f32 0.0, %v3582
    %v3584 = vpop.f32.mrf.mxu0
    %3585 = vdwg.mxu0
    %v3586 = vadd.f32 %v3558, %v3570
    %v3587 = vadd.f32 %v3559, %v3583
    %v3589 = vsel %vm296, %v273, 0
    %3591 = vmatpush.bf16.msra.mxu0 0
    %3592 = vmatpush.bf16.msra.mxu0 0
    %3593 = vmatpush.bf16.msra.mxu0 0
    %3594 = vmatpush.bf16.msra.mxu0 0
    %3595 = vmatpush.bf16.msra.mxu0 0
    %3596 = vmatpush.bf16.msra.mxu0 0
    %3597 = vmatpush.bf16.msra.mxu0 %v518
    %3598 = vmatpush.bf16.msra.mxu0 %v508
    %3599 = vmatmul.bf16.gmra.mxu0 %v3589
    %v3600 = vpop.f32.mrf.mxu0
    %v3601 = vadd.f32 0.0, %v3600
    %v3602 = vpop.f32.mrf.mxu0
    %3603 = vdwg.mxu0
    %3604 = vmatpush.bf16.msra.mxu0 0
    %3605 = vmatpush.bf16.msra.mxu0 0
    %3606 = vmatpush.bf16.msra.mxu0 0
    %3607 = vmatpush.bf16.msra.mxu0 0
    %3608 = vmatpush.bf16.msra.mxu0 0
    %3609 = vmatpush.bf16.msra.mxu0 0
    %3610 = vmatpush.bf16.msra.mxu0 %v521
    %3611 = vmatpush.bf16.msra.mxu0 %v509
    %3612 = vmatmul.bf16.gmra.mxu0 %v3589
    %v3613 = vpop.f32.mrf.mxu0
    %v3614 = vadd.f32 0.0, %v3613
    %v3615 = vpop.f32.mrf.mxu0
    %3616 = vdwg.mxu0
    %v3617 = vadd.f32 %v3586, %v3601
    %v3618 = vadd.f32 %v3587, %v3614
    %v3619 = vadd.f32 %v3617, %v552
    %v3620 = vadd.f32 %v3618, %v553
    %v3621 = vtanh.pop %v3619
    %v3622 = vtanh.pop %v3620
    %v3623 = vadd.f32 %v3478, %v3621
    %v3624 = vadd.f32 %v3479, %v3622
    %v3625 = vmul.f32 %v3623, 0.5
    %v3626 = vmul.f32 %v3624, 0.5
    %v3627 = vpack.c.bf16 %v3625, %v3625
    %v3628 = vpack.c.bf16 %v3626, %v3626
    %3629 = vmatpush.bf16.msra.mxu0 0
    %3630 = vmatpush.bf16.msra.mxu0 0
    %3631 = vmatpush.bf16.msra.mxu0 0
    %3632 = vmatpush.bf16.msra.mxu0 0
    %3633 = vmatpush.bf16.msra.mxu0 0
    %3634 = vmatpush.bf16.msra.mxu0 0
    %3635 = vmatpush.bf16.msra.mxu0 %v302
    %3636 = vmatpush.bf16.msra.mxu0 %v290
    %3637 = vmatmul.bf16.gmra.mxu0 %v3297
    %v3638 = vpop.f32.mrf.mxu0
    %v3639 = vadd.f32 0.0, %v3638
    %v3640 = vpop.f32.mrf.mxu0
    %3641 = vdwg.mxu0
    %3642 = vmatpush.bf16.msra.mxu0 0
    %3643 = vmatpush.bf16.msra.mxu0 0
    %3644 = vmatpush.bf16.msra.mxu0 0
    %3645 = vmatpush.bf16.msra.mxu0 0
    %3646 = vmatpush.bf16.msra.mxu0 0
    %3647 = vmatpush.bf16.msra.mxu0 0
    %3648 = vmatpush.bf16.msra.mxu0 %v305
    %3649 = vmatpush.bf16.msra.mxu0 %v291
    %3650 = vmatmul.bf16.gmra.mxu0 %v3297
    %v3651 = vpop.f32.mrf.mxu0
    %v3652 = vadd.f32 0.0, %v3651
    %v3653 = vpop.f32.mrf.mxu0
    %3654 = vdwg.mxu0
    %3655 = vmatpush.bf16.msra.mxu0 0
    %3656 = vmatpush.bf16.msra.mxu0 0
    %3657 = vmatpush.bf16.msra.mxu0 0
    %3658 = vmatpush.bf16.msra.mxu0 0
    %3659 = vmatpush.bf16.msra.mxu0 0
    %3660 = vmatpush.bf16.msra.mxu0 0
    %3661 = vmatpush.bf16.msra.mxu0 %v355
    %3662 = vmatpush.bf16.msra.mxu0 %v345
    %3663 = vmatmul.bf16.gmra.mxu0 %v3154
    %v3664 = vpop.f32.mrf.mxu0
    %v3665 = vadd.f32 %v3639, %v3664
    %v3666 = vpop.f32.mrf.mxu0
    %3667 = vdwg.mxu0
    %3668 = vmatpush.bf16.msra.mxu0 0
    %3669 = vmatpush.bf16.msra.mxu0 0
    %3670 = vmatpush.bf16.msra.mxu0 0
    %3671 = vmatpush.bf16.msra.mxu0 0
    %3672 = vmatpush.bf16.msra.mxu0 0
    %3673 = vmatpush.bf16.msra.mxu0 0
    %3674 = vmatpush.bf16.msra.mxu0 %v358
    %3675 = vmatpush.bf16.msra.mxu0 %v346
    %3676 = vmatmul.bf16.gmra.mxu0 %v3154
    %v3677 = vpop.f32.mrf.mxu0
    %v3678 = vadd.f32 %v3652, %v3677
    %v3679 = vpop.f32.mrf.mxu0
    %3680 = vdwg.mxu0
    %3681 = vmatpush.bf16.msra.mxu0 0
    %3682 = vmatpush.bf16.msra.mxu0 0
    %3683 = vmatpush.bf16.msra.mxu0 0
    %3684 = vmatpush.bf16.msra.mxu0 0
    %3685 = vmatpush.bf16.msra.mxu0 0
    %3686 = vmatpush.bf16.msra.mxu0 0
    %3687 = vmatpush.bf16.msra.mxu0 %v408
    %3688 = vmatpush.bf16.msra.mxu0 %v398
    %3689 = vmatmul.bf16.gmra.mxu0 %v3446
    %v3690 = vpop.f32.mrf.mxu0
    %v3691 = vadd.f32 0.0, %v3690
    %v3692 = vpop.f32.mrf.mxu0
    %3693 = vdwg.mxu0
    %3694 = vmatpush.bf16.msra.mxu0 0
    %3695 = vmatpush.bf16.msra.mxu0 0
    %3696 = vmatpush.bf16.msra.mxu0 0
    %3697 = vmatpush.bf16.msra.mxu0 0
    %3698 = vmatpush.bf16.msra.mxu0 0
    %3699 = vmatpush.bf16.msra.mxu0 0
    %3700 = vmatpush.bf16.msra.mxu0 %v411
    %3701 = vmatpush.bf16.msra.mxu0 %v399
    %3702 = vmatmul.bf16.gmra.mxu0 %v3446
    %v3703 = vpop.f32.mrf.mxu0
    %v3704 = vadd.f32 0.0, %v3703
    %v3705 = vpop.f32.mrf.mxu0
    %3706 = vdwg.mxu0
    %v3707 = vadd.f32 %v3665, %v3691
    %v3708 = vadd.f32 %v3678, %v3704
    %3709 = vmatpush.bf16.msra.mxu0 0
    %3710 = vmatpush.bf16.msra.mxu0 0
    %3711 = vmatpush.bf16.msra.mxu0 0
    %3712 = vmatpush.bf16.msra.mxu0 0
    %3713 = vmatpush.bf16.msra.mxu0 0
    %3714 = vmatpush.bf16.msra.mxu0 0
    %3715 = vmatpush.bf16.msra.mxu0 %v463
    %3716 = vmatpush.bf16.msra.mxu0 %v453
    %3717 = vmatmul.bf16.gmra.mxu0 %v3589
    %v3718 = vpop.f32.mrf.mxu0
    %v3719 = vadd.f32 0.0, %v3718
    %v3720 = vpop.f32.mrf.mxu0
    %3721 = vdwg.mxu0
    %3722 = vmatpush.bf16.msra.mxu0 0
    %3723 = vmatpush.bf16.msra.mxu0 0
    %3724 = vmatpush.bf16.msra.mxu0 0
    %3725 = vmatpush.bf16.msra.mxu0 0
    %3726 = vmatpush.bf16.msra.mxu0 0
    %3727 = vmatpush.bf16.msra.mxu0 0
    %3728 = vmatpush.bf16.msra.mxu0 %v466
    %3729 = vmatpush.bf16.msra.mxu0 %v454
    %3730 = vmatmul.bf16.gmra.mxu0 %v3589
    %v3731 = vpop.f32.mrf.mxu0
    %v3732 = vadd.f32 0.0, %v3731
    %v3733 = vpop.f32.mrf.mxu0
    %3734 = vdwg.mxu0
    %v3735 = vadd.f32 %v3707, %v3719
    %v3736 = vadd.f32 %v3708, %v3732
    %v3738 = vsel %vm296, %v275, 0
    %3740 = vmatpush.bf16.msra.mxu0 0
    %3741 = vmatpush.bf16.msra.mxu0 0
    %3742 = vmatpush.bf16.msra.mxu0 0
    %3743 = vmatpush.bf16.msra.mxu0 0
    %3744 = vmatpush.bf16.msra.mxu0 0
    %3745 = vmatpush.bf16.msra.mxu0 0
    %3746 = vmatpush.bf16.msra.mxu0 %v518
    %3747 = vmatpush.bf16.msra.mxu0 %v508
    %3748 = vmatmul.bf16.gmra.mxu0 %v3738
    %v3749 = vpop.f32.mrf.mxu0
    %v3750 = vadd.f32 0.0, %v3749
    %v3751 = vpop.f32.mrf.mxu0
    %3752 = vdwg.mxu0
    %3753 = vmatpush.bf16.msra.mxu0 0
    %3754 = vmatpush.bf16.msra.mxu0 0
    %3755 = vmatpush.bf16.msra.mxu0 0
    %3756 = vmatpush.bf16.msra.mxu0 0
    %3757 = vmatpush.bf16.msra.mxu0 0
    %3758 = vmatpush.bf16.msra.mxu0 0
    %3759 = vmatpush.bf16.msra.mxu0 %v521
    %3760 = vmatpush.bf16.msra.mxu0 %v509
    %3761 = vmatmul.bf16.gmra.mxu0 %v3738
    %v3762 = vpop.f32.mrf.mxu0
    %v3763 = vadd.f32 0.0, %v3762
    %v3764 = vpop.f32.mrf.mxu0
    %3765 = vdwg.mxu0
    %v3766 = vadd.f32 %v3735, %v3750
    %v3767 = vadd.f32 %v3736, %v3763
    %v3768 = vadd.f32 %v3766, %v552
    %v3769 = vadd.f32 %v3767, %v553
    %v3770 = vtanh.pop %v3768
    %v3771 = vtanh.pop %v3769
    %3772 = vmatpush.bf16.msra.mxu0 0
    %3773 = vmatpush.bf16.msra.mxu0 0
    %3774 = vmatpush.bf16.msra.mxu0 0
    %3775 = vmatpush.bf16.msra.mxu0 0
    %3776 = vmatpush.bf16.msra.mxu0 0
    %3777 = vmatpush.bf16.msra.mxu0 0
    %3778 = vmatpush.bf16.msra.mxu0 %v302
    %3779 = vmatpush.bf16.msra.mxu0 %v290
    %3780 = vmatmul.bf16.gmra.mxu0 %v3446
    %v3781 = vpop.f32.mrf.mxu0
    %v3782 = vadd.f32 0.0, %v3781
    %v3783 = vpop.f32.mrf.mxu0
    %3784 = vdwg.mxu0
    %3785 = vmatpush.bf16.msra.mxu0 0
    %3786 = vmatpush.bf16.msra.mxu0 0
    %3787 = vmatpush.bf16.msra.mxu0 0
    %3788 = vmatpush.bf16.msra.mxu0 0
    %3789 = vmatpush.bf16.msra.mxu0 0
    %3790 = vmatpush.bf16.msra.mxu0 0
    %3791 = vmatpush.bf16.msra.mxu0 %v305
    %3792 = vmatpush.bf16.msra.mxu0 %v291
    %3793 = vmatmul.bf16.gmra.mxu0 %v3446
    %v3794 = vpop.f32.mrf.mxu0
    %v3795 = vadd.f32 0.0, %v3794
    %v3796 = vpop.f32.mrf.mxu0
    %3797 = vdwg.mxu0
    %3798 = vmatpush.bf16.msra.mxu0 0
    %3799 = vmatpush.bf16.msra.mxu0 0
    %3800 = vmatpush.bf16.msra.mxu0 0
    %3801 = vmatpush.bf16.msra.mxu0 0
    %3802 = vmatpush.bf16.msra.mxu0 0
    %3803 = vmatpush.bf16.msra.mxu0 0
    %3804 = vmatpush.bf16.msra.mxu0 %v355
    %3805 = vmatpush.bf16.msra.mxu0 %v345
    %3806 = vmatmul.bf16.gmra.mxu0 %v3297
    %v3807 = vpop.f32.mrf.mxu0
    %v3808 = vadd.f32 %v3782, %v3807
    %v3809 = vpop.f32.mrf.mxu0
    %3810 = vdwg.mxu0
    %3811 = vmatpush.bf16.msra.mxu0 0
    %3812 = vmatpush.bf16.msra.mxu0 0
    %3813 = vmatpush.bf16.msra.mxu0 0
    %3814 = vmatpush.bf16.msra.mxu0 0
    %3815 = vmatpush.bf16.msra.mxu0 0
    %3816 = vmatpush.bf16.msra.mxu0 0
    %3817 = vmatpush.bf16.msra.mxu0 %v358
    %3818 = vmatpush.bf16.msra.mxu0 %v346
    %3819 = vmatmul.bf16.gmra.mxu0 %v3297
    %v3820 = vpop.f32.mrf.mxu0
    %v3821 = vadd.f32 %v3795, %v3820
    %v3822 = vpop.f32.mrf.mxu0
    %3823 = vdwg.mxu0
    %3824 = vmatpush.bf16.msra.mxu0 0
    %3825 = vmatpush.bf16.msra.mxu0 0
    %3826 = vmatpush.bf16.msra.mxu0 0
    %3827 = vmatpush.bf16.msra.mxu0 0
    %3828 = vmatpush.bf16.msra.mxu0 0
    %3829 = vmatpush.bf16.msra.mxu0 0
    %3830 = vmatpush.bf16.msra.mxu0 %v408
    %3831 = vmatpush.bf16.msra.mxu0 %v398
    %3832 = vmatmul.bf16.gmra.mxu0 %v3589
    %v3833 = vpop.f32.mrf.mxu0
    %v3834 = vadd.f32 0.0, %v3833
    %v3835 = vpop.f32.mrf.mxu0
    %3836 = vdwg.mxu0
    %3837 = vmatpush.bf16.msra.mxu0 0
    %3838 = vmatpush.bf16.msra.mxu0 0
    %3839 = vmatpush.bf16.msra.mxu0 0
    %3840 = vmatpush.bf16.msra.mxu0 0
    %3841 = vmatpush.bf16.msra.mxu0 0
    %3842 = vmatpush.bf16.msra.mxu0 0
    %3843 = vmatpush.bf16.msra.mxu0 %v411
    %3844 = vmatpush.bf16.msra.mxu0 %v399
    %3845 = vmatmul.bf16.gmra.mxu0 %v3589
    %v3846 = vpop.f32.mrf.mxu0
    %v3847 = vadd.f32 0.0, %v3846
    %v3848 = vpop.f32.mrf.mxu0
    %3849 = vdwg.mxu0
    %v3850 = vadd.f32 %v3808, %v3834
    %v3851 = vadd.f32 %v3821, %v3847
    %3852 = vmatpush.bf16.msra.mxu0 0
    %3853 = vmatpush.bf16.msra.mxu0 0
    %3854 = vmatpush.bf16.msra.mxu0 0
    %3855 = vmatpush.bf16.msra.mxu0 0
    %3856 = vmatpush.bf16.msra.mxu0 0
    %3857 = vmatpush.bf16.msra.mxu0 0
    %3858 = vmatpush.bf16.msra.mxu0 %v463
    %3859 = vmatpush.bf16.msra.mxu0 %v453
    %3860 = vmatmul.bf16.gmra.mxu0 %v3738
    %v3861 = vpop.f32.mrf.mxu0
    %v3862 = vadd.f32 0.0, %v3861
    %v3863 = vpop.f32.mrf.mxu0
    %3864 = vdwg.mxu0
    %3865 = vmatpush.bf16.msra.mxu0 0
    %3866 = vmatpush.bf16.msra.mxu0 0
    %3867 = vmatpush.bf16.msra.mxu0 0
    %3868 = vmatpush.bf16.msra.mxu0 0
    %3869 = vmatpush.bf16.msra.mxu0 0
    %3870 = vmatpush.bf16.msra.mxu0 0
    %3871 = vmatpush.bf16.msra.mxu0 %v466
    %3872 = vmatpush.bf16.msra.mxu0 %v454
    %3873 = vmatmul.bf16.gmra.mxu0 %v3738
    %v3874 = vpop.f32.mrf.mxu0
    %v3875 = vadd.f32 0.0, %v3874
    %v3876 = vpop.f32.mrf.mxu0
    %3877 = vdwg.mxu0
    %v3878 = vadd.f32 %v3850, %v3862
    %v3879 = vadd.f32 %v3851, %v3875
    %v3881 = vsel %vm296, %v277, 0
    %3883 = vmatpush.bf16.msra.mxu0 0
    %3884 = vmatpush.bf16.msra.mxu0 0
    %3885 = vmatpush.bf16.msra.mxu0 0
    %3886 = vmatpush.bf16.msra.mxu0 0
    %3887 = vmatpush.bf16.msra.mxu0 0
    %3888 = vmatpush.bf16.msra.mxu0 0
    %3889 = vmatpush.bf16.msra.mxu0 %v518
    %3890 = vmatpush.bf16.msra.mxu0 %v508
    %3891 = vmatmul.bf16.gmra.mxu0 %v3881
    %v3892 = vpop.f32.mrf.mxu0
    %v3893 = vadd.f32 0.0, %v3892
    %v3894 = vpop.f32.mrf.mxu0
    %3895 = vdwg.mxu0
    %3896 = vmatpush.bf16.msra.mxu0 0
    %3897 = vmatpush.bf16.msra.mxu0 0
    %3898 = vmatpush.bf16.msra.mxu0 0
    %3899 = vmatpush.bf16.msra.mxu0 0
    %3900 = vmatpush.bf16.msra.mxu0 0
    %3901 = vmatpush.bf16.msra.mxu0 0
    %3902 = vmatpush.bf16.msra.mxu0 %v521
    %3903 = vmatpush.bf16.msra.mxu0 %v509
    %3904 = vmatmul.bf16.gmra.mxu0 %v3881
    %v3905 = vpop.f32.mrf.mxu0
    %v3906 = vadd.f32 0.0, %v3905
    %v3907 = vpop.f32.mrf.mxu0
    %3908 = vdwg.mxu0
    %v3909 = vadd.f32 %v3878, %v3893
    %v3910 = vadd.f32 %v3879, %v3906
    %v3911 = vadd.f32 %v3909, %v552
    %v3912 = vadd.f32 %v3910, %v553
    %v3913 = vtanh.pop %v3911
    %v3914 = vtanh.pop %v3912
    %v3915 = vadd.f32 %v3770, %v3913
    %v3916 = vadd.f32 %v3771, %v3914
    %v3917 = vmul.f32 %v3915, 0.5
    %v3918 = vmul.f32 %v3916, 0.5
    %v3919 = vpack.c.bf16 %v3917, %v3917
    %v3920 = vpack.c.bf16 %v3918, %v3918
    %v3939 = vunpack.c.l.b16 %v146
    %v3940 = vunpack.c.l.b16 %v147
    %v3941 = vunpack.c.l.b16 %v148
    %v3942 = vunpack.c.l.b16 %v149
    %v3943 = vunpack.c.l.b16 %v150
    %v3944 = vunpack.c.l.b16 %v151
    %v3945 = vunpack.c.l.b16 %v152
    %v3946 = vunpack.c.l.b16 %v153
    %v3947 = vunpack.c.l.b16 %v154
    %v3948 = vunpack.c.l.b16 %v155
    %v3949 = vunpack.c.l.b16 %v156
    %v3950 = vunpack.c.l.b16 %v157
    %v3951 = vunpack.c.l.b16 %v158
    %v3952 = vunpack.c.l.b16 %v159
    %v3953 = vunpack.c.l.b16 %v160
    %v3954 = vunpack.c.l.b16 %v161
    %v3955 = vunpack.c.l.b16 %v162
    %v3956 = vunpack.c.l.b16 %v163
    %v3957 = vpack.c.b16 %v3940, %v3939
    %v3958 = vpack.c.b16 %v3942, %v3941
    %v3959 = vpack.c.b16 %v3944, %v3943
    %v3960 = vpack.c.b16 %v3946, %v3945
    %v3961 = vpack.c.b16 %v3948, %v3947
    %v3962 = vpack.c.b16 %v3950, %v3949
    %v3963 = vpack.c.b16 %v3952, %v3951
    %v3964 = vpack.c.b16 %v3954, %v3953
    %v3965 = vpack.c.b16 %v3956, %v3955
    %vm3975 = vcmask 130048
    %v3977 = vsel %vm3975, %v1000, 0
    %3979 = vmatpush.bf16.msra.mxu0 %v3964
    %3980 = vmatpush.bf16.msra.mxu0 %v3963
    %3981 = vmatpush.bf16.msra.mxu0 %v3962
    %3982 = vmatpush.bf16.msra.mxu0 %v3961
    %3983 = vmatpush.bf16.msra.mxu0 %v3960
    %3984 = vmatpush.bf16.msra.mxu0 %v3959
    %3985 = vmatpush.bf16.msra.mxu0 %v3958
    %3986 = vmatpush.bf16.msra.mxu0 %v3957
    %3987 = vmatmul.bf16.gmra.mxu0 %v999
    %v3988 = vpop.f32.mrf.mxu0
    %v3989 = vadd.f32 0.0, %v3988
    %v3990 = vpop.f32.mrf.mxu0
    %3991 = vdwg.mxu0
    %3992 = vmatpush.bf16.msra.mxu0 0
    %3993 = vmatpush.bf16.msra.mxu0 0
    %3994 = vmatpush.bf16.msra.mxu0 0
    %3995 = vmatpush.bf16.msra.mxu0 0
    %3996 = vmatpush.bf16.msra.mxu0 0
    %3997 = vmatpush.bf16.msra.mxu0 0
    %3998 = vmatpush.bf16.msra.mxu0 0
    %3999 = vmatpush.bf16.msra.mxu0 %v3965
    %4000 = vmatmul.bf16.gmra.mxu0 %v3977
    %v4001 = vpop.f32.mrf.mxu0
    %v4002 = vadd.f32 %v3989, %v4001
    %v4003 = vpop.f32.mrf.mxu0
    %4004 = vdwg.mxu0
    %v4023 = vunpack.c.l.b16 %v127
    %v4024 = vunpack.c.l.b16 %v128
    %v4025 = vunpack.c.l.b16 %v129
    %v4026 = vunpack.c.l.b16 %v130
    %v4027 = vunpack.c.l.b16 %v131
    %v4028 = vunpack.c.l.b16 %v132
    %v4029 = vunpack.c.l.b16 %v133
    %v4030 = vunpack.c.l.b16 %v134
    %v4031 = vunpack.c.l.b16 %v135
    %v4032 = vunpack.c.l.b16 %v136
    %v4033 = vunpack.c.l.b16 %v137
    %v4034 = vunpack.c.l.b16 %v138
    %v4035 = vunpack.c.l.b16 %v139
    %v4036 = vunpack.c.l.b16 %v140
    %v4037 = vunpack.c.l.b16 %v141
    %v4038 = vunpack.c.l.b16 %v142
    %v4039 = vunpack.c.l.b16 %v143
    %v4040 = vunpack.c.l.b16 %v144
    %v4041 = vpack.c.b16 %v4024, %v4023
    %v4042 = vpack.c.b16 %v4026, %v4025
    %v4043 = vpack.c.b16 %v4028, %v4027
    %v4044 = vpack.c.b16 %v4030, %v4029
    %v4045 = vpack.c.b16 %v4032, %v4031
    %v4046 = vpack.c.b16 %v4034, %v4033
    %v4047 = vpack.c.b16 %v4036, %v4035
    %v4048 = vpack.c.b16 %v4038, %v4037
    %v4049 = vpack.c.b16 %v4040, %v4039
    %v4060 = vsel %vm3975, %v708, 0
    %4062 = vmatpush.bf16.msra.mxu0 %v4048
    %4063 = vmatpush.bf16.msra.mxu0 %v4047
    %4064 = vmatpush.bf16.msra.mxu0 %v4046
    %4065 = vmatpush.bf16.msra.mxu0 %v4045
    %4066 = vmatpush.bf16.msra.mxu0 %v4044
    %4067 = vmatpush.bf16.msra.mxu0 %v4043
    %4068 = vmatpush.bf16.msra.mxu0 %v4042
    %4069 = vmatpush.bf16.msra.mxu0 %v4041
    %4070 = vmatmul.bf16.gmra.mxu0 %v707
    %v4071 = vpop.f32.mrf.mxu0
    %v4072 = vadd.f32 %v4002, %v4071
    %v4073 = vpop.f32.mrf.mxu0
    %4074 = vdwg.mxu0
    %4075 = vmatpush.bf16.msra.mxu0 0
    %4076 = vmatpush.bf16.msra.mxu0 0
    %4077 = vmatpush.bf16.msra.mxu0 0
    %4078 = vmatpush.bf16.msra.mxu0 0
    %4079 = vmatpush.bf16.msra.mxu0 0
    %4080 = vmatpush.bf16.msra.mxu0 0
    %4081 = vmatpush.bf16.msra.mxu0 0
    %4082 = vmatpush.bf16.msra.mxu0 %v4049
    %4083 = vmatmul.bf16.gmra.mxu0 %v4060
    %v4084 = vpop.f32.mrf.mxu0
    %v4085 = vadd.f32 %v4072, %v4084
    %v4086 = vpop.f32.mrf.mxu0
    %4087 = vdwg.mxu0
    %v4106 = vunpack.c.l.b16 %v165
    %v4107 = vunpack.c.l.b16 %v166
    %v4108 = vunpack.c.l.b16 %v167
    %v4109 = vunpack.c.l.b16 %v168
    %v4110 = vunpack.c.l.b16 %v169
    %v4111 = vunpack.c.l.b16 %v170
    %v4112 = vunpack.c.l.b16 %v171
    %v4113 = vunpack.c.l.b16 %v172
    %v4114 = vunpack.c.l.b16 %v173
    %v4115 = vunpack.c.l.b16 %v174
    %v4116 = vunpack.c.l.b16 %v175
    %v4117 = vunpack.c.l.b16 %v176
    %v4118 = vunpack.c.l.b16 %v177
    %v4119 = vunpack.c.l.b16 %v178
    %v4120 = vunpack.c.l.b16 %v179
    %v4121 = vunpack.c.l.b16 %v180
    %v4122 = vunpack.c.l.b16 %v181
    %v4123 = vunpack.c.l.b16 %v182
    %v4124 = vpack.c.b16 %v4107, %v4106
    %v4125 = vpack.c.b16 %v4109, %v4108
    %v4126 = vpack.c.b16 %v4111, %v4110
    %v4127 = vpack.c.b16 %v4113, %v4112
    %v4128 = vpack.c.b16 %v4115, %v4114
    %v4129 = vpack.c.b16 %v4117, %v4116
    %v4130 = vpack.c.b16 %v4119, %v4118
    %v4131 = vpack.c.b16 %v4121, %v4120
    %v4132 = vpack.c.b16 %v4123, %v4122
    %v4143 = vsel %vm3975, %v1292, 0
    %4145 = vmatpush.bf16.msra.mxu0 %v4131
    %4146 = vmatpush.bf16.msra.mxu0 %v4130
    %4147 = vmatpush.bf16.msra.mxu0 %v4129
    %4148 = vmatpush.bf16.msra.mxu0 %v4128
    %4149 = vmatpush.bf16.msra.mxu0 %v4127
    %4150 = vmatpush.bf16.msra.mxu0 %v4126
    %4151 = vmatpush.bf16.msra.mxu0 %v4125
    %4152 = vmatpush.bf16.msra.mxu0 %v4124
    %4153 = vmatmul.bf16.gmra.mxu0 %v1291
    %v4154 = vpop.f32.mrf.mxu0
    %v4155 = vadd.f32 0.0, %v4154
    %v4156 = vpop.f32.mrf.mxu0
    %4157 = vdwg.mxu0
    %4158 = vmatpush.bf16.msra.mxu0 0
    %4159 = vmatpush.bf16.msra.mxu0 0
    %4160 = vmatpush.bf16.msra.mxu0 0
    %4161 = vmatpush.bf16.msra.mxu0 0
    %4162 = vmatpush.bf16.msra.mxu0 0
    %4163 = vmatpush.bf16.msra.mxu0 0
    %4164 = vmatpush.bf16.msra.mxu0 0
    %4165 = vmatpush.bf16.msra.mxu0 %v4132
    %4166 = vmatmul.bf16.gmra.mxu0 %v4143
    %v4167 = vpop.f32.mrf.mxu0
    %v4168 = vadd.f32 %v4155, %v4167
    %v4169 = vpop.f32.mrf.mxu0
    %4170 = vdwg.mxu0
    %v4171 = vadd.f32 %v4085, %v4168
    %v4190 = vunpack.c.l.b16 %v184
    %v4191 = vunpack.c.l.b16 %v185
    %v4192 = vunpack.c.l.b16 %v186
    %v4193 = vunpack.c.l.b16 %v187
    %v4194 = vunpack.c.l.b16 %v188
    %v4195 = vunpack.c.l.b16 %v189
    %v4196 = vunpack.c.l.b16 %v190
    %v4197 = vunpack.c.l.b16 %v191
    %v4198 = vunpack.c.l.b16 %v192
    %v4199 = vunpack.c.l.b16 %v193
    %v4200 = vunpack.c.l.b16 %v194
    %v4201 = vunpack.c.l.b16 %v195
    %v4202 = vunpack.c.l.b16 %v196
    %v4203 = vunpack.c.l.b16 %v197
    %v4204 = vunpack.c.l.b16 %v198
    %v4205 = vunpack.c.l.b16 %v199
    %v4206 = vunpack.c.l.b16 %v200
    %v4207 = vunpack.c.l.b16 %v201
    %v4208 = vpack.c.b16 %v4191, %v4190
    %v4209 = vpack.c.b16 %v4193, %v4192
    %v4210 = vpack.c.b16 %v4195, %v4194
    %v4211 = vpack.c.b16 %v4197, %v4196
    %v4212 = vpack.c.b16 %v4199, %v4198
    %v4213 = vpack.c.b16 %v4201, %v4200
    %v4214 = vpack.c.b16 %v4203, %v4202
    %v4215 = vpack.c.b16 %v4205, %v4204
    %v4216 = vpack.c.b16 %v4207, %v4206
    %v4227 = vsel %vm3975, %v1584, 0
    %4229 = vmatpush.bf16.msra.mxu0 %v4215
    %4230 = vmatpush.bf16.msra.mxu0 %v4214
    %4231 = vmatpush.bf16.msra.mxu0 %v4213
    %4232 = vmatpush.bf16.msra.mxu0 %v4212
    %4233 = vmatpush.bf16.msra.mxu0 %v4211
    %4234 = vmatpush.bf16.msra.mxu0 %v4210
    %4235 = vmatpush.bf16.msra.mxu0 %v4209
    %4236 = vmatpush.bf16.msra.mxu0 %v4208
    %4237 = vmatmul.bf16.gmra.mxu0 %v1583
    %v4238 = vpop.f32.mrf.mxu0
    %v4239 = vadd.f32 0.0, %v4238
    %v4240 = vpop.f32.mrf.mxu0
    %4241 = vdwg.mxu0
    %4242 = vmatpush.bf16.msra.mxu0 0
    %4243 = vmatpush.bf16.msra.mxu0 0
    %4244 = vmatpush.bf16.msra.mxu0 0
    %4245 = vmatpush.bf16.msra.mxu0 0
    %4246 = vmatpush.bf16.msra.mxu0 0
    %4247 = vmatpush.bf16.msra.mxu0 0
    %4248 = vmatpush.bf16.msra.mxu0 0
    %4249 = vmatpush.bf16.msra.mxu0 %v4216
    %4250 = vmatmul.bf16.gmra.mxu0 %v4227
    %v4251 = vpop.f32.mrf.mxu0
    %v4252 = vadd.f32 %v4239, %v4251
    %v4253 = vpop.f32.mrf.mxu0
    %4254 = vdwg.mxu0
    %v4255 = vadd.f32 %v4171, %v4252
    %v4274 = vunpack.c.l.b16 %v203
    %v4275 = vunpack.c.l.b16 %v204
    %v4276 = vunpack.c.l.b16 %v205
    %v4277 = vunpack.c.l.b16 %v206
    %v4278 = vunpack.c.l.b16 %v207
    %v4279 = vunpack.c.l.b16 %v208
    %v4280 = vunpack.c.l.b16 %v209
    %v4281 = vunpack.c.l.b16 %v210
    %v4282 = vunpack.c.l.b16 %v211
    %v4283 = vunpack.c.l.b16 %v212
    %v4284 = vunpack.c.l.b16 %v213
    %v4285 = vunpack.c.l.b16 %v214
    %v4286 = vunpack.c.l.b16 %v215
    %v4287 = vunpack.c.l.b16 %v216
    %v4288 = vunpack.c.l.b16 %v217
    %v4289 = vunpack.c.l.b16 %v218
    %v4290 = vunpack.c.l.b16 %v219
    %v4291 = vunpack.c.l.b16 %v220
    %v4292 = vpack.c.b16 %v4275, %v4274
    %v4293 = vpack.c.b16 %v4277, %v4276
    %v4294 = vpack.c.b16 %v4279, %v4278
    %v4295 = vpack.c.b16 %v4281, %v4280
    %v4296 = vpack.c.b16 %v4283, %v4282
    %v4297 = vpack.c.b16 %v4285, %v4284
    %v4298 = vpack.c.b16 %v4287, %v4286
    %v4299 = vpack.c.b16 %v4289, %v4288
    %v4300 = vpack.c.b16 %v4291, %v4290
    %v4311 = vsel %vm3975, %v1876, 0
    %4313 = vmatpush.bf16.msra.mxu0 %v4299
    %4314 = vmatpush.bf16.msra.mxu0 %v4298
    %4315 = vmatpush.bf16.msra.mxu0 %v4297
    %4316 = vmatpush.bf16.msra.mxu0 %v4296
    %4317 = vmatpush.bf16.msra.mxu0 %v4295
    %4318 = vmatpush.bf16.msra.mxu0 %v4294
    %4319 = vmatpush.bf16.msra.mxu0 %v4293
    %4320 = vmatpush.bf16.msra.mxu0 %v4292
    %4321 = vmatmul.bf16.gmra.mxu0 %v1875
    %v4322 = vpop.f32.mrf.mxu0
    %v4323 = vadd.f32 0.0, %v4322
    %v4324 = vpop.f32.mrf.mxu0
    %4325 = vdwg.mxu0
    %4326 = vmatpush.bf16.msra.mxu0 0
    %4327 = vmatpush.bf16.msra.mxu0 0
    %4328 = vmatpush.bf16.msra.mxu0 0
    %4329 = vmatpush.bf16.msra.mxu0 0
    %4330 = vmatpush.bf16.msra.mxu0 0
    %4331 = vmatpush.bf16.msra.mxu0 0
    %4332 = vmatpush.bf16.msra.mxu0 0
    %4333 = vmatpush.bf16.msra.mxu0 %v4300
    %4334 = vmatmul.bf16.gmra.mxu0 %v4311
    %v4335 = vpop.f32.mrf.mxu0
    %v4336 = vadd.f32 %v4323, %v4335
    %v4337 = vpop.f32.mrf.mxu0
    %4338 = vdwg.mxu0
    %v4339 = vadd.f32 %v4255, %v4336
    %v4341 = vperm.slane %v222, 0
    %v4343 = vadd.f32 %v4339, %v4341
    %v4344 = vtanh.pop %v4343
    %4345 = vmatpush.bf16.msra.mxu0 %v3964
    %4346 = vmatpush.bf16.msra.mxu0 %v3963
    %4347 = vmatpush.bf16.msra.mxu0 %v3962
    %4348 = vmatpush.bf16.msra.mxu0 %v3961
    %4349 = vmatpush.bf16.msra.mxu0 %v3960
    %4350 = vmatpush.bf16.msra.mxu0 %v3959
    %4351 = vmatpush.bf16.msra.mxu0 %v3958
    %4352 = vmatpush.bf16.msra.mxu0 %v3957
    %4353 = vmatmul.bf16.gmra.mxu0 %v1291
    %v4354 = vpop.f32.mrf.mxu0
    %v4355 = vadd.f32 0.0, %v4354
    %v4356 = vpop.f32.mrf.mxu0
    %4357 = vdwg.mxu0
    %4358 = vmatpush.bf16.msra.mxu0 0
    %4359 = vmatpush.bf16.msra.mxu0 0
    %4360 = vmatpush.bf16.msra.mxu0 0
    %4361 = vmatpush.bf16.msra.mxu0 0
    %4362 = vmatpush.bf16.msra.mxu0 0
    %4363 = vmatpush.bf16.msra.mxu0 0
    %4364 = vmatpush.bf16.msra.mxu0 0
    %4365 = vmatpush.bf16.msra.mxu0 %v3965
    %4366 = vmatmul.bf16.gmra.mxu0 %v4143
    %v4367 = vpop.f32.mrf.mxu0
    %v4368 = vadd.f32 %v4355, %v4367
    %v4369 = vpop.f32.mrf.mxu0
    %4370 = vdwg.mxu0
    %4371 = vmatpush.bf16.msra.mxu0 %v4048
    %4372 = vmatpush.bf16.msra.mxu0 %v4047
    %4373 = vmatpush.bf16.msra.mxu0 %v4046
    %4374 = vmatpush.bf16.msra.mxu0 %v4045
    %4375 = vmatpush.bf16.msra.mxu0 %v4044
    %4376 = vmatpush.bf16.msra.mxu0 %v4043
    %4377 = vmatpush.bf16.msra.mxu0 %v4042
    %4378 = vmatpush.bf16.msra.mxu0 %v4041
    %4379 = vmatmul.bf16.gmra.mxu0 %v999
    %v4380 = vpop.f32.mrf.mxu0
    %v4381 = vadd.f32 %v4368, %v4380
    %v4382 = vpop.f32.mrf.mxu0
    %4383 = vdwg.mxu0
    %4384 = vmatpush.bf16.msra.mxu0 0
    %4385 = vmatpush.bf16.msra.mxu0 0
    %4386 = vmatpush.bf16.msra.mxu0 0
    %4387 = vmatpush.bf16.msra.mxu0 0
    %4388 = vmatpush.bf16.msra.mxu0 0
    %4389 = vmatpush.bf16.msra.mxu0 0
    %4390 = vmatpush.bf16.msra.mxu0 0
    %4391 = vmatpush.bf16.msra.mxu0 %v4049
    %4392 = vmatmul.bf16.gmra.mxu0 %v3977
    %v4393 = vpop.f32.mrf.mxu0
    %v4394 = vadd.f32 %v4381, %v4393
    %v4395 = vpop.f32.mrf.mxu0
    %4396 = vdwg.mxu0
    %4397 = vmatpush.bf16.msra.mxu0 %v4131
    %4398 = vmatpush.bf16.msra.mxu0 %v4130
    %4399 = vmatpush.bf16.msra.mxu0 %v4129
    %4400 = vmatpush.bf16.msra.mxu0 %v4128
    %4401 = vmatpush.bf16.msra.mxu0 %v4127
    %4402 = vmatpush.bf16.msra.mxu0 %v4126
    %4403 = vmatpush.bf16.msra.mxu0 %v4125
    %4404 = vmatpush.bf16.msra.mxu0 %v4124
    %4405 = vmatmul.bf16.gmra.mxu0 %v1583
    %v4406 = vpop.f32.mrf.mxu0
    %v4407 = vadd.f32 0.0, %v4406
    %v4408 = vpop.f32.mrf.mxu0
    %4409 = vdwg.mxu0
    %4410 = vmatpush.bf16.msra.mxu0 0
    %4411 = vmatpush.bf16.msra.mxu0 0
    %4412 = vmatpush.bf16.msra.mxu0 0
    %4413 = vmatpush.bf16.msra.mxu0 0
    %4414 = vmatpush.bf16.msra.mxu0 0
    %4415 = vmatpush.bf16.msra.mxu0 0
    %4416 = vmatpush.bf16.msra.mxu0 0
    %4417 = vmatpush.bf16.msra.mxu0 %v4132
    %4418 = vmatmul.bf16.gmra.mxu0 %v4227
    %v4419 = vpop.f32.mrf.mxu0
    %v4420 = vadd.f32 %v4407, %v4419
    %v4421 = vpop.f32.mrf.mxu0
    %4422 = vdwg.mxu0
    %v4423 = vadd.f32 %v4394, %v4420
    %4424 = vmatpush.bf16.msra.mxu0 %v4215
    %4425 = vmatpush.bf16.msra.mxu0 %v4214
    %4426 = vmatpush.bf16.msra.mxu0 %v4213
    %4427 = vmatpush.bf16.msra.mxu0 %v4212
    %4428 = vmatpush.bf16.msra.mxu0 %v4211
    %4429 = vmatpush.bf16.msra.mxu0 %v4210
    %4430 = vmatpush.bf16.msra.mxu0 %v4209
    %4431 = vmatpush.bf16.msra.mxu0 %v4208
    %4432 = vmatmul.bf16.gmra.mxu0 %v1875
    %v4433 = vpop.f32.mrf.mxu0
    %v4434 = vadd.f32 0.0, %v4433
    %v4435 = vpop.f32.mrf.mxu0
    %4436 = vdwg.mxu0
    %4437 = vmatpush.bf16.msra.mxu0 0
    %4438 = vmatpush.bf16.msra.mxu0 0
    %4439 = vmatpush.bf16.msra.mxu0 0
    %4440 = vmatpush.bf16.msra.mxu0 0
    %4441 = vmatpush.bf16.msra.mxu0 0
    %4442 = vmatpush.bf16.msra.mxu0 0
    %4443 = vmatpush.bf16.msra.mxu0 0
    %4444 = vmatpush.bf16.msra.mxu0 %v4216
    %4445 = vmatmul.bf16.gmra.mxu0 %v4311
    %v4446 = vpop.f32.mrf.mxu0
    %v4447 = vadd.f32 %v4434, %v4446
    %v4448 = vpop.f32.mrf.mxu0
    %4449 = vdwg.mxu0
    %v4450 = vadd.f32 %v4423, %v4447
    %v4452 = vsel %vm3975, %v2168, 0
    %4454 = vmatpush.bf16.msra.mxu0 %v4299
    %4455 = vmatpush.bf16.msra.mxu0 %v4298
    %4456 = vmatpush.bf16.msra.mxu0 %v4297
    %4457 = vmatpush.bf16.msra.mxu0 %v4296
    %4458 = vmatpush.bf16.msra.mxu0 %v4295
    %4459 = vmatpush.bf16.msra.mxu0 %v4294
    %4460 = vmatpush.bf16.msra.mxu0 %v4293
    %4461 = vmatpush.bf16.msra.mxu0 %v4292
    %4462 = vmatmul.bf16.gmra.mxu0 %v2167
    %v4463 = vpop.f32.mrf.mxu0
    %v4464 = vadd.f32 0.0, %v4463
    %v4465 = vpop.f32.mrf.mxu0
    %4466 = vdwg.mxu0
    %4467 = vmatpush.bf16.msra.mxu0 0
    %4468 = vmatpush.bf16.msra.mxu0 0
    %4469 = vmatpush.bf16.msra.mxu0 0
    %4470 = vmatpush.bf16.msra.mxu0 0
    %4471 = vmatpush.bf16.msra.mxu0 0
    %4472 = vmatpush.bf16.msra.mxu0 0
    %4473 = vmatpush.bf16.msra.mxu0 0
    %4474 = vmatpush.bf16.msra.mxu0 %v4300
    %4475 = vmatmul.bf16.gmra.mxu0 %v4452
    %v4476 = vpop.f32.mrf.mxu0
    %v4477 = vadd.f32 %v4464, %v4476
    %v4478 = vpop.f32.mrf.mxu0
    %4479 = vdwg.mxu0
    %v4480 = vadd.f32 %v4450, %v4477
    %v4481 = vadd.f32 %v4480, %v4341
    %v4482 = vtanh.pop %v4481
    %v4483 = vadd.f32 %v4344, %v4482
    %v4484 = vmul.f32 %v4483, 0.5
    %v4485 = vpack.c.bf16 %v4484, %v4484
    %4486 = vmatpush.bf16.msra.mxu0 %v3964
    %4487 = vmatpush.bf16.msra.mxu0 %v3963
    %4488 = vmatpush.bf16.msra.mxu0 %v3962
    %4489 = vmatpush.bf16.msra.mxu0 %v3961
    %4490 = vmatpush.bf16.msra.mxu0 %v3960
    %4491 = vmatpush.bf16.msra.mxu0 %v3959
    %4492 = vmatpush.bf16.msra.mxu0 %v3958
    %4493 = vmatpush.bf16.msra.mxu0 %v3957
    %4494 = vmatmul.bf16.gmra.mxu0 %v1583
    %v4495 = vpop.f32.mrf.mxu0
    %v4496 = vadd.f32 0.0, %v4495
    %v4497 = vpop.f32.mrf.mxu0
    %4498 = vdwg.mxu0
    %4499 = vmatpush.bf16.msra.mxu0 0
    %4500 = vmatpush.bf16.msra.mxu0 0
    %4501 = vmatpush.bf16.msra.mxu0 0
    %4502 = vmatpush.bf16.msra.mxu0 0
    %4503 = vmatpush.bf16.msra.mxu0 0
    %4504 = vmatpush.bf16.msra.mxu0 0
    %4505 = vmatpush.bf16.msra.mxu0 0
    %4506 = vmatpush.bf16.msra.mxu0 %v3965
    %4507 = vmatmul.bf16.gmra.mxu0 %v4227
    %v4508 = vpop.f32.mrf.mxu0
    %v4509 = vadd.f32 %v4496, %v4508
    %v4510 = vpop.f32.mrf.mxu0
    %4511 = vdwg.mxu0
    %4512 = vmatpush.bf16.msra.mxu0 %v4048
    %4513 = vmatpush.bf16.msra.mxu0 %v4047
    %4514 = vmatpush.bf16.msra.mxu0 %v4046
    %4515 = vmatpush.bf16.msra.mxu0 %v4045
    %4516 = vmatpush.bf16.msra.mxu0 %v4044
    %4517 = vmatpush.bf16.msra.mxu0 %v4043
    %4518 = vmatpush.bf16.msra.mxu0 %v4042
    %4519 = vmatpush.bf16.msra.mxu0 %v4041
    %4520 = vmatmul.bf16.gmra.mxu0 %v1291
    %v4521 = vpop.f32.mrf.mxu0
    %v4522 = vadd.f32 %v4509, %v4521
    %v4523 = vpop.f32.mrf.mxu0
    %4524 = vdwg.mxu0
    %4525 = vmatpush.bf16.msra.mxu0 0
    %4526 = vmatpush.bf16.msra.mxu0 0
    %4527 = vmatpush.bf16.msra.mxu0 0
    %4528 = vmatpush.bf16.msra.mxu0 0
    %4529 = vmatpush.bf16.msra.mxu0 0
    %4530 = vmatpush.bf16.msra.mxu0 0
    %4531 = vmatpush.bf16.msra.mxu0 0
    %4532 = vmatpush.bf16.msra.mxu0 %v4049
    %4533 = vmatmul.bf16.gmra.mxu0 %v4143
    %v4534 = vpop.f32.mrf.mxu0
    %v4535 = vadd.f32 %v4522, %v4534
    %v4536 = vpop.f32.mrf.mxu0
    %4537 = vdwg.mxu0
    %4538 = vmatpush.bf16.msra.mxu0 %v4131
    %4539 = vmatpush.bf16.msra.mxu0 %v4130
    %4540 = vmatpush.bf16.msra.mxu0 %v4129
    %4541 = vmatpush.bf16.msra.mxu0 %v4128
    %4542 = vmatpush.bf16.msra.mxu0 %v4127
    %4543 = vmatpush.bf16.msra.mxu0 %v4126
    %4544 = vmatpush.bf16.msra.mxu0 %v4125
    %4545 = vmatpush.bf16.msra.mxu0 %v4124
    %4546 = vmatmul.bf16.gmra.mxu0 %v1875
    %v4547 = vpop.f32.mrf.mxu0
    %v4548 = vadd.f32 0.0, %v4547
    %v4549 = vpop.f32.mrf.mxu0
    %4550 = vdwg.mxu0
    %4551 = vmatpush.bf16.msra.mxu0 0
    %4552 = vmatpush.bf16.msra.mxu0 0
    %4553 = vmatpush.bf16.msra.mxu0 0
    %4554 = vmatpush.bf16.msra.mxu0 0
    %4555 = vmatpush.bf16.msra.mxu0 0
    %4556 = vmatpush.bf16.msra.mxu0 0
    %4557 = vmatpush.bf16.msra.mxu0 0
    %4558 = vmatpush.bf16.msra.mxu0 %v4132
    %4559 = vmatmul.bf16.gmra.mxu0 %v4311
    %v4560 = vpop.f32.mrf.mxu0
    %v4561 = vadd.f32 %v4548, %v4560
    %v4562 = vpop.f32.mrf.mxu0
    %4563 = vdwg.mxu0
    %v4564 = vadd.f32 %v4535, %v4561
    %4565 = vmatpush.bf16.msra.mxu0 %v4215
    %4566 = vmatpush.bf16.msra.mxu0 %v4214
    %4567 = vmatpush.bf16.msra.mxu0 %v4213
    %4568 = vmatpush.bf16.msra.mxu0 %v4212
    %4569 = vmatpush.bf16.msra.mxu0 %v4211
    %4570 = vmatpush.bf16.msra.mxu0 %v4210
    %4571 = vmatpush.bf16.msra.mxu0 %v4209
    %4572 = vmatpush.bf16.msra.mxu0 %v4208
    %4573 = vmatmul.bf16.gmra.mxu0 %v2167
    %v4574 = vpop.f32.mrf.mxu0
    %v4575 = vadd.f32 0.0, %v4574
    %v4576 = vpop.f32.mrf.mxu0
    %4577 = vdwg.mxu0
    %4578 = vmatpush.bf16.msra.mxu0 0
    %4579 = vmatpush.bf16.msra.mxu0 0
    %4580 = vmatpush.bf16.msra.mxu0 0
    %4581 = vmatpush.bf16.msra.mxu0 0
    %4582 = vmatpush.bf16.msra.mxu0 0
    %4583 = vmatpush.bf16.msra.mxu0 0
    %4584 = vmatpush.bf16.msra.mxu0 0
    %4585 = vmatpush.bf16.msra.mxu0 %v4216
    %4586 = vmatmul.bf16.gmra.mxu0 %v4452
    %v4587 = vpop.f32.mrf.mxu0
    %v4588 = vadd.f32 %v4575, %v4587
    %v4589 = vpop.f32.mrf.mxu0
    %4590 = vdwg.mxu0
    %v4591 = vadd.f32 %v4564, %v4588
    %v4593 = vsel %vm3975, %v2460, 0
    %4595 = vmatpush.bf16.msra.mxu0 %v4299
    %4596 = vmatpush.bf16.msra.mxu0 %v4298
    %4597 = vmatpush.bf16.msra.mxu0 %v4297
    %4598 = vmatpush.bf16.msra.mxu0 %v4296
    %4599 = vmatpush.bf16.msra.mxu0 %v4295
    %4600 = vmatpush.bf16.msra.mxu0 %v4294
    %4601 = vmatpush.bf16.msra.mxu0 %v4293
    %4602 = vmatpush.bf16.msra.mxu0 %v4292
    %4603 = vmatmul.bf16.gmra.mxu0 %v2459
    %v4604 = vpop.f32.mrf.mxu0
    %v4605 = vadd.f32 0.0, %v4604
    %v4606 = vpop.f32.mrf.mxu0
    %4607 = vdwg.mxu0
    %4608 = vmatpush.bf16.msra.mxu0 0
    %4609 = vmatpush.bf16.msra.mxu0 0
    %4610 = vmatpush.bf16.msra.mxu0 0
    %4611 = vmatpush.bf16.msra.mxu0 0
    %4612 = vmatpush.bf16.msra.mxu0 0
    %4613 = vmatpush.bf16.msra.mxu0 0
    %4614 = vmatpush.bf16.msra.mxu0 0
    %4615 = vmatpush.bf16.msra.mxu0 %v4300
    %4616 = vmatmul.bf16.gmra.mxu0 %v4593
    %v4617 = vpop.f32.mrf.mxu0
    %v4618 = vadd.f32 %v4605, %v4617
    %v4619 = vpop.f32.mrf.mxu0
    %4620 = vdwg.mxu0
    %v4621 = vadd.f32 %v4591, %v4618
    %v4622 = vadd.f32 %v4621, %v4341
    %v4623 = vtanh.pop %v4622
    %4624 = vmatpush.bf16.msra.mxu0 %v3964
    %4625 = vmatpush.bf16.msra.mxu0 %v3963
    %4626 = vmatpush.bf16.msra.mxu0 %v3962
    %4627 = vmatpush.bf16.msra.mxu0 %v3961
    %4628 = vmatpush.bf16.msra.mxu0 %v3960
    %4629 = vmatpush.bf16.msra.mxu0 %v3959
    %4630 = vmatpush.bf16.msra.mxu0 %v3958
    %4631 = vmatpush.bf16.msra.mxu0 %v3957
    %4632 = vmatmul.bf16.gmra.mxu0 %v1875
    %v4633 = vpop.f32.mrf.mxu0
    %v4634 = vadd.f32 0.0, %v4633
    %v4635 = vpop.f32.mrf.mxu0
    %4636 = vdwg.mxu0
    %4637 = vmatpush.bf16.msra.mxu0 0
    %4638 = vmatpush.bf16.msra.mxu0 0
    %4639 = vmatpush.bf16.msra.mxu0 0
    %4640 = vmatpush.bf16.msra.mxu0 0
    %4641 = vmatpush.bf16.msra.mxu0 0
    %4642 = vmatpush.bf16.msra.mxu0 0
    %4643 = vmatpush.bf16.msra.mxu0 0
    %4644 = vmatpush.bf16.msra.mxu0 %v3965
    %4645 = vmatmul.bf16.gmra.mxu0 %v4311
    %v4646 = vpop.f32.mrf.mxu0
    %v4647 = vadd.f32 %v4634, %v4646
    %v4648 = vpop.f32.mrf.mxu0
    %4649 = vdwg.mxu0
    %4650 = vmatpush.bf16.msra.mxu0 %v4048
    %4651 = vmatpush.bf16.msra.mxu0 %v4047
    %4652 = vmatpush.bf16.msra.mxu0 %v4046
    %4653 = vmatpush.bf16.msra.mxu0 %v4045
    %4654 = vmatpush.bf16.msra.mxu0 %v4044
    %4655 = vmatpush.bf16.msra.mxu0 %v4043
    %4656 = vmatpush.bf16.msra.mxu0 %v4042
    %4657 = vmatpush.bf16.msra.mxu0 %v4041
    %4658 = vmatmul.bf16.gmra.mxu0 %v1583
    %v4659 = vpop.f32.mrf.mxu0
    %v4660 = vadd.f32 %v4647, %v4659
    %v4661 = vpop.f32.mrf.mxu0
    %4662 = vdwg.mxu0
    %4663 = vmatpush.bf16.msra.mxu0 0
    %4664 = vmatpush.bf16.msra.mxu0 0
    %4665 = vmatpush.bf16.msra.mxu0 0
    %4666 = vmatpush.bf16.msra.mxu0 0
    %4667 = vmatpush.bf16.msra.mxu0 0
    %4668 = vmatpush.bf16.msra.mxu0 0
    %4669 = vmatpush.bf16.msra.mxu0 0
    %4670 = vmatpush.bf16.msra.mxu0 %v4049
    %4671 = vmatmul.bf16.gmra.mxu0 %v4227
    %v4672 = vpop.f32.mrf.mxu0
    %v4673 = vadd.f32 %v4660, %v4672
    %v4674 = vpop.f32.mrf.mxu0
    %4675 = vdwg.mxu0
    %4676 = vmatpush.bf16.msra.mxu0 %v4131
    %4677 = vmatpush.bf16.msra.mxu0 %v4130
    %4678 = vmatpush.bf16.msra.mxu0 %v4129
    %4679 = vmatpush.bf16.msra.mxu0 %v4128
    %4680 = vmatpush.bf16.msra.mxu0 %v4127
    %4681 = vmatpush.bf16.msra.mxu0 %v4126
    %4682 = vmatpush.bf16.msra.mxu0 %v4125
    %4683 = vmatpush.bf16.msra.mxu0 %v4124
    %4684 = vmatmul.bf16.gmra.mxu0 %v2167
    %v4685 = vpop.f32.mrf.mxu0
    %v4686 = vadd.f32 0.0, %v4685
    %v4687 = vpop.f32.mrf.mxu0
    %4688 = vdwg.mxu0
    %4689 = vmatpush.bf16.msra.mxu0 0
    %4690 = vmatpush.bf16.msra.mxu0 0
    %4691 = vmatpush.bf16.msra.mxu0 0
    %4692 = vmatpush.bf16.msra.mxu0 0
    %4693 = vmatpush.bf16.msra.mxu0 0
    %4694 = vmatpush.bf16.msra.mxu0 0
    %4695 = vmatpush.bf16.msra.mxu0 0
    %4696 = vmatpush.bf16.msra.mxu0 %v4132
    %4697 = vmatmul.bf16.gmra.mxu0 %v4452
    %v4698 = vpop.f32.mrf.mxu0
    %v4699 = vadd.f32 %v4686, %v4698
    %v4700 = vpop.f32.mrf.mxu0
    %4701 = vdwg.mxu0
    %v4702 = vadd.f32 %v4673, %v4699
    %4703 = vmatpush.bf16.msra.mxu0 %v4215
    %4704 = vmatpush.bf16.msra.mxu0 %v4214
    %4705 = vmatpush.bf16.msra.mxu0 %v4213
    %4706 = vmatpush.bf16.msra.mxu0 %v4212
    %4707 = vmatpush.bf16.msra.mxu0 %v4211
    %4708 = vmatpush.bf16.msra.mxu0 %v4210
    %4709 = vmatpush.bf16.msra.mxu0 %v4209
    %4710 = vmatpush.bf16.msra.mxu0 %v4208
    %4711 = vmatmul.bf16.gmra.mxu0 %v2459
    %v4712 = vpop.f32.mrf.mxu0
    %v4713 = vadd.f32 0.0, %v4712
    %v4714 = vpop.f32.mrf.mxu0
    %4715 = vdwg.mxu0
    %4716 = vmatpush.bf16.msra.mxu0 0
    %4717 = vmatpush.bf16.msra.mxu0 0
    %4718 = vmatpush.bf16.msra.mxu0 0
    %4719 = vmatpush.bf16.msra.mxu0 0
    %4720 = vmatpush.bf16.msra.mxu0 0
    %4721 = vmatpush.bf16.msra.mxu0 0
    %4722 = vmatpush.bf16.msra.mxu0 0
    %4723 = vmatpush.bf16.msra.mxu0 %v4216
    %4724 = vmatmul.bf16.gmra.mxu0 %v4593
    %v4725 = vpop.f32.mrf.mxu0
    %v4726 = vadd.f32 %v4713, %v4725
    %v4727 = vpop.f32.mrf.mxu0
    %4728 = vdwg.mxu0
    %v4729 = vadd.f32 %v4702, %v4726
    %v4731 = vsel %vm3975, %v2752, 0
    %4733 = vmatpush.bf16.msra.mxu0 %v4299
    %4734 = vmatpush.bf16.msra.mxu0 %v4298
    %4735 = vmatpush.bf16.msra.mxu0 %v4297
    %4736 = vmatpush.bf16.msra.mxu0 %v4296
    %4737 = vmatpush.bf16.msra.mxu0 %v4295
    %4738 = vmatpush.bf16.msra.mxu0 %v4294
    %4739 = vmatpush.bf16.msra.mxu0 %v4293
    %4740 = vmatpush.bf16.msra.mxu0 %v4292
    %4741 = vmatmul.bf16.gmra.mxu0 %v2751
    %v4742 = vpop.f32.mrf.mxu0
    %v4743 = vadd.f32 0.0, %v4742
    %v4744 = vpop.f32.mrf.mxu0
    %4745 = vdwg.mxu0
    %4746 = vmatpush.bf16.msra.mxu0 0
    %4747 = vmatpush.bf16.msra.mxu0 0
    %4748 = vmatpush.bf16.msra.mxu0 0
    %4749 = vmatpush.bf16.msra.mxu0 0
    %4750 = vmatpush.bf16.msra.mxu0 0
    %4751 = vmatpush.bf16.msra.mxu0 0
    %4752 = vmatpush.bf16.msra.mxu0 0
    %4753 = vmatpush.bf16.msra.mxu0 %v4300
    %4754 = vmatmul.bf16.gmra.mxu0 %v4731
    %v4755 = vpop.f32.mrf.mxu0
    %v4756 = vadd.f32 %v4743, %v4755
    %v4757 = vpop.f32.mrf.mxu0
    %4758 = vdwg.mxu0
    %v4759 = vadd.f32 %v4729, %v4756
    %v4760 = vadd.f32 %v4759, %v4341
    %v4761 = vtanh.pop %v4760
    %v4762 = vadd.f32 %v4623, %v4761
    %v4763 = vmul.f32 %v4762, 0.5
    %v4764 = vpack.c.bf16 %v4763, %v4763
    %4765 = vmatpush.bf16.msra.mxu0 %v3964
    %4766 = vmatpush.bf16.msra.mxu0 %v3963
    %4767 = vmatpush.bf16.msra.mxu0 %v3962
    %4768 = vmatpush.bf16.msra.mxu0 %v3961
    %4769 = vmatpush.bf16.msra.mxu0 %v3960
    %4770 = vmatpush.bf16.msra.mxu0 %v3959
    %4771 = vmatpush.bf16.msra.mxu0 %v3958
    %4772 = vmatpush.bf16.msra.mxu0 %v3957
    %4773 = vmatmul.bf16.gmra.mxu0 %v2167
    %v4774 = vpop.f32.mrf.mxu0
    %v4775 = vadd.f32 0.0, %v4774
    %v4776 = vpop.f32.mrf.mxu0
    %4777 = vdwg.mxu0
    %4778 = vmatpush.bf16.msra.mxu0 0
    %4779 = vmatpush.bf16.msra.mxu0 0
    %4780 = vmatpush.bf16.msra.mxu0 0
    %4781 = vmatpush.bf16.msra.mxu0 0
    %4782 = vmatpush.bf16.msra.mxu0 0
    %4783 = vmatpush.bf16.msra.mxu0 0
    %4784 = vmatpush.bf16.msra.mxu0 0
    %4785 = vmatpush.bf16.msra.mxu0 %v3965
    %4786 = vmatmul.bf16.gmra.mxu0 %v4452
    %v4787 = vpop.f32.mrf.mxu0
    %v4788 = vadd.f32 %v4775, %v4787
    %v4789 = vpop.f32.mrf.mxu0
    %4790 = vdwg.mxu0
    %4791 = vmatpush.bf16.msra.mxu0 %v4048
    %4792 = vmatpush.bf16.msra.mxu0 %v4047
    %4793 = vmatpush.bf16.msra.mxu0 %v4046
    %4794 = vmatpush.bf16.msra.mxu0 %v4045
    %4795 = vmatpush.bf16.msra.mxu0 %v4044
    %4796 = vmatpush.bf16.msra.mxu0 %v4043
    %4797 = vmatpush.bf16.msra.mxu0 %v4042
    %4798 = vmatpush.bf16.msra.mxu0 %v4041
    %4799 = vmatmul.bf16.gmra.mxu0 %v1875
    %v4800 = vpop.f32.mrf.mxu0
    %v4801 = vadd.f32 %v4788, %v4800
    %v4802 = vpop.f32.mrf.mxu0
    %4803 = vdwg.mxu0
    %4804 = vmatpush.bf16.msra.mxu0 0
    %4805 = vmatpush.bf16.msra.mxu0 0
    %4806 = vmatpush.bf16.msra.mxu0 0
    %4807 = vmatpush.bf16.msra.mxu0 0
    %4808 = vmatpush.bf16.msra.mxu0 0
    %4809 = vmatpush.bf16.msra.mxu0 0
    %4810 = vmatpush.bf16.msra.mxu0 0
    %4811 = vmatpush.bf16.msra.mxu0 %v4049
    %4812 = vmatmul.bf16.gmra.mxu0 %v4311
    %v4813 = vpop.f32.mrf.mxu0
    %v4814 = vadd.f32 %v4801, %v4813
    %v4815 = vpop.f32.mrf.mxu0
    %4816 = vdwg.mxu0
    %4817 = vmatpush.bf16.msra.mxu0 %v4131
    %4818 = vmatpush.bf16.msra.mxu0 %v4130
    %4819 = vmatpush.bf16.msra.mxu0 %v4129
    %4820 = vmatpush.bf16.msra.mxu0 %v4128
    %4821 = vmatpush.bf16.msra.mxu0 %v4127
    %4822 = vmatpush.bf16.msra.mxu0 %v4126
    %4823 = vmatpush.bf16.msra.mxu0 %v4125
    %4824 = vmatpush.bf16.msra.mxu0 %v4124
    %4825 = vmatmul.bf16.gmra.mxu0 %v2459
    %v4826 = vpop.f32.mrf.mxu0
    %v4827 = vadd.f32 0.0, %v4826
    %v4828 = vpop.f32.mrf.mxu0
    %4829 = vdwg.mxu0
    %4830 = vmatpush.bf16.msra.mxu0 0
    %4831 = vmatpush.bf16.msra.mxu0 0
    %4832 = vmatpush.bf16.msra.mxu0 0
    %4833 = vmatpush.bf16.msra.mxu0 0
    %4834 = vmatpush.bf16.msra.mxu0 0
    %4835 = vmatpush.bf16.msra.mxu0 0
    %4836 = vmatpush.bf16.msra.mxu0 0
    %4837 = vmatpush.bf16.msra.mxu0 %v4132
    %4838 = vmatmul.bf16.gmra.mxu0 %v4593
    %v4839 = vpop.f32.mrf.mxu0
    %v4840 = vadd.f32 %v4827, %v4839
    %v4841 = vpop.f32.mrf.mxu0
    %4842 = vdwg.mxu0
    %v4843 = vadd.f32 %v4814, %v4840
    %4844 = vmatpush.bf16.msra.mxu0 %v4215
    %4845 = vmatpush.bf16.msra.mxu0 %v4214
    %4846 = vmatpush.bf16.msra.mxu0 %v4213
    %4847 = vmatpush.bf16.msra.mxu0 %v4212
    %4848 = vmatpush.bf16.msra.mxu0 %v4211
    %4849 = vmatpush.bf16.msra.mxu0 %v4210
    %4850 = vmatpush.bf16.msra.mxu0 %v4209
    %4851 = vmatpush.bf16.msra.mxu0 %v4208
    %4852 = vmatmul.bf16.gmra.mxu0 %v2751
    %v4853 = vpop.f32.mrf.mxu0
    %v4854 = vadd.f32 0.0, %v4853
    %v4855 = vpop.f32.mrf.mxu0
    %4856 = vdwg.mxu0
    %4857 = vmatpush.bf16.msra.mxu0 0
    %4858 = vmatpush.bf16.msra.mxu0 0
    %4859 = vmatpush.bf16.msra.mxu0 0
    %4860 = vmatpush.bf16.msra.mxu0 0
    %4861 = vmatpush.bf16.msra.mxu0 0
    %4862 = vmatpush.bf16.msra.mxu0 0
    %4863 = vmatpush.bf16.msra.mxu0 0
    %4864 = vmatpush.bf16.msra.mxu0 %v4216
    %4865 = vmatmul.bf16.gmra.mxu0 %v4731
    %v4866 = vpop.f32.mrf.mxu0
    %v4867 = vadd.f32 %v4854, %v4866
    %v4868 = vpop.f32.mrf.mxu0
    %4869 = vdwg.mxu0
    %v4870 = vadd.f32 %v4843, %v4867
    %v4872 = vsel %vm3975, %v3044, 0
    %4874 = vmatpush.bf16.msra.mxu0 %v4299
    %4875 = vmatpush.bf16.msra.mxu0 %v4298
    %4876 = vmatpush.bf16.msra.mxu0 %v4297
    %4877 = vmatpush.bf16.msra.mxu0 %v4296
    %4878 = vmatpush.bf16.msra.mxu0 %v4295
    %4879 = vmatpush.bf16.msra.mxu0 %v4294
    %4880 = vmatpush.bf16.msra.mxu0 %v4293
    %4881 = vmatpush.bf16.msra.mxu0 %v4292
    %4882 = vmatmul.bf16.gmra.mxu0 %v3043
    %v4883 = vpop.f32.mrf.mxu0
    %v4884 = vadd.f32 0.0, %v4883
    %v4885 = vpop.f32.mrf.mxu0
    %4886 = vdwg.mxu0
    %4887 = vmatpush.bf16.msra.mxu0 0
    %4888 = vmatpush.bf16.msra.mxu0 0
    %4889 = vmatpush.bf16.msra.mxu0 0
    %4890 = vmatpush.bf16.msra.mxu0 0
    %4891 = vmatpush.bf16.msra.mxu0 0
    %4892 = vmatpush.bf16.msra.mxu0 0
    %4893 = vmatpush.bf16.msra.mxu0 0
    %4894 = vmatpush.bf16.msra.mxu0 %v4300
    %4895 = vmatmul.bf16.gmra.mxu0 %v4872
    %v4896 = vpop.f32.mrf.mxu0
    %v4897 = vadd.f32 %v4884, %v4896
    %v4898 = vpop.f32.mrf.mxu0
    %4899 = vdwg.mxu0
    %v4900 = vadd.f32 %v4870, %v4897
    %v4901 = vadd.f32 %v4900, %v4341
    %v4902 = vtanh.pop %v4901
    %4903 = vmatpush.bf16.msra.mxu0 %v3964
    %4904 = vmatpush.bf16.msra.mxu0 %v3963
    %4905 = vmatpush.bf16.msra.mxu0 %v3962
    %4906 = vmatpush.bf16.msra.mxu0 %v3961
    %4907 = vmatpush.bf16.msra.mxu0 %v3960
    %4908 = vmatpush.bf16.msra.mxu0 %v3959
    %4909 = vmatpush.bf16.msra.mxu0 %v3958
    %4910 = vmatpush.bf16.msra.mxu0 %v3957
    %4911 = vmatmul.bf16.gmra.mxu0 %v2459
    %v4912 = vpop.f32.mrf.mxu0
    %v4913 = vadd.f32 0.0, %v4912
    %v4914 = vpop.f32.mrf.mxu0
    %4915 = vdwg.mxu0
    %4916 = vmatpush.bf16.msra.mxu0 0
    %4917 = vmatpush.bf16.msra.mxu0 0
    %4918 = vmatpush.bf16.msra.mxu0 0
    %4919 = vmatpush.bf16.msra.mxu0 0
    %4920 = vmatpush.bf16.msra.mxu0 0
    %4921 = vmatpush.bf16.msra.mxu0 0
    %4922 = vmatpush.bf16.msra.mxu0 0
    %4923 = vmatpush.bf16.msra.mxu0 %v3965
    %4924 = vmatmul.bf16.gmra.mxu0 %v4593
    %v4925 = vpop.f32.mrf.mxu0
    %v4926 = vadd.f32 %v4913, %v4925
    %v4927 = vpop.f32.mrf.mxu0
    %4928 = vdwg.mxu0
    %4929 = vmatpush.bf16.msra.mxu0 %v4048
    %4930 = vmatpush.bf16.msra.mxu0 %v4047
    %4931 = vmatpush.bf16.msra.mxu0 %v4046
    %4932 = vmatpush.bf16.msra.mxu0 %v4045
    %4933 = vmatpush.bf16.msra.mxu0 %v4044
    %4934 = vmatpush.bf16.msra.mxu0 %v4043
    %4935 = vmatpush.bf16.msra.mxu0 %v4042
    %4936 = vmatpush.bf16.msra.mxu0 %v4041
    %4937 = vmatmul.bf16.gmra.mxu0 %v2167
    %v4938 = vpop.f32.mrf.mxu0
    %v4939 = vadd.f32 %v4926, %v4938
    %v4940 = vpop.f32.mrf.mxu0
    %4941 = vdwg.mxu0
    %4942 = vmatpush.bf16.msra.mxu0 0
    %4943 = vmatpush.bf16.msra.mxu0 0
    %4944 = vmatpush.bf16.msra.mxu0 0
    %4945 = vmatpush.bf16.msra.mxu0 0
    %4946 = vmatpush.bf16.msra.mxu0 0
    %4947 = vmatpush.bf16.msra.mxu0 0
    %4948 = vmatpush.bf16.msra.mxu0 0
    %4949 = vmatpush.bf16.msra.mxu0 %v4049
    %4950 = vmatmul.bf16.gmra.mxu0 %v4452
    %v4951 = vpop.f32.mrf.mxu0
    %v4952 = vadd.f32 %v4939, %v4951
    %v4953 = vpop.f32.mrf.mxu0
    %4954 = vdwg.mxu0
    %4955 = vmatpush.bf16.msra.mxu0 %v4131
    %4956 = vmatpush.bf16.msra.mxu0 %v4130
    %4957 = vmatpush.bf16.msra.mxu0 %v4129
    %4958 = vmatpush.bf16.msra.mxu0 %v4128
    %4959 = vmatpush.bf16.msra.mxu0 %v4127
    %4960 = vmatpush.bf16.msra.mxu0 %v4126
    %4961 = vmatpush.bf16.msra.mxu0 %v4125
    %4962 = vmatpush.bf16.msra.mxu0 %v4124
    %4963 = vmatmul.bf16.gmra.mxu0 %v2751
    %v4964 = vpop.f32.mrf.mxu0
    %v4965 = vadd.f32 0.0, %v4964
    %v4966 = vpop.f32.mrf.mxu0
    %4967 = vdwg.mxu0
    %4968 = vmatpush.bf16.msra.mxu0 0
    %4969 = vmatpush.bf16.msra.mxu0 0
    %4970 = vmatpush.bf16.msra.mxu0 0
    %4971 = vmatpush.bf16.msra.mxu0 0
    %4972 = vmatpush.bf16.msra.mxu0 0
    %4973 = vmatpush.bf16.msra.mxu0 0
    %4974 = vmatpush.bf16.msra.mxu0 0
    %4975 = vmatpush.bf16.msra.mxu0 %v4132
    %4976 = vmatmul.bf16.gmra.mxu0 %v4731
    %v4977 = vpop.f32.mrf.mxu0
    %v4978 = vadd.f32 %v4965, %v4977
    %v4979 = vpop.f32.mrf.mxu0
    %4980 = vdwg.mxu0
    %v4981 = vadd.f32 %v4952, %v4978
    %4982 = vmatpush.bf16.msra.mxu0 %v4215
    %4983 = vmatpush.bf16.msra.mxu0 %v4214
    %4984 = vmatpush.bf16.msra.mxu0 %v4213
    %4985 = vmatpush.bf16.msra.mxu0 %v4212
    %4986 = vmatpush.bf16.msra.mxu0 %v4211
    %4987 = vmatpush.bf16.msra.mxu0 %v4210
    %4988 = vmatpush.bf16.msra.mxu0 %v4209
    %4989 = vmatpush.bf16.msra.mxu0 %v4208
    %4990 = vmatmul.bf16.gmra.mxu0 %v3043
    %v4991 = vpop.f32.mrf.mxu0
    %v4992 = vadd.f32 0.0, %v4991
    %v4993 = vpop.f32.mrf.mxu0
    %4994 = vdwg.mxu0
    %4995 = vmatpush.bf16.msra.mxu0 0
    %4996 = vmatpush.bf16.msra.mxu0 0
    %4997 = vmatpush.bf16.msra.mxu0 0
    %4998 = vmatpush.bf16.msra.mxu0 0
    %4999 = vmatpush.bf16.msra.mxu0 0
    %5000 = vmatpush.bf16.msra.mxu0 0
    %5001 = vmatpush.bf16.msra.mxu0 0
    %5002 = vmatpush.bf16.msra.mxu0 %v4216
    %5003 = vmatmul.bf16.gmra.mxu0 %v4872
    %v5004 = vpop.f32.mrf.mxu0
    %v5005 = vadd.f32 %v4992, %v5004
    %v5006 = vpop.f32.mrf.mxu0
    %5007 = vdwg.mxu0
    %v5008 = vadd.f32 %v4981, %v5005
    %v5010 = vsel %vm3975, %v3336, 0
    %5012 = vmatpush.bf16.msra.mxu0 %v4299
    %5013 = vmatpush.bf16.msra.mxu0 %v4298
    %5014 = vmatpush.bf16.msra.mxu0 %v4297
    %5015 = vmatpush.bf16.msra.mxu0 %v4296
    %5016 = vmatpush.bf16.msra.mxu0 %v4295
    %5017 = vmatpush.bf16.msra.mxu0 %v4294
    %5018 = vmatpush.bf16.msra.mxu0 %v4293
    %5019 = vmatpush.bf16.msra.mxu0 %v4292
    %5020 = vmatmul.bf16.gmra.mxu0 %v3335
    %v5021 = vpop.f32.mrf.mxu0
    %v5022 = vadd.f32 0.0, %v5021
    %v5023 = vpop.f32.mrf.mxu0
    %5024 = vdwg.mxu0
    %5025 = vmatpush.bf16.msra.mxu0 0
    %5026 = vmatpush.bf16.msra.mxu0 0
    %5027 = vmatpush.bf16.msra.mxu0 0
    %5028 = vmatpush.bf16.msra.mxu0 0
    %5029 = vmatpush.bf16.msra.mxu0 0
    %5030 = vmatpush.bf16.msra.mxu0 0
    %5031 = vmatpush.bf16.msra.mxu0 0
    %5032 = vmatpush.bf16.msra.mxu0 %v4300
    %5033 = vmatmul.bf16.gmra.mxu0 %v5010
    %v5034 = vpop.f32.mrf.mxu0
    %v5035 = vadd.f32 %v5022, %v5034
    %v5036 = vpop.f32.mrf.mxu0
    %5037 = vdwg.mxu0
    %v5038 = vadd.f32 %v5008, %v5035
    %v5039 = vadd.f32 %v5038, %v4341
    %v5040 = vtanh.pop %v5039
    %v5041 = vadd.f32 %v4902, %v5040
    %v5042 = vmul.f32 %v5041, 0.5
    %v5043 = vpack.c.bf16 %v5042, %v5042
    %5044 = vmatpush.bf16.msra.mxu0 %v3964
    %5045 = vmatpush.bf16.msra.mxu0 %v3963
    %5046 = vmatpush.bf16.msra.mxu0 %v3962
    %5047 = vmatpush.bf16.msra.mxu0 %v3961
    %5048 = vmatpush.bf16.msra.mxu0 %v3960
    %5049 = vmatpush.bf16.msra.mxu0 %v3959
    %5050 = vmatpush.bf16.msra.mxu0 %v3958
    %5051 = vmatpush.bf16.msra.mxu0 %v3957
    %5052 = vmatmul.bf16.gmra.mxu0 %v2751
    %v5053 = vpop.f32.mrf.mxu0
    %v5054 = vadd.f32 0.0, %v5053
    %v5055 = vpop.f32.mrf.mxu0
    %5056 = vdwg.mxu0
    %5057 = vmatpush.bf16.msra.mxu0 0
    %5058 = vmatpush.bf16.msra.mxu0 0
    %5059 = vmatpush.bf16.msra.mxu0 0
    %5060 = vmatpush.bf16.msra.mxu0 0
    %5061 = vmatpush.bf16.msra.mxu0 0
    %5062 = vmatpush.bf16.msra.mxu0 0
    %5063 = vmatpush.bf16.msra.mxu0 0
    %5064 = vmatpush.bf16.msra.mxu0 %v3965
    %5065 = vmatmul.bf16.gmra.mxu0 %v4731
    %v5066 = vpop.f32.mrf.mxu0
    %v5067 = vadd.f32 %v5054, %v5066
    %v5068 = vpop.f32.mrf.mxu0
    %5069 = vdwg.mxu0
    %5070 = vmatpush.bf16.msra.mxu0 %v4048
    %5071 = vmatpush.bf16.msra.mxu0 %v4047
    %5072 = vmatpush.bf16.msra.mxu0 %v4046
    %5073 = vmatpush.bf16.msra.mxu0 %v4045
    %5074 = vmatpush.bf16.msra.mxu0 %v4044
    %5075 = vmatpush.bf16.msra.mxu0 %v4043
    %5076 = vmatpush.bf16.msra.mxu0 %v4042
    %5077 = vmatpush.bf16.msra.mxu0 %v4041
    %5078 = vmatmul.bf16.gmra.mxu0 %v2459
    %v5079 = vpop.f32.mrf.mxu0
    %v5080 = vadd.f32 %v5067, %v5079
    %v5081 = vpop.f32.mrf.mxu0
    %5082 = vdwg.mxu0
    %5083 = vmatpush.bf16.msra.mxu0 0
    %5084 = vmatpush.bf16.msra.mxu0 0
    %5085 = vmatpush.bf16.msra.mxu0 0
    %5086 = vmatpush.bf16.msra.mxu0 0
    %5087 = vmatpush.bf16.msra.mxu0 0
    %5088 = vmatpush.bf16.msra.mxu0 0
    %5089 = vmatpush.bf16.msra.mxu0 0
    %5090 = vmatpush.bf16.msra.mxu0 %v4049
    %5091 = vmatmul.bf16.gmra.mxu0 %v4593
    %v5092 = vpop.f32.mrf.mxu0
    %v5093 = vadd.f32 %v5080, %v5092
    %v5094 = vpop.f32.mrf.mxu0
    %5095 = vdwg.mxu0
    %5096 = vmatpush.bf16.msra.mxu0 %v4131
    %5097 = vmatpush.bf16.msra.mxu0 %v4130
    %5098 = vmatpush.bf16.msra.mxu0 %v4129
    %5099 = vmatpush.bf16.msra.mxu0 %v4128
    %5100 = vmatpush.bf16.msra.mxu0 %v4127
    %5101 = vmatpush.bf16.msra.mxu0 %v4126
    %5102 = vmatpush.bf16.msra.mxu0 %v4125
    %5103 = vmatpush.bf16.msra.mxu0 %v4124
    %5104 = vmatmul.bf16.gmra.mxu0 %v3043
    %v5105 = vpop.f32.mrf.mxu0
    %v5106 = vadd.f32 0.0, %v5105
    %v5107 = vpop.f32.mrf.mxu0
    %5108 = vdwg.mxu0
    %5109 = vmatpush.bf16.msra.mxu0 0
    %5110 = vmatpush.bf16.msra.mxu0 0
    %5111 = vmatpush.bf16.msra.mxu0 0
    %5112 = vmatpush.bf16.msra.mxu0 0
    %5113 = vmatpush.bf16.msra.mxu0 0
    %5114 = vmatpush.bf16.msra.mxu0 0
    %5115 = vmatpush.bf16.msra.mxu0 0
    %5116 = vmatpush.bf16.msra.mxu0 %v4132
    %5117 = vmatmul.bf16.gmra.mxu0 %v4872
    %v5118 = vpop.f32.mrf.mxu0
    %v5119 = vadd.f32 %v5106, %v5118
    %v5120 = vpop.f32.mrf.mxu0
    %5121 = vdwg.mxu0
    %v5122 = vadd.f32 %v5093, %v5119
    %5123 = vmatpush.bf16.msra.mxu0 %v4215
    %5124 = vmatpush.bf16.msra.mxu0 %v4214
    %5125 = vmatpush.bf16.msra.mxu0 %v4213
    %5126 = vmatpush.bf16.msra.mxu0 %v4212
    %5127 = vmatpush.bf16.msra.mxu0 %v4211
    %5128 = vmatpush.bf16.msra.mxu0 %v4210
    %5129 = vmatpush.bf16.msra.mxu0 %v4209
    %5130 = vmatpush.bf16.msra.mxu0 %v4208
    %5131 = vmatmul.bf16.gmra.mxu0 %v3335
    %v5132 = vpop.f32.mrf.mxu0
    %v5133 = vadd.f32 0.0, %v5132
    %v5134 = vpop.f32.mrf.mxu0
    %5135 = vdwg.mxu0
    %5136 = vmatpush.bf16.msra.mxu0 0
    %5137 = vmatpush.bf16.msra.mxu0 0
    %5138 = vmatpush.bf16.msra.mxu0 0
    %5139 = vmatpush.bf16.msra.mxu0 0
    %5140 = vmatpush.bf16.msra.mxu0 0
    %5141 = vmatpush.bf16.msra.mxu0 0
    %5142 = vmatpush.bf16.msra.mxu0 0
    %5143 = vmatpush.bf16.msra.mxu0 %v4216
    %5144 = vmatmul.bf16.gmra.mxu0 %v5010
    %v5145 = vpop.f32.mrf.mxu0
    %v5146 = vadd.f32 %v5133, %v5145
    %v5147 = vpop.f32.mrf.mxu0
    %5148 = vdwg.mxu0
    %v5149 = vadd.f32 %v5122, %v5146
    %v5151 = vsel %vm3975, %v3628, 0
    %5153 = vmatpush.bf16.msra.mxu0 %v4299
    %5154 = vmatpush.bf16.msra.mxu0 %v4298
    %5155 = vmatpush.bf16.msra.mxu0 %v4297
    %5156 = vmatpush.bf16.msra.mxu0 %v4296
    %5157 = vmatpush.bf16.msra.mxu0 %v4295
    %5158 = vmatpush.bf16.msra.mxu0 %v4294
    %5159 = vmatpush.bf16.msra.mxu0 %v4293
    %5160 = vmatpush.bf16.msra.mxu0 %v4292
    %5161 = vmatmul.bf16.gmra.mxu0 %v3627
    %v5162 = vpop.f32.mrf.mxu0
    %v5163 = vadd.f32 0.0, %v5162
    %v5164 = vpop.f32.mrf.mxu0
    %5165 = vdwg.mxu0
    %5166 = vmatpush.bf16.msra.mxu0 0
    %5167 = vmatpush.bf16.msra.mxu0 0
    %5168 = vmatpush.bf16.msra.mxu0 0
    %5169 = vmatpush.bf16.msra.mxu0 0
    %5170 = vmatpush.bf16.msra.mxu0 0
    %5171 = vmatpush.bf16.msra.mxu0 0
    %5172 = vmatpush.bf16.msra.mxu0 0
    %5173 = vmatpush.bf16.msra.mxu0 %v4300
    %5174 = vmatmul.bf16.gmra.mxu0 %v5151
    %v5175 = vpop.f32.mrf.mxu0
    %v5176 = vadd.f32 %v5163, %v5175
    %v5177 = vpop.f32.mrf.mxu0
    %5178 = vdwg.mxu0
    %v5179 = vadd.f32 %v5149, %v5176
    %v5180 = vadd.f32 %v5179, %v4341
    %v5181 = vtanh.pop %v5180
    %5182 = vmatpush.bf16.msra.mxu0 %v3964
    %5183 = vmatpush.bf16.msra.mxu0 %v3963
    %5184 = vmatpush.bf16.msra.mxu0 %v3962
    %5185 = vmatpush.bf16.msra.mxu0 %v3961
    %5186 = vmatpush.bf16.msra.mxu0 %v3960
    %5187 = vmatpush.bf16.msra.mxu0 %v3959
    %5188 = vmatpush.bf16.msra.mxu0 %v3958
    %5189 = vmatpush.bf16.msra.mxu0 %v3957
    %5190 = vmatmul.bf16.gmra.mxu0 %v3043
    %v5191 = vpop.f32.mrf.mxu0
    %v5192 = vadd.f32 0.0, %v5191
    %v5193 = vpop.f32.mrf.mxu0
    %5194 = vdwg.mxu0
    %5195 = vmatpush.bf16.msra.mxu0 0
    %5196 = vmatpush.bf16.msra.mxu0 0
    %5197 = vmatpush.bf16.msra.mxu0 0
    %5198 = vmatpush.bf16.msra.mxu0 0
    %5199 = vmatpush.bf16.msra.mxu0 0
    %5200 = vmatpush.bf16.msra.mxu0 0
    %5201 = vmatpush.bf16.msra.mxu0 0
    %5202 = vmatpush.bf16.msra.mxu0 %v3965
    %5203 = vmatmul.bf16.gmra.mxu0 %v4872
    %v5204 = vpop.f32.mrf.mxu0
    %v5205 = vadd.f32 %v5192, %v5204
    %v5206 = vpop.f32.mrf.mxu0
    %5207 = vdwg.mxu0
    %5208 = vmatpush.bf16.msra.mxu0 %v4048
    %5209 = vmatpush.bf16.msra.mxu0 %v4047
    %5210 = vmatpush.bf16.msra.mxu0 %v4046
    %5211 = vmatpush.bf16.msra.mxu0 %v4045
    %5212 = vmatpush.bf16.msra.mxu0 %v4044
    %5213 = vmatpush.bf16.msra.mxu0 %v4043
    %5214 = vmatpush.bf16.msra.mxu0 %v4042
    %5215 = vmatpush.bf16.msra.mxu0 %v4041
    %5216 = vmatmul.bf16.gmra.mxu0 %v2751
    %v5217 = vpop.f32.mrf.mxu0
    %v5218 = vadd.f32 %v5205, %v5217
    %v5219 = vpop.f32.mrf.mxu0
    %5220 = vdwg.mxu0
    %5221 = vmatpush.bf16.msra.mxu0 0
    %5222 = vmatpush.bf16.msra.mxu0 0
    %5223 = vmatpush.bf16.msra.mxu0 0
    %5224 = vmatpush.bf16.msra.mxu0 0
    %5225 = vmatpush.bf16.msra.mxu0 0
    %5226 = vmatpush.bf16.msra.mxu0 0
    %5227 = vmatpush.bf16.msra.mxu0 0
    %5228 = vmatpush.bf16.msra.mxu0 %v4049
    %5229 = vmatmul.bf16.gmra.mxu0 %v4731
    %v5230 = vpop.f32.mrf.mxu0
    %v5231 = vadd.f32 %v5218, %v5230
    %v5232 = vpop.f32.mrf.mxu0
    %5233 = vdwg.mxu0
    %5234 = vmatpush.bf16.msra.mxu0 %v4131
    %5235 = vmatpush.bf16.msra.mxu0 %v4130
    %5236 = vmatpush.bf16.msra.mxu0 %v4129
    %5237 = vmatpush.bf16.msra.mxu0 %v4128
    %5238 = vmatpush.bf16.msra.mxu0 %v4127
    %5239 = vmatpush.bf16.msra.mxu0 %v4126
    %5240 = vmatpush.bf16.msra.mxu0 %v4125
    %5241 = vmatpush.bf16.msra.mxu0 %v4124
    %5242 = vmatmul.bf16.gmra.mxu0 %v3335
    %v5243 = vpop.f32.mrf.mxu0
    %v5244 = vadd.f32 0.0, %v5243
    %v5245 = vpop.f32.mrf.mxu0
    %5246 = vdwg.mxu0
    %5247 = vmatpush.bf16.msra.mxu0 0
    %5248 = vmatpush.bf16.msra.mxu0 0
    %5249 = vmatpush.bf16.msra.mxu0 0
    %5250 = vmatpush.bf16.msra.mxu0 0
    %5251 = vmatpush.bf16.msra.mxu0 0
    %5252 = vmatpush.bf16.msra.mxu0 0
    %5253 = vmatpush.bf16.msra.mxu0 0
    %5254 = vmatpush.bf16.msra.mxu0 %v4132
    %5255 = vmatmul.bf16.gmra.mxu0 %v5010
    %v5256 = vpop.f32.mrf.mxu0
    %v5257 = vadd.f32 %v5244, %v5256
    %v5258 = vpop.f32.mrf.mxu0
    %5259 = vdwg.mxu0
    %v5260 = vadd.f32 %v5231, %v5257
    %5261 = vmatpush.bf16.msra.mxu0 %v4215
    %5262 = vmatpush.bf16.msra.mxu0 %v4214
    %5263 = vmatpush.bf16.msra.mxu0 %v4213
    %5264 = vmatpush.bf16.msra.mxu0 %v4212
    %5265 = vmatpush.bf16.msra.mxu0 %v4211
    %5266 = vmatpush.bf16.msra.mxu0 %v4210
    %5267 = vmatpush.bf16.msra.mxu0 %v4209
    %5268 = vmatpush.bf16.msra.mxu0 %v4208
    %5269 = vmatmul.bf16.gmra.mxu0 %v3627
    %v5270 = vpop.f32.mrf.mxu0
    %v5271 = vadd.f32 0.0, %v5270
    %v5272 = vpop.f32.mrf.mxu0
    %5273 = vdwg.mxu0
    %5274 = vmatpush.bf16.msra.mxu0 0
    %5275 = vmatpush.bf16.msra.mxu0 0
    %5276 = vmatpush.bf16.msra.mxu0 0
    %5277 = vmatpush.bf16.msra.mxu0 0
    %5278 = vmatpush.bf16.msra.mxu0 0
    %5279 = vmatpush.bf16.msra.mxu0 0
    %5280 = vmatpush.bf16.msra.mxu0 0
    %5281 = vmatpush.bf16.msra.mxu0 %v4216
    %5282 = vmatmul.bf16.gmra.mxu0 %v5151
    %v5283 = vpop.f32.mrf.mxu0
    %v5284 = vadd.f32 %v5271, %v5283
    %v5285 = vpop.f32.mrf.mxu0
    %5286 = vdwg.mxu0
    %v5287 = vadd.f32 %v5260, %v5284
    %v5289 = vsel %vm3975, %v3920, 0
    %5291 = vmatpush.bf16.msra.mxu0 %v4299
    %5292 = vmatpush.bf16.msra.mxu0 %v4298
    %5293 = vmatpush.bf16.msra.mxu0 %v4297
    %5294 = vmatpush.bf16.msra.mxu0 %v4296
    %5295 = vmatpush.bf16.msra.mxu0 %v4295
    %5296 = vmatpush.bf16.msra.mxu0 %v4294
    %5297 = vmatpush.bf16.msra.mxu0 %v4293
    %5298 = vmatpush.bf16.msra.mxu0 %v4292
    %5299 = vmatmul.bf16.gmra.mxu0 %v3919
    %v5300 = vpop.f32.mrf.mxu0
    %v5301 = vadd.f32 0.0, %v5300
    %v5302 = vpop.f32.mrf.mxu0
    %5303 = vdwg.mxu0
    %5304 = vmatpush.bf16.msra.mxu0 0
    %5305 = vmatpush.bf16.msra.mxu0 0
    %5306 = vmatpush.bf16.msra.mxu0 0
    %5307 = vmatpush.bf16.msra.mxu0 0
    %5308 = vmatpush.bf16.msra.mxu0 0
    %5309 = vmatpush.bf16.msra.mxu0 0
    %5310 = vmatpush.bf16.msra.mxu0 0
    %5311 = vmatpush.bf16.msra.mxu0 %v4300
    %5312 = vmatmul.bf16.gmra.mxu0 %v5289
    %v5313 = vpop.f32.mrf.mxu0
    %v5314 = vadd.f32 %v5301, %v5313
    %v5315 = vpop.f32.mrf.mxu0
    %5316 = vdwg.mxu0
    %v5317 = vadd.f32 %v5287, %v5314
    %v5318 = vadd.f32 %v5317, %v4341
    %v5319 = vtanh.pop %v5318
    %v5320 = vadd.f32 %v5181, %v5319
    %v5321 = vmul.f32 %v5320, 0.5
    %v5322 = vpack.c.bf16 %v5321, %v5321
    %v5323 = vld [vmem:[#allocation7] sm:$0xf]
    %v5324 = vld [vmem:[#allocation7 + $0x4] sm:$0xf]
    %v5325 = vld [vmem:[#allocation7 + $0x8] sm:$0xf]
    %v5326 = vld [vmem:[#allocation7 + $0xc] sm:$0xf]
    %v5327 = vld [vmem:[#allocation7 + $0x10] sm:$0xf]
    %v5328 = vld [vmem:[#allocation7 + $0x14] sm:$0xf]
    %v5329 = vld [vmem:[#allocation7 + $0x18] sm:$0xf]
    %v5330 = vld [vmem:[#allocation7 + $0x1c] sm:$0xf]
    %v5331 = vld [vmem:[#allocation7 + $0x20] sm:$0xf]
    %v5332 = vld [vmem:[#allocation7 + $0x24] sm:$0xf]
    %v5333 = vld [vmem:[#allocation7 + $0x28] sm:$0xf]
    %v5334 = vld [vmem:[#allocation7 + $0x2c] sm:$0xf]
    %v5335 = vld [vmem:[#allocation7 + $0x30] sm:$0xf]
    %v5336 = vld [vmem:[#allocation7 + $0x34] sm:$0xf]
    %v5337 = vld [vmem:[#allocation7 + $0x38] sm:$0xf]
    %v5338 = vld [vmem:[#allocation7 + $0x3c] sm:$0xf]
    %s5339 = scalar_lea.vmem [#allocation7], 64
    %v5340 = vld [vmem:[%s5339] sm:$0xf]
    %v5341 = vld [vmem:[%s5339 + $0x4] sm:$0xf]
    %v5342 = vld [vmem:[%s5339 + $0x8] sm:$0xf]
    %v5343 = vld [vmem:[%s5339 + $0xc] sm:$0xf]
    %v5344 = vld [vmem:[%s5339 + $0x10] sm:$0xf]
    %v5345 = vld [vmem:[%s5339 + $0x14] sm:$0xf]
    %v5346 = vld [vmem:[%s5339 + $0x18] sm:$0xf]
    %v5347 = vld [vmem:[%s5339 + $0x1c] sm:$0xf]
    %v5348 = vld [vmem:[%s5339 + $0x20] sm:$0xf]
    %v5349 = vld [vmem:[%s5339 + $0x24] sm:$0xf]
    %v5350 = vld [vmem:[%s5339 + $0x28] sm:$0xf]
    %v5351 = vld [vmem:[%s5339 + $0x2c] sm:$0xf]
    %v5352 = vld [vmem:[%s5339 + $0x30] sm:$0xf]
    %v5353 = vld [vmem:[%s5339 + $0x34] sm:$0xf]
    %v5354 = vld [vmem:[%s5339 + $0x38] sm:$0xf]
    %v5355 = vld [vmem:[%s5339 + $0x3c] sm:$0xf]
    %v5372 = vunpack.c.l.b16 %v5340
    %v5373 = vunpack.c.l.b16 %v5341
    %v5374 = vunpack.c.l.b16 %v5342
    %v5375 = vunpack.c.l.b16 %v5343
    %v5376 = vunpack.c.l.b16 %v5344
    %v5377 = vunpack.c.l.b16 %v5345
    %v5378 = vunpack.c.l.b16 %v5346
    %v5379 = vunpack.c.l.b16 %v5347
    %v5380 = vunpack.c.l.b16 %v5348
    %v5381 = vunpack.c.l.b16 %v5349
    %v5382 = vunpack.c.l.b16 %v5350
    %v5383 = vunpack.c.l.b16 %v5351
    %v5384 = vunpack.c.l.b16 %v5352
    %v5385 = vunpack.c.l.b16 %v5353
    %v5386 = vunpack.c.l.b16 %v5354
    %v5387 = vunpack.c.l.b16 %v5355
    %v5388 = vpack.c.b16 %v5373, %v5372
    %v5389 = vpack.c.b16 %v5375, %v5374
    %v5390 = vpack.c.b16 %v5377, %v5376
    %v5391 = vpack.c.b16 %v5379, %v5378
    %v5392 = vpack.c.b16 %v5381, %v5380
    %v5393 = vpack.c.b16 %v5383, %v5382
    %v5394 = vpack.c.b16 %v5385, %v5384
    %v5395 = vpack.c.b16 %v5387, %v5386
    %5404 = vmatpush.bf16.msra.mxu0 %v5395
    %5405 = vmatpush.bf16.msra.mxu0 %v5394
    %5406 = vmatpush.bf16.msra.mxu0 %v5393
    %5407 = vmatpush.bf16.msra.mxu0 %v5392
    %5408 = vmatpush.bf16.msra.mxu0 %v5391
    %5409 = vmatpush.bf16.msra.mxu0 %v5390
    %5410 = vmatpush.bf16.msra.mxu0 %v5389
    %5411 = vmatpush.bf16.msra.mxu0 %v5388
    %5412 = vmatmul.bf16.gmra.mxu0 %v4764
    %v5413 = vpop.f32.mrf.mxu0
    %v5414 = vadd.f32 0.0, %v5413
    %v5415 = vpop.f32.mrf.mxu0
    %5416 = vdwg.mxu0
    %v5433 = vunpack.c.l.b16 %v5323
    %v5434 = vunpack.c.l.b16 %v5324
    %v5435 = vunpack.c.l.b16 %v5325
    %v5436 = vunpack.c.l.b16 %v5326
    %v5437 = vunpack.c.l.b16 %v5327
    %v5438 = vunpack.c.l.b16 %v5328
    %v5439 = vunpack.c.l.b16 %v5329
    %v5440 = vunpack.c.l.b16 %v5330
    %v5441 = vunpack.c.l.b16 %v5331
    %v5442 = vunpack.c.l.b16 %v5332
    %v5443 = vunpack.c.l.b16 %v5333
    %v5444 = vunpack.c.l.b16 %v5334
    %v5445 = vunpack.c.l.b16 %v5335
    %v5446 = vunpack.c.l.b16 %v5336
    %v5447 = vunpack.c.l.b16 %v5337
    %v5448 = vunpack.c.l.b16 %v5338
    %v5449 = vpack.c.b16 %v5434, %v5433
    %v5450 = vpack.c.b16 %v5436, %v5435
    %v5451 = vpack.c.b16 %v5438, %v5437
    %v5452 = vpack.c.b16 %v5440, %v5439
    %v5453 = vpack.c.b16 %v5442, %v5441
    %v5454 = vpack.c.b16 %v5444, %v5443
    %v5455 = vpack.c.b16 %v5446, %v5445
    %v5456 = vpack.c.b16 %v5448, %v5447
    %5465 = vmatpush.bf16.msra.mxu0 %v5456
    %5466 = vmatpush.bf16.msra.mxu0 %v5455
    %5467 = vmatpush.bf16.msra.mxu0 %v5454
    %5468 = vmatpush.bf16.msra.mxu0 %v5453
    %5469 = vmatpush.bf16.msra.mxu0 %v5452
    %5470 = vmatpush.bf16.msra.mxu0 %v5451
    %5471 = vmatpush.bf16.msra.mxu0 %v5450
    %5472 = vmatpush.bf16.msra.mxu0 %v5449
    %5473 = vmatmul.bf16.gmra.mxu0 %v4485
    %v5474 = vpop.f32.mrf.mxu0
    %v5475 = vadd.f32 %v5414, %v5474
    %v5476 = vpop.f32.mrf.mxu0
    %5477 = vdwg.mxu0
    %s5478 = scalar_lea.vmem [#allocation7], 128
    %v5479 = vld [vmem:[%s5478] sm:$0xf]
    %v5480 = vld [vmem:[%s5478 + $0x4] sm:$0xf]
    %v5481 = vld [vmem:[%s5478 + $0x8] sm:$0xf]
    %v5482 = vld [vmem:[%s5478 + $0xc] sm:$0xf]
    %v5483 = vld [vmem:[%s5478 + $0x10] sm:$0xf]
    %v5484 = vld [vmem:[%s5478 + $0x14] sm:$0xf]
    %v5485 = vld [vmem:[%s5478 + $0x18] sm:$0xf]
    %v5486 = vld [vmem:[%s5478 + $0x1c] sm:$0xf]
    %v5487 = vld [vmem:[%s5478 + $0x20] sm:$0xf]
    %v5488 = vld [vmem:[%s5478 + $0x24] sm:$0xf]
    %v5489 = vld [vmem:[%s5478 + $0x28] sm:$0xf]
    %v5490 = vld [vmem:[%s5478 + $0x2c] sm:$0xf]
    %v5491 = vld [vmem:[%s5478 + $0x30] sm:$0xf]
    %v5492 = vld [vmem:[%s5478 + $0x34] sm:$0xf]
    %v5493 = vld [vmem:[%s5478 + $0x38] sm:$0xf]
    %v5494 = vld [vmem:[%s5478 + $0x3c] sm:$0xf]
    %v5511 = vunpack.c.l.b16 %v5479
    %v5512 = vunpack.c.l.b16 %v5480
    %v5513 = vunpack.c.l.b16 %v5481
    %v5514 = vunpack.c.l.b16 %v5482
    %v5515 = vunpack.c.l.b16 %v5483
    %v5516 = vunpack.c.l.b16 %v5484
    %v5517 = vunpack.c.l.b16 %v5485
    %v5518 = vunpack.c.l.b16 %v5486
    %v5519 = vunpack.c.l.b16 %v5487
    %v5520 = vunpack.c.l.b16 %v5488
    %v5521 = vunpack.c.l.b16 %v5489
    %v5522 = vunpack.c.l.b16 %v5490
    %v5523 = vunpack.c.l.b16 %v5491
    %v5524 = vunpack.c.l.b16 %v5492
    %v5525 = vunpack.c.l.b16 %v5493
    %v5526 = vunpack.c.l.b16 %v5494
    %v5527 = vpack.c.b16 %v5512, %v5511
    %v5528 = vpack.c.b16 %v5514, %v5513
    %v5529 = vpack.c.b16 %v5516, %v5515
    %v5530 = vpack.c.b16 %v5518, %v5517
    %v5531 = vpack.c.b16 %v5520, %v5519
    %v5532 = vpack.c.b16 %v5522, %v5521
    %v5533 = vpack.c.b16 %v5524, %v5523
    %v5534 = vpack.c.b16 %v5526, %v5525
    %5543 = vmatpush.bf16.msra.mxu0 %v5534
    %5544 = vmatpush.bf16.msra.mxu0 %v5533
    %5545 = vmatpush.bf16.msra.mxu0 %v5532
    %5546 = vmatpush.bf16.msra.mxu0 %v5531
    %5547 = vmatpush.bf16.msra.mxu0 %v5530
    %5548 = vmatpush.bf16.msra.mxu0 %v5529
    %5549 = vmatpush.bf16.msra.mxu0 %v5528
    %5550 = vmatpush.bf16.msra.mxu0 %v5527
    %5551 = vmatmul.bf16.gmra.mxu0 %v5043
    %v5552 = vpop.f32.mrf.mxu0
    %v5553 = vadd.f32 0.0, %v5552
    %v5554 = vpop.f32.mrf.mxu0
    %5555 = vdwg.mxu0
    %v5556 = vadd.f32 %v5475, %v5553
    %s5557 = scalar_lea.vmem [#allocation7], 192
    %v5558 = vld [vmem:[%s5557] sm:$0xf]
    %v5559 = vld [vmem:[%s5557 + $0x4] sm:$0xf]
    %v5560 = vld [vmem:[%s5557 + $0x8] sm:$0xf]
    %v5561 = vld [vmem:[%s5557 + $0xc] sm:$0xf]
    %v5562 = vld [vmem:[%s5557 + $0x10] sm:$0xf]
    %v5563 = vld [vmem:[%s5557 + $0x14] sm:$0xf]
    %v5564 = vld [vmem:[%s5557 + $0x18] sm:$0xf]
    %v5565 = vld [vmem:[%s5557 + $0x1c] sm:$0xf]
    %v5566 = vld [vmem:[%s5557 + $0x20] sm:$0xf]
    %v5567 = vld [vmem:[%s5557 + $0x24] sm:$0xf]
    %v5568 = vld [vmem:[%s5557 + $0x28] sm:$0xf]
    %v5569 = vld [vmem:[%s5557 + $0x2c] sm:$0xf]
    %v5570 = vld [vmem:[%s5557 + $0x30] sm:$0xf]
    %v5571 = vld [vmem:[%s5557 + $0x34] sm:$0xf]
    %v5572 = vld [vmem:[%s5557 + $0x38] sm:$0xf]
    %v5573 = vld [vmem:[%s5557 + $0x3c] sm:$0xf]
    %v5590 = vunpack.c.l.b16 %v5558
    %v5591 = vunpack.c.l.b16 %v5559
    %v5592 = vunpack.c.l.b16 %v5560
    %v5593 = vunpack.c.l.b16 %v5561
    %v5594 = vunpack.c.l.b16 %v5562
    %v5595 = vunpack.c.l.b16 %v5563
    %v5596 = vunpack.c.l.b16 %v5564
    %v5597 = vunpack.c.l.b16 %v5565
    %v5598 = vunpack.c.l.b16 %v5566
    %v5599 = vunpack.c.l.b16 %v5567
    %v5600 = vunpack.c.l.b16 %v5568
    %v5601 = vunpack.c.l.b16 %v5569
    %v5602 = vunpack.c.l.b16 %v5570
    %v5603 = vunpack.c.l.b16 %v5571
    %v5604 = vunpack.c.l.b16 %v5572
    %v5605 = vunpack.c.l.b16 %v5573
    %v5606 = vpack.c.b16 %v5591, %v5590
    %v5607 = vpack.c.b16 %v5593, %v5592
    %v5608 = vpack.c.b16 %v5595, %v5594
    %v5609 = vpack.c.b16 %v5597, %v5596
    %v5610 = vpack.c.b16 %v5599, %v5598
    %v5611 = vpack.c.b16 %v5601, %v5600
    %v5612 = vpack.c.b16 %v5603, %v5602
    %v5613 = vpack.c.b16 %v5605, %v5604
    %5622 = vmatpush.bf16.msra.mxu0 %v5613
    %5623 = vmatpush.bf16.msra.mxu0 %v5612
    %5624 = vmatpush.bf16.msra.mxu0 %v5611
    %5625 = vmatpush.bf16.msra.mxu0 %v5610
    %5626 = vmatpush.bf16.msra.mxu0 %v5609
    %5627 = vmatpush.bf16.msra.mxu0 %v5608
    %5628 = vmatpush.bf16.msra.mxu0 %v5607
    %5629 = vmatpush.bf16.msra.mxu0 %v5606
    %5630 = vmatmul.bf16.gmra.mxu0 %v5322
    %v5631 = vpop.f32.mrf.mxu0
    %v5632 = vadd.f32 0.0, %v5631
    %v5633 = vpop.f32.mrf.mxu0
    %5634 = vdwg.mxu0
    %v5635 = vadd.f32 %v5556, %v5632
    %v5636 = vld [vmem:[%s6] sm:$0x1]
    %v5638 = vperm.slane %v5636, 0
    %v5640 = vadd.f32 %v5635, %v5638
    %v5641 = vtanh.pop %v5640
    %v5642 = vpack.c.bf16 %v5641, %v5641
    %v5643 = vld [vmem:[%s7] sm:$0xf]
    %v5644 = vld [vmem:[%s7 + $0x4] sm:$0xf]
    %v5645 = vld [vmem:[%s7 + $0x8] sm:$0xf]
    %v5646 = vld [vmem:[%s7 + $0xc] sm:$0xf]
    %v5647 = vld [vmem:[%s7 + $0x10] sm:$0xf]
    %v5648 = vld [vmem:[%s7 + $0x14] sm:$0xf]
    %v5649 = vld [vmem:[%s7 + $0x18] sm:$0xf]
    %v5650 = vld [vmem:[%s7 + $0x1c] sm:$0xf]
    %v5651 = vld [vmem:[%s7 + $0x20] sm:$0xf]
    %v5652 = vld [vmem:[%s7 + $0x24] sm:$0xf]
    %v5653 = vld [vmem:[%s7 + $0x28] sm:$0xf]
    %v5654 = vld [vmem:[%s7 + $0x2c] sm:$0xf]
    %v5655 = vld [vmem:[%s7 + $0x30] sm:$0xf]
    %v5656 = vld [vmem:[%s7 + $0x34] sm:$0xf]
    %v5657 = vld [vmem:[%s7 + $0x38] sm:$0xf]
    %v5658 = vld [vmem:[%s7 + $0x3c] sm:$0xf]
    %v5659 = vld [vmem:[%s8] sm:$0x1]
    %v5661 = vperm.slane %v5659, 0
    %v5679 = vunpack.c.l.b16 %v5643
    %v5680 = vunpack.c.l.b16 %v5644
    %v5681 = vunpack.c.l.b16 %v5645
    %v5682 = vunpack.c.l.b16 %v5646
    %v5683 = vunpack.c.l.b16 %v5647
    %v5684 = vunpack.c.l.b16 %v5648
    %v5685 = vunpack.c.l.b16 %v5649
    %v5686 = vunpack.c.l.b16 %v5650
    %v5687 = vunpack.c.l.b16 %v5651
    %v5688 = vunpack.c.l.b16 %v5652
    %v5689 = vunpack.c.l.b16 %v5653
    %v5690 = vunpack.c.l.b16 %v5654
    %v5691 = vunpack.c.l.b16 %v5655
    %v5692 = vunpack.c.l.b16 %v5656
    %v5693 = vunpack.c.l.b16 %v5657
    %v5694 = vunpack.c.l.b16 %v5658
    %v5695 = vpack.c.b16 %v5680, %v5679
    %v5696 = vpack.c.b16 %v5682, %v5681
    %v5697 = vpack.c.b16 %v5684, %v5683
    %v5698 = vpack.c.b16 %v5686, %v5685
    %v5699 = vpack.c.b16 %v5688, %v5687
    %v5700 = vpack.c.b16 %v5690, %v5689
    %v5701 = vpack.c.b16 %v5692, %v5691
    %v5702 = vpack.c.b16 %v5694, %v5693
    %5711 = vmatpush.bf16.msra.mxu0 %v5702
    %5712 = vmatpush.bf16.msra.mxu0 %v5701
    %5713 = vmatpush.bf16.msra.mxu0 %v5700
    %5714 = vmatpush.bf16.msra.mxu0 %v5699
    %5715 = vmatpush.bf16.msra.mxu0 %v5698
    %5716 = vmatpush.bf16.msra.mxu0 %v5697
    %5717 = vmatpush.bf16.msra.mxu0 %v5696
    %5718 = vmatpush.bf16.msra.mxu0 %v5695
    %5719 = vmatmul.bf16.gmra.mxu0 %v5642
    %v5720 = vpop.f32.mrf.mxu0
    %v5721 = vadd.f32 %v5661, %v5720
    %v5722 = vpop.f32.mrf.mxu0
    %5723 = vdwg.mxu0
    %v5724 = vtanh.pop %v5721
    %v5725 = vpack.c.bf16 %v5724, %v5724
    %v5726 = vld [vmem:[#allocation8] sm:$0xf]
    %v5727 = vld [vmem:[#allocation8 + $0x4] sm:$0xf]
    %v5728 = vld [vmem:[#allocation8 + $0x8] sm:$0xf]
    %v5729 = vld [vmem:[#allocation8 + $0xc] sm:$0xf]
    %v5730 = vld [vmem:[#allocation8 + $0x10] sm:$0xf]
    %v5731 = vld [vmem:[#allocation8 + $0x14] sm:$0xf]
    %v5732 = vld [vmem:[#allocation8 + $0x18] sm:$0xf]
    %v5733 = vld [vmem:[#allocation8 + $0x1c] sm:$0xf]
    %v5734 = vld [vmem:[#allocation8 + $0x20] sm:$0xf]
    %v5735 = vld [vmem:[#allocation8 + $0x24] sm:$0xf]
    %v5736 = vld [vmem:[#allocation8 + $0x28] sm:$0xf]
    %v5737 = vld [vmem:[#allocation8 + $0x2c] sm:$0xf]
    %v5738 = vld [vmem:[#allocation8 + $0x30] sm:$0xf]
    %v5739 = vld [vmem:[#allocation8 + $0x34] sm:$0xf]
    %v5740 = vld [vmem:[#allocation8 + $0x38] sm:$0xf]
    %v5741 = vld [vmem:[#allocation8 + $0x3c] sm:$0xf]
    %v5742 = vld [vmem:[%s10] sm:$0x1]
    %v5744 = vperm.slane %v5742, 0
    %v5762 = vunpack.c.l.b16 %v5726
    %v5763 = vunpack.c.l.b16 %v5727
    %v5764 = vunpack.c.l.b16 %v5728
    %v5765 = vunpack.c.l.b16 %v5729
    %v5766 = vunpack.c.l.b16 %v5730
    %v5767 = vunpack.c.l.b16 %v5731
    %v5768 = vunpack.c.l.b16 %v5732
    %v5769 = vunpack.c.l.b16 %v5733
    %v5770 = vunpack.c.l.b16 %v5734
    %v5771 = vunpack.c.l.b16 %v5735
    %v5772 = vunpack.c.l.b16 %v5736
    %v5773 = vunpack.c.l.b16 %v5737
    %v5774 = vunpack.c.l.b16 %v5738
    %v5775 = vunpack.c.l.b16 %v5739
    %v5776 = vunpack.c.l.b16 %v5740
    %v5777 = vunpack.c.l.b16 %v5741
    %v5778 = vpack.c.b16 %v5763, %v5762
    %v5779 = vpack.c.b16 %v5765, %v5764
    %v5780 = vpack.c.b16 %v5767, %v5766
    %v5781 = vpack.c.b16 %v5769, %v5768
    %v5782 = vpack.c.b16 %v5771, %v5770
    %v5783 = vpack.c.b16 %v5773, %v5772
    %v5784 = vpack.c.b16 %v5775, %v5774
    %v5785 = vpack.c.b16 %v5777, %v5776
    %5794 = vmatpush.bf16.msra.mxu0 %v5785
    %5795 = vmatpush.bf16.msra.mxu0 %v5784
    %5796 = vmatpush.bf16.msra.mxu0 %v5783
    %5797 = vmatpush.bf16.msra.mxu0 %v5782
    %5798 = vmatpush.bf16.msra.mxu0 %v5781
    %5799 = vmatpush.bf16.msra.mxu0 %v5780
    %5800 = vmatpush.bf16.msra.mxu0 %v5779
    %5801 = vmatpush.bf16.msra.mxu0 %v5778
    %5802 = vmatmul.bf16.gmra.mxu0 %v5725
    %v5803 = vpop.f32.mrf.mxu0
    %v5804 = vadd.f32 %v5744, %v5803
    %v5805 = vpop.f32.mrf.mxu0
    %5806 = vdwg.mxu0
    %5807 = vst [vmem:[#allocation10] sm:$0x3] %v5804
    // Predicated region
    $region62: #{lenet_forward.1} parent=1 // pred_check
      _
    $region63: #{lenet_forward.1} parent=1 // pred_check_branch
      %5809 = sbr.rel (0) target = $region65
    $region64: #{lenet_forward.1} parent=1 // pred_region
      %5811 = vsyncadd [#allocation4], 0
      %s5813 = sshll.u32 [#allocation10], 4
      %s5814 = int_to_ptr.vmem [resolvable:$true] %s5813
      %s5815 = sshll.u32 %s11, 4
      %s5816 = int_to_ptr.hbm [resolvable:$true] %s5815
      %5818 = dma.vmem_to_hbm [thread:$0]  %s5814, 32, %s5816, [#allocation4]
    $region65: #{lenet_forward.1} parent=1 // pred_fallthru
      _
    // Predicated region
    $region66: #{lenet_forward.1} parent=1 // pred_check
      _
    $region67: #{lenet_forward.1} parent=1 // pred_check_branch
      %5820 = sbr.rel (0) target = $region69
    $region68: #{lenet_forward.1} parent=1 // pred_region
      %5822 = dma.done [#allocation4], 32
    $region69: #{lenet_forward.1} parent=1 // pred_fallthru
      _
    %5823 = vsyncpa [#allocation3], 1
    %5824 = vsyncpa [#allocation6], 1
    %5825 = vsyncpa [#allocation9], 1
    %5826 = vsyncpa [#allocation4], 1

</llo_original>
